<compile_context>
chip_gen: v6e
topology: v6e:2x2x1
jax: 0.10.0
libtpu: 0.0.40
codegen_flags: <defaults>
</compile_context>

<pallas_src>
import functools
import math

import jax
import jax.numpy as jnp
from jax.experimental import pallas as pl
from jax.experimental.pallas import tpu as pltpu

_VMEM = pl.BlockSpec(memory_space=pltpu.MemorySpace.VMEM)
_SMEM = pl.BlockSpec(memory_space=pltpu.MemorySpace.SMEM)

# Matmul operand dtype (MXU accumulation is f32 either way).  bf16 halves
# VMEM/HBM bytes and runs the MXU at full rate; set to jnp.float32 for closer
# numerical parity with the f32 PyTorch reference.
_OPERAND_DTYPE = jnp.bfloat16


# ------------------------------ the fused kernel ------------------------------

def _fista_forward_kernel(coef_ref, x_ref,
                          a1_ref, a1t_ref, a2_ref, a2t_ref, a3_ref, a3t_ref,
                          b1_ref, b2_ref, b3_ref, wc_ref, bc_ref,
                          out_ref, *, T):
    """Whole ML_FISTA_NET forward on VMEM-resident values.

    Layouts (lane dim last):
      activations : (N, C*H*W) f32 rows  -> lanes 784 / 1152 / 256 / 32 wide
      a{l}        : (Cin*H*W, Cout*Ho*Wo) dense conv operator, scaled by c_l (bf16)
      a{l}t       : its transpose = dense conv_transpose operator            (bf16)
      b{l}        : (1, Cout*Ho*Wo) bias row, broadcast over the batch rows
      coef        : (T,) FISTA momentum coefficients in SMEM
    """
    def mm(lhs, rhs_ref):
        return jnp.dot(lhs.astype(_OPERAND_DTYPE), rhs_ref[...],
                       preferred_element_type=jnp.float32)

    x = x_ref[...]
    b1 = b1_ref[...]
    b2 = b2_ref[...]
    b3 = b3_ref[...]

    # -------------------------------- encoder --------------------------------
    # gamma_l = relu(c_l * conv(gamma_{l-1}, W_l, s_l) + b_l); c_l folded into a_l.
    g1 = jnp.maximum(mm(x, a1_ref) + b1, 0.0)
    g2 = jnp.maximum(mm(g1, a2_ref) + b2, 0.0)
    g3 = jnp.maximum(mm(g2, a3_ref) + b3, 0.0)
    g3_prv = g3

    # ---------------------------- FISTA iterations ----------------------------
    # T is static & small -> unrolled Python loop (full scheduler visibility).
    # coef comes from SMEM, so there is exactly ONE compiled kernel variant.
    # TODO(synk): for large T, switch to grid=(T,) marked "arbitrary" with
    # g3 / g3_prv carried in VMEM scratch instead of unrolling.
    for it in range(T):
        coef = coef_ref[it]
        z = g3 + coef * (g3 - g3_prv)            # momentum step
        g3_prv = g3
        g2d = mm(z, a3t_ref)                     # conv_t(Z, W3)
        g1d = mm(g2d, a2t_ref)                   # conv_t(g2d, W2)
        r1 = mm(g1d, a1t_ref) - x                # conv_t(g1d, W1) - x
        # gamma1 = relu(g1d - c1*conv(r1, W1) + b1)
        g1 = jnp.maximum(g1d - mm(r1, a1_ref) + b1, 0.0)
        # gamma2 = relu(g2d - c2*conv(conv_t(g2d, W2) - gamma1, W2) + b2); reuse g1d
        g2 = jnp.maximum(g2d - mm(g1d - g1, a2_ref) + b2, 0.0)
        # gamma3 = relu(Z - c3*conv(conv_t(Z, W3) - gamma2, W3) + b3); reuse g2d
        g3 = jnp.maximum(z - mm(g2d - g2, a3_ref) + b3, 0.0)

    # ---------------------------------- head ----------------------------------
    # Linear(m3, 10) + log_softmax fused as the epilogue (f32; tiny).
    logits = (jnp.dot(g3, wc_ref[...], preferred_element_type=jnp.float32)
              + bc_ref[...])
    m = jnp.max(logits, axis=-1, keepdims=True)
    lse = jnp.log(jnp.sum(jnp.exp(logits - m), axis=-1, keepdims=True)) + m
    out_ref[...] = logits - lse


# -------------------- dense conv operator (built once, in XLA) ----------------

def _conv_matrix(W, H, Wd, stride):
    """Dense matrix A such that x.reshape(N,-1) @ A == conv2d(x, W, stride).reshape(N,-1)
    (PyTorch NCHW row-major flattening on both sides), and y_flat @ A.T equals
    conv_transpose2d(y, W, stride) flattened.  Built from one-hot selectors, so it
    is a couple of tiny einsum contractions — no scatter, no im2col slabs."""
    Cout, Cin, kh, kw = W.shape
    Ho = (H - kh) // stride + 1
    Wo = (Wd - kw) // stride + 1
    # eh[ki, oh, ih] = (ih == stride*oh + ki);  ew[kj, ow, iw] likewise.
    eh = (jnp.arange(H)[None, None, :]
          == (stride * jnp.arange(Ho)[None, :, None]
              + jnp.arange(kh)[:, None, None])).astype(W.dtype)
    ew = (jnp.arange(Wd)[None, None, :]
          == (stride * jnp.arange(Wo)[None, :, None]
              + jnp.arange(kw)[:, None, None])).astype(W.dtype)
    # A[(ci,ih,iw),(co,oh,ow)] = sum_{ki,kj} W[co,ci,ki,kj]*eh[ki,oh,ih]*ew[kj,ow,iw]
    a = jnp.einsum('ocij,iph,jqw->chwopq', W, eh, ew)
    return a.reshape(Cin * H * Wd, Cout * Ho * Wo), (Ho, Wo)


# ---------------------------------- params ------------------------------------

def make_params(key, m1, m2, m3):
    k1, k2, k3, k4, k5 = jax.random.split(key, 5)
    return {
        "W1": (0.1 / math.sqrt(36)) * jax.random.normal(k1, (m1, 1, 6, 6), jnp.float32),
        "W2": (0.1 / math.sqrt(m1 * 36)) * jax.random.normal(k2, (m2, m1, 6, 6), jnp.float32),
        "W3": (0.1 / math.sqrt(m2 * 16)) * jax.random.normal(k3, (m3, m2, 4, 4), jnp.float32),
        "c1": jnp.ones((1,), jnp.float32),
        "c2": jnp.ones((1,), jnp.float32),
        "c3": jnp.ones((1,), jnp.float32),
        "b1": jnp.zeros((m1,), jnp.float32),
        "b2": jnp.zeros((m2,), jnp.float32),
        "b3": jnp.zeros((m3,), jnp.float32),
        # nn.Linear(m3, 10) default init: U(-1/sqrt(m3), 1/sqrt(m3))
        "Wc": jax.random.uniform(k4, (10, m3), jnp.float32,
                                 -1.0 / math.sqrt(m3), 1.0 / math.sqrt(m3)),
        "bc": jax.random.uniform(k5, (10,), jnp.float32,
                                 -1.0 / math.sqrt(m3), 1.0 / math.sqrt(m3)),
    }


# ---------------------------------- forward -----------------------------------

@functools.partial(jax.jit, static_argnums=(2,))
def ml_fista_net_forward(params, x, T):
    W1, W2, W3 = params["W1"], params["W2"], params["W3"]
    c1, c2, c3 = params["c1"], params["c2"], params["c3"]
    s1, s2, s3 = 2, 2, 1
    N, _, H0, W0 = x.shape

    # Dense conv / conv_transpose operators, built ONCE per forward (outside the
    # kernel, outside the T loop).  c_l is folded into the forward operator so the
    # kernel never scales; the adjoint (transposed-conv) operator is unscaled,
    # exactly as in the reference.
    A1, (H1, V1) = _conv_matrix(W1, H0, W0, s1)
    A2, (H2, V2) = _conv_matrix(W2, H1, V1, s2)
    A3, (H3, V3) = _conv_matrix(W3, H2, V2, s3)
    assert H3 == 1 and V3 == 1, "Linear(m3, 10) head requires 1x1 spatial after conv3"

    a1c = (c1[0] * A1).astype(_OPERAND_DTYPE)
    a2c = (c2[0] * A2).astype(_OPERAND_DTYPE)
    a3c = (c3[0] * A3).astype(_OPERAND_DTYPE)
    a1t = A1.T.astype(_OPERAND_DTYPE)
    a2t = A2.T.astype(_OPERAND_DTYPE)
    a3t = A3.T.astype(_OPERAND_DTYPE)

    # Per-channel biases flattened to (1, Cout*Ho*Wo) rows (broadcast over batch).
    b1f = jnp.repeat(params["b1"].reshape(-1), H1 * V1).reshape(1, -1)
    b2f = jnp.repeat(params["b2"].reshape(-1), H2 * V2).reshape(1, -1)
    b3f = jnp.repeat(params["b3"].reshape(-1), H3 * V3).reshape(1, -1)

    wc_t = params["Wc"].T.astype(jnp.float32)          # (m3, 10)
    bc = params["bc"].reshape(1, -1).astype(jnp.float32)

    # FISTA momentum coefficients: pure function of T, passed as SMEM *data*
    # (single kernel, no per-iteration constant baking).
    t = 1.0
    coef_list = []
    for _ in range(T):
        t_prv = t
        t = (1.0 + math.sqrt(1.0 + 4.0 * t_prv * t_prv)) / 2.0
        coef_list.append((t_prv - 1.0) / t)
    coefs = jnp.asarray(coef_list if coef_list else [0.0], jnp.float32)

    x_flat = x.reshape(N, -1).astype(jnp.float32)      # (N, Cin*H*W), lane-dense

    kern = functools.partial(_fista_forward_kernel, T=T)
    return pl.pallas_call(
        kern,
        out_shape=jax.ShapeDtypeStruct((N, 10), jnp.float32),
        in_specs=[_SMEM] + [_VMEM] * 12,
        out_specs=_VMEM,
        compiler_params=pltpu.CompilerParams(vmem_limit_bytes=32 * 1024 * 1024),
    )(coefs, x_flat, a1c, a1t, a2c, a2t, a3c, a3t, b1f, b2f, b3f, wc_t, bc)


# ------------------------------------ main -------------------------------------

if __name__ == "__main__":
    # The Linear(m3, 10) head on the flattened gamma3 forces 1x1 spatial after the
    # three convs, which implies 28x28 MNIST-style inputs.
    m1, m2, m3, T = 8, 16, 32, 2
    batch = 2

    key = jax.random.PRNGKey(0)
    kx, kp = jax.random.split(key)
    x = jax.random.normal(kx, (batch, 1, 28, 28), jnp.float32)
    params = make_params(kp, m1, m2, m3)

    out = ml_fista_net_forward(params, x, T)
    out = jax.block_until_ready(out)

    assert out.shape == (batch, 10)
    # log_softmax rows must sum (in prob space) to 1
    assert bool(jnp.all(jnp.abs(jnp.sum(jnp.exp(out), axis=1) - 1.0) < 1e-4))
    print("KERNEL_OK")
</pallas_src>

<mosaic_0001>
module attributes {stable_mosaic.version = 11 : i64} {
  func.func @_fista_forward_kernel(%arg0: memref<2xf32, #tpu.memory_space<smem>>, %arg1: memref<2x784xf32, #tpu.memory_space<vmem>>, %arg2: memref<784x1152xbf16, #tpu.memory_space<vmem>>, %arg3: memref<1152x784xbf16, #tpu.memory_space<vmem>>, %arg4: memref<1152x256xbf16, #tpu.memory_space<vmem>>, %arg5: memref<256x1152xbf16, #tpu.memory_space<vmem>>, %arg6: memref<256x32xbf16, #tpu.memory_space<vmem>>, %arg7: memref<32x256xbf16, #tpu.memory_space<vmem>>, %arg8: memref<1x1152xf32, #tpu.memory_space<vmem>>, %arg9: memref<1x256xf32, #tpu.memory_space<vmem>>, %arg10: memref<1x32xf32, #tpu.memory_space<vmem>>, %arg11: memref<32x10xf32, #tpu.memory_space<vmem>>, %arg12: memref<1x10xf32, #tpu.memory_space<vmem>>, %arg13: memref<2x10xf32, #tpu.memory_space<vmem>>) attributes {dimension_semantics = [], scalar_prefetch = 0 : i64, scratch_operands = 0 : i64, tpu.core_type = #tpu.core_type<tc>} {
    %c0 = arith.constant 0 : index
    %c0_0 = arith.constant 0 : index
    %0 = vector.load %arg1[%c0, %c0_0] : memref<2x784xf32, #tpu.memory_space<vmem>>, vector<2x784xf32>
    %c0_1 = arith.constant 0 : index
    %c0_2 = arith.constant 0 : index
    %1 = vector.load %arg8[%c0_1, %c0_2] : memref<1x1152xf32, #tpu.memory_space<vmem>>, vector<1x1152xf32>
    %c0_3 = arith.constant 0 : index
    %c0_4 = arith.constant 0 : index
    %2 = vector.load %arg9[%c0_3, %c0_4] : memref<1x256xf32, #tpu.memory_space<vmem>>, vector<1x256xf32>
    %c0_5 = arith.constant 0 : index
    %c0_6 = arith.constant 0 : index
    %3 = vector.load %arg10[%c0_5, %c0_6] : memref<1x32xf32, #tpu.memory_space<vmem>>, vector<1x32xf32>
    %4 = arith.truncf %0 : vector<2x784xf32> to vector<2x784xbf16>
    %c0_7 = arith.constant 0 : index
    %c0_8 = arith.constant 0 : index
    %5 = vector.load %arg2[%c0_7, %c0_8] : memref<784x1152xbf16, #tpu.memory_space<vmem>>, vector<784x1152xbf16>
    %cst = arith.constant dense<0.000000e+00> : vector<2x1152xf32>
    %6 = tpu.matmul %4, %5, %cst {dimension_numbers = #tpu.dot_dimension_numbers<[1], [0], [0], [1], [0, 0, 1, 1], [], []>} : vector<2x784xbf16>, vector<784x1152xbf16>, vector<2x1152xf32> -> vector<2x1152xf32>
    %7 = vector.broadcast %1 : vector<1x1152xf32> to vector<2x1152xf32>
    %8 = arith.addf %6, %7 : vector<2x1152xf32>
    %cst_9 = arith.constant 0.000000e+00 : f32
    %9 = vector.broadcast %cst_9 : f32 to vector<2x1152xf32>
    %10 = arith.maximumf %8, %9 : vector<2x1152xf32>
    %11 = arith.truncf %10 : vector<2x1152xf32> to vector<2x1152xbf16>
    %c0_10 = arith.constant 0 : index
    %c0_11 = arith.constant 0 : index
    %12 = vector.load %arg4[%c0_10, %c0_11] : memref<1152x256xbf16, #tpu.memory_space<vmem>>, vector<1152x256xbf16>
    %cst_12 = arith.constant dense<0.000000e+00> : vector<2x256xf32>
    %13 = tpu.matmul %11, %12, %cst_12 {dimension_numbers = #tpu.dot_dimension_numbers<[1], [0], [0], [1], [0, 0, 1, 1], [], []>} : vector<2x1152xbf16>, vector<1152x256xbf16>, vector<2x256xf32> -> vector<2x256xf32>
    %14 = vector.broadcast %2 : vector<1x256xf32> to vector<2x256xf32>
    %15 = arith.addf %13, %14 : vector<2x256xf32>
    %cst_13 = arith.constant 0.000000e+00 : f32
    %16 = vector.broadcast %cst_13 : f32 to vector<2x256xf32>
    %17 = arith.maximumf %15, %16 : vector<2x256xf32>
    %18 = arith.truncf %17 : vector<2x256xf32> to vector<2x256xbf16>
    %c0_14 = arith.constant 0 : index
    %c0_15 = arith.constant 0 : index
    %19 = vector.load %arg6[%c0_14, %c0_15] : memref<256x32xbf16, #tpu.memory_space<vmem>>, vector<256x32xbf16>
    %cst_16 = arith.constant dense<0.000000e+00> : vector<2x32xf32>
    %20 = tpu.matmul %18, %19, %cst_16 {dimension_numbers = #tpu.dot_dimension_numbers<[1], [0], [0], [1], [0, 0, 1, 1], [], []>} : vector<2x256xbf16>, vector<256x32xbf16>, vector<2x32xf32> -> vector<2x32xf32>
    %21 = vector.broadcast %3 : vector<1x32xf32> to vector<2x32xf32>
    %22 = arith.addf %20, %21 : vector<2x32xf32>
    %cst_17 = arith.constant 0.000000e+00 : f32
    %23 = vector.broadcast %cst_17 : f32 to vector<2x32xf32>
    %24 = arith.maximumf %22, %23 : vector<2x32xf32>
    %c0_18 = arith.constant 0 : index
    %25 = memref.load %arg0[%c0_18] : memref<2xf32, #tpu.memory_space<smem>>
    %26 = arith.subf %24, %24 : vector<2x32xf32>
    %27 = vector.broadcast %25 : f32 to vector<2x32xf32>
    %28 = arith.mulf %27, %26 : vector<2x32xf32>
    %29 = arith.addf %24, %28 : vector<2x32xf32>
    %30 = arith.truncf %29 : vector<2x32xf32> to vector<2x32xbf16>
    %c0_19 = arith.constant 0 : index
    %c0_20 = arith.constant 0 : index
    %31 = vector.load %arg7[%c0_19, %c0_20] : memref<32x256xbf16, #tpu.memory_space<vmem>>, vector<32x256xbf16>
    %cst_21 = arith.constant dense<0.000000e+00> : vector<2x256xf32>
    %32 = tpu.matmul %30, %31, %cst_21 {dimension_numbers = #tpu.dot_dimension_numbers<[1], [0], [0], [1], [0, 0, 1, 1], [], []>} : vector<2x32xbf16>, vector<32x256xbf16>, vector<2x256xf32> -> vector<2x256xf32>
    %33 = arith.truncf %32 : vector<2x256xf32> to vector<2x256xbf16>
    %c0_22 = arith.constant 0 : index
    %c0_23 = arith.constant 0 : index
    %34 = vector.load %arg5[%c0_22, %c0_23] : memref<256x1152xbf16, #tpu.memory_space<vmem>>, vector<256x1152xbf16>
    %cst_24 = arith.constant dense<0.000000e+00> : vector<2x1152xf32>
    %35 = tpu.matmul %33, %34, %cst_24 {dimension_numbers = #tpu.dot_dimension_numbers<[1], [0], [0], [1], [0, 0, 1, 1], [], []>} : vector<2x256xbf16>, vector<256x1152xbf16>, vector<2x1152xf32> -> vector<2x1152xf32>
    %36 = arith.truncf %35 : vector<2x1152xf32> to vector<2x1152xbf16>
    %c0_25 = arith.constant 0 : index
    %c0_26 = arith.constant 0 : index
    %37 = vector.load %arg3[%c0_25, %c0_26] : memref<1152x784xbf16, #tpu.memory_space<vmem>>, vector<1152x784xbf16>
    %cst_27 = arith.constant dense<0.000000e+00> : vector<2x784xf32>
    %38 = tpu.matmul %36, %37, %cst_27 {dimension_numbers = #tpu.dot_dimension_numbers<[1], [0], [0], [1], [0, 0, 1, 1], [], []>} : vector<2x1152xbf16>, vector<1152x784xbf16>, vector<2x784xf32> -> vector<2x784xf32>
    %39 = arith.subf %38, %0 : vector<2x784xf32>
    %40 = arith.truncf %39 : vector<2x784xf32> to vector<2x784xbf16>
    %c0_28 = arith.constant 0 : index
    %c0_29 = arith.constant 0 : index
    %41 = vector.load %arg2[%c0_28, %c0_29] : memref<784x1152xbf16, #tpu.memory_space<vmem>>, vector<784x1152xbf16>
    %cst_30 = arith.constant dense<0.000000e+00> : vector<2x1152xf32>
    %42 = tpu.matmul %40, %41, %cst_30 {dimension_numbers = #tpu.dot_dimension_numbers<[1], [0], [0], [1], [0, 0, 1, 1], [], []>} : vector<2x784xbf16>, vector<784x1152xbf16>, vector<2x1152xf32> -> vector<2x1152xf32>
    %43 = arith.subf %35, %42 : vector<2x1152xf32>
    %44 = vector.broadcast %1 : vector<1x1152xf32> to vector<2x1152xf32>
    %45 = arith.addf %43, %44 : vector<2x1152xf32>
    %cst_31 = arith.constant 0.000000e+00 : f32
    %46 = vector.broadcast %cst_31 : f32 to vector<2x1152xf32>
    %47 = arith.maximumf %45, %46 : vector<2x1152xf32>
    %48 = arith.subf %35, %47 : vector<2x1152xf32>
    %49 = arith.truncf %48 : vector<2x1152xf32> to vector<2x1152xbf16>
    %c0_32 = arith.constant 0 : index
    %c0_33 = arith.constant 0 : index
    %50 = vector.load %arg4[%c0_32, %c0_33] : memref<1152x256xbf16, #tpu.memory_space<vmem>>, vector<1152x256xbf16>
    %cst_34 = arith.constant dense<0.000000e+00> : vector<2x256xf32>
    %51 = tpu.matmul %49, %50, %cst_34 {dimension_numbers = #tpu.dot_dimension_numbers<[1], [0], [0], [1], [0, 0, 1, 1], [], []>} : vector<2x1152xbf16>, vector<1152x256xbf16>, vector<2x256xf32> -> vector<2x256xf32>
    %52 = arith.subf %32, %51 : vector<2x256xf32>
    %53 = vector.broadcast %2 : vector<1x256xf32> to vector<2x256xf32>
    %54 = arith.addf %52, %53 : vector<2x256xf32>
    %cst_35 = arith.constant 0.000000e+00 : f32
    %55 = vector.broadcast %cst_35 : f32 to vector<2x256xf32>
    %56 = arith.maximumf %54, %55 : vector<2x256xf32>
    %57 = arith.subf %32, %56 : vector<2x256xf32>
    %58 = arith.truncf %57 : vector<2x256xf32> to vector<2x256xbf16>
    %c0_36 = arith.constant 0 : index
    %c0_37 = arith.constant 0 : index
    %59 = vector.load %arg6[%c0_36, %c0_37] : memref<256x32xbf16, #tpu.memory_space<vmem>>, vector<256x32xbf16>
    %cst_38 = arith.constant dense<0.000000e+00> : vector<2x32xf32>
    %60 = tpu.matmul %58, %59, %cst_38 {dimension_numbers = #tpu.dot_dimension_numbers<[1], [0], [0], [1], [0, 0, 1, 1], [], []>} : vector<2x256xbf16>, vector<256x32xbf16>, vector<2x32xf32> -> vector<2x32xf32>
    %61 = arith.subf %29, %60 : vector<2x32xf32>
    %62 = vector.broadcast %3 : vector<1x32xf32> to vector<2x32xf32>
    %63 = arith.addf %61, %62 : vector<2x32xf32>
    %cst_39 = arith.constant 0.000000e+00 : f32
    %64 = vector.broadcast %cst_39 : f32 to vector<2x32xf32>
    %65 = arith.maximumf %63, %64 : vector<2x32xf32>
    %c1 = arith.constant 1 : index
    %66 = memref.load %arg0[%c1] : memref<2xf32, #tpu.memory_space<smem>>
    %67 = arith.subf %65, %24 : vector<2x32xf32>
    %68 = vector.broadcast %66 : f32 to vector<2x32xf32>
    %69 = arith.mulf %68, %67 : vector<2x32xf32>
    %70 = arith.addf %65, %69 : vector<2x32xf32>
    %71 = arith.truncf %70 : vector<2x32xf32> to vector<2x32xbf16>
    %c0_40 = arith.constant 0 : index
    %c0_41 = arith.constant 0 : index
    %72 = vector.load %arg7[%c0_40, %c0_41] : memref<32x256xbf16, #tpu.memory_space<vmem>>, vector<32x256xbf16>
    %cst_42 = arith.constant dense<0.000000e+00> : vector<2x256xf32>
    %73 = tpu.matmul %71, %72, %cst_42 {dimension_numbers = #tpu.dot_dimension_numbers<[1], [0], [0], [1], [0, 0, 1, 1], [], []>} : vector<2x32xbf16>, vector<32x256xbf16>, vector<2x256xf32> -> vector<2x256xf32>
    %74 = arith.truncf %73 : vector<2x256xf32> to vector<2x256xbf16>
    %c0_43 = arith.constant 0 : index
    %c0_44 = arith.constant 0 : index
    %75 = vector.load %arg5[%c0_43, %c0_44] : memref<256x1152xbf16, #tpu.memory_space<vmem>>, vector<256x1152xbf16>
    %cst_45 = arith.constant dense<0.000000e+00> : vector<2x1152xf32>
    %76 = tpu.matmul %74, %75, %cst_45 {dimension_numbers = #tpu.dot_dimension_numbers<[1], [0], [0], [1], [0, 0, 1, 1], [], []>} : vector<2x256xbf16>, vector<256x1152xbf16>, vector<2x1152xf32> -> vector<2x1152xf32>
    %77 = arith.truncf %76 : vector<2x1152xf32> to vector<2x1152xbf16>
    %c0_46 = arith.constant 0 : index
    %c0_47 = arith.constant 0 : index
    %78 = vector.load %arg3[%c0_46, %c0_47] : memref<1152x784xbf16, #tpu.memory_space<vmem>>, vector<1152x784xbf16>
    %cst_48 = arith.constant dense<0.000000e+00> : vector<2x784xf32>
    %79 = tpu.matmul %77, %78, %cst_48 {dimension_numbers = #tpu.dot_dimension_numbers<[1], [0], [0], [1], [0, 0, 1, 1], [], []>} : vector<2x1152xbf16>, vector<1152x784xbf16>, vector<2x784xf32> -> vector<2x784xf32>
    %80 = arith.subf %79, %0 : vector<2x784xf32>
    %81 = arith.truncf %80 : vector<2x784xf32> to vector<2x784xbf16>
    %c0_49 = arith.constant 0 : index
    %c0_50 = arith.constant 0 : index
    %82 = vector.load %arg2[%c0_49, %c0_50] : memref<784x1152xbf16, #tpu.memory_space<vmem>>, vector<784x1152xbf16>
    %cst_51 = arith.constant dense<0.000000e+00> : vector<2x1152xf32>
    %83 = tpu.matmul %81, %82, %cst_51 {dimension_numbers = #tpu.dot_dimension_numbers<[1], [0], [0], [1], [0, 0, 1, 1], [], []>} : vector<2x784xbf16>, vector<784x1152xbf16>, vector<2x1152xf32> -> vector<2x1152xf32>
    %84 = arith.subf %76, %83 : vector<2x1152xf32>
    %85 = vector.broadcast %1 : vector<1x1152xf32> to vector<2x1152xf32>
    %86 = arith.addf %84, %85 : vector<2x1152xf32>
    %cst_52 = arith.constant 0.000000e+00 : f32
    %87 = vector.broadcast %cst_52 : f32 to vector<2x1152xf32>
    %88 = arith.maximumf %86, %87 : vector<2x1152xf32>
    %89 = arith.subf %76, %88 : vector<2x1152xf32>
    %90 = arith.truncf %89 : vector<2x1152xf32> to vector<2x1152xbf16>
    %c0_53 = arith.constant 0 : index
    %c0_54 = arith.constant 0 : index
    %91 = vector.load %arg4[%c0_53, %c0_54] : memref<1152x256xbf16, #tpu.memory_space<vmem>>, vector<1152x256xbf16>
    %cst_55 = arith.constant dense<0.000000e+00> : vector<2x256xf32>
    %92 = tpu.matmul %90, %91, %cst_55 {dimension_numbers = #tpu.dot_dimension_numbers<[1], [0], [0], [1], [0, 0, 1, 1], [], []>} : vector<2x1152xbf16>, vector<1152x256xbf16>, vector<2x256xf32> -> vector<2x256xf32>
    %93 = arith.subf %73, %92 : vector<2x256xf32>
    %94 = vector.broadcast %2 : vector<1x256xf32> to vector<2x256xf32>
    %95 = arith.addf %93, %94 : vector<2x256xf32>
    %cst_56 = arith.constant 0.000000e+00 : f32
    %96 = vector.broadcast %cst_56 : f32 to vector<2x256xf32>
    %97 = arith.maximumf %95, %96 : vector<2x256xf32>
    %98 = arith.subf %73, %97 : vector<2x256xf32>
    %99 = arith.truncf %98 : vector<2x256xf32> to vector<2x256xbf16>
    %c0_57 = arith.constant 0 : index
    %c0_58 = arith.constant 0 : index
    %100 = vector.load %arg6[%c0_57, %c0_58] : memref<256x32xbf16, #tpu.memory_space<vmem>>, vector<256x32xbf16>
    %cst_59 = arith.constant dense<0.000000e+00> : vector<2x32xf32>
    %101 = tpu.matmul %99, %100, %cst_59 {dimension_numbers = #tpu.dot_dimension_numbers<[1], [0], [0], [1], [0, 0, 1, 1], [], []>} : vector<2x256xbf16>, vector<256x32xbf16>, vector<2x32xf32> -> vector<2x32xf32>
    %102 = arith.subf %70, %101 : vector<2x32xf32>
    %103 = vector.broadcast %3 : vector<1x32xf32> to vector<2x32xf32>
    %104 = arith.addf %102, %103 : vector<2x32xf32>
    %cst_60 = arith.constant 0.000000e+00 : f32
    %105 = vector.broadcast %cst_60 : f32 to vector<2x32xf32>
    %106 = arith.maximumf %104, %105 : vector<2x32xf32>
    %c0_61 = arith.constant 0 : index
    %c0_62 = arith.constant 0 : index
    %107 = vector.load %arg11[%c0_61, %c0_62] : memref<32x10xf32, #tpu.memory_space<vmem>>, vector<32x10xf32>
    %cst_63 = arith.constant dense<0.000000e+00> : vector<2x10xf32>
    %108 = tpu.matmul %106, %107, %cst_63 {dimension_numbers = #tpu.dot_dimension_numbers<[1], [0], [0], [1], [0, 0, 1, 1], [], []>} : vector<2x32xf32>, vector<32x10xf32>, vector<2x10xf32> -> vector<2x10xf32>
    %c0_64 = arith.constant 0 : index
    %c0_65 = arith.constant 0 : index
    %109 = vector.load %arg12[%c0_64, %c0_65] : memref<1x10xf32, #tpu.memory_space<vmem>>, vector<1x10xf32>
    %110 = vector.broadcast %109 : vector<1x10xf32> to vector<2x10xf32>
    %111 = arith.addf %108, %110 : vector<2x10xf32>
    %cst_66 = arith.constant dense<0xFF800000> : vector<2xf32>
    %112 = vector.multi_reduction <maximumf>, %111, %cst_66 [1] : vector<2x10xf32> to vector<2xf32>
    %113 = vector.shape_cast %112 : vector<2xf32> to vector<2x1xf32>
    %114 = vector.broadcast %113 : vector<2x1xf32> to vector<2x10xf32>
    %115 = arith.subf %111, %114 : vector<2x10xf32>
    %116 = math.exp %115 : vector<2x10xf32>
    %cst_67 = arith.constant dense<0.000000e+00> : vector<2xf32>
    %117 = vector.multi_reduction <add>, %116, %cst_67 [1] : vector<2x10xf32> to vector<2xf32>
    %118 = vector.shape_cast %117 : vector<2xf32> to vector<2x1xf32>
    %119 = math.log %118 : vector<2x1xf32>
    %120 = arith.addf %119, %113 : vector<2x1xf32>
    %121 = vector.broadcast %120 : vector<2x1xf32> to vector<2x10xf32>
    %122 = arith.subf %111, %121 : vector<2x10xf32>
    %c0_68 = arith.constant 0 : index
    %c0_69 = arith.constant 0 : index
    %123 = vector.load %arg13[%c0_68, %c0_69] : memref<2x10xf32, #tpu.memory_space<vmem>>, vector<2x10xf32>
    tpu.vector_store %arg13[%c0_68, %c0_69], %122 {strides = array<i32>} : memref<2x10xf32, #tpu.memory_space<vmem>>, vector<2x10xf32>,
    return
  }
}

</mosaic_0001>

<llo_original>
// kernel: ml_fista_net_forward.1
$region0: #{ml_fista_net_forward.1}
  #allocation0 [shape = 'u32[]', space=smem, size = 0x4, offset = 0x4, fixed_abs, tag = 'smem constant byte address 0x4 - core index']
  #allocation1 [shape = 'u32[144,128]{1,0:T(1,128)}', space=vmem, size = 0x12000, scoped, tag = 'internal scratch']
  %s0 = inlined_call_operand.vmem [shape: f32[2], index: 0, kind: input, shape index: {}]
  %s1 = inlined_call_operand.vmem [shape: f32[2,784], index: 1, kind: input, shape index: {}]
  %s2 = inlined_call_operand.vmem [shape: bf16[784,1152], index: 2, kind: input, shape index: {}]
  %s3 = inlined_call_operand.vmem [shape: bf16[1152,784], index: 3, kind: input, shape index: {}]
  %s4 = inlined_call_operand.vmem [shape: bf16[1152,256], index: 4, kind: input, shape index: {}]
  %s5 = inlined_call_operand.vmem [shape: bf16[256,1152], index: 5, kind: input, shape index: {}]
  %s6 = inlined_call_operand.vmem [shape: bf16[256,32], index: 6, kind: input, shape index: {}]
  %s7 = inlined_call_operand.vmem [shape: bf16[32,256], index: 7, kind: input, shape index: {}]
  %s8 = inlined_call_operand.vmem [shape: f32[1,1152], index: 8, kind: input, shape index: {}]
  %s9 = inlined_call_operand.vmem [shape: f32[1,256], index: 9, kind: input, shape index: {}]
  %s10 = inlined_call_operand.vmem [shape: f32[1,32], index: 10, kind: input, shape index: {}]
  %s11 = inlined_call_operand.vmem [shape: f32[32,10], index: 11, kind: input, shape index: {}]
  %s12 = inlined_call_operand.vmem [shape: f32[1,10], index: 12, kind: input, shape index: {}]
  %s13 = inlined_call_operand.hbm [shape: f32[2,10], index: 13, kind: output, shape index: {}]
  %s14 = sld [smem:[#allocation0]]
  $region66: #{ml_fista_net_forward.1} parent=0
    _
  %s16 = ssub.s32 1, %s14
  %s17 = scalar_select 0, %s16, %s14
  $region1: #{ml_fista_net_forward.1} parent=0
    #allocation2 [shape = 'u8[512]{0}', space=smem, size = 0x200, scoped, tag = 'input window, operand 0, single buffered']
    #allocation3 [shape = 's32[1]{0}', space=sflag, size = 0x4, scoped, tag = 'scoped memory for ml_fista_net_forward.1']
    #allocation4 [shape = 's32[1]{0}', space=sflag, size = 0x4, scoped, tag = 'scoped memory for ml_fista_net_forward.1']
    #allocation5 [shape = 'u8[1024]{0}', space=vmem, size = 0x400, scoped, tag = 'output window, operand 0, single buffered']
    %18 = vsyncpa [#allocation4], 0
    %19 = vsyncpa [#allocation3], 0
    // Predicated region
    $region2: #{ml_fista_net_forward.1} parent=1 // pred_check
      _
    $region3: #{ml_fista_net_forward.1} parent=1 // pred_check_branch
      %21 = sbr.rel (0) target = $region5
    $region4: #{ml_fista_net_forward.1} parent=1 // pred_region
      %s23 = ssub.s32 16, 16
      %24 = vsyncadd [#allocation4], %s23
      %s26 = sshll.u32 %s0, 4
      %s27 = int_to_ptr.vmem [resolvable:$true] %s26
      %29 = dma.vmem_to_smem %s27, 16, [#allocation2], [#allocation4]
    $region5: #{ml_fista_net_forward.1} parent=1 // pred_fallthru
      _
    // Predicated region
    $region6: #{ml_fista_net_forward.1} parent=1 // pred_check
      _
    $region7: #{ml_fista_net_forward.1} parent=1 // pred_check_branch
      %31 = sbr.rel (0) target = $region9
    $region8: #{ml_fista_net_forward.1} parent=1 // pred_region
      _
    $region9: #{ml_fista_net_forward.1} parent=1 // pred_fallthru
      _
    // Predicated region
    $region10: #{ml_fista_net_forward.1} parent=1 // pred_check
      _
    $region11: #{ml_fista_net_forward.1} parent=1 // pred_check_branch
      %33 = sbr.rel (0) target = $region13
    $region12: #{ml_fista_net_forward.1} parent=1 // pred_region
      _
    $region13: #{ml_fista_net_forward.1} parent=1 // pred_fallthru
      _
    // Predicated region
    $region14: #{ml_fista_net_forward.1} parent=1 // pred_check
      _
    $region15: #{ml_fista_net_forward.1} parent=1 // pred_check_branch
      %35 = sbr.rel (0) target = $region17
    $region16: #{ml_fista_net_forward.1} parent=1 // pred_region
      _
    $region17: #{ml_fista_net_forward.1} parent=1 // pred_fallthru
      _
    // Predicated region
    $region18: #{ml_fista_net_forward.1} parent=1 // pred_check
      _
    $region19: #{ml_fista_net_forward.1} parent=1 // pred_check_branch
      %37 = sbr.rel (0) target = $region21
    $region20: #{ml_fista_net_forward.1} parent=1 // pred_region
      _
    $region21: #{ml_fista_net_forward.1} parent=1 // pred_fallthru
      _
    // Predicated region
    $region22: #{ml_fista_net_forward.1} parent=1 // pred_check
      _
    $region23: #{ml_fista_net_forward.1} parent=1 // pred_check_branch
      %39 = sbr.rel (0) target = $region25
    $region24: #{ml_fista_net_forward.1} parent=1 // pred_region
      _
    $region25: #{ml_fista_net_forward.1} parent=1 // pred_fallthru
      _
    // Predicated region
    $region26: #{ml_fista_net_forward.1} parent=1 // pred_check
      _
    $region27: #{ml_fista_net_forward.1} parent=1 // pred_check_branch
      %41 = sbr.rel (0) target = $region29
    $region28: #{ml_fista_net_forward.1} parent=1 // pred_region
      _
    $region29: #{ml_fista_net_forward.1} parent=1 // pred_fallthru
      _
    // Predicated region
    $region30: #{ml_fista_net_forward.1} parent=1 // pred_check
      _
    $region31: #{ml_fista_net_forward.1} parent=1 // pred_check_branch
      %43 = sbr.rel (0) target = $region33
    $region32: #{ml_fista_net_forward.1} parent=1 // pred_region
      _
    $region33: #{ml_fista_net_forward.1} parent=1 // pred_fallthru
      _
    // Predicated region
    $region34: #{ml_fista_net_forward.1} parent=1 // pred_check
      _
    $region35: #{ml_fista_net_forward.1} parent=1 // pred_check_branch
      %45 = sbr.rel (0) target = $region37
    $region36: #{ml_fista_net_forward.1} parent=1 // pred_region
      _
    $region37: #{ml_fista_net_forward.1} parent=1 // pred_fallthru
      _
    // Predicated region
    $region38: #{ml_fista_net_forward.1} parent=1 // pred_check
      _
    $region39: #{ml_fista_net_forward.1} parent=1 // pred_check_branch
      %47 = sbr.rel (0) target = $region41
    $region40: #{ml_fista_net_forward.1} parent=1 // pred_region
      _
    $region41: #{ml_fista_net_forward.1} parent=1 // pred_fallthru
      _
    // Predicated region
    $region42: #{ml_fista_net_forward.1} parent=1 // pred_check
      _
    $region43: #{ml_fista_net_forward.1} parent=1 // pred_check_branch
      %49 = sbr.rel (0) target = $region45
    $region44: #{ml_fista_net_forward.1} parent=1 // pred_region
      _
    $region45: #{ml_fista_net_forward.1} parent=1 // pred_fallthru
      _
    // Predicated region
    $region46: #{ml_fista_net_forward.1} parent=1 // pred_check
      _
    $region47: #{ml_fista_net_forward.1} parent=1 // pred_check_branch
      %51 = sbr.rel (0) target = $region49
    $region48: #{ml_fista_net_forward.1} parent=1 // pred_region
      _
    $region49: #{ml_fista_net_forward.1} parent=1 // pred_fallthru
      _
    // Predicated region
    $region50: #{ml_fista_net_forward.1} parent=1 // pred_check
      _
    $region51: #{ml_fista_net_forward.1} parent=1 // pred_check_branch
      %53 = sbr.rel (0) target = $region53
    $region52: #{ml_fista_net_forward.1} parent=1 // pred_region
      _
    $region53: #{ml_fista_net_forward.1} parent=1 // pred_fallthru
      _
    // Predicated region
    $region54: #{ml_fista_net_forward.1} parent=1 // pred_check
      _
    $region55: #{ml_fista_net_forward.1} parent=1 // pred_check_branch
      %55 = sbr.rel (0) target = $region57
    $region56: #{ml_fista_net_forward.1} parent=1 // pred_region
      %56 = dma.done [#allocation4], 16
    $region57: #{ml_fista_net_forward.1} parent=1 // pred_fallthru
      _
    %57 = sfence
    %v59 = vld [vmem:[%s1] sm:$0xff]
    %v60 = vld [vmem:[%s1 + $0x8] sm:$0x3f]
    %v61 = vld [vmem:[%s8] sm:$0xff]
    %v62 = vld [vmem:[%s8 + $0x8] sm:$0x1]
    %v63 = vld [vmem:[%s9] sm:$0x3]
    %v64 = vld [vmem:[%s10] sm:$0x1]
    %v67 = vcombine.high %v59, %v59
    %v69 = vunpack.c.l.s4 1983009808
    %v70 = vunpack.c.0.s8 %v69
    %v71 = vlaneseq
    %v72 = vshrl.u32 %v71, 7
    %v73 = vsub.s32 %v70, %v72
    %v74 = vrot.slane %v59, %v73
    %v76 = vunpack.c.l.s4 1983009808
    %v77 = vunpack.c.0.s8 %v76
    %v78 = vlaneseq
    %v79 = vshrl.u32 %v78, 7
    %v80 = vsub.s32 %v77, %v79
    %v81 = vrot.slane %v67, %v80
    %v82 = vcombine.high %v74, %v74
    %v83 = vcombine.high %v81, %v81
    %v84 = vcombine.high %v60, %v60
    %v86 = vunpack.c.l.s4 1983009808
    %v87 = vunpack.c.0.s8 %v86
    %v88 = vlaneseq
    %v89 = vshrl.u32 %v88, 7
    %v90 = vsub.s32 %v87, %v89
    %v91 = vrot.slane %v60, %v90
    %v93 = vunpack.c.l.s4 1983009808
    %v94 = vunpack.c.0.s8 %v93
    %v95 = vlaneseq
    %v96 = vshrl.u32 %v95, 7
    %v97 = vsub.s32 %v94, %v96
    %v98 = vrot.slane %v84, %v97
    %v99 = vcombine.high %v91, %v91
    %v107 = vpack.c.bf16 %v74, %v74
    %v108 = vpack.c.bf16 %v82, %v82
    %v109 = vpack.c.bf16 %v81, %v81
    %v110 = vpack.c.bf16 %v83, %v83
    %v111 = vpack.c.bf16 %v91, %v91
    %v112 = vpack.c.bf16 %v99, %v99
    %v113 = vpack.c.bf16 %v98, %v98
    %v114 = vld [vmem:[%s2] sm:$0xff]
    %v115 = vld [vmem:[%s2 + $0x8] sm:$0xff]
    %v116 = vld [vmem:[%s2 + $0x10] sm:$0xff]
    %v117 = vld [vmem:[%s2 + $0x18] sm:$0xff]
    %v118 = vld [vmem:[%s2 + $0x20] sm:$0xf]
    %v119 = vld [vmem:[%s2 + $0x24] sm:$0xff]
    %v120 = vld [vmem:[%s2 + $0x2c] sm:$0xff]
    %v121 = vld [vmem:[%s2 + $0x34] sm:$0xff]
    %v122 = vld [vmem:[%s2 + $0x3c] sm:$0xff]
    %v123 = vld [vmem:[%s2 + $0x44] sm:$0xf]
    %v124 = vld [vmem:[%s2 + $0x48] sm:$0xff]
    %v125 = vld [vmem:[%s2 + $0x50] sm:$0xff]
    %v126 = vld [vmem:[%s2 + $0x58] sm:$0xff]
    %v127 = vld [vmem:[%s2 + $0x60] sm:$0xff]
    %v128 = vld [vmem:[%s2 + $0x68] sm:$0xf]
    %v129 = vld [vmem:[%s2 + $0x6c] sm:$0xff]
    %v130 = vld [vmem:[%s2 + $0x74] sm:$0xff]
    %v131 = vld [vmem:[%s2 + $0x7c] sm:$0xff]
    %v132 = vld [vmem:[%s2 + $0x84] sm:$0xff]
    %v133 = vld [vmem:[%s2 + $0x8c] sm:$0xf]
    %v134 = vld [vmem:[%s2 + $0x90] sm:$0xff]
    %v135 = vld [vmem:[%s2 + $0x98] sm:$0xff]
    %v136 = vld [vmem:[%s2 + $0xa0] sm:$0xff]
    %v137 = vld [vmem:[%s2 + $0xa8] sm:$0xff]
    %v138 = vld [vmem:[%s2 + $0xb0] sm:$0xf]
    %v139 = vld [vmem:[%s2 + $0xb4] sm:$0xff]
    %v140 = vld [vmem:[%s2 + $0xbc] sm:$0xff]
    %v141 = vld [vmem:[%s2 + $0xc4] sm:$0xff]
    %v142 = vld [vmem:[%s2 + $0xcc] sm:$0xff]
    %v143 = vld [vmem:[%s2 + $0xd4] sm:$0xf]
    %v144 = vld [vmem:[%s2 + $0xd8] sm:$0xff]
    %v145 = vld [vmem:[%s2 + $0xe0] sm:$0xff]
    %v146 = vld [vmem:[%s2 + $0xe8] sm:$0xff]
    %v147 = vld [vmem:[%s2 + $0xf0] sm:$0xff]
    %v148 = vld [vmem:[%s2 + $0xf8] sm:$0xf]
    %v149 = vld [vmem:[%s2 + $0xfc] sm:$0xff]
    %v150 = vld [vmem:[%s2 + $0x104] sm:$0xff]
    %v151 = vld [vmem:[%s2 + $0x10c] sm:$0xff]
    %v152 = vld [vmem:[%s2 + $0x114] sm:$0xff]
    %v153 = vld [vmem:[%s2 + $0x11c] sm:$0xf]
    %v154 = vld [vmem:[%s2 + $0x120] sm:$0xff]
    %v155 = vld [vmem:[%s2 + $0x128] sm:$0xff]
    %v156 = vld [vmem:[%s2 + $0x130] sm:$0xff]
    %v157 = vld [vmem:[%s2 + $0x138] sm:$0xff]
    %v158 = vld [vmem:[%s2 + $0x140] sm:$0xf]
    %v159 = vld [vmem:[%s2 + $0x144] sm:$0xff]
    %v160 = vld [vmem:[%s2 + $0x14c] sm:$0xff]
    %v161 = vld [vmem:[%s2 + $0x154] sm:$0xff]
    %v162 = vld [vmem:[%s2 + $0x15c] sm:$0xff]
    %v163 = vld [vmem:[%s2 + $0x164] sm:$0xf]
    %v164 = vld [vmem:[%s2 + $0x168] sm:$0xff]
    %v165 = vld [vmem:[%s2 + $0x170] sm:$0xff]
    %v166 = vld [vmem:[%s2 + $0x178] sm:$0xff]
    %v167 = vld [vmem:[%s2 + $0x180] sm:$0xff]
    %v168 = vld [vmem:[%s2 + $0x188] sm:$0xf]
    %v169 = vld [vmem:[%s2 + $0x18c] sm:$0xff]
    %v170 = vld [vmem:[%s2 + $0x194] sm:$0xff]
    %v171 = vld [vmem:[%s2 + $0x19c] sm:$0xff]
    %v172 = vld [vmem:[%s2 + $0x1a4] sm:$0xff]
    %v173 = vld [vmem:[%s2 + $0x1ac] sm:$0xf]
    %v174 = vld [vmem:[%s2 + $0x1b0] sm:$0xff]
    %v175 = vld [vmem:[%s2 + $0x1b8] sm:$0xff]
    %v176 = vld [vmem:[%s2 + $0x1c0] sm:$0xff]
    %v177 = vld [vmem:[%s2 + $0x1c8] sm:$0xff]
    %v178 = vld [vmem:[%s2 + $0x1d0] sm:$0xf]
    %v179 = vld [vmem:[%s2 + $0x1d4] sm:$0xff]
    %v180 = vld [vmem:[%s2 + $0x1dc] sm:$0xff]
    %v181 = vld [vmem:[%s2 + $0x1e4] sm:$0xff]
    %v182 = vld [vmem:[%s2 + $0x1ec] sm:$0xff]
    %v183 = vld [vmem:[%s2 + $0x1f4] sm:$0xf]
    %v184 = vld [vmem:[%s2 + $0x1f8] sm:$0xff]
    %v185 = vld [vmem:[%s2 + $0x200] sm:$0xff]
    %v186 = vld [vmem:[%s2 + $0x208] sm:$0xff]
    %v187 = vld [vmem:[%s2 + $0x210] sm:$0xff]
    %v188 = vld [vmem:[%s2 + $0x218] sm:$0xf]
    %v189 = vld [vmem:[%s2 + $0x21c] sm:$0xff]
    %v190 = vld [vmem:[%s2 + $0x224] sm:$0xff]
    %v191 = vld [vmem:[%s2 + $0x22c] sm:$0xff]
    %v192 = vld [vmem:[%s2 + $0x234] sm:$0xff]
    %v193 = vld [vmem:[%s2 + $0x23c] sm:$0xf]
    %v194 = vld [vmem:[%s2 + $0x240] sm:$0xff]
    %v195 = vld [vmem:[%s2 + $0x248] sm:$0xff]
    %v196 = vld [vmem:[%s2 + $0x250] sm:$0xff]
    %v197 = vld [vmem:[%s2 + $0x258] sm:$0xff]
    %v198 = vld [vmem:[%s2 + $0x260] sm:$0xf]
    %v199 = vld [vmem:[%s2 + $0x264] sm:$0xff]
    %v200 = vld [vmem:[%s2 + $0x26c] sm:$0xff]
    %v201 = vld [vmem:[%s2 + $0x274] sm:$0xff]
    %v202 = vld [vmem:[%s2 + $0x27c] sm:$0xff]
    %v203 = vld [vmem:[%s2 + $0x284] sm:$0xf]
    %v204 = vld [vmem:[%s2 + $0x288] sm:$0xff]
    %v205 = vld [vmem:[%s2 + $0x290] sm:$0xff]
    %v206 = vld [vmem:[%s2 + $0x298] sm:$0xff]
    %v207 = vld [vmem:[%s2 + $0x2a0] sm:$0xff]
    %v208 = vld [vmem:[%s2 + $0x2a8] sm:$0xf]
    %v209 = vld [vmem:[%s2 + $0x2ac] sm:$0xff]
    %v210 = vld [vmem:[%s2 + $0x2b4] sm:$0xff]
    %v211 = vld [vmem:[%s2 + $0x2bc] sm:$0xff]
    %v212 = vld [vmem:[%s2 + $0x2c4] sm:$0xff]
    %v213 = vld [vmem:[%s2 + $0x2cc] sm:$0xf]
    %v214 = vld [vmem:[%s2 + $0x2d0] sm:$0xff]
    %v215 = vld [vmem:[%s2 + $0x2d8] sm:$0xff]
    %v216 = vld [vmem:[%s2 + $0x2e0] sm:$0xff]
    %v217 = vld [vmem:[%s2 + $0x2e8] sm:$0xff]
    %v218 = vld [vmem:[%s2 + $0x2f0] sm:$0xf]
    %v219 = vld [vmem:[%s2 + $0x2f4] sm:$0xff]
    %v220 = vld [vmem:[%s2 + $0x2fc] sm:$0xff]
    %v221 = vld [vmem:[%s2 + $0x304] sm:$0xff]
    %v222 = vld [vmem:[%s2 + $0x30c] sm:$0xff]
    %v223 = vld [vmem:[%s2 + $0x314] sm:$0xf]
    %v224 = vld [vmem:[%s2 + $0x318] sm:$0xff]
    %v225 = vld [vmem:[%s2 + $0x320] sm:$0xff]
    %v226 = vld [vmem:[%s2 + $0x328] sm:$0xff]
    %v227 = vld [vmem:[%s2 + $0x330] sm:$0xff]
    %v228 = vld [vmem:[%s2 + $0x338] sm:$0xf]
    %v229 = vld [vmem:[%s2 + $0x33c] sm:$0xff]
    %v230 = vld [vmem:[%s2 + $0x344] sm:$0xff]
    %v231 = vld [vmem:[%s2 + $0x34c] sm:$0xff]
    %v232 = vld [vmem:[%s2 + $0x354] sm:$0xff]
    %v233 = vld [vmem:[%s2 + $0x35c] sm:$0xf]
    %v234 = vld [vmem:[%s2 + $0x360] sm:$0xff]
    %v235 = vld [vmem:[%s2 + $0x368] sm:$0xff]
    %v236 = vld [vmem:[%s2 + $0x370] sm:$0xff]
    %v237 = vld [vmem:[%s2 + $0x378] sm:$0xff]
    %v238 = vld [vmem:[%s2 + $0x380] sm:$0xf]
    %v239 = vld [vmem:[%s2 + $0x384] sm:$0xff]
    %v240 = vld [vmem:[%s2 + $0x38c] sm:$0xff]
    %v241 = vld [vmem:[%s2 + $0x394] sm:$0xff]
    %v242 = vld [vmem:[%s2 + $0x39c] sm:$0xff]
    %v243 = vld [vmem:[%s2 + $0x3a4] sm:$0xf]
    %v244 = vld [vmem:[%s2 + $0x3a8] sm:$0xff]
    %v245 = vld [vmem:[%s2 + $0x3b0] sm:$0xff]
    %v246 = vld [vmem:[%s2 + $0x3b8] sm:$0xff]
    %v247 = vld [vmem:[%s2 + $0x3c0] sm:$0xff]
    %v248 = vld [vmem:[%s2 + $0x3c8] sm:$0xf]
    %v249 = vld [vmem:[%s2 + $0x3cc] sm:$0xff]
    %v250 = vld [vmem:[%s2 + $0x3d4] sm:$0xff]
    %v251 = vld [vmem:[%s2 + $0x3dc] sm:$0xff]
    %v252 = vld [vmem:[%s2 + $0x3e4] sm:$0xff]
    %v253 = vld [vmem:[%s2 + $0x3ec] sm:$0xf]
    %v254 = vld [vmem:[%s2 + $0x3f0] sm:$0xff]
    %v255 = vld [vmem:[%s2 + $0x3f8] sm:$0xff]
    %v256 = vld [vmem:[%s2 + $0x400] sm:$0xff]
    %v257 = vld [vmem:[%s2 + $0x408] sm:$0xff]
    %v258 = vld [vmem:[%s2 + $0x410] sm:$0xf]
    %v259 = vld [vmem:[%s2 + $0x414] sm:$0xff]
    %v260 = vld [vmem:[%s2 + $0x41c] sm:$0xff]
    %v261 = vld [vmem:[%s2 + $0x424] sm:$0xff]
    %v262 = vld [vmem:[%s2 + $0x42c] sm:$0xff]
    %v263 = vld [vmem:[%s2 + $0x434] sm:$0xf]
    %v264 = vld [vmem:[%s2 + $0x438] sm:$0xff]
    %v265 = vld [vmem:[%s2 + $0x440] sm:$0xff]
    %v266 = vld [vmem:[%s2 + $0x448] sm:$0xff]
    %v267 = vld [vmem:[%s2 + $0x450] sm:$0xff]
    %v268 = vld [vmem:[%s2 + $0x458] sm:$0xf]
    %v269 = vld [vmem:[%s2 + $0x45c] sm:$0xff]
    %v270 = vld [vmem:[%s2 + $0x464] sm:$0xff]
    %v271 = vld [vmem:[%s2 + $0x46c] sm:$0xff]
    %v272 = vld [vmem:[%s2 + $0x474] sm:$0xff]
    %v273 = vld [vmem:[%s2 + $0x47c] sm:$0xf]
    %v274 = vld [vmem:[%s2 + $0x480] sm:$0xff]
    %v275 = vld [vmem:[%s2 + $0x488] sm:$0xff]
    %v276 = vld [vmem:[%s2 + $0x490] sm:$0xff]
    %v277 = vld [vmem:[%s2 + $0x498] sm:$0xff]
    %v278 = vld [vmem:[%s2 + $0x4a0] sm:$0xf]
    %v279 = vld [vmem:[%s2 + $0x4a4] sm:$0xff]
    %v280 = vld [vmem:[%s2 + $0x4ac] sm:$0xff]
    %v281 = vld [vmem:[%s2 + $0x4b4] sm:$0xff]
    %v282 = vld [vmem:[%s2 + $0x4bc] sm:$0xff]
    %v283 = vld [vmem:[%s2 + $0x4c4] sm:$0xf]
    %v284 = vld [vmem:[%s2 + $0x4c8] sm:$0xff]
    %v285 = vld [vmem:[%s2 + $0x4d0] sm:$0xff]
    %v286 = vld [vmem:[%s2 + $0x4d8] sm:$0xff]
    %v287 = vld [vmem:[%s2 + $0x4e0] sm:$0xff]
    %v288 = vld [vmem:[%s2 + $0x4e8] sm:$0xf]
    %v289 = vld [vmem:[%s2 + $0x4ec] sm:$0xff]
    %v290 = vld [vmem:[%s2 + $0x4f4] sm:$0xff]
    %v291 = vld [vmem:[%s2 + $0x4fc] sm:$0xff]
    %v292 = vld [vmem:[%s2 + $0x504] sm:$0xff]
    %v293 = vld [vmem:[%s2 + $0x50c] sm:$0xf]
    %v294 = vld [vmem:[%s2 + $0x510] sm:$0xff]
    %v295 = vld [vmem:[%s2 + $0x518] sm:$0xff]
    %v296 = vld [vmem:[%s2 + $0x520] sm:$0xff]
    %v297 = vld [vmem:[%s2 + $0x528] sm:$0xff]
    %v298 = vld [vmem:[%s2 + $0x530] sm:$0xf]
    %v299 = vld [vmem:[%s2 + $0x534] sm:$0xff]
    %v300 = vld [vmem:[%s2 + $0x53c] sm:$0xff]
    %v301 = vld [vmem:[%s2 + $0x544] sm:$0xff]
    %v302 = vld [vmem:[%s2 + $0x54c] sm:$0xff]
    %v303 = vld [vmem:[%s2 + $0x554] sm:$0xf]
    %v304 = vld [vmem:[%s2 + $0x558] sm:$0xff]
    %v305 = vld [vmem:[%s2 + $0x560] sm:$0xff]
    %v306 = vld [vmem:[%s2 + $0x568] sm:$0xff]
    %v307 = vld [vmem:[%s2 + $0x570] sm:$0xff]
    %v308 = vld [vmem:[%s2 + $0x578] sm:$0xf]
    %v309 = vld [vmem:[%s2 + $0x57c] sm:$0xff]
    %v310 = vld [vmem:[%s2 + $0x584] sm:$0xff]
    %v311 = vld [vmem:[%s2 + $0x58c] sm:$0xff]
    %v312 = vld [vmem:[%s2 + $0x594] sm:$0xff]
    %v313 = vld [vmem:[%s2 + $0x59c] sm:$0xf]
    %v314 = vld [vmem:[%s2 + $0x5a0] sm:$0xff]
    %v315 = vld [vmem:[%s2 + $0x5a8] sm:$0xff]
    %v316 = vld [vmem:[%s2 + $0x5b0] sm:$0xff]
    %v317 = vld [vmem:[%s2 + $0x5b8] sm:$0xff]
    %v318 = vld [vmem:[%s2 + $0x5c0] sm:$0xf]
    %v319 = vld [vmem:[%s2 + $0x5c4] sm:$0xff]
    %v320 = vld [vmem:[%s2 + $0x5cc] sm:$0xff]
    %v321 = vld [vmem:[%s2 + $0x5d4] sm:$0xff]
    %v322 = vld [vmem:[%s2 + $0x5dc] sm:$0xff]
    %v323 = vld [vmem:[%s2 + $0x5e4] sm:$0xf]
    %v324 = vld [vmem:[%s2 + $0x5e8] sm:$0xff]
    %v325 = vld [vmem:[%s2 + $0x5f0] sm:$0xff]
    %v326 = vld [vmem:[%s2 + $0x5f8] sm:$0xff]
    %v327 = vld [vmem:[%s2 + $0x600] sm:$0xff]
    %v328 = vld [vmem:[%s2 + $0x608] sm:$0xf]
    %v329 = vld [vmem:[%s2 + $0x60c] sm:$0xff]
    %v330 = vld [vmem:[%s2 + $0x614] sm:$0xff]
    %v331 = vld [vmem:[%s2 + $0x61c] sm:$0xff]
    %v332 = vld [vmem:[%s2 + $0x624] sm:$0xff]
    %v333 = vld [vmem:[%s2 + $0x62c] sm:$0xf]
    %v334 = vld [vmem:[%s2 + $0x630] sm:$0xff]
    %v335 = vld [vmem:[%s2 + $0x638] sm:$0xff]
    %v336 = vld [vmem:[%s2 + $0x640] sm:$0xff]
    %v337 = vld [vmem:[%s2 + $0x648] sm:$0xff]
    %v338 = vld [vmem:[%s2 + $0x650] sm:$0xf]
    %v339 = vld [vmem:[%s2 + $0x654] sm:$0xff]
    %v340 = vld [vmem:[%s2 + $0x65c] sm:$0xff]
    %v341 = vld [vmem:[%s2 + $0x664] sm:$0xff]
    %v342 = vld [vmem:[%s2 + $0x66c] sm:$0xff]
    %v343 = vld [vmem:[%s2 + $0x674] sm:$0xf]
    %v344 = vld [vmem:[%s2 + $0x678] sm:$0xff]
    %v345 = vld [vmem:[%s2 + $0x680] sm:$0xff]
    %v346 = vld [vmem:[%s2 + $0x688] sm:$0xff]
    %v347 = vld [vmem:[%s2 + $0x690] sm:$0xff]
    %v348 = vld [vmem:[%s2 + $0x698] sm:$0xf]
    %v349 = vld [vmem:[%s2 + $0x69c] sm:$0xff]
    %v350 = vld [vmem:[%s2 + $0x6a4] sm:$0xff]
    %v351 = vld [vmem:[%s2 + $0x6ac] sm:$0xff]
    %v352 = vld [vmem:[%s2 + $0x6b4] sm:$0xff]
    %v353 = vld [vmem:[%s2 + $0x6bc] sm:$0xf]
    %v354 = vld [vmem:[%s2 + $0x6c0] sm:$0xff]
    %v355 = vld [vmem:[%s2 + $0x6c8] sm:$0xff]
    %v356 = vld [vmem:[%s2 + $0x6d0] sm:$0xff]
    %v357 = vld [vmem:[%s2 + $0x6d8] sm:$0xff]
    %v358 = vld [vmem:[%s2 + $0x6e0] sm:$0xf]
    %v359 = vld [vmem:[%s2 + $0x6e4] sm:$0xff]
    %v360 = vld [vmem:[%s2 + $0x6ec] sm:$0xff]
    %v361 = vld [vmem:[%s2 + $0x6f4] sm:$0xff]
    %v362 = vld [vmem:[%s2 + $0x6fc] sm:$0xff]
    %v363 = vld [vmem:[%s2 + $0x704] sm:$0xf]
    %v364 = vld [vmem:[%s2 + $0x708] sm:$0xff]
    %v365 = vld [vmem:[%s2 + $0x710] sm:$0xff]
    %v366 = vld [vmem:[%s2 + $0x718] sm:$0xff]
    %v367 = vld [vmem:[%s2 + $0x720] sm:$0xff]
    %v368 = vld [vmem:[%s2 + $0x728] sm:$0xf]
    %v369 = vld [vmem:[%s2 + $0x72c] sm:$0xff]
    %v370 = vld [vmem:[%s2 + $0x734] sm:$0xff]
    %v371 = vld [vmem:[%s2 + $0x73c] sm:$0xff]
    %v372 = vld [vmem:[%s2 + $0x744] sm:$0xff]
    %v373 = vld [vmem:[%s2 + $0x74c] sm:$0xf]
    %v374 = vld [vmem:[%s2 + $0x750] sm:$0xff]
    %v375 = vld [vmem:[%s2 + $0x758] sm:$0xff]
    %v376 = vld [vmem:[%s2 + $0x760] sm:$0xff]
    %v377 = vld [vmem:[%s2 + $0x768] sm:$0xff]
    %v378 = vld [vmem:[%s2 + $0x770] sm:$0xf]
    %v379 = vld [vmem:[%s2 + $0x774] sm:$0xff]
    %v380 = vld [vmem:[%s2 + $0x77c] sm:$0xff]
    %v381 = vld [vmem:[%s2 + $0x784] sm:$0xff]
    %v382 = vld [vmem:[%s2 + $0x78c] sm:$0xff]
    %v383 = vld [vmem:[%s2 + $0x794] sm:$0xf]
    %v384 = vld [vmem:[%s2 + $0x798] sm:$0xff]
    %v385 = vld [vmem:[%s2 + $0x7a0] sm:$0xff]
    %v386 = vld [vmem:[%s2 + $0x7a8] sm:$0xff]
    %v387 = vld [vmem:[%s2 + $0x7b0] sm:$0xff]
    %v388 = vld [vmem:[%s2 + $0x7b8] sm:$0xf]
    %v389 = vld [vmem:[%s2 + $0x7bc] sm:$0xff]
    %v390 = vld [vmem:[%s2 + $0x7c4] sm:$0xff]
    %v391 = vld [vmem:[%s2 + $0x7cc] sm:$0xff]
    %v392 = vld [vmem:[%s2 + $0x7d4] sm:$0xff]
    %v393 = vld [vmem:[%s2 + $0x7dc] sm:$0xf]
    %v394 = vld [vmem:[%s2 + $0x7e0] sm:$0xff]
    %v395 = vld [vmem:[%s2 + $0x7e8] sm:$0xff]
    %v396 = vld [vmem:[%s2 + $0x7f0] sm:$0xff]
    %v397 = vld [vmem:[%s2 + $0x7f8] sm:$0xff]
    %v398 = vld [vmem:[%s2 + $0x800] sm:$0xf]
    %v399 = vld [vmem:[%s2 + $0x804] sm:$0xff]
    %v400 = vld [vmem:[%s2 + $0x80c] sm:$0xff]
    %v401 = vld [vmem:[%s2 + $0x814] sm:$0xff]
    %v402 = vld [vmem:[%s2 + $0x81c] sm:$0xff]
    %v403 = vld [vmem:[%s2 + $0x824] sm:$0xf]
    %v404 = vld [vmem:[%s2 + $0x828] sm:$0xff]
    %v405 = vld [vmem:[%s2 + $0x830] sm:$0xff]
    %v406 = vld [vmem:[%s2 + $0x838] sm:$0xff]
    %v407 = vld [vmem:[%s2 + $0x840] sm:$0xff]
    %v408 = vld [vmem:[%s2 + $0x848] sm:$0xf]
    %v409 = vld [vmem:[%s2 + $0x84c] sm:$0xff]
    %v410 = vld [vmem:[%s2 + $0x854] sm:$0xff]
    %v411 = vld [vmem:[%s2 + $0x85c] sm:$0xff]
    %v412 = vld [vmem:[%s2 + $0x864] sm:$0xff]
    %v413 = vld [vmem:[%s2 + $0x86c] sm:$0xf]
    %v414 = vld [vmem:[%s2 + $0x870] sm:$0xff]
    %v415 = vld [vmem:[%s2 + $0x878] sm:$0xff]
    %v416 = vld [vmem:[%s2 + $0x880] sm:$0xff]
    %v417 = vld [vmem:[%s2 + $0x888] sm:$0xff]
    %v418 = vld [vmem:[%s2 + $0x890] sm:$0xf]
    %v419 = vld [vmem:[%s2 + $0x894] sm:$0xff]
    %v420 = vld [vmem:[%s2 + $0x89c] sm:$0xff]
    %v421 = vld [vmem:[%s2 + $0x8a4] sm:$0xff]
    %v422 = vld [vmem:[%s2 + $0x8ac] sm:$0xff]
    %v423 = vld [vmem:[%s2 + $0x8b4] sm:$0xf]
    %v424 = vld [vmem:[%s2 + $0x8b8] sm:$0xff]
    %v425 = vld [vmem:[%s2 + $0x8c0] sm:$0xff]
    %v426 = vld [vmem:[%s2 + $0x8c8] sm:$0xff]
    %v427 = vld [vmem:[%s2 + $0x8d0] sm:$0xff]
    %v428 = vld [vmem:[%s2 + $0x8d8] sm:$0xf]
    %v429 = vld [vmem:[%s2 + $0x8dc] sm:$0xff]
    %v430 = vld [vmem:[%s2 + $0x8e4] sm:$0xff]
    %v431 = vld [vmem:[%s2 + $0x8ec] sm:$0xff]
    %v432 = vld [vmem:[%s2 + $0x8f4] sm:$0xff]
    %v433 = vld [vmem:[%s2 + $0x8fc] sm:$0xf]
    %v434 = vld [vmem:[%s2 + $0x900] sm:$0xff]
    %v435 = vld [vmem:[%s2 + $0x908] sm:$0xff]
    %v436 = vld [vmem:[%s2 + $0x910] sm:$0xff]
    %v437 = vld [vmem:[%s2 + $0x918] sm:$0xff]
    %v438 = vld [vmem:[%s2 + $0x920] sm:$0xf]
    %v439 = vld [vmem:[%s2 + $0x924] sm:$0xff]
    %v440 = vld [vmem:[%s2 + $0x92c] sm:$0xff]
    %v441 = vld [vmem:[%s2 + $0x934] sm:$0xff]
    %v442 = vld [vmem:[%s2 + $0x93c] sm:$0xff]
    %v443 = vld [vmem:[%s2 + $0x944] sm:$0xf]
    %v444 = vld [vmem:[%s2 + $0x948] sm:$0xff]
    %v445 = vld [vmem:[%s2 + $0x950] sm:$0xff]
    %v446 = vld [vmem:[%s2 + $0x958] sm:$0xff]
    %v447 = vld [vmem:[%s2 + $0x960] sm:$0xff]
    %v448 = vld [vmem:[%s2 + $0x968] sm:$0xf]
    %v449 = vld [vmem:[%s2 + $0x96c] sm:$0xff]
    %v450 = vld [vmem:[%s2 + $0x974] sm:$0xff]
    %v451 = vld [vmem:[%s2 + $0x97c] sm:$0xff]
    %v452 = vld [vmem:[%s2 + $0x984] sm:$0xff]
    %v453 = vld [vmem:[%s2 + $0x98c] sm:$0xf]
    %v454 = vld [vmem:[%s2 + $0x990] sm:$0xff]
    %v455 = vld [vmem:[%s2 + $0x998] sm:$0xff]
    %v456 = vld [vmem:[%s2 + $0x9a0] sm:$0xff]
    %v457 = vld [vmem:[%s2 + $0x9a8] sm:$0xff]
    %v458 = vld [vmem:[%s2 + $0x9b0] sm:$0xf]
    %v459 = vld [vmem:[%s2 + $0x9b4] sm:$0xff]
    %v460 = vld [vmem:[%s2 + $0x9bc] sm:$0xff]
    %v461 = vld [vmem:[%s2 + $0x9c4] sm:$0xff]
    %v462 = vld [vmem:[%s2 + $0x9cc] sm:$0xff]
    %v463 = vld [vmem:[%s2 + $0x9d4] sm:$0xf]
    %v464 = vld [vmem:[%s2 + $0x9d8] sm:$0xff]
    %v465 = vld [vmem:[%s2 + $0x9e0] sm:$0xff]
    %v466 = vld [vmem:[%s2 + $0x9e8] sm:$0xff]
    %v467 = vld [vmem:[%s2 + $0x9f0] sm:$0xff]
    %v468 = vld [vmem:[%s2 + $0x9f8] sm:$0xf]
    %v469 = vld [vmem:[%s2 + $0x9fc] sm:$0xff]
    %v470 = vld [vmem:[%s2 + $0xa04] sm:$0xff]
    %v471 = vld [vmem:[%s2 + $0xa0c] sm:$0xff]
    %v472 = vld [vmem:[%s2 + $0xa14] sm:$0xff]
    %v473 = vld [vmem:[%s2 + $0xa1c] sm:$0xf]
    %v474 = vld [vmem:[%s2 + $0xa20] sm:$0xff]
    %v475 = vld [vmem:[%s2 + $0xa28] sm:$0xff]
    %v476 = vld [vmem:[%s2 + $0xa30] sm:$0xff]
    %v477 = vld [vmem:[%s2 + $0xa38] sm:$0xff]
    %v478 = vld [vmem:[%s2 + $0xa40] sm:$0xf]
    %v479 = vld [vmem:[%s2 + $0xa44] sm:$0xff]
    %v480 = vld [vmem:[%s2 + $0xa4c] sm:$0xff]
    %v481 = vld [vmem:[%s2 + $0xa54] sm:$0xff]
    %v482 = vld [vmem:[%s2 + $0xa5c] sm:$0xff]
    %v483 = vld [vmem:[%s2 + $0xa64] sm:$0xf]
    %v484 = vld [vmem:[%s2 + $0xa68] sm:$0xff]
    %v485 = vld [vmem:[%s2 + $0xa70] sm:$0xff]
    %v486 = vld [vmem:[%s2 + $0xa78] sm:$0xff]
    %v487 = vld [vmem:[%s2 + $0xa80] sm:$0xff]
    %v488 = vld [vmem:[%s2 + $0xa88] sm:$0xf]
    %v489 = vld [vmem:[%s2 + $0xa8c] sm:$0xff]
    %v490 = vld [vmem:[%s2 + $0xa94] sm:$0xff]
    %v491 = vld [vmem:[%s2 + $0xa9c] sm:$0xff]
    %v492 = vld [vmem:[%s2 + $0xaa4] sm:$0xff]
    %v493 = vld [vmem:[%s2 + $0xaac] sm:$0xf]
    %v494 = vld [vmem:[%s2 + $0xab0] sm:$0xff]
    %v495 = vld [vmem:[%s2 + $0xab8] sm:$0xff]
    %v496 = vld [vmem:[%s2 + $0xac0] sm:$0xff]
    %v497 = vld [vmem:[%s2 + $0xac8] sm:$0xff]
    %v498 = vld [vmem:[%s2 + $0xad0] sm:$0xf]
    %v499 = vld [vmem:[%s2 + $0xad4] sm:$0xff]
    %v500 = vld [vmem:[%s2 + $0xadc] sm:$0xff]
    %v501 = vld [vmem:[%s2 + $0xae4] sm:$0xff]
    %v502 = vld [vmem:[%s2 + $0xaec] sm:$0xff]
    %v503 = vld [vmem:[%s2 + $0xaf4] sm:$0xf]
    %v504 = vld [vmem:[%s2 + $0xaf8] sm:$0xff]
    %v505 = vld [vmem:[%s2 + $0xb00] sm:$0xff]
    %v506 = vld [vmem:[%s2 + $0xb08] sm:$0xff]
    %v507 = vld [vmem:[%s2 + $0xb10] sm:$0xff]
    %v508 = vld [vmem:[%s2 + $0xb18] sm:$0xf]
    %v509 = vld [vmem:[%s2 + $0xb1c] sm:$0xff]
    %v510 = vld [vmem:[%s2 + $0xb24] sm:$0xff]
    %v511 = vld [vmem:[%s2 + $0xb2c] sm:$0xff]
    %v512 = vld [vmem:[%s2 + $0xb34] sm:$0xff]
    %v513 = vld [vmem:[%s2 + $0xb3c] sm:$0xf]
    %v514 = vld [vmem:[%s2 + $0xb40] sm:$0xff]
    %v515 = vld [vmem:[%s2 + $0xb48] sm:$0xff]
    %v516 = vld [vmem:[%s2 + $0xb50] sm:$0xff]
    %v517 = vld [vmem:[%s2 + $0xb58] sm:$0xff]
    %v518 = vld [vmem:[%s2 + $0xb60] sm:$0xf]
    %v519 = vld [vmem:[%s2 + $0xb64] sm:$0xff]
    %v520 = vld [vmem:[%s2 + $0xb6c] sm:$0xff]
    %v521 = vld [vmem:[%s2 + $0xb74] sm:$0xff]
    %v522 = vld [vmem:[%s2 + $0xb7c] sm:$0xff]
    %v523 = vld [vmem:[%s2 + $0xb84] sm:$0xf]
    %v524 = vld [vmem:[%s2 + $0xb88] sm:$0xff]
    %v525 = vld [vmem:[%s2 + $0xb90] sm:$0xff]
    %v526 = vld [vmem:[%s2 + $0xb98] sm:$0xff]
    %v527 = vld [vmem:[%s2 + $0xba0] sm:$0xff]
    %v528 = vld [vmem:[%s2 + $0xba8] sm:$0xf]
    %v529 = vld [vmem:[%s2 + $0xbac] sm:$0xff]
    %v530 = vld [vmem:[%s2 + $0xbb4] sm:$0xff]
    %v531 = vld [vmem:[%s2 + $0xbbc] sm:$0xff]
    %v532 = vld [vmem:[%s2 + $0xbc4] sm:$0xff]
    %v533 = vld [vmem:[%s2 + $0xbcc] sm:$0xf]
    %v534 = vld [vmem:[%s2 + $0xbd0] sm:$0xff]
    %v535 = vld [vmem:[%s2 + $0xbd8] sm:$0xff]
    %v536 = vld [vmem:[%s2 + $0xbe0] sm:$0xff]
    %v537 = vld [vmem:[%s2 + $0xbe8] sm:$0xff]
    %v538 = vld [vmem:[%s2 + $0xbf0] sm:$0xf]
    %v539 = vld [vmem:[%s2 + $0xbf4] sm:$0xff]
    %v540 = vld [vmem:[%s2 + $0xbfc] sm:$0xff]
    %v541 = vld [vmem:[%s2 + $0xc04] sm:$0xff]
    %v542 = vld [vmem:[%s2 + $0xc0c] sm:$0xff]
    %v543 = vld [vmem:[%s2 + $0xc14] sm:$0xf]
    %v544 = vld [vmem:[%s2 + $0xc18] sm:$0xff]
    %v545 = vld [vmem:[%s2 + $0xc20] sm:$0xff]
    %v546 = vld [vmem:[%s2 + $0xc28] sm:$0xff]
    %v547 = vld [vmem:[%s2 + $0xc30] sm:$0xff]
    %v548 = vld [vmem:[%s2 + $0xc38] sm:$0xf]
    %v549 = vld [vmem:[%s2 + $0xc3c] sm:$0xff]
    %v550 = vld [vmem:[%s2 + $0xc44] sm:$0xff]
    %v551 = vld [vmem:[%s2 + $0xc4c] sm:$0xff]
    %v552 = vld [vmem:[%s2 + $0xc54] sm:$0xff]
    %v553 = vld [vmem:[%s2 + $0xc5c] sm:$0xf]
    %v554 = vld [vmem:[%s2 + $0xc60] sm:$0xff]
    %v555 = vld [vmem:[%s2 + $0xc68] sm:$0xff]
    %v556 = vld [vmem:[%s2 + $0xc70] sm:$0xff]
    %v557 = vld [vmem:[%s2 + $0xc78] sm:$0xff]
    %v558 = vld [vmem:[%s2 + $0xc80] sm:$0xf]
    %v559 = vld [vmem:[%s2 + $0xc84] sm:$0xff]
    %v560 = vld [vmem:[%s2 + $0xc8c] sm:$0xff]
    %v561 = vld [vmem:[%s2 + $0xc94] sm:$0xff]
    %v562 = vld [vmem:[%s2 + $0xc9c] sm:$0xff]
    %v563 = vld [vmem:[%s2 + $0xca4] sm:$0xf]
    %v564 = vld [vmem:[%s2 + $0xca8] sm:$0xff]
    %v565 = vld [vmem:[%s2 + $0xcb0] sm:$0xff]
    %v566 = vld [vmem:[%s2 + $0xcb8] sm:$0xff]
    %v567 = vld [vmem:[%s2 + $0xcc0] sm:$0xff]
    %v568 = vld [vmem:[%s2 + $0xcc8] sm:$0xf]
    %v569 = vld [vmem:[%s2 + $0xccc] sm:$0xff]
    %v570 = vld [vmem:[%s2 + $0xcd4] sm:$0xff]
    %v571 = vld [vmem:[%s2 + $0xcdc] sm:$0xff]
    %v572 = vld [vmem:[%s2 + $0xce4] sm:$0xff]
    %v573 = vld [vmem:[%s2 + $0xcec] sm:$0xf]
    %v574 = vld [vmem:[%s2 + $0xcf0] sm:$0xff]
    %v575 = vld [vmem:[%s2 + $0xcf8] sm:$0xff]
    %v576 = vld [vmem:[%s2 + $0xd00] sm:$0xff]
    %v577 = vld [vmem:[%s2 + $0xd08] sm:$0xff]
    %v578 = vld [vmem:[%s2 + $0xd10] sm:$0xf]
    %v579 = vld [vmem:[%s2 + $0xd14] sm:$0xff]
    %v580 = vld [vmem:[%s2 + $0xd1c] sm:$0xff]
    %v581 = vld [vmem:[%s2 + $0xd24] sm:$0xff]
    %v582 = vld [vmem:[%s2 + $0xd2c] sm:$0xff]
    %v583 = vld [vmem:[%s2 + $0xd34] sm:$0xf]
    %v584 = vld [vmem:[%s2 + $0xd38] sm:$0xff]
    %v585 = vld [vmem:[%s2 + $0xd40] sm:$0xff]
    %v586 = vld [vmem:[%s2 + $0xd48] sm:$0xff]
    %v587 = vld [vmem:[%s2 + $0xd50] sm:$0xff]
    %v588 = vld [vmem:[%s2 + $0xd58] sm:$0xf]
    %v589 = vld [vmem:[%s2 + $0xd5c] sm:$0xff]
    %v590 = vld [vmem:[%s2 + $0xd64] sm:$0xff]
    %v591 = vld [vmem:[%s2 + $0xd6c] sm:$0xff]
    %v592 = vld [vmem:[%s2 + $0xd74] sm:$0xff]
    %v593 = vld [vmem:[%s2 + $0xd7c] sm:$0xf]
    %v594 = vld [vmem:[%s2 + $0xd80] sm:$0xff]
    %v595 = vld [vmem:[%s2 + $0xd88] sm:$0xff]
    %v596 = vld [vmem:[%s2 + $0xd90] sm:$0xff]
    %v597 = vld [vmem:[%s2 + $0xd98] sm:$0xff]
    %v598 = vld [vmem:[%s2 + $0xda0] sm:$0xf]
    %v599 = vld [vmem:[%s2 + $0xda4] sm:$0xff]
    %v600 = vld [vmem:[%s2 + $0xdac] sm:$0xff]
    %v601 = vld [vmem:[%s2 + $0xdb4] sm:$0xff]
    %v602 = vld [vmem:[%s2 + $0xdbc] sm:$0xff]
    %v603 = vld [vmem:[%s2 + $0xdc4] sm:$0xf]
    %v606 = vlaneseq
    %v607 = vshrl.u32 %v606, 7
    %v608 = vsub.s32 0, %v607
    %v609 = vrot.slane %v61, %v608
    %v610 = vlaneseq
    %v611 = vshrl.u32 %v610, 7
    %v612 = vsub.s32 1, %v611
    %v613 = vrot.slane %v61, %v612
    %v614 = vlaneseq
    %v615 = vshrl.u32 %v614, 7
    %v616 = vsub.s32 2, %v615
    %v617 = vrot.slane %v61, %v616
    %v618 = vlaneseq
    %v619 = vshrl.u32 %v618, 7
    %v620 = vsub.s32 3, %v619
    %v621 = vrot.slane %v61, %v620
    %v622 = vlaneseq
    %v623 = vshrl.u32 %v622, 7
    %v624 = vsub.s32 4, %v623
    %v625 = vrot.slane %v61, %v624
    %v626 = vlaneseq
    %v627 = vshrl.u32 %v626, 7
    %v628 = vsub.s32 5, %v627
    %v629 = vrot.slane %v61, %v628
    %v630 = vlaneseq
    %v631 = vshrl.u32 %v630, 7
    %v632 = vsub.s32 6, %v631
    %v633 = vrot.slane %v61, %v632
    %v634 = vlaneseq
    %v635 = vshrl.u32 %v634, 7
    %v636 = vsub.s32 7, %v635
    %v637 = vrot.slane %v61, %v636
    %v638 = vlaneseq
    %v639 = vshrl.u32 %v638, 7
    %v640 = vsub.s32 0, %v639
    %v641 = vrot.slane %v62, %v640
    %v1141 = vunpack.c.l.b16 %v114
    %v1142 = vunpack.c.h.b16 %v114
    %v1143 = vunpack.c.l.b16 %v115
    %v1144 = vunpack.c.h.b16 %v115
    %v1145 = vunpack.c.l.b16 %v116
    %v1146 = vunpack.c.h.b16 %v116
    %v1147 = vunpack.c.l.b16 %v117
    %v1148 = vunpack.c.h.b16 %v117
    %v1149 = vunpack.c.l.b16 %v118
    %v1150 = vunpack.c.l.b16 %v119
    %v1151 = vunpack.c.h.b16 %v119
    %v1152 = vunpack.c.l.b16 %v120
    %v1153 = vunpack.c.h.b16 %v120
    %v1154 = vunpack.c.l.b16 %v121
    %v1155 = vunpack.c.h.b16 %v121
    %v1156 = vunpack.c.l.b16 %v122
    %v1157 = vunpack.c.h.b16 %v122
    %v1158 = vunpack.c.l.b16 %v123
    %v1159 = vunpack.c.l.b16 %v124
    %v1160 = vunpack.c.h.b16 %v124
    %v1161 = vunpack.c.l.b16 %v125
    %v1162 = vunpack.c.h.b16 %v125
    %v1163 = vunpack.c.l.b16 %v126
    %v1164 = vunpack.c.h.b16 %v126
    %v1165 = vunpack.c.l.b16 %v127
    %v1166 = vunpack.c.h.b16 %v127
    %v1167 = vunpack.c.l.b16 %v128
    %v1168 = vunpack.c.l.b16 %v129
    %v1169 = vunpack.c.h.b16 %v129
    %v1170 = vunpack.c.l.b16 %v130
    %v1171 = vunpack.c.h.b16 %v130
    %v1172 = vunpack.c.l.b16 %v131
    %v1173 = vunpack.c.h.b16 %v131
    %v1174 = vunpack.c.l.b16 %v132
    %v1175 = vunpack.c.h.b16 %v132
    %v1176 = vunpack.c.l.b16 %v133
    %v1177 = vunpack.c.l.b16 %v134
    %v1178 = vunpack.c.h.b16 %v134
    %v1179 = vunpack.c.l.b16 %v135
    %v1180 = vunpack.c.h.b16 %v135
    %v1181 = vunpack.c.l.b16 %v136
    %v1182 = vunpack.c.h.b16 %v136
    %v1183 = vunpack.c.l.b16 %v137
    %v1184 = vunpack.c.h.b16 %v137
    %v1185 = vunpack.c.l.b16 %v138
    %v1186 = vunpack.c.l.b16 %v139
    %v1187 = vunpack.c.h.b16 %v139
    %v1188 = vunpack.c.l.b16 %v140
    %v1189 = vunpack.c.h.b16 %v140
    %v1190 = vunpack.c.l.b16 %v141
    %v1191 = vunpack.c.h.b16 %v141
    %v1192 = vunpack.c.l.b16 %v142
    %v1193 = vunpack.c.h.b16 %v142
    %v1194 = vunpack.c.l.b16 %v143
    %v1195 = vunpack.c.l.b16 %v144
    %v1196 = vunpack.c.h.b16 %v144
    %v1197 = vunpack.c.l.b16 %v145
    %v1198 = vunpack.c.h.b16 %v145
    %v1199 = vunpack.c.l.b16 %v146
    %v1200 = vunpack.c.h.b16 %v146
    %v1201 = vunpack.c.l.b16 %v147
    %v1202 = vunpack.c.h.b16 %v147
    %v1203 = vunpack.c.l.b16 %v148
    %v1204 = vunpack.c.l.b16 %v149
    %v1205 = vunpack.c.h.b16 %v149
    %v1206 = vunpack.c.l.b16 %v150
    %v1207 = vunpack.c.h.b16 %v150
    %v1208 = vunpack.c.l.b16 %v151
    %v1209 = vunpack.c.h.b16 %v151
    %v1210 = vunpack.c.l.b16 %v152
    %v1211 = vunpack.c.h.b16 %v152
    %v1212 = vunpack.c.l.b16 %v153
    %v1213 = vunpack.c.l.b16 %v154
    %v1214 = vunpack.c.h.b16 %v154
    %v1215 = vunpack.c.l.b16 %v155
    %v1216 = vunpack.c.h.b16 %v155
    %v1217 = vunpack.c.l.b16 %v156
    %v1218 = vunpack.c.h.b16 %v156
    %v1219 = vunpack.c.l.b16 %v157
    %v1220 = vunpack.c.h.b16 %v157
    %v1221 = vunpack.c.l.b16 %v158
    %v1222 = vunpack.c.l.b16 %v159
    %v1223 = vunpack.c.h.b16 %v159
    %v1224 = vunpack.c.l.b16 %v160
    %v1225 = vunpack.c.h.b16 %v160
    %v1226 = vunpack.c.l.b16 %v161
    %v1227 = vunpack.c.h.b16 %v161
    %v1228 = vunpack.c.l.b16 %v162
    %v1229 = vunpack.c.h.b16 %v162
    %v1230 = vunpack.c.l.b16 %v163
    %v1231 = vunpack.c.l.b16 %v164
    %v1232 = vunpack.c.h.b16 %v164
    %v1233 = vunpack.c.l.b16 %v165
    %v1234 = vunpack.c.h.b16 %v165
    %v1235 = vunpack.c.l.b16 %v166
    %v1236 = vunpack.c.h.b16 %v166
    %v1237 = vunpack.c.l.b16 %v167
    %v1238 = vunpack.c.h.b16 %v167
    %v1239 = vunpack.c.l.b16 %v168
    %v1240 = vunpack.c.l.b16 %v169
    %v1241 = vunpack.c.h.b16 %v169
    %v1242 = vunpack.c.l.b16 %v170
    %v1243 = vunpack.c.h.b16 %v170
    %v1244 = vunpack.c.l.b16 %v171
    %v1245 = vunpack.c.h.b16 %v171
    %v1246 = vunpack.c.l.b16 %v172
    %v1247 = vunpack.c.h.b16 %v172
    %v1248 = vunpack.c.l.b16 %v173
    %v1249 = vunpack.c.l.b16 %v174
    %v1250 = vunpack.c.h.b16 %v174
    %v1251 = vunpack.c.l.b16 %v175
    %v1252 = vunpack.c.h.b16 %v175
    %v1253 = vunpack.c.l.b16 %v176
    %v1254 = vunpack.c.h.b16 %v176
    %v1255 = vunpack.c.l.b16 %v177
    %v1256 = vunpack.c.h.b16 %v177
    %v1257 = vunpack.c.l.b16 %v178
    %v1258 = vunpack.c.l.b16 %v179
    %v1259 = vunpack.c.h.b16 %v179
    %v1260 = vunpack.c.l.b16 %v180
    %v1261 = vunpack.c.h.b16 %v180
    %v1262 = vunpack.c.l.b16 %v181
    %v1263 = vunpack.c.h.b16 %v181
    %v1264 = vunpack.c.l.b16 %v182
    %v1265 = vunpack.c.h.b16 %v182
    %v1266 = vunpack.c.l.b16 %v183
    %v1267 = vunpack.c.l.b16 %v184
    %v1268 = vunpack.c.h.b16 %v184
    %v1269 = vunpack.c.l.b16 %v185
    %v1270 = vunpack.c.h.b16 %v185
    %v1271 = vunpack.c.l.b16 %v186
    %v1272 = vunpack.c.h.b16 %v186
    %v1273 = vunpack.c.l.b16 %v187
    %v1274 = vunpack.c.h.b16 %v187
    %v1275 = vunpack.c.l.b16 %v188
    %v1276 = vunpack.c.l.b16 %v189
    %v1277 = vunpack.c.h.b16 %v189
    %v1278 = vunpack.c.l.b16 %v190
    %v1279 = vunpack.c.h.b16 %v190
    %v1280 = vunpack.c.l.b16 %v191
    %v1281 = vunpack.c.h.b16 %v191
    %v1282 = vunpack.c.l.b16 %v192
    %v1283 = vunpack.c.h.b16 %v192
    %v1284 = vunpack.c.l.b16 %v193
    %v1285 = vunpack.c.l.b16 %v194
    %v1286 = vunpack.c.h.b16 %v194
    %v1287 = vunpack.c.l.b16 %v195
    %v1288 = vunpack.c.h.b16 %v195
    %v1289 = vunpack.c.l.b16 %v196
    %v1290 = vunpack.c.h.b16 %v196
    %v1291 = vunpack.c.l.b16 %v197
    %v1292 = vunpack.c.h.b16 %v197
    %v1293 = vunpack.c.l.b16 %v198
    %v1294 = vunpack.c.l.b16 %v199
    %v1295 = vunpack.c.h.b16 %v199
    %v1296 = vunpack.c.l.b16 %v200
    %v1297 = vunpack.c.h.b16 %v200
    %v1298 = vunpack.c.l.b16 %v201
    %v1299 = vunpack.c.h.b16 %v201
    %v1300 = vunpack.c.l.b16 %v202
    %v1301 = vunpack.c.h.b16 %v202
    %v1302 = vunpack.c.l.b16 %v203
    %v1303 = vunpack.c.l.b16 %v204
    %v1304 = vunpack.c.h.b16 %v204
    %v1305 = vunpack.c.l.b16 %v205
    %v1306 = vunpack.c.h.b16 %v205
    %v1307 = vunpack.c.l.b16 %v206
    %v1308 = vunpack.c.h.b16 %v206
    %v1309 = vunpack.c.l.b16 %v207
    %v1310 = vunpack.c.h.b16 %v207
    %v1311 = vunpack.c.l.b16 %v208
    %v1312 = vunpack.c.l.b16 %v209
    %v1313 = vunpack.c.h.b16 %v209
    %v1314 = vunpack.c.l.b16 %v210
    %v1315 = vunpack.c.h.b16 %v210
    %v1316 = vunpack.c.l.b16 %v211
    %v1317 = vunpack.c.h.b16 %v211
    %v1318 = vunpack.c.l.b16 %v212
    %v1319 = vunpack.c.h.b16 %v212
    %v1320 = vunpack.c.l.b16 %v213
    %v1321 = vunpack.c.l.b16 %v214
    %v1322 = vunpack.c.h.b16 %v214
    %v1323 = vunpack.c.l.b16 %v215
    %v1324 = vunpack.c.h.b16 %v215
    %v1325 = vunpack.c.l.b16 %v216
    %v1326 = vunpack.c.h.b16 %v216
    %v1327 = vunpack.c.l.b16 %v217
    %v1328 = vunpack.c.h.b16 %v217
    %v1329 = vunpack.c.l.b16 %v218
    %v1330 = vunpack.c.l.b16 %v219
    %v1331 = vunpack.c.h.b16 %v219
    %v1332 = vunpack.c.l.b16 %v220
    %v1333 = vunpack.c.h.b16 %v220
    %v1334 = vunpack.c.l.b16 %v221
    %v1335 = vunpack.c.h.b16 %v221
    %v1336 = vunpack.c.l.b16 %v222
    %v1337 = vunpack.c.h.b16 %v222
    %v1338 = vunpack.c.l.b16 %v223
    %v1339 = vunpack.c.l.b16 %v224
    %v1340 = vunpack.c.h.b16 %v224
    %v1341 = vunpack.c.l.b16 %v225
    %v1342 = vunpack.c.h.b16 %v225
    %v1343 = vunpack.c.l.b16 %v226
    %v1344 = vunpack.c.h.b16 %v226
    %v1345 = vunpack.c.l.b16 %v227
    %v1346 = vunpack.c.h.b16 %v227
    %v1347 = vunpack.c.l.b16 %v228
    %v1348 = vunpack.c.l.b16 %v229
    %v1349 = vunpack.c.h.b16 %v229
    %v1350 = vunpack.c.l.b16 %v230
    %v1351 = vunpack.c.h.b16 %v230
    %v1352 = vunpack.c.l.b16 %v231
    %v1353 = vunpack.c.h.b16 %v231
    %v1354 = vunpack.c.l.b16 %v232
    %v1355 = vunpack.c.h.b16 %v232
    %v1356 = vunpack.c.l.b16 %v233
    %v1357 = vunpack.c.l.b16 %v234
    %v1358 = vunpack.c.h.b16 %v234
    %v1359 = vunpack.c.l.b16 %v235
    %v1360 = vunpack.c.h.b16 %v235
    %v1361 = vunpack.c.l.b16 %v236
    %v1362 = vunpack.c.h.b16 %v236
    %v1363 = vunpack.c.l.b16 %v237
    %v1364 = vunpack.c.h.b16 %v237
    %v1365 = vunpack.c.l.b16 %v238
    %v1366 = vunpack.c.l.b16 %v239
    %v1367 = vunpack.c.h.b16 %v239
    %v1368 = vunpack.c.l.b16 %v240
    %v1369 = vunpack.c.h.b16 %v240
    %v1370 = vunpack.c.l.b16 %v241
    %v1371 = vunpack.c.h.b16 %v241
    %v1372 = vunpack.c.l.b16 %v242
    %v1373 = vunpack.c.h.b16 %v242
    %v1374 = vunpack.c.l.b16 %v243
    %v1375 = vunpack.c.l.b16 %v244
    %v1376 = vunpack.c.h.b16 %v244
    %v1377 = vunpack.c.l.b16 %v245
    %v1378 = vunpack.c.h.b16 %v245
    %v1379 = vunpack.c.l.b16 %v246
    %v1380 = vunpack.c.h.b16 %v246
    %v1381 = vunpack.c.l.b16 %v247
    %v1382 = vunpack.c.h.b16 %v247
    %v1383 = vunpack.c.l.b16 %v248
    %v1384 = vunpack.c.l.b16 %v249
    %v1385 = vunpack.c.h.b16 %v249
    %v1386 = vunpack.c.l.b16 %v250
    %v1387 = vunpack.c.h.b16 %v250
    %v1388 = vunpack.c.l.b16 %v251
    %v1389 = vunpack.c.h.b16 %v251
    %v1390 = vunpack.c.l.b16 %v252
    %v1391 = vunpack.c.h.b16 %v252
    %v1392 = vunpack.c.l.b16 %v253
    %v1393 = vunpack.c.l.b16 %v254
    %v1394 = vunpack.c.h.b16 %v254
    %v1395 = vunpack.c.l.b16 %v255
    %v1396 = vunpack.c.h.b16 %v255
    %v1397 = vunpack.c.l.b16 %v256
    %v1398 = vunpack.c.h.b16 %v256
    %v1399 = vunpack.c.l.b16 %v257
    %v1400 = vunpack.c.h.b16 %v257
    %v1401 = vunpack.c.l.b16 %v258
    %v1402 = vunpack.c.l.b16 %v259
    %v1403 = vunpack.c.h.b16 %v259
    %v1404 = vunpack.c.l.b16 %v260
    %v1405 = vunpack.c.h.b16 %v260
    %v1406 = vunpack.c.l.b16 %v261
    %v1407 = vunpack.c.h.b16 %v261
    %v1408 = vunpack.c.l.b16 %v262
    %v1409 = vunpack.c.h.b16 %v262
    %v1410 = vunpack.c.l.b16 %v263
    %v1411 = vunpack.c.l.b16 %v264
    %v1412 = vunpack.c.h.b16 %v264
    %v1413 = vunpack.c.l.b16 %v265
    %v1414 = vunpack.c.h.b16 %v265
    %v1415 = vunpack.c.l.b16 %v266
    %v1416 = vunpack.c.h.b16 %v266
    %v1417 = vunpack.c.l.b16 %v267
    %v1418 = vunpack.c.h.b16 %v267
    %v1419 = vunpack.c.l.b16 %v268
    %v1420 = vunpack.c.l.b16 %v269
    %v1421 = vunpack.c.h.b16 %v269
    %v1422 = vunpack.c.l.b16 %v270
    %v1423 = vunpack.c.h.b16 %v270
    %v1424 = vunpack.c.l.b16 %v271
    %v1425 = vunpack.c.h.b16 %v271
    %v1426 = vunpack.c.l.b16 %v272
    %v1427 = vunpack.c.h.b16 %v272
    %v1428 = vunpack.c.l.b16 %v273
    %v1429 = vunpack.c.l.b16 %v274
    %v1430 = vunpack.c.h.b16 %v274
    %v1431 = vunpack.c.l.b16 %v275
    %v1432 = vunpack.c.h.b16 %v275
    %v1433 = vunpack.c.l.b16 %v276
    %v1434 = vunpack.c.h.b16 %v276
    %v1435 = vunpack.c.l.b16 %v277
    %v1436 = vunpack.c.h.b16 %v277
    %v1437 = vunpack.c.l.b16 %v278
    %v1438 = vunpack.c.l.b16 %v279
    %v1439 = vunpack.c.h.b16 %v279
    %v1440 = vunpack.c.l.b16 %v280
    %v1441 = vunpack.c.h.b16 %v280
    %v1442 = vunpack.c.l.b16 %v281
    %v1443 = vunpack.c.h.b16 %v281
    %v1444 = vunpack.c.l.b16 %v282
    %v1445 = vunpack.c.h.b16 %v282
    %v1446 = vunpack.c.l.b16 %v283
    %v1447 = vunpack.c.l.b16 %v284
    %v1448 = vunpack.c.h.b16 %v284
    %v1449 = vunpack.c.l.b16 %v285
    %v1450 = vunpack.c.h.b16 %v285
    %v1451 = vunpack.c.l.b16 %v286
    %v1452 = vunpack.c.h.b16 %v286
    %v1453 = vunpack.c.l.b16 %v287
    %v1454 = vunpack.c.h.b16 %v287
    %v1455 = vunpack.c.l.b16 %v288
    %v1456 = vunpack.c.l.b16 %v289
    %v1457 = vunpack.c.h.b16 %v289
    %v1458 = vunpack.c.l.b16 %v290
    %v1459 = vunpack.c.h.b16 %v290
    %v1460 = vunpack.c.l.b16 %v291
    %v1461 = vunpack.c.h.b16 %v291
    %v1462 = vunpack.c.l.b16 %v292
    %v1463 = vunpack.c.h.b16 %v292
    %v1464 = vunpack.c.l.b16 %v293
    %v1465 = vunpack.c.l.b16 %v294
    %v1466 = vunpack.c.h.b16 %v294
    %v1467 = vunpack.c.l.b16 %v295
    %v1468 = vunpack.c.h.b16 %v295
    %v1469 = vunpack.c.l.b16 %v296
    %v1470 = vunpack.c.h.b16 %v296
    %v1471 = vunpack.c.l.b16 %v297
    %v1472 = vunpack.c.h.b16 %v297
    %v1473 = vunpack.c.l.b16 %v298
    %v1474 = vunpack.c.l.b16 %v299
    %v1475 = vunpack.c.h.b16 %v299
    %v1476 = vunpack.c.l.b16 %v300
    %v1477 = vunpack.c.h.b16 %v300
    %v1478 = vunpack.c.l.b16 %v301
    %v1479 = vunpack.c.h.b16 %v301
    %v1480 = vunpack.c.l.b16 %v302
    %v1481 = vunpack.c.h.b16 %v302
    %v1482 = vunpack.c.l.b16 %v303
    %v1483 = vunpack.c.l.b16 %v304
    %v1484 = vunpack.c.h.b16 %v304
    %v1485 = vunpack.c.l.b16 %v305
    %v1486 = vunpack.c.h.b16 %v305
    %v1487 = vunpack.c.l.b16 %v306
    %v1488 = vunpack.c.h.b16 %v306
    %v1489 = vunpack.c.l.b16 %v307
    %v1490 = vunpack.c.h.b16 %v307
    %v1491 = vunpack.c.l.b16 %v308
    %v1492 = vunpack.c.l.b16 %v309
    %v1493 = vunpack.c.h.b16 %v309
    %v1494 = vunpack.c.l.b16 %v310
    %v1495 = vunpack.c.h.b16 %v310
    %v1496 = vunpack.c.l.b16 %v311
    %v1497 = vunpack.c.h.b16 %v311
    %v1498 = vunpack.c.l.b16 %v312
    %v1499 = vunpack.c.h.b16 %v312
    %v1500 = vunpack.c.l.b16 %v313
    %v1501 = vunpack.c.l.b16 %v314
    %v1502 = vunpack.c.h.b16 %v314
    %v1503 = vunpack.c.l.b16 %v315
    %v1504 = vunpack.c.h.b16 %v315
    %v1505 = vunpack.c.l.b16 %v316
    %v1506 = vunpack.c.h.b16 %v316
    %v1507 = vunpack.c.l.b16 %v317
    %v1508 = vunpack.c.h.b16 %v317
    %v1509 = vunpack.c.l.b16 %v318
    %v1510 = vunpack.c.l.b16 %v319
    %v1511 = vunpack.c.h.b16 %v319
    %v1512 = vunpack.c.l.b16 %v320
    %v1513 = vunpack.c.h.b16 %v320
    %v1514 = vunpack.c.l.b16 %v321
    %v1515 = vunpack.c.h.b16 %v321
    %v1516 = vunpack.c.l.b16 %v322
    %v1517 = vunpack.c.h.b16 %v322
    %v1518 = vunpack.c.l.b16 %v323
    %v1519 = vunpack.c.l.b16 %v324
    %v1520 = vunpack.c.h.b16 %v324
    %v1521 = vunpack.c.l.b16 %v325
    %v1522 = vunpack.c.h.b16 %v325
    %v1523 = vunpack.c.l.b16 %v326
    %v1524 = vunpack.c.h.b16 %v326
    %v1525 = vunpack.c.l.b16 %v327
    %v1526 = vunpack.c.h.b16 %v327
    %v1527 = vunpack.c.l.b16 %v328
    %v1528 = vunpack.c.l.b16 %v329
    %v1529 = vunpack.c.h.b16 %v329
    %v1530 = vunpack.c.l.b16 %v330
    %v1531 = vunpack.c.h.b16 %v330
    %v1532 = vunpack.c.l.b16 %v331
    %v1533 = vunpack.c.h.b16 %v331
    %v1534 = vunpack.c.l.b16 %v332
    %v1535 = vunpack.c.h.b16 %v332
    %v1536 = vunpack.c.l.b16 %v333
    %v1537 = vunpack.c.l.b16 %v334
    %v1538 = vunpack.c.h.b16 %v334
    %v1539 = vunpack.c.l.b16 %v335
    %v1540 = vunpack.c.h.b16 %v335
    %v1541 = vunpack.c.l.b16 %v336
    %v1542 = vunpack.c.h.b16 %v336
    %v1543 = vunpack.c.l.b16 %v337
    %v1544 = vunpack.c.h.b16 %v337
    %v1545 = vunpack.c.l.b16 %v338
    %v1546 = vunpack.c.l.b16 %v339
    %v1547 = vunpack.c.h.b16 %v339
    %v1548 = vunpack.c.l.b16 %v340
    %v1549 = vunpack.c.h.b16 %v340
    %v1550 = vunpack.c.l.b16 %v341
    %v1551 = vunpack.c.h.b16 %v341
    %v1552 = vunpack.c.l.b16 %v342
    %v1553 = vunpack.c.h.b16 %v342
    %v1554 = vunpack.c.l.b16 %v343
    %v1555 = vunpack.c.l.b16 %v344
    %v1556 = vunpack.c.h.b16 %v344
    %v1557 = vunpack.c.l.b16 %v345
    %v1558 = vunpack.c.h.b16 %v345
    %v1559 = vunpack.c.l.b16 %v346
    %v1560 = vunpack.c.h.b16 %v346
    %v1561 = vunpack.c.l.b16 %v347
    %v1562 = vunpack.c.h.b16 %v347
    %v1563 = vunpack.c.l.b16 %v348
    %v1564 = vunpack.c.l.b16 %v349
    %v1565 = vunpack.c.h.b16 %v349
    %v1566 = vunpack.c.l.b16 %v350
    %v1567 = vunpack.c.h.b16 %v350
    %v1568 = vunpack.c.l.b16 %v351
    %v1569 = vunpack.c.h.b16 %v351
    %v1570 = vunpack.c.l.b16 %v352
    %v1571 = vunpack.c.h.b16 %v352
    %v1572 = vunpack.c.l.b16 %v353
    %v1573 = vunpack.c.l.b16 %v354
    %v1574 = vunpack.c.h.b16 %v354
    %v1575 = vunpack.c.l.b16 %v355
    %v1576 = vunpack.c.h.b16 %v355
    %v1577 = vunpack.c.l.b16 %v356
    %v1578 = vunpack.c.h.b16 %v356
    %v1579 = vunpack.c.l.b16 %v357
    %v1580 = vunpack.c.h.b16 %v357
    %v1581 = vunpack.c.l.b16 %v358
    %v1582 = vunpack.c.l.b16 %v359
    %v1583 = vunpack.c.h.b16 %v359
    %v1584 = vunpack.c.l.b16 %v360
    %v1585 = vunpack.c.h.b16 %v360
    %v1586 = vunpack.c.l.b16 %v361
    %v1587 = vunpack.c.h.b16 %v361
    %v1588 = vunpack.c.l.b16 %v362
    %v1589 = vunpack.c.h.b16 %v362
    %v1590 = vunpack.c.l.b16 %v363
    %v1591 = vunpack.c.l.b16 %v364
    %v1592 = vunpack.c.h.b16 %v364
    %v1593 = vunpack.c.l.b16 %v365
    %v1594 = vunpack.c.h.b16 %v365
    %v1595 = vunpack.c.l.b16 %v366
    %v1596 = vunpack.c.h.b16 %v366
    %v1597 = vunpack.c.l.b16 %v367
    %v1598 = vunpack.c.h.b16 %v367
    %v1599 = vunpack.c.l.b16 %v368
    %v1600 = vunpack.c.l.b16 %v369
    %v1601 = vunpack.c.h.b16 %v369
    %v1602 = vunpack.c.l.b16 %v370
    %v1603 = vunpack.c.h.b16 %v370
    %v1604 = vunpack.c.l.b16 %v371
    %v1605 = vunpack.c.h.b16 %v371
    %v1606 = vunpack.c.l.b16 %v372
    %v1607 = vunpack.c.h.b16 %v372
    %v1608 = vunpack.c.l.b16 %v373
    %v1609 = vunpack.c.l.b16 %v374
    %v1610 = vunpack.c.h.b16 %v374
    %v1611 = vunpack.c.l.b16 %v375
    %v1612 = vunpack.c.h.b16 %v375
    %v1613 = vunpack.c.l.b16 %v376
    %v1614 = vunpack.c.h.b16 %v376
    %v1615 = vunpack.c.l.b16 %v377
    %v1616 = vunpack.c.h.b16 %v377
    %v1617 = vunpack.c.l.b16 %v378
    %v1618 = vunpack.c.l.b16 %v379
    %v1619 = vunpack.c.h.b16 %v379
    %v1620 = vunpack.c.l.b16 %v380
    %v1621 = vunpack.c.h.b16 %v380
    %v1622 = vunpack.c.l.b16 %v381
    %v1623 = vunpack.c.h.b16 %v381
    %v1624 = vunpack.c.l.b16 %v382
    %v1625 = vunpack.c.h.b16 %v382
    %v1626 = vunpack.c.l.b16 %v383
    %v1627 = vunpack.c.l.b16 %v384
    %v1628 = vunpack.c.h.b16 %v384
    %v1629 = vunpack.c.l.b16 %v385
    %v1630 = vunpack.c.h.b16 %v385
    %v1631 = vunpack.c.l.b16 %v386
    %v1632 = vunpack.c.h.b16 %v386
    %v1633 = vunpack.c.l.b16 %v387
    %v1634 = vunpack.c.h.b16 %v387
    %v1635 = vunpack.c.l.b16 %v388
    %v1636 = vunpack.c.l.b16 %v389
    %v1637 = vunpack.c.h.b16 %v389
    %v1638 = vunpack.c.l.b16 %v390
    %v1639 = vunpack.c.h.b16 %v390
    %v1640 = vunpack.c.l.b16 %v391
    %v1641 = vunpack.c.h.b16 %v391
    %v1642 = vunpack.c.l.b16 %v392
    %v1643 = vunpack.c.h.b16 %v392
    %v1644 = vunpack.c.l.b16 %v393
    %v1645 = vunpack.c.l.b16 %v394
    %v1646 = vunpack.c.h.b16 %v394
    %v1647 = vunpack.c.l.b16 %v395
    %v1648 = vunpack.c.h.b16 %v395
    %v1649 = vunpack.c.l.b16 %v396
    %v1650 = vunpack.c.h.b16 %v396
    %v1651 = vunpack.c.l.b16 %v397
    %v1652 = vunpack.c.h.b16 %v397
    %v1653 = vunpack.c.l.b16 %v398
    %v1654 = vunpack.c.l.b16 %v399
    %v1655 = vunpack.c.h.b16 %v399
    %v1656 = vunpack.c.l.b16 %v400
    %v1657 = vunpack.c.h.b16 %v400
    %v1658 = vunpack.c.l.b16 %v401
    %v1659 = vunpack.c.h.b16 %v401
    %v1660 = vunpack.c.l.b16 %v402
    %v1661 = vunpack.c.h.b16 %v402
    %v1662 = vunpack.c.l.b16 %v403
    %v1663 = vunpack.c.l.b16 %v404
    %v1664 = vunpack.c.h.b16 %v404
    %v1665 = vunpack.c.l.b16 %v405
    %v1666 = vunpack.c.h.b16 %v405
    %v1667 = vunpack.c.l.b16 %v406
    %v1668 = vunpack.c.h.b16 %v406
    %v1669 = vunpack.c.l.b16 %v407
    %v1670 = vunpack.c.h.b16 %v407
    %v1671 = vunpack.c.l.b16 %v408
    %v1672 = vunpack.c.l.b16 %v409
    %v1673 = vunpack.c.h.b16 %v409
    %v1674 = vunpack.c.l.b16 %v410
    %v1675 = vunpack.c.h.b16 %v410
    %v1676 = vunpack.c.l.b16 %v411
    %v1677 = vunpack.c.h.b16 %v411
    %v1678 = vunpack.c.l.b16 %v412
    %v1679 = vunpack.c.h.b16 %v412
    %v1680 = vunpack.c.l.b16 %v413
    %v1681 = vunpack.c.l.b16 %v414
    %v1682 = vunpack.c.h.b16 %v414
    %v1683 = vunpack.c.l.b16 %v415
    %v1684 = vunpack.c.h.b16 %v415
    %v1685 = vunpack.c.l.b16 %v416
    %v1686 = vunpack.c.h.b16 %v416
    %v1687 = vunpack.c.l.b16 %v417
    %v1688 = vunpack.c.h.b16 %v417
    %v1689 = vunpack.c.l.b16 %v418
    %v1690 = vunpack.c.l.b16 %v419
    %v1691 = vunpack.c.h.b16 %v419
    %v1692 = vunpack.c.l.b16 %v420
    %v1693 = vunpack.c.h.b16 %v420
    %v1694 = vunpack.c.l.b16 %v421
    %v1695 = vunpack.c.h.b16 %v421
    %v1696 = vunpack.c.l.b16 %v422
    %v1697 = vunpack.c.h.b16 %v422
    %v1698 = vunpack.c.l.b16 %v423
    %v1699 = vunpack.c.l.b16 %v424
    %v1700 = vunpack.c.h.b16 %v424
    %v1701 = vunpack.c.l.b16 %v425
    %v1702 = vunpack.c.h.b16 %v425
    %v1703 = vunpack.c.l.b16 %v426
    %v1704 = vunpack.c.h.b16 %v426
    %v1705 = vunpack.c.l.b16 %v427
    %v1706 = vunpack.c.h.b16 %v427
    %v1707 = vunpack.c.l.b16 %v428
    %v1708 = vunpack.c.l.b16 %v429
    %v1709 = vunpack.c.h.b16 %v429
    %v1710 = vunpack.c.l.b16 %v430
    %v1711 = vunpack.c.h.b16 %v430
    %v1712 = vunpack.c.l.b16 %v431
    %v1713 = vunpack.c.h.b16 %v431
    %v1714 = vunpack.c.l.b16 %v432
    %v1715 = vunpack.c.h.b16 %v432
    %v1716 = vunpack.c.l.b16 %v433
    %v1717 = vunpack.c.l.b16 %v434
    %v1718 = vunpack.c.h.b16 %v434
    %v1719 = vunpack.c.l.b16 %v435
    %v1720 = vunpack.c.h.b16 %v435
    %v1721 = vunpack.c.l.b16 %v436
    %v1722 = vunpack.c.h.b16 %v436
    %v1723 = vunpack.c.l.b16 %v437
    %v1724 = vunpack.c.h.b16 %v437
    %v1725 = vunpack.c.l.b16 %v438
    %v1726 = vunpack.c.l.b16 %v439
    %v1727 = vunpack.c.h.b16 %v439
    %v1728 = vunpack.c.l.b16 %v440
    %v1729 = vunpack.c.h.b16 %v440
    %v1730 = vunpack.c.l.b16 %v441
    %v1731 = vunpack.c.h.b16 %v441
    %v1732 = vunpack.c.l.b16 %v442
    %v1733 = vunpack.c.h.b16 %v442
    %v1734 = vunpack.c.l.b16 %v443
    %v1735 = vunpack.c.l.b16 %v444
    %v1736 = vunpack.c.h.b16 %v444
    %v1737 = vunpack.c.l.b16 %v445
    %v1738 = vunpack.c.h.b16 %v445
    %v1739 = vunpack.c.l.b16 %v446
    %v1740 = vunpack.c.h.b16 %v446
    %v1741 = vunpack.c.l.b16 %v447
    %v1742 = vunpack.c.h.b16 %v447
    %v1743 = vunpack.c.l.b16 %v448
    %v1744 = vunpack.c.l.b16 %v449
    %v1745 = vunpack.c.h.b16 %v449
    %v1746 = vunpack.c.l.b16 %v450
    %v1747 = vunpack.c.h.b16 %v450
    %v1748 = vunpack.c.l.b16 %v451
    %v1749 = vunpack.c.h.b16 %v451
    %v1750 = vunpack.c.l.b16 %v452
    %v1751 = vunpack.c.h.b16 %v452
    %v1752 = vunpack.c.l.b16 %v453
    %v1753 = vunpack.c.l.b16 %v454
    %v1754 = vunpack.c.h.b16 %v454
    %v1755 = vunpack.c.l.b16 %v455
    %v1756 = vunpack.c.h.b16 %v455
    %v1757 = vunpack.c.l.b16 %v456
    %v1758 = vunpack.c.h.b16 %v456
    %v1759 = vunpack.c.l.b16 %v457
    %v1760 = vunpack.c.h.b16 %v457
    %v1761 = vunpack.c.l.b16 %v458
    %v1762 = vunpack.c.l.b16 %v459
    %v1763 = vunpack.c.h.b16 %v459
    %v1764 = vunpack.c.l.b16 %v460
    %v1765 = vunpack.c.h.b16 %v460
    %v1766 = vunpack.c.l.b16 %v461
    %v1767 = vunpack.c.h.b16 %v461
    %v1768 = vunpack.c.l.b16 %v462
    %v1769 = vunpack.c.h.b16 %v462
    %v1770 = vunpack.c.l.b16 %v463
    %v1771 = vunpack.c.l.b16 %v464
    %v1772 = vunpack.c.h.b16 %v464
    %v1773 = vunpack.c.l.b16 %v465
    %v1774 = vunpack.c.h.b16 %v465
    %v1775 = vunpack.c.l.b16 %v466
    %v1776 = vunpack.c.h.b16 %v466
    %v1777 = vunpack.c.l.b16 %v467
    %v1778 = vunpack.c.h.b16 %v467
    %v1779 = vunpack.c.l.b16 %v468
    %v1780 = vunpack.c.l.b16 %v469
    %v1781 = vunpack.c.h.b16 %v469
    %v1782 = vunpack.c.l.b16 %v470
    %v1783 = vunpack.c.h.b16 %v470
    %v1784 = vunpack.c.l.b16 %v471
    %v1785 = vunpack.c.h.b16 %v471
    %v1786 = vunpack.c.l.b16 %v472
    %v1787 = vunpack.c.h.b16 %v472
    %v1788 = vunpack.c.l.b16 %v473
    %v1789 = vunpack.c.l.b16 %v474
    %v1790 = vunpack.c.h.b16 %v474
    %v1791 = vunpack.c.l.b16 %v475
    %v1792 = vunpack.c.h.b16 %v475
    %v1793 = vunpack.c.l.b16 %v476
    %v1794 = vunpack.c.h.b16 %v476
    %v1795 = vunpack.c.l.b16 %v477
    %v1796 = vunpack.c.h.b16 %v477
    %v1797 = vunpack.c.l.b16 %v478
    %v1798 = vunpack.c.l.b16 %v479
    %v1799 = vunpack.c.h.b16 %v479
    %v1800 = vunpack.c.l.b16 %v480
    %v1801 = vunpack.c.h.b16 %v480
    %v1802 = vunpack.c.l.b16 %v481
    %v1803 = vunpack.c.h.b16 %v481
    %v1804 = vunpack.c.l.b16 %v482
    %v1805 = vunpack.c.h.b16 %v482
    %v1806 = vunpack.c.l.b16 %v483
    %v1807 = vunpack.c.l.b16 %v484
    %v1808 = vunpack.c.h.b16 %v484
    %v1809 = vunpack.c.l.b16 %v485
    %v1810 = vunpack.c.h.b16 %v485
    %v1811 = vunpack.c.l.b16 %v486
    %v1812 = vunpack.c.h.b16 %v486
    %v1813 = vunpack.c.l.b16 %v487
    %v1814 = vunpack.c.h.b16 %v487
    %v1815 = vunpack.c.l.b16 %v488
    %v1816 = vunpack.c.l.b16 %v489
    %v1817 = vunpack.c.h.b16 %v489
    %v1818 = vunpack.c.l.b16 %v490
    %v1819 = vunpack.c.h.b16 %v490
    %v1820 = vunpack.c.l.b16 %v491
    %v1821 = vunpack.c.h.b16 %v491
    %v1822 = vunpack.c.l.b16 %v492
    %v1823 = vunpack.c.h.b16 %v492
    %v1824 = vunpack.c.l.b16 %v493
    %v1825 = vunpack.c.l.b16 %v494
    %v1826 = vunpack.c.h.b16 %v494
    %v1827 = vunpack.c.l.b16 %v495
    %v1828 = vunpack.c.h.b16 %v495
    %v1829 = vunpack.c.l.b16 %v496
    %v1830 = vunpack.c.h.b16 %v496
    %v1831 = vunpack.c.l.b16 %v497
    %v1832 = vunpack.c.h.b16 %v497
    %v1833 = vunpack.c.l.b16 %v498
    %v1834 = vunpack.c.l.b16 %v499
    %v1835 = vunpack.c.h.b16 %v499
    %v1836 = vunpack.c.l.b16 %v500
    %v1837 = vunpack.c.h.b16 %v500
    %v1838 = vunpack.c.l.b16 %v501
    %v1839 = vunpack.c.h.b16 %v501
    %v1840 = vunpack.c.l.b16 %v502
    %v1841 = vunpack.c.h.b16 %v502
    %v1842 = vunpack.c.l.b16 %v503
    %v1843 = vunpack.c.l.b16 %v504
    %v1844 = vunpack.c.h.b16 %v504
    %v1845 = vunpack.c.l.b16 %v505
    %v1846 = vunpack.c.h.b16 %v505
    %v1847 = vunpack.c.l.b16 %v506
    %v1848 = vunpack.c.h.b16 %v506
    %v1849 = vunpack.c.l.b16 %v507
    %v1850 = vunpack.c.h.b16 %v507
    %v1851 = vunpack.c.l.b16 %v508
    %v1852 = vunpack.c.l.b16 %v509
    %v1853 = vunpack.c.h.b16 %v509
    %v1854 = vunpack.c.l.b16 %v510
    %v1855 = vunpack.c.h.b16 %v510
    %v1856 = vunpack.c.l.b16 %v511
    %v1857 = vunpack.c.h.b16 %v511
    %v1858 = vunpack.c.l.b16 %v512
    %v1859 = vunpack.c.h.b16 %v512
    %v1860 = vunpack.c.l.b16 %v513
    %v1861 = vunpack.c.l.b16 %v514
    %v1862 = vunpack.c.h.b16 %v514
    %v1863 = vunpack.c.l.b16 %v515
    %v1864 = vunpack.c.h.b16 %v515
    %v1865 = vunpack.c.l.b16 %v516
    %v1866 = vunpack.c.h.b16 %v516
    %v1867 = vunpack.c.l.b16 %v517
    %v1868 = vunpack.c.h.b16 %v517
    %v1869 = vunpack.c.l.b16 %v518
    %v1870 = vunpack.c.l.b16 %v519
    %v1871 = vunpack.c.h.b16 %v519
    %v1872 = vunpack.c.l.b16 %v520
    %v1873 = vunpack.c.h.b16 %v520
    %v1874 = vunpack.c.l.b16 %v521
    %v1875 = vunpack.c.h.b16 %v521
    %v1876 = vunpack.c.l.b16 %v522
    %v1877 = vunpack.c.h.b16 %v522
    %v1878 = vunpack.c.l.b16 %v523
    %v1879 = vunpack.c.l.b16 %v524
    %v1880 = vunpack.c.h.b16 %v524
    %v1881 = vunpack.c.l.b16 %v525
    %v1882 = vunpack.c.h.b16 %v525
    %v1883 = vunpack.c.l.b16 %v526
    %v1884 = vunpack.c.h.b16 %v526
    %v1885 = vunpack.c.l.b16 %v527
    %v1886 = vunpack.c.h.b16 %v527
    %v1887 = vunpack.c.l.b16 %v528
    %v1888 = vunpack.c.l.b16 %v529
    %v1889 = vunpack.c.h.b16 %v529
    %v1890 = vunpack.c.l.b16 %v530
    %v1891 = vunpack.c.h.b16 %v530
    %v1892 = vunpack.c.l.b16 %v531
    %v1893 = vunpack.c.h.b16 %v531
    %v1894 = vunpack.c.l.b16 %v532
    %v1895 = vunpack.c.h.b16 %v532
    %v1896 = vunpack.c.l.b16 %v533
    %v1897 = vunpack.c.l.b16 %v534
    %v1898 = vunpack.c.h.b16 %v534
    %v1899 = vunpack.c.l.b16 %v535
    %v1900 = vunpack.c.h.b16 %v535
    %v1901 = vunpack.c.l.b16 %v536
    %v1902 = vunpack.c.h.b16 %v536
    %v1903 = vunpack.c.l.b16 %v537
    %v1904 = vunpack.c.h.b16 %v537
    %v1905 = vunpack.c.l.b16 %v538
    %v1906 = vunpack.c.l.b16 %v539
    %v1907 = vunpack.c.h.b16 %v539
    %v1908 = vunpack.c.l.b16 %v540
    %v1909 = vunpack.c.h.b16 %v540
    %v1910 = vunpack.c.l.b16 %v541
    %v1911 = vunpack.c.h.b16 %v541
    %v1912 = vunpack.c.l.b16 %v542
    %v1913 = vunpack.c.h.b16 %v542
    %v1914 = vunpack.c.l.b16 %v543
    %v1915 = vunpack.c.l.b16 %v544
    %v1916 = vunpack.c.h.b16 %v544
    %v1917 = vunpack.c.l.b16 %v545
    %v1918 = vunpack.c.h.b16 %v545
    %v1919 = vunpack.c.l.b16 %v546
    %v1920 = vunpack.c.h.b16 %v546
    %v1921 = vunpack.c.l.b16 %v547
    %v1922 = vunpack.c.h.b16 %v547
    %v1923 = vunpack.c.l.b16 %v548
    %v1924 = vunpack.c.l.b16 %v549
    %v1925 = vunpack.c.h.b16 %v549
    %v1926 = vunpack.c.l.b16 %v550
    %v1927 = vunpack.c.h.b16 %v550
    %v1928 = vunpack.c.l.b16 %v551
    %v1929 = vunpack.c.h.b16 %v551
    %v1930 = vunpack.c.l.b16 %v552
    %v1931 = vunpack.c.h.b16 %v552
    %v1932 = vunpack.c.l.b16 %v553
    %v1933 = vunpack.c.l.b16 %v554
    %v1934 = vunpack.c.h.b16 %v554
    %v1935 = vunpack.c.l.b16 %v555
    %v1936 = vunpack.c.h.b16 %v555
    %v1937 = vunpack.c.l.b16 %v556
    %v1938 = vunpack.c.h.b16 %v556
    %v1939 = vunpack.c.l.b16 %v557
    %v1940 = vunpack.c.h.b16 %v557
    %v1941 = vunpack.c.l.b16 %v558
    %v1942 = vunpack.c.l.b16 %v559
    %v1943 = vunpack.c.h.b16 %v559
    %v1944 = vunpack.c.l.b16 %v560
    %v1945 = vunpack.c.h.b16 %v560
    %v1946 = vunpack.c.l.b16 %v561
    %v1947 = vunpack.c.h.b16 %v561
    %v1948 = vunpack.c.l.b16 %v562
    %v1949 = vunpack.c.h.b16 %v562
    %v1950 = vunpack.c.l.b16 %v563
    %v1951 = vunpack.c.l.b16 %v564
    %v1952 = vunpack.c.h.b16 %v564
    %v1953 = vunpack.c.l.b16 %v565
    %v1954 = vunpack.c.h.b16 %v565
    %v1955 = vunpack.c.l.b16 %v566
    %v1956 = vunpack.c.h.b16 %v566
    %v1957 = vunpack.c.l.b16 %v567
    %v1958 = vunpack.c.h.b16 %v567
    %v1959 = vunpack.c.l.b16 %v568
    %v1960 = vunpack.c.l.b16 %v569
    %v1961 = vunpack.c.h.b16 %v569
    %v1962 = vunpack.c.l.b16 %v570
    %v1963 = vunpack.c.h.b16 %v570
    %v1964 = vunpack.c.l.b16 %v571
    %v1965 = vunpack.c.h.b16 %v571
    %v1966 = vunpack.c.l.b16 %v572
    %v1967 = vunpack.c.h.b16 %v572
    %v1968 = vunpack.c.l.b16 %v573
    %v1969 = vunpack.c.l.b16 %v574
    %v1970 = vunpack.c.h.b16 %v574
    %v1971 = vunpack.c.l.b16 %v575
    %v1972 = vunpack.c.h.b16 %v575
    %v1973 = vunpack.c.l.b16 %v576
    %v1974 = vunpack.c.h.b16 %v576
    %v1975 = vunpack.c.l.b16 %v577
    %v1976 = vunpack.c.h.b16 %v577
    %v1977 = vunpack.c.l.b16 %v578
    %v1978 = vunpack.c.l.b16 %v579
    %v1979 = vunpack.c.h.b16 %v579
    %v1980 = vunpack.c.l.b16 %v580
    %v1981 = vunpack.c.h.b16 %v580
    %v1982 = vunpack.c.l.b16 %v581
    %v1983 = vunpack.c.h.b16 %v581
    %v1984 = vunpack.c.l.b16 %v582
    %v1985 = vunpack.c.h.b16 %v582
    %v1986 = vunpack.c.l.b16 %v583
    %v1987 = vunpack.c.l.b16 %v584
    %v1988 = vunpack.c.h.b16 %v584
    %v1989 = vunpack.c.l.b16 %v585
    %v1990 = vunpack.c.h.b16 %v585
    %v1991 = vunpack.c.l.b16 %v586
    %v1992 = vunpack.c.h.b16 %v586
    %v1993 = vunpack.c.l.b16 %v587
    %v1994 = vunpack.c.h.b16 %v587
    %v1995 = vunpack.c.l.b16 %v588
    %v1996 = vunpack.c.l.b16 %v589
    %v1997 = vunpack.c.h.b16 %v589
    %v1998 = vunpack.c.l.b16 %v590
    %v1999 = vunpack.c.h.b16 %v590
    %v2000 = vunpack.c.l.b16 %v591
    %v2001 = vunpack.c.h.b16 %v591
    %v2002 = vunpack.c.l.b16 %v592
    %v2003 = vunpack.c.h.b16 %v592
    %v2004 = vunpack.c.l.b16 %v593
    %v2005 = vunpack.c.l.b16 %v594
    %v2006 = vunpack.c.h.b16 %v594
    %v2007 = vunpack.c.l.b16 %v595
    %v2008 = vunpack.c.h.b16 %v595
    %v2009 = vunpack.c.l.b16 %v596
    %v2010 = vunpack.c.h.b16 %v596
    %v2011 = vunpack.c.l.b16 %v597
    %v2012 = vunpack.c.h.b16 %v597
    %v2013 = vunpack.c.l.b16 %v598
    %v2014 = vunpack.c.l.b16 %v599
    %v2015 = vunpack.c.h.b16 %v599
    %v2016 = vunpack.c.l.b16 %v600
    %v2017 = vunpack.c.h.b16 %v600
    %v2018 = vunpack.c.l.b16 %v601
    %v2019 = vunpack.c.h.b16 %v601
    %v2020 = vunpack.c.l.b16 %v602
    %v2021 = vunpack.c.h.b16 %v602
    %v2022 = vunpack.c.l.b16 %v603
    %v2023 = vpack.c.b16 %v1150, %v1141
    %v2024 = vpack.c.b16 %v1151, %v1142
    %v2025 = vpack.c.b16 %v1152, %v1143
    %v2026 = vpack.c.b16 %v1153, %v1144
    %v2027 = vpack.c.b16 %v1154, %v1145
    %v2028 = vpack.c.b16 %v1155, %v1146
    %v2029 = vpack.c.b16 %v1156, %v1147
    %v2030 = vpack.c.b16 %v1157, %v1148
    %v2031 = vpack.c.b16 %v1158, %v1149
    %v2032 = vpack.c.b16 %v1168, %v1159
    %v2033 = vpack.c.b16 %v1169, %v1160
    %v2034 = vpack.c.b16 %v1170, %v1161
    %v2035 = vpack.c.b16 %v1171, %v1162
    %v2036 = vpack.c.b16 %v1172, %v1163
    %v2037 = vpack.c.b16 %v1173, %v1164
    %v2038 = vpack.c.b16 %v1174, %v1165
    %v2039 = vpack.c.b16 %v1175, %v1166
    %v2040 = vpack.c.b16 %v1176, %v1167
    %v2041 = vpack.c.b16 %v1186, %v1177
    %v2042 = vpack.c.b16 %v1187, %v1178
    %v2043 = vpack.c.b16 %v1188, %v1179
    %v2044 = vpack.c.b16 %v1189, %v1180
    %v2045 = vpack.c.b16 %v1190, %v1181
    %v2046 = vpack.c.b16 %v1191, %v1182
    %v2047 = vpack.c.b16 %v1192, %v1183
    %v2048 = vpack.c.b16 %v1193, %v1184
    %v2049 = vpack.c.b16 %v1194, %v1185
    %v2050 = vpack.c.b16 %v1204, %v1195
    %v2051 = vpack.c.b16 %v1205, %v1196
    %v2052 = vpack.c.b16 %v1206, %v1197
    %v2053 = vpack.c.b16 %v1207, %v1198
    %v2054 = vpack.c.b16 %v1208, %v1199
    %v2055 = vpack.c.b16 %v1209, %v1200
    %v2056 = vpack.c.b16 %v1210, %v1201
    %v2057 = vpack.c.b16 %v1211, %v1202
    %v2058 = vpack.c.b16 %v1212, %v1203
    %v2059 = vpack.c.b16 %v1222, %v1213
    %v2060 = vpack.c.b16 %v1223, %v1214
    %v2061 = vpack.c.b16 %v1224, %v1215
    %v2062 = vpack.c.b16 %v1225, %v1216
    %v2063 = vpack.c.b16 %v1226, %v1217
    %v2064 = vpack.c.b16 %v1227, %v1218
    %v2065 = vpack.c.b16 %v1228, %v1219
    %v2066 = vpack.c.b16 %v1229, %v1220
    %v2067 = vpack.c.b16 %v1230, %v1221
    %v2068 = vpack.c.b16 %v1240, %v1231
    %v2069 = vpack.c.b16 %v1241, %v1232
    %v2070 = vpack.c.b16 %v1242, %v1233
    %v2071 = vpack.c.b16 %v1243, %v1234
    %v2072 = vpack.c.b16 %v1244, %v1235
    %v2073 = vpack.c.b16 %v1245, %v1236
    %v2074 = vpack.c.b16 %v1246, %v1237
    %v2075 = vpack.c.b16 %v1247, %v1238
    %v2076 = vpack.c.b16 %v1248, %v1239
    %v2077 = vpack.c.b16 %v1258, %v1249
    %v2078 = vpack.c.b16 %v1259, %v1250
    %v2079 = vpack.c.b16 %v1260, %v1251
    %v2080 = vpack.c.b16 %v1261, %v1252
    %v2081 = vpack.c.b16 %v1262, %v1253
    %v2082 = vpack.c.b16 %v1263, %v1254
    %v2083 = vpack.c.b16 %v1264, %v1255
    %v2084 = vpack.c.b16 %v1265, %v1256
    %v2085 = vpack.c.b16 %v1266, %v1257
    %v2086 = vpack.c.b16 %v1276, %v1267
    %v2087 = vpack.c.b16 %v1277, %v1268
    %v2088 = vpack.c.b16 %v1278, %v1269
    %v2089 = vpack.c.b16 %v1279, %v1270
    %v2090 = vpack.c.b16 %v1280, %v1271
    %v2091 = vpack.c.b16 %v1281, %v1272
    %v2092 = vpack.c.b16 %v1282, %v1273
    %v2093 = vpack.c.b16 %v1283, %v1274
    %v2094 = vpack.c.b16 %v1284, %v1275
    %v2095 = vpack.c.b16 %v1294, %v1285
    %v2096 = vpack.c.b16 %v1295, %v1286
    %v2097 = vpack.c.b16 %v1296, %v1287
    %v2098 = vpack.c.b16 %v1297, %v1288
    %v2099 = vpack.c.b16 %v1298, %v1289
    %v2100 = vpack.c.b16 %v1299, %v1290
    %v2101 = vpack.c.b16 %v1300, %v1291
    %v2102 = vpack.c.b16 %v1301, %v1292
    %v2103 = vpack.c.b16 %v1302, %v1293
    %v2104 = vpack.c.b16 %v1312, %v1303
    %v2105 = vpack.c.b16 %v1313, %v1304
    %v2106 = vpack.c.b16 %v1314, %v1305
    %v2107 = vpack.c.b16 %v1315, %v1306
    %v2108 = vpack.c.b16 %v1316, %v1307
    %v2109 = vpack.c.b16 %v1317, %v1308
    %v2110 = vpack.c.b16 %v1318, %v1309
    %v2111 = vpack.c.b16 %v1319, %v1310
    %v2112 = vpack.c.b16 %v1320, %v1311
    %v2113 = vpack.c.b16 %v1330, %v1321
    %v2114 = vpack.c.b16 %v1331, %v1322
    %v2115 = vpack.c.b16 %v1332, %v1323
    %v2116 = vpack.c.b16 %v1333, %v1324
    %v2117 = vpack.c.b16 %v1334, %v1325
    %v2118 = vpack.c.b16 %v1335, %v1326
    %v2119 = vpack.c.b16 %v1336, %v1327
    %v2120 = vpack.c.b16 %v1337, %v1328
    %v2121 = vpack.c.b16 %v1338, %v1329
    %v2122 = vpack.c.b16 %v1348, %v1339
    %v2123 = vpack.c.b16 %v1349, %v1340
    %v2124 = vpack.c.b16 %v1350, %v1341
    %v2125 = vpack.c.b16 %v1351, %v1342
    %v2126 = vpack.c.b16 %v1352, %v1343
    %v2127 = vpack.c.b16 %v1353, %v1344
    %v2128 = vpack.c.b16 %v1354, %v1345
    %v2129 = vpack.c.b16 %v1355, %v1346
    %v2130 = vpack.c.b16 %v1356, %v1347
    %v2131 = vpack.c.b16 %v1366, %v1357
    %v2132 = vpack.c.b16 %v1367, %v1358
    %v2133 = vpack.c.b16 %v1368, %v1359
    %v2134 = vpack.c.b16 %v1369, %v1360
    %v2135 = vpack.c.b16 %v1370, %v1361
    %v2136 = vpack.c.b16 %v1371, %v1362
    %v2137 = vpack.c.b16 %v1372, %v1363
    %v2138 = vpack.c.b16 %v1373, %v1364
    %v2139 = vpack.c.b16 %v1374, %v1365
    %v2140 = vpack.c.b16 %v1384, %v1375
    %v2141 = vpack.c.b16 %v1385, %v1376
    %v2142 = vpack.c.b16 %v1386, %v1377
    %v2143 = vpack.c.b16 %v1387, %v1378
    %v2144 = vpack.c.b16 %v1388, %v1379
    %v2145 = vpack.c.b16 %v1389, %v1380
    %v2146 = vpack.c.b16 %v1390, %v1381
    %v2147 = vpack.c.b16 %v1391, %v1382
    %v2148 = vpack.c.b16 %v1392, %v1383
    %v2149 = vpack.c.b16 %v1402, %v1393
    %v2150 = vpack.c.b16 %v1403, %v1394
    %v2151 = vpack.c.b16 %v1404, %v1395
    %v2152 = vpack.c.b16 %v1405, %v1396
    %v2153 = vpack.c.b16 %v1406, %v1397
    %v2154 = vpack.c.b16 %v1407, %v1398
    %v2155 = vpack.c.b16 %v1408, %v1399
    %v2156 = vpack.c.b16 %v1409, %v1400
    %v2157 = vpack.c.b16 %v1410, %v1401
    %v2158 = vpack.c.b16 %v1420, %v1411
    %v2159 = vpack.c.b16 %v1421, %v1412
    %v2160 = vpack.c.b16 %v1422, %v1413
    %v2161 = vpack.c.b16 %v1423, %v1414
    %v2162 = vpack.c.b16 %v1424, %v1415
    %v2163 = vpack.c.b16 %v1425, %v1416
    %v2164 = vpack.c.b16 %v1426, %v1417
    %v2165 = vpack.c.b16 %v1427, %v1418
    %v2166 = vpack.c.b16 %v1428, %v1419
    %v2167 = vpack.c.b16 %v1438, %v1429
    %v2168 = vpack.c.b16 %v1439, %v1430
    %v2169 = vpack.c.b16 %v1440, %v1431
    %v2170 = vpack.c.b16 %v1441, %v1432
    %v2171 = vpack.c.b16 %v1442, %v1433
    %v2172 = vpack.c.b16 %v1443, %v1434
    %v2173 = vpack.c.b16 %v1444, %v1435
    %v2174 = vpack.c.b16 %v1445, %v1436
    %v2175 = vpack.c.b16 %v1446, %v1437
    %v2176 = vpack.c.b16 %v1456, %v1447
    %v2177 = vpack.c.b16 %v1457, %v1448
    %v2178 = vpack.c.b16 %v1458, %v1449
    %v2179 = vpack.c.b16 %v1459, %v1450
    %v2180 = vpack.c.b16 %v1460, %v1451
    %v2181 = vpack.c.b16 %v1461, %v1452
    %v2182 = vpack.c.b16 %v1462, %v1453
    %v2183 = vpack.c.b16 %v1463, %v1454
    %v2184 = vpack.c.b16 %v1464, %v1455
    %v2185 = vpack.c.b16 %v1474, %v1465
    %v2186 = vpack.c.b16 %v1475, %v1466
    %v2187 = vpack.c.b16 %v1476, %v1467
    %v2188 = vpack.c.b16 %v1477, %v1468
    %v2189 = vpack.c.b16 %v1478, %v1469
    %v2190 = vpack.c.b16 %v1479, %v1470
    %v2191 = vpack.c.b16 %v1480, %v1471
    %v2192 = vpack.c.b16 %v1481, %v1472
    %v2193 = vpack.c.b16 %v1482, %v1473
    %v2194 = vpack.c.b16 %v1492, %v1483
    %v2195 = vpack.c.b16 %v1493, %v1484
    %v2196 = vpack.c.b16 %v1494, %v1485
    %v2197 = vpack.c.b16 %v1495, %v1486
    %v2198 = vpack.c.b16 %v1496, %v1487
    %v2199 = vpack.c.b16 %v1497, %v1488
    %v2200 = vpack.c.b16 %v1498, %v1489
    %v2201 = vpack.c.b16 %v1499, %v1490
    %v2202 = vpack.c.b16 %v1500, %v1491
    %v2203 = vpack.c.b16 %v1510, %v1501
    %v2204 = vpack.c.b16 %v1511, %v1502
    %v2205 = vpack.c.b16 %v1512, %v1503
    %v2206 = vpack.c.b16 %v1513, %v1504
    %v2207 = vpack.c.b16 %v1514, %v1505
    %v2208 = vpack.c.b16 %v1515, %v1506
    %v2209 = vpack.c.b16 %v1516, %v1507
    %v2210 = vpack.c.b16 %v1517, %v1508
    %v2211 = vpack.c.b16 %v1518, %v1509
    %v2212 = vpack.c.b16 %v1528, %v1519
    %v2213 = vpack.c.b16 %v1529, %v1520
    %v2214 = vpack.c.b16 %v1530, %v1521
    %v2215 = vpack.c.b16 %v1531, %v1522
    %v2216 = vpack.c.b16 %v1532, %v1523
    %v2217 = vpack.c.b16 %v1533, %v1524
    %v2218 = vpack.c.b16 %v1534, %v1525
    %v2219 = vpack.c.b16 %v1535, %v1526
    %v2220 = vpack.c.b16 %v1536, %v1527
    %v2221 = vpack.c.b16 %v1546, %v1537
    %v2222 = vpack.c.b16 %v1547, %v1538
    %v2223 = vpack.c.b16 %v1548, %v1539
    %v2224 = vpack.c.b16 %v1549, %v1540
    %v2225 = vpack.c.b16 %v1550, %v1541
    %v2226 = vpack.c.b16 %v1551, %v1542
    %v2227 = vpack.c.b16 %v1552, %v1543
    %v2228 = vpack.c.b16 %v1553, %v1544
    %v2229 = vpack.c.b16 %v1554, %v1545
    %v2230 = vpack.c.b16 %v1564, %v1555
    %v2231 = vpack.c.b16 %v1565, %v1556
    %v2232 = vpack.c.b16 %v1566, %v1557
    %v2233 = vpack.c.b16 %v1567, %v1558
    %v2234 = vpack.c.b16 %v1568, %v1559
    %v2235 = vpack.c.b16 %v1569, %v1560
    %v2236 = vpack.c.b16 %v1570, %v1561
    %v2237 = vpack.c.b16 %v1571, %v1562
    %v2238 = vpack.c.b16 %v1572, %v1563
    %v2239 = vpack.c.b16 %v1582, %v1573
    %v2240 = vpack.c.b16 %v1583, %v1574
    %v2241 = vpack.c.b16 %v1584, %v1575
    %v2242 = vpack.c.b16 %v1585, %v1576
    %v2243 = vpack.c.b16 %v1586, %v1577
    %v2244 = vpack.c.b16 %v1587, %v1578
    %v2245 = vpack.c.b16 %v1588, %v1579
    %v2246 = vpack.c.b16 %v1589, %v1580
    %v2247 = vpack.c.b16 %v1590, %v1581
    %v2248 = vpack.c.b16 %v1600, %v1591
    %v2249 = vpack.c.b16 %v1601, %v1592
    %v2250 = vpack.c.b16 %v1602, %v1593
    %v2251 = vpack.c.b16 %v1603, %v1594
    %v2252 = vpack.c.b16 %v1604, %v1595
    %v2253 = vpack.c.b16 %v1605, %v1596
    %v2254 = vpack.c.b16 %v1606, %v1597
    %v2255 = vpack.c.b16 %v1607, %v1598
    %v2256 = vpack.c.b16 %v1608, %v1599
    %v2257 = vpack.c.b16 %v1618, %v1609
    %v2258 = vpack.c.b16 %v1619, %v1610
    %v2259 = vpack.c.b16 %v1620, %v1611
    %v2260 = vpack.c.b16 %v1621, %v1612
    %v2261 = vpack.c.b16 %v1622, %v1613
    %v2262 = vpack.c.b16 %v1623, %v1614
    %v2263 = vpack.c.b16 %v1624, %v1615
    %v2264 = vpack.c.b16 %v1625, %v1616
    %v2265 = vpack.c.b16 %v1626, %v1617
    %v2266 = vpack.c.b16 %v1636, %v1627
    %v2267 = vpack.c.b16 %v1637, %v1628
    %v2268 = vpack.c.b16 %v1638, %v1629
    %v2269 = vpack.c.b16 %v1639, %v1630
    %v2270 = vpack.c.b16 %v1640, %v1631
    %v2271 = vpack.c.b16 %v1641, %v1632
    %v2272 = vpack.c.b16 %v1642, %v1633
    %v2273 = vpack.c.b16 %v1643, %v1634
    %v2274 = vpack.c.b16 %v1644, %v1635
    %v2275 = vpack.c.b16 %v1654, %v1645
    %v2276 = vpack.c.b16 %v1655, %v1646
    %v2277 = vpack.c.b16 %v1656, %v1647
    %v2278 = vpack.c.b16 %v1657, %v1648
    %v2279 = vpack.c.b16 %v1658, %v1649
    %v2280 = vpack.c.b16 %v1659, %v1650
    %v2281 = vpack.c.b16 %v1660, %v1651
    %v2282 = vpack.c.b16 %v1661, %v1652
    %v2283 = vpack.c.b16 %v1662, %v1653
    %v2284 = vpack.c.b16 %v1672, %v1663
    %v2285 = vpack.c.b16 %v1673, %v1664
    %v2286 = vpack.c.b16 %v1674, %v1665
    %v2287 = vpack.c.b16 %v1675, %v1666
    %v2288 = vpack.c.b16 %v1676, %v1667
    %v2289 = vpack.c.b16 %v1677, %v1668
    %v2290 = vpack.c.b16 %v1678, %v1669
    %v2291 = vpack.c.b16 %v1679, %v1670
    %v2292 = vpack.c.b16 %v1680, %v1671
    %v2293 = vpack.c.b16 %v1690, %v1681
    %v2294 = vpack.c.b16 %v1691, %v1682
    %v2295 = vpack.c.b16 %v1692, %v1683
    %v2296 = vpack.c.b16 %v1693, %v1684
    %v2297 = vpack.c.b16 %v1694, %v1685
    %v2298 = vpack.c.b16 %v1695, %v1686
    %v2299 = vpack.c.b16 %v1696, %v1687
    %v2300 = vpack.c.b16 %v1697, %v1688
    %v2301 = vpack.c.b16 %v1698, %v1689
    %v2302 = vpack.c.b16 %v1708, %v1699
    %v2303 = vpack.c.b16 %v1709, %v1700
    %v2304 = vpack.c.b16 %v1710, %v1701
    %v2305 = vpack.c.b16 %v1711, %v1702
    %v2306 = vpack.c.b16 %v1712, %v1703
    %v2307 = vpack.c.b16 %v1713, %v1704
    %v2308 = vpack.c.b16 %v1714, %v1705
    %v2309 = vpack.c.b16 %v1715, %v1706
    %v2310 = vpack.c.b16 %v1716, %v1707
    %v2311 = vpack.c.b16 %v1726, %v1717
    %v2312 = vpack.c.b16 %v1727, %v1718
    %v2313 = vpack.c.b16 %v1728, %v1719
    %v2314 = vpack.c.b16 %v1729, %v1720
    %v2315 = vpack.c.b16 %v1730, %v1721
    %v2316 = vpack.c.b16 %v1731, %v1722
    %v2317 = vpack.c.b16 %v1732, %v1723
    %v2318 = vpack.c.b16 %v1733, %v1724
    %v2319 = vpack.c.b16 %v1734, %v1725
    %v2320 = vpack.c.b16 %v1744, %v1735
    %v2321 = vpack.c.b16 %v1745, %v1736
    %v2322 = vpack.c.b16 %v1746, %v1737
    %v2323 = vpack.c.b16 %v1747, %v1738
    %v2324 = vpack.c.b16 %v1748, %v1739
    %v2325 = vpack.c.b16 %v1749, %v1740
    %v2326 = vpack.c.b16 %v1750, %v1741
    %v2327 = vpack.c.b16 %v1751, %v1742
    %v2328 = vpack.c.b16 %v1752, %v1743
    %v2329 = vpack.c.b16 %v1762, %v1753
    %v2330 = vpack.c.b16 %v1763, %v1754
    %v2331 = vpack.c.b16 %v1764, %v1755
    %v2332 = vpack.c.b16 %v1765, %v1756
    %v2333 = vpack.c.b16 %v1766, %v1757
    %v2334 = vpack.c.b16 %v1767, %v1758
    %v2335 = vpack.c.b16 %v1768, %v1759
    %v2336 = vpack.c.b16 %v1769, %v1760
    %v2337 = vpack.c.b16 %v1770, %v1761
    %v2338 = vpack.c.b16 %v1780, %v1771
    %v2339 = vpack.c.b16 %v1781, %v1772
    %v2340 = vpack.c.b16 %v1782, %v1773
    %v2341 = vpack.c.b16 %v1783, %v1774
    %v2342 = vpack.c.b16 %v1784, %v1775
    %v2343 = vpack.c.b16 %v1785, %v1776
    %v2344 = vpack.c.b16 %v1786, %v1777
    %v2345 = vpack.c.b16 %v1787, %v1778
    %v2346 = vpack.c.b16 %v1788, %v1779
    %v2347 = vpack.c.b16 %v1798, %v1789
    %v2348 = vpack.c.b16 %v1799, %v1790
    %v2349 = vpack.c.b16 %v1800, %v1791
    %v2350 = vpack.c.b16 %v1801, %v1792
    %v2351 = vpack.c.b16 %v1802, %v1793
    %v2352 = vpack.c.b16 %v1803, %v1794
    %v2353 = vpack.c.b16 %v1804, %v1795
    %v2354 = vpack.c.b16 %v1805, %v1796
    %v2355 = vpack.c.b16 %v1806, %v1797
    %v2356 = vpack.c.b16 %v1816, %v1807
    %v2357 = vpack.c.b16 %v1817, %v1808
    %v2358 = vpack.c.b16 %v1818, %v1809
    %v2359 = vpack.c.b16 %v1819, %v1810
    %v2360 = vpack.c.b16 %v1820, %v1811
    %v2361 = vpack.c.b16 %v1821, %v1812
    %v2362 = vpack.c.b16 %v1822, %v1813
    %v2363 = vpack.c.b16 %v1823, %v1814
    %v2364 = vpack.c.b16 %v1824, %v1815
    %v2365 = vpack.c.b16 %v1834, %v1825
    %v2366 = vpack.c.b16 %v1835, %v1826
    %v2367 = vpack.c.b16 %v1836, %v1827
    %v2368 = vpack.c.b16 %v1837, %v1828
    %v2369 = vpack.c.b16 %v1838, %v1829
    %v2370 = vpack.c.b16 %v1839, %v1830
    %v2371 = vpack.c.b16 %v1840, %v1831
    %v2372 = vpack.c.b16 %v1841, %v1832
    %v2373 = vpack.c.b16 %v1842, %v1833
    %v2374 = vpack.c.b16 %v1852, %v1843
    %v2375 = vpack.c.b16 %v1853, %v1844
    %v2376 = vpack.c.b16 %v1854, %v1845
    %v2377 = vpack.c.b16 %v1855, %v1846
    %v2378 = vpack.c.b16 %v1856, %v1847
    %v2379 = vpack.c.b16 %v1857, %v1848
    %v2380 = vpack.c.b16 %v1858, %v1849
    %v2381 = vpack.c.b16 %v1859, %v1850
    %v2382 = vpack.c.b16 %v1860, %v1851
    %v2383 = vpack.c.b16 %v1870, %v1861
    %v2384 = vpack.c.b16 %v1871, %v1862
    %v2385 = vpack.c.b16 %v1872, %v1863
    %v2386 = vpack.c.b16 %v1873, %v1864
    %v2387 = vpack.c.b16 %v1874, %v1865
    %v2388 = vpack.c.b16 %v1875, %v1866
    %v2389 = vpack.c.b16 %v1876, %v1867
    %v2390 = vpack.c.b16 %v1877, %v1868
    %v2391 = vpack.c.b16 %v1878, %v1869
    %v2392 = vpack.c.b16 %v1888, %v1879
    %v2393 = vpack.c.b16 %v1889, %v1880
    %v2394 = vpack.c.b16 %v1890, %v1881
    %v2395 = vpack.c.b16 %v1891, %v1882
    %v2396 = vpack.c.b16 %v1892, %v1883
    %v2397 = vpack.c.b16 %v1893, %v1884
    %v2398 = vpack.c.b16 %v1894, %v1885
    %v2399 = vpack.c.b16 %v1895, %v1886
    %v2400 = vpack.c.b16 %v1896, %v1887
    %v2401 = vpack.c.b16 %v1906, %v1897
    %v2402 = vpack.c.b16 %v1907, %v1898
    %v2403 = vpack.c.b16 %v1908, %v1899
    %v2404 = vpack.c.b16 %v1909, %v1900
    %v2405 = vpack.c.b16 %v1910, %v1901
    %v2406 = vpack.c.b16 %v1911, %v1902
    %v2407 = vpack.c.b16 %v1912, %v1903
    %v2408 = vpack.c.b16 %v1913, %v1904
    %v2409 = vpack.c.b16 %v1914, %v1905
    %v2410 = vpack.c.b16 %v1924, %v1915
    %v2411 = vpack.c.b16 %v1925, %v1916
    %v2412 = vpack.c.b16 %v1926, %v1917
    %v2413 = vpack.c.b16 %v1927, %v1918
    %v2414 = vpack.c.b16 %v1928, %v1919
    %v2415 = vpack.c.b16 %v1929, %v1920
    %v2416 = vpack.c.b16 %v1930, %v1921
    %v2417 = vpack.c.b16 %v1931, %v1922
    %v2418 = vpack.c.b16 %v1932, %v1923
    %v2419 = vpack.c.b16 %v1942, %v1933
    %v2420 = vpack.c.b16 %v1943, %v1934
    %v2421 = vpack.c.b16 %v1944, %v1935
    %v2422 = vpack.c.b16 %v1945, %v1936
    %v2423 = vpack.c.b16 %v1946, %v1937
    %v2424 = vpack.c.b16 %v1947, %v1938
    %v2425 = vpack.c.b16 %v1948, %v1939
    %v2426 = vpack.c.b16 %v1949, %v1940
    %v2427 = vpack.c.b16 %v1950, %v1941
    %v2428 = vpack.c.b16 %v1960, %v1951
    %v2429 = vpack.c.b16 %v1961, %v1952
    %v2430 = vpack.c.b16 %v1962, %v1953
    %v2431 = vpack.c.b16 %v1963, %v1954
    %v2432 = vpack.c.b16 %v1964, %v1955
    %v2433 = vpack.c.b16 %v1965, %v1956
    %v2434 = vpack.c.b16 %v1966, %v1957
    %v2435 = vpack.c.b16 %v1967, %v1958
    %v2436 = vpack.c.b16 %v1968, %v1959
    %v2437 = vpack.c.b16 %v1978, %v1969
    %v2438 = vpack.c.b16 %v1979, %v1970
    %v2439 = vpack.c.b16 %v1980, %v1971
    %v2440 = vpack.c.b16 %v1981, %v1972
    %v2441 = vpack.c.b16 %v1982, %v1973
    %v2442 = vpack.c.b16 %v1983, %v1974
    %v2443 = vpack.c.b16 %v1984, %v1975
    %v2444 = vpack.c.b16 %v1985, %v1976
    %v2445 = vpack.c.b16 %v1986, %v1977
    %v2446 = vpack.c.b16 %v1996, %v1987
    %v2447 = vpack.c.b16 %v1997, %v1988
    %v2448 = vpack.c.b16 %v1998, %v1989
    %v2449 = vpack.c.b16 %v1999, %v1990
    %v2450 = vpack.c.b16 %v2000, %v1991
    %v2451 = vpack.c.b16 %v2001, %v1992
    %v2452 = vpack.c.b16 %v2002, %v1993
    %v2453 = vpack.c.b16 %v2003, %v1994
    %v2454 = vpack.c.b16 %v2004, %v1995
    %v2455 = vpack.c.b16 %v2014, %v2005
    %v2456 = vpack.c.b16 %v2015, %v2006
    %v2457 = vpack.c.b16 %v2016, %v2007
    %v2458 = vpack.c.b16 %v2017, %v2008
    %v2459 = vpack.c.b16 %v2018, %v2009
    %v2460 = vpack.c.b16 %v2019, %v2010
    %v2461 = vpack.c.b16 %v2020, %v2011
    %v2462 = vpack.c.b16 %v2021, %v2012
    %v2463 = vpack.c.b16 %v2022, %v2013
    %vm2905 = vcmask 130048
    %v2907 = vsel %vm2905, %v113, 0
    %2909 = vmatprep.subr.bf16.mxu0 %v2087
    %2910 = vmatpush1.bf16.msra.mxu0 %v2086
    %2911 = vmatprep.subr.bf16.mxu0 %v2078
    %2912 = vmatpush1.bf16.msra.mxu0 %v2077
    %2913 = vmatprep.subr.bf16.mxu0 %v2069
    %2914 = vmatpush1.bf16.msra.mxu0 %v2068
    %2915 = vmatprep.subr.bf16.mxu0 %v2060
    %2916 = vmatpush1.bf16.msra.mxu0 %v2059
    %2917 = vmatprep.subr.bf16.mxu0 %v2051
    %2918 = vmatpush1.bf16.msra.mxu0 %v2050
    %2919 = vmatprep.subr.bf16.mxu0 %v2042
    %2920 = vmatpush1.bf16.msra.mxu0 %v2041
    %2921 = vmatprep.subr.bf16.mxu0 %v2033
    %2922 = vmatpush1.bf16.msra.mxu0 %v2032
    %2923 = vmatprep.subr.bf16.mxu0 %v2024
    %2924 = vmatpush1.bf16.msra.mxu0 %v2023
    %2925 = vmatprep.subr.bf16.mxu0 %v2159
    %2926 = vmatpush2.bf16.msra.mxu0 %v2158
    %2927 = vmatprep.subr.bf16.mxu0 %v2150
    %2928 = vmatpush2.bf16.msra.mxu0 %v2149
    %2929 = vmatprep.subr.bf16.mxu0 %v2141
    %2930 = vmatpush2.bf16.msra.mxu0 %v2140
    %2931 = vmatprep.subr.bf16.mxu0 %v2132
    %2932 = vmatpush2.bf16.msra.mxu0 %v2131
    %2933 = vmatprep.subr.bf16.mxu0 %v2123
    %2934 = vmatpush2.bf16.msra.mxu0 %v2122
    %2935 = vmatprep.subr.bf16.mxu0 %v2114
    %2936 = vmatpush2.bf16.msra.mxu0 %v2113
    %2937 = vmatprep.subr.bf16.mxu0 %v2105
    %2938 = vmatpush2.bf16.msra.mxu0 %v2104
    %2939 = vmatprep.subr.bf16.mxu0 %v2096
    %2940 = vmatpush2.bf16.msra.mxu0 %v2095
    %2941 = vmatprep.mubr.bf16.mxu0 %v108
    %2942 = vmatmul.mubr.bf16.gmra.mxu0 %v107
    %v2943 = vpop.f32.mrf.mxu0
    %v2944 = vadd.f32 %v609, %v2943
    %v2945 = vpop.f32.mrf.mxu0
    %v2946 = vadd.f32 %v613, %v2945
    %v2947 = vpop.f32.mrf.mxu0
    %v2948 = vpop.f32.mrf.mxu0
    %2949 = vdwg.mxu0
    %2950 = vmatprep.subr.bf16.mxu0 %v2231
    %2951 = vmatpush1.bf16.msra.mxu0 %v2230
    %2952 = vmatprep.subr.bf16.mxu0 %v2222
    %2953 = vmatpush1.bf16.msra.mxu0 %v2221
    %2954 = vmatprep.subr.bf16.mxu0 %v2213
    %2955 = vmatpush1.bf16.msra.mxu0 %v2212
    %2956 = vmatprep.subr.bf16.mxu0 %v2204
    %2957 = vmatpush1.bf16.msra.mxu0 %v2203
    %2958 = vmatprep.subr.bf16.mxu0 %v2195
    %2959 = vmatpush1.bf16.msra.mxu0 %v2194
    %2960 = vmatprep.subr.bf16.mxu0 %v2186
    %2961 = vmatpush1.bf16.msra.mxu0 %v2185
    %2962 = vmatprep.subr.bf16.mxu0 %v2177
    %2963 = vmatpush1.bf16.msra.mxu0 %v2176
    %2964 = vmatprep.subr.bf16.mxu0 %v2168
    %2965 = vmatpush1.bf16.msra.mxu0 %v2167
    %2966 = vmatprep.subr.bf16.mxu0 %v2303
    %2967 = vmatpush2.bf16.msra.mxu0 %v2302
    %2968 = vmatprep.subr.bf16.mxu0 %v2294
    %2969 = vmatpush2.bf16.msra.mxu0 %v2293
    %2970 = vmatprep.subr.bf16.mxu0 %v2285
    %2971 = vmatpush2.bf16.msra.mxu0 %v2284
    %2972 = vmatprep.subr.bf16.mxu0 %v2276
    %2973 = vmatpush2.bf16.msra.mxu0 %v2275
    %2974 = vmatprep.subr.bf16.mxu0 %v2267
    %2975 = vmatpush2.bf16.msra.mxu0 %v2266
    %2976 = vmatprep.subr.bf16.mxu0 %v2258
    %2977 = vmatpush2.bf16.msra.mxu0 %v2257
    %2978 = vmatprep.subr.bf16.mxu0 %v2249
    %2979 = vmatpush2.bf16.msra.mxu0 %v2248
    %2980 = vmatprep.subr.bf16.mxu0 %v2240
    %2981 = vmatpush2.bf16.msra.mxu0 %v2239
    %2982 = vmatprep.mubr.bf16.mxu0 %v110
    %2983 = vmatmul.mubr.bf16.gmra.mxu0 %v109
    %v2984 = vpop.f32.mrf.mxu0
    %v2985 = vadd.f32 %v2944, %v2984
    %v2986 = vpop.f32.mrf.mxu0
    %v2987 = vadd.f32 %v2946, %v2986
    %v2988 = vpop.f32.mrf.mxu0
    %v2989 = vpop.f32.mrf.mxu0
    %2990 = vdwg.mxu0
    %2991 = vmatprep.subr.bf16.mxu0 %v2375
    %2992 = vmatpush1.bf16.msra.mxu0 %v2374
    %2993 = vmatprep.subr.bf16.mxu0 %v2366
    %2994 = vmatpush1.bf16.msra.mxu0 %v2365
    %2995 = vmatprep.subr.bf16.mxu0 %v2357
    %2996 = vmatpush1.bf16.msra.mxu0 %v2356
    %2997 = vmatprep.subr.bf16.mxu0 %v2348
    %2998 = vmatpush1.bf16.msra.mxu0 %v2347
    %2999 = vmatprep.subr.bf16.mxu0 %v2339
    %3000 = vmatpush1.bf16.msra.mxu0 %v2338
    %3001 = vmatprep.subr.bf16.mxu0 %v2330
    %3002 = vmatpush1.bf16.msra.mxu0 %v2329
    %3003 = vmatprep.subr.bf16.mxu0 %v2321
    %3004 = vmatpush1.bf16.msra.mxu0 %v2320
    %3005 = vmatprep.subr.bf16.mxu0 %v2312
    %3006 = vmatpush1.bf16.msra.mxu0 %v2311
    %3007 = vmatprep.subr.bf16.mxu0 %v2447
    %3008 = vmatpush2.bf16.msra.mxu0 %v2446
    %3009 = vmatprep.subr.bf16.mxu0 %v2438
    %3010 = vmatpush2.bf16.msra.mxu0 %v2437
    %3011 = vmatprep.subr.bf16.mxu0 %v2429
    %3012 = vmatpush2.bf16.msra.mxu0 %v2428
    %3013 = vmatprep.subr.bf16.mxu0 %v2420
    %3014 = vmatpush2.bf16.msra.mxu0 %v2419
    %3015 = vmatprep.subr.bf16.mxu0 %v2411
    %3016 = vmatpush2.bf16.msra.mxu0 %v2410
    %3017 = vmatprep.subr.bf16.mxu0 %v2402
    %3018 = vmatpush2.bf16.msra.mxu0 %v2401
    %3019 = vmatprep.subr.bf16.mxu0 %v2393
    %3020 = vmatpush2.bf16.msra.mxu0 %v2392
    %3021 = vmatprep.subr.bf16.mxu0 %v2384
    %3022 = vmatpush2.bf16.msra.mxu0 %v2383
    %3023 = vmatprep.mubr.bf16.mxu0 %v112
    %3024 = vmatmul.mubr.bf16.gmra.mxu0 %v111
    %v3025 = vpop.f32.mrf.mxu0
    %v3026 = vadd.f32 %v2985, %v3025
    %v3027 = vpop.f32.mrf.mxu0
    %v3028 = vadd.f32 %v2987, %v3027
    %v3029 = vpop.f32.mrf.mxu0
    %v3030 = vpop.f32.mrf.mxu0
    %3031 = vdwg.mxu0
    %3032 = vmatprep.subr.bf16.mxu0 0
    %3033 = vmatpush1.bf16.msra.mxu0 0
    %3034 = vmatprep.subr.bf16.mxu0 0
    %3035 = vmatpush1.bf16.msra.mxu0 0
    %3036 = vmatprep.subr.bf16.mxu0 0
    %3037 = vmatpush1.bf16.msra.mxu0 0
    %3038 = vmatprep.subr.bf16.mxu0 0
    %3039 = vmatpush1.bf16.msra.mxu0 0
    %3040 = vmatprep.subr.bf16.mxu0 0
    %3041 = vmatpush1.bf16.msra.mxu0 0
    %3042 = vmatprep.subr.bf16.mxu0 0
    %3043 = vmatpush1.bf16.msra.mxu0 0
    %3044 = vmatprep.subr.bf16.mxu0 0
    %3045 = vmatpush1.bf16.msra.mxu0 0
    %3046 = vmatprep.subr.bf16.mxu0 %v2456
    %3047 = vmatpush1.bf16.msra.mxu0 %v2455
    %3048 = vmatprep.subr.bf16.mxu0 0
    %3049 = vmatpush2.bf16.msra.mxu0 0
    %3050 = vmatprep.subr.bf16.mxu0 0
    %3051 = vmatpush2.bf16.msra.mxu0 0
    %3052 = vmatprep.subr.bf16.mxu0 0
    %3053 = vmatpush2.bf16.msra.mxu0 0
    %3054 = vmatprep.subr.bf16.mxu0 0
    %3055 = vmatpush2.bf16.msra.mxu0 0
    %3056 = vmatprep.subr.bf16.mxu0 0
    %3057 = vmatpush2.bf16.msra.mxu0 0
    %3058 = vmatprep.subr.bf16.mxu0 0
    %3059 = vmatpush2.bf16.msra.mxu0 0
    %3060 = vmatprep.subr.bf16.mxu0 0
    %3061 = vmatpush2.bf16.msra.mxu0 0
    %3062 = vmatprep.subr.bf16.mxu0 0
    %3063 = vmatpush2.bf16.msra.mxu0 0
    %3064 = vmatprep.mubr.bf16.mxu0 0
    %3065 = vmatmul.mubr.bf16.gmra.mxu0 %v2907
    %v3066 = vpop.f32.mrf.mxu0
    %v3067 = vadd.f32 %v3026, %v3066
    %v3068 = vpop.f32.mrf.mxu0
    %v3069 = vadd.f32 %v3028, %v3068
    %v3070 = vpop.f32.mrf.mxu0
    %v3071 = vpop.f32.mrf.mxu0
    %3072 = vdwg.mxu0
    %3073 = vmatprep.subr.bf16.mxu0 %v2089
    %3074 = vmatpush1.bf16.msra.mxu0 %v2088
    %3075 = vmatprep.subr.bf16.mxu0 %v2080
    %3076 = vmatpush1.bf16.msra.mxu0 %v2079
    %3077 = vmatprep.subr.bf16.mxu0 %v2071
    %3078 = vmatpush1.bf16.msra.mxu0 %v2070
    %3079 = vmatprep.subr.bf16.mxu0 %v2062
    %3080 = vmatpush1.bf16.msra.mxu0 %v2061
    %3081 = vmatprep.subr.bf16.mxu0 %v2053
    %3082 = vmatpush1.bf16.msra.mxu0 %v2052
    %3083 = vmatprep.subr.bf16.mxu0 %v2044
    %3084 = vmatpush1.bf16.msra.mxu0 %v2043
    %3085 = vmatprep.subr.bf16.mxu0 %v2035
    %3086 = vmatpush1.bf16.msra.mxu0 %v2034
    %3087 = vmatprep.subr.bf16.mxu0 %v2026
    %3088 = vmatpush1.bf16.msra.mxu0 %v2025
    %3089 = vmatprep.subr.bf16.mxu0 %v2161
    %3090 = vmatpush2.bf16.msra.mxu0 %v2160
    %3091 = vmatprep.subr.bf16.mxu0 %v2152
    %3092 = vmatpush2.bf16.msra.mxu0 %v2151
    %3093 = vmatprep.subr.bf16.mxu0 %v2143
    %3094 = vmatpush2.bf16.msra.mxu0 %v2142
    %3095 = vmatprep.subr.bf16.mxu0 %v2134
    %3096 = vmatpush2.bf16.msra.mxu0 %v2133
    %3097 = vmatprep.subr.bf16.mxu0 %v2125
    %3098 = vmatpush2.bf16.msra.mxu0 %v2124
    %3099 = vmatprep.subr.bf16.mxu0 %v2116
    %3100 = vmatpush2.bf16.msra.mxu0 %v2115
    %3101 = vmatprep.subr.bf16.mxu0 %v2107
    %3102 = vmatpush2.bf16.msra.mxu0 %v2106
    %3103 = vmatprep.subr.bf16.mxu0 %v2098
    %3104 = vmatpush2.bf16.msra.mxu0 %v2097
    %3105 = vmatprep.mubr.bf16.mxu0 %v108
    %3106 = vmatmul.mubr.bf16.gmra.mxu0 %v107
    %v3107 = vpop.f32.mrf.mxu0
    %v3108 = vadd.f32 %v617, %v3107
    %v3109 = vpop.f32.mrf.mxu0
    %v3110 = vadd.f32 %v621, %v3109
    %v3111 = vpop.f32.mrf.mxu0
    %v3112 = vpop.f32.mrf.mxu0
    %3113 = vdwg.mxu0
    %3114 = vmatprep.subr.bf16.mxu0 %v2233
    %3115 = vmatpush1.bf16.msra.mxu0 %v2232
    %3116 = vmatprep.subr.bf16.mxu0 %v2224
    %3117 = vmatpush1.bf16.msra.mxu0 %v2223
    %3118 = vmatprep.subr.bf16.mxu0 %v2215
    %3119 = vmatpush1.bf16.msra.mxu0 %v2214
    %3120 = vmatprep.subr.bf16.mxu0 %v2206
    %3121 = vmatpush1.bf16.msra.mxu0 %v2205
    %3122 = vmatprep.subr.bf16.mxu0 %v2197
    %3123 = vmatpush1.bf16.msra.mxu0 %v2196
    %3124 = vmatprep.subr.bf16.mxu0 %v2188
    %3125 = vmatpush1.bf16.msra.mxu0 %v2187
    %3126 = vmatprep.subr.bf16.mxu0 %v2179
    %3127 = vmatpush1.bf16.msra.mxu0 %v2178
    %3128 = vmatprep.subr.bf16.mxu0 %v2170
    %3129 = vmatpush1.bf16.msra.mxu0 %v2169
    %3130 = vmatprep.subr.bf16.mxu0 %v2305
    %3131 = vmatpush2.bf16.msra.mxu0 %v2304
    %3132 = vmatprep.subr.bf16.mxu0 %v2296
    %3133 = vmatpush2.bf16.msra.mxu0 %v2295
    %3134 = vmatprep.subr.bf16.mxu0 %v2287
    %3135 = vmatpush2.bf16.msra.mxu0 %v2286
    %3136 = vmatprep.subr.bf16.mxu0 %v2278
    %3137 = vmatpush2.bf16.msra.mxu0 %v2277
    %3138 = vmatprep.subr.bf16.mxu0 %v2269
    %3139 = vmatpush2.bf16.msra.mxu0 %v2268
    %3140 = vmatprep.subr.bf16.mxu0 %v2260
    %3141 = vmatpush2.bf16.msra.mxu0 %v2259
    %3142 = vmatprep.subr.bf16.mxu0 %v2251
    %3143 = vmatpush2.bf16.msra.mxu0 %v2250
    %3144 = vmatprep.subr.bf16.mxu0 %v2242
    %3145 = vmatpush2.bf16.msra.mxu0 %v2241
    %3146 = vmatprep.mubr.bf16.mxu0 %v110
    %3147 = vmatmul.mubr.bf16.gmra.mxu0 %v109
    %v3148 = vpop.f32.mrf.mxu0
    %v3149 = vadd.f32 %v3108, %v3148
    %v3150 = vpop.f32.mrf.mxu0
    %v3151 = vadd.f32 %v3110, %v3150
    %v3152 = vpop.f32.mrf.mxu0
    %v3153 = vpop.f32.mrf.mxu0
    %3154 = vdwg.mxu0
    %3155 = vmatprep.subr.bf16.mxu0 %v2377
    %3156 = vmatpush1.bf16.msra.mxu0 %v2376
    %3157 = vmatprep.subr.bf16.mxu0 %v2368
    %3158 = vmatpush1.bf16.msra.mxu0 %v2367
    %3159 = vmatprep.subr.bf16.mxu0 %v2359
    %3160 = vmatpush1.bf16.msra.mxu0 %v2358
    %3161 = vmatprep.subr.bf16.mxu0 %v2350
    %3162 = vmatpush1.bf16.msra.mxu0 %v2349
    %3163 = vmatprep.subr.bf16.mxu0 %v2341
    %3164 = vmatpush1.bf16.msra.mxu0 %v2340
    %3165 = vmatprep.subr.bf16.mxu0 %v2332
    %3166 = vmatpush1.bf16.msra.mxu0 %v2331
    %3167 = vmatprep.subr.bf16.mxu0 %v2323
    %3168 = vmatpush1.bf16.msra.mxu0 %v2322
    %3169 = vmatprep.subr.bf16.mxu0 %v2314
    %3170 = vmatpush1.bf16.msra.mxu0 %v2313
    %3171 = vmatprep.subr.bf16.mxu0 %v2449
    %3172 = vmatpush2.bf16.msra.mxu0 %v2448
    %3173 = vmatprep.subr.bf16.mxu0 %v2440
    %3174 = vmatpush2.bf16.msra.mxu0 %v2439
    %3175 = vmatprep.subr.bf16.mxu0 %v2431
    %3176 = vmatpush2.bf16.msra.mxu0 %v2430
    %3177 = vmatprep.subr.bf16.mxu0 %v2422
    %3178 = vmatpush2.bf16.msra.mxu0 %v2421
    %3179 = vmatprep.subr.bf16.mxu0 %v2413
    %3180 = vmatpush2.bf16.msra.mxu0 %v2412
    %3181 = vmatprep.subr.bf16.mxu0 %v2404
    %3182 = vmatpush2.bf16.msra.mxu0 %v2403
    %3183 = vmatprep.subr.bf16.mxu0 %v2395
    %3184 = vmatpush2.bf16.msra.mxu0 %v2394
    %3185 = vmatprep.subr.bf16.mxu0 %v2386
    %3186 = vmatpush2.bf16.msra.mxu0 %v2385
    %3187 = vmatprep.mubr.bf16.mxu0 %v112
    %3188 = vmatmul.mubr.bf16.gmra.mxu0 %v111
    %v3189 = vpop.f32.mrf.mxu0
    %v3190 = vadd.f32 %v3149, %v3189
    %v3191 = vpop.f32.mrf.mxu0
    %v3192 = vadd.f32 %v3151, %v3191
    %v3193 = vpop.f32.mrf.mxu0
    %v3194 = vpop.f32.mrf.mxu0
    %3195 = vdwg.mxu0
    %3196 = vmatprep.subr.bf16.mxu0 0
    %3197 = vmatpush1.bf16.msra.mxu0 0
    %3198 = vmatprep.subr.bf16.mxu0 0
    %3199 = vmatpush1.bf16.msra.mxu0 0
    %3200 = vmatprep.subr.bf16.mxu0 0
    %3201 = vmatpush1.bf16.msra.mxu0 0
    %3202 = vmatprep.subr.bf16.mxu0 0
    %3203 = vmatpush1.bf16.msra.mxu0 0
    %3204 = vmatprep.subr.bf16.mxu0 0
    %3205 = vmatpush1.bf16.msra.mxu0 0
    %3206 = vmatprep.subr.bf16.mxu0 0
    %3207 = vmatpush1.bf16.msra.mxu0 0
    %3208 = vmatprep.subr.bf16.mxu0 0
    %3209 = vmatpush1.bf16.msra.mxu0 0
    %3210 = vmatprep.subr.bf16.mxu0 %v2458
    %3211 = vmatpush1.bf16.msra.mxu0 %v2457
    %3212 = vmatprep.subr.bf16.mxu0 0
    %3213 = vmatpush2.bf16.msra.mxu0 0
    %3214 = vmatprep.subr.bf16.mxu0 0
    %3215 = vmatpush2.bf16.msra.mxu0 0
    %3216 = vmatprep.subr.bf16.mxu0 0
    %3217 = vmatpush2.bf16.msra.mxu0 0
    %3218 = vmatprep.subr.bf16.mxu0 0
    %3219 = vmatpush2.bf16.msra.mxu0 0
    %3220 = vmatprep.subr.bf16.mxu0 0
    %3221 = vmatpush2.bf16.msra.mxu0 0
    %3222 = vmatprep.subr.bf16.mxu0 0
    %3223 = vmatpush2.bf16.msra.mxu0 0
    %3224 = vmatprep.subr.bf16.mxu0 0
    %3225 = vmatpush2.bf16.msra.mxu0 0
    %3226 = vmatprep.subr.bf16.mxu0 0
    %3227 = vmatpush2.bf16.msra.mxu0 0
    %3228 = vmatprep.mubr.bf16.mxu0 0
    %3229 = vmatmul.mubr.bf16.gmra.mxu0 %v2907
    %v3230 = vpop.f32.mrf.mxu0
    %v3231 = vadd.f32 %v3190, %v3230
    %v3232 = vpop.f32.mrf.mxu0
    %v3233 = vadd.f32 %v3192, %v3232
    %v3234 = vpop.f32.mrf.mxu0
    %v3235 = vpop.f32.mrf.mxu0
    %3236 = vdwg.mxu0
    %3237 = vmatprep.subr.bf16.mxu0 %v2091
    %3238 = vmatpush1.bf16.msra.mxu0 %v2090
    %3239 = vmatprep.subr.bf16.mxu0 %v2082
    %3240 = vmatpush1.bf16.msra.mxu0 %v2081
    %3241 = vmatprep.subr.bf16.mxu0 %v2073
    %3242 = vmatpush1.bf16.msra.mxu0 %v2072
    %3243 = vmatprep.subr.bf16.mxu0 %v2064
    %3244 = vmatpush1.bf16.msra.mxu0 %v2063
    %3245 = vmatprep.subr.bf16.mxu0 %v2055
    %3246 = vmatpush1.bf16.msra.mxu0 %v2054
    %3247 = vmatprep.subr.bf16.mxu0 %v2046
    %3248 = vmatpush1.bf16.msra.mxu0 %v2045
    %3249 = vmatprep.subr.bf16.mxu0 %v2037
    %3250 = vmatpush1.bf16.msra.mxu0 %v2036
    %3251 = vmatprep.subr.bf16.mxu0 %v2028
    %3252 = vmatpush1.bf16.msra.mxu0 %v2027
    %3253 = vmatprep.subr.bf16.mxu0 %v2163
    %3254 = vmatpush2.bf16.msra.mxu0 %v2162
    %3255 = vmatprep.subr.bf16.mxu0 %v2154
    %3256 = vmatpush2.bf16.msra.mxu0 %v2153
    %3257 = vmatprep.subr.bf16.mxu0 %v2145
    %3258 = vmatpush2.bf16.msra.mxu0 %v2144
    %3259 = vmatprep.subr.bf16.mxu0 %v2136
    %3260 = vmatpush2.bf16.msra.mxu0 %v2135
    %3261 = vmatprep.subr.bf16.mxu0 %v2127
    %3262 = vmatpush2.bf16.msra.mxu0 %v2126
    %3263 = vmatprep.subr.bf16.mxu0 %v2118
    %3264 = vmatpush2.bf16.msra.mxu0 %v2117
    %3265 = vmatprep.subr.bf16.mxu0 %v2109
    %3266 = vmatpush2.bf16.msra.mxu0 %v2108
    %3267 = vmatprep.subr.bf16.mxu0 %v2100
    %3268 = vmatpush2.bf16.msra.mxu0 %v2099
    %3269 = vmatprep.mubr.bf16.mxu0 %v108
    %3270 = vmatmul.mubr.bf16.gmra.mxu0 %v107
    %v3271 = vpop.f32.mrf.mxu0
    %v3272 = vadd.f32 %v625, %v3271
    %v3273 = vpop.f32.mrf.mxu0
    %v3274 = vadd.f32 %v629, %v3273
    %v3275 = vpop.f32.mrf.mxu0
    %v3276 = vpop.f32.mrf.mxu0
    %3277 = vdwg.mxu0
    %3278 = vmatprep.subr.bf16.mxu0 %v2235
    %3279 = vmatpush1.bf16.msra.mxu0 %v2234
    %3280 = vmatprep.subr.bf16.mxu0 %v2226
    %3281 = vmatpush1.bf16.msra.mxu0 %v2225
    %3282 = vmatprep.subr.bf16.mxu0 %v2217
    %3283 = vmatpush1.bf16.msra.mxu0 %v2216
    %3284 = vmatprep.subr.bf16.mxu0 %v2208
    %3285 = vmatpush1.bf16.msra.mxu0 %v2207
    %3286 = vmatprep.subr.bf16.mxu0 %v2199
    %3287 = vmatpush1.bf16.msra.mxu0 %v2198
    %3288 = vmatprep.subr.bf16.mxu0 %v2190
    %3289 = vmatpush1.bf16.msra.mxu0 %v2189
    %3290 = vmatprep.subr.bf16.mxu0 %v2181
    %3291 = vmatpush1.bf16.msra.mxu0 %v2180
    %3292 = vmatprep.subr.bf16.mxu0 %v2172
    %3293 = vmatpush1.bf16.msra.mxu0 %v2171
    %3294 = vmatprep.subr.bf16.mxu0 %v2307
    %3295 = vmatpush2.bf16.msra.mxu0 %v2306
    %3296 = vmatprep.subr.bf16.mxu0 %v2298
    %3297 = vmatpush2.bf16.msra.mxu0 %v2297
    %3298 = vmatprep.subr.bf16.mxu0 %v2289
    %3299 = vmatpush2.bf16.msra.mxu0 %v2288
    %3300 = vmatprep.subr.bf16.mxu0 %v2280
    %3301 = vmatpush2.bf16.msra.mxu0 %v2279
    %3302 = vmatprep.subr.bf16.mxu0 %v2271
    %3303 = vmatpush2.bf16.msra.mxu0 %v2270
    %3304 = vmatprep.subr.bf16.mxu0 %v2262
    %3305 = vmatpush2.bf16.msra.mxu0 %v2261
    %3306 = vmatprep.subr.bf16.mxu0 %v2253
    %3307 = vmatpush2.bf16.msra.mxu0 %v2252
    %3308 = vmatprep.subr.bf16.mxu0 %v2244
    %3309 = vmatpush2.bf16.msra.mxu0 %v2243
    %3310 = vmatprep.mubr.bf16.mxu0 %v110
    %3311 = vmatmul.mubr.bf16.gmra.mxu0 %v109
    %v3312 = vpop.f32.mrf.mxu0
    %v3313 = vadd.f32 %v3272, %v3312
    %v3314 = vpop.f32.mrf.mxu0
    %v3315 = vadd.f32 %v3274, %v3314
    %v3316 = vpop.f32.mrf.mxu0
    %v3317 = vpop.f32.mrf.mxu0
    %3318 = vdwg.mxu0
    %3319 = vmatprep.subr.bf16.mxu0 %v2379
    %3320 = vmatpush1.bf16.msra.mxu0 %v2378
    %3321 = vmatprep.subr.bf16.mxu0 %v2370
    %3322 = vmatpush1.bf16.msra.mxu0 %v2369
    %3323 = vmatprep.subr.bf16.mxu0 %v2361
    %3324 = vmatpush1.bf16.msra.mxu0 %v2360
    %3325 = vmatprep.subr.bf16.mxu0 %v2352
    %3326 = vmatpush1.bf16.msra.mxu0 %v2351
    %3327 = vmatprep.subr.bf16.mxu0 %v2343
    %3328 = vmatpush1.bf16.msra.mxu0 %v2342
    %3329 = vmatprep.subr.bf16.mxu0 %v2334
    %3330 = vmatpush1.bf16.msra.mxu0 %v2333
    %3331 = vmatprep.subr.bf16.mxu0 %v2325
    %3332 = vmatpush1.bf16.msra.mxu0 %v2324
    %3333 = vmatprep.subr.bf16.mxu0 %v2316
    %3334 = vmatpush1.bf16.msra.mxu0 %v2315
    %3335 = vmatprep.subr.bf16.mxu0 %v2451
    %3336 = vmatpush2.bf16.msra.mxu0 %v2450
    %3337 = vmatprep.subr.bf16.mxu0 %v2442
    %3338 = vmatpush2.bf16.msra.mxu0 %v2441
    %3339 = vmatprep.subr.bf16.mxu0 %v2433
    %3340 = vmatpush2.bf16.msra.mxu0 %v2432
    %3341 = vmatprep.subr.bf16.mxu0 %v2424
    %3342 = vmatpush2.bf16.msra.mxu0 %v2423
    %3343 = vmatprep.subr.bf16.mxu0 %v2415
    %3344 = vmatpush2.bf16.msra.mxu0 %v2414
    %3345 = vmatprep.subr.bf16.mxu0 %v2406
    %3346 = vmatpush2.bf16.msra.mxu0 %v2405
    %3347 = vmatprep.subr.bf16.mxu0 %v2397
    %3348 = vmatpush2.bf16.msra.mxu0 %v2396
    %3349 = vmatprep.subr.bf16.mxu0 %v2388
    %3350 = vmatpush2.bf16.msra.mxu0 %v2387
    %3351 = vmatprep.mubr.bf16.mxu0 %v112
    %3352 = vmatmul.mubr.bf16.gmra.mxu0 %v111
    %v3353 = vpop.f32.mrf.mxu0
    %v3354 = vadd.f32 %v3313, %v3353
    %v3355 = vpop.f32.mrf.mxu0
    %v3356 = vadd.f32 %v3315, %v3355
    %v3357 = vpop.f32.mrf.mxu0
    %v3358 = vpop.f32.mrf.mxu0
    %3359 = vdwg.mxu0
    %3360 = vmatprep.subr.bf16.mxu0 0
    %3361 = vmatpush1.bf16.msra.mxu0 0
    %3362 = vmatprep.subr.bf16.mxu0 0
    %3363 = vmatpush1.bf16.msra.mxu0 0
    %3364 = vmatprep.subr.bf16.mxu0 0
    %3365 = vmatpush1.bf16.msra.mxu0 0
    %3366 = vmatprep.subr.bf16.mxu0 0
    %3367 = vmatpush1.bf16.msra.mxu0 0
    %3368 = vmatprep.subr.bf16.mxu0 0
    %3369 = vmatpush1.bf16.msra.mxu0 0
    %3370 = vmatprep.subr.bf16.mxu0 0
    %3371 = vmatpush1.bf16.msra.mxu0 0
    %3372 = vmatprep.subr.bf16.mxu0 0
    %3373 = vmatpush1.bf16.msra.mxu0 0
    %3374 = vmatprep.subr.bf16.mxu0 %v2460
    %3375 = vmatpush1.bf16.msra.mxu0 %v2459
    %3376 = vmatprep.subr.bf16.mxu0 0
    %3377 = vmatpush2.bf16.msra.mxu0 0
    %3378 = vmatprep.subr.bf16.mxu0 0
    %3379 = vmatpush2.bf16.msra.mxu0 0
    %3380 = vmatprep.subr.bf16.mxu0 0
    %3381 = vmatpush2.bf16.msra.mxu0 0
    %3382 = vmatprep.subr.bf16.mxu0 0
    %3383 = vmatpush2.bf16.msra.mxu0 0
    %3384 = vmatprep.subr.bf16.mxu0 0
    %3385 = vmatpush2.bf16.msra.mxu0 0
    %3386 = vmatprep.subr.bf16.mxu0 0
    %3387 = vmatpush2.bf16.msra.mxu0 0
    %3388 = vmatprep.subr.bf16.mxu0 0
    %3389 = vmatpush2.bf16.msra.mxu0 0
    %3390 = vmatprep.subr.bf16.mxu0 0
    %3391 = vmatpush2.bf16.msra.mxu0 0
    %3392 = vmatprep.mubr.bf16.mxu0 0
    %3393 = vmatmul.mubr.bf16.gmra.mxu0 %v2907
    %v3394 = vpop.f32.mrf.mxu0
    %v3395 = vadd.f32 %v3354, %v3394
    %v3396 = vpop.f32.mrf.mxu0
    %v3397 = vadd.f32 %v3356, %v3396
    %v3398 = vpop.f32.mrf.mxu0
    %v3399 = vpop.f32.mrf.mxu0
    %3400 = vdwg.mxu0
    %3401 = vmatprep.subr.bf16.mxu0 %v2093
    %3402 = vmatpush1.bf16.msra.mxu0 %v2092
    %3403 = vmatprep.subr.bf16.mxu0 %v2084
    %3404 = vmatpush1.bf16.msra.mxu0 %v2083
    %3405 = vmatprep.subr.bf16.mxu0 %v2075
    %3406 = vmatpush1.bf16.msra.mxu0 %v2074
    %3407 = vmatprep.subr.bf16.mxu0 %v2066
    %3408 = vmatpush1.bf16.msra.mxu0 %v2065
    %3409 = vmatprep.subr.bf16.mxu0 %v2057
    %3410 = vmatpush1.bf16.msra.mxu0 %v2056
    %3411 = vmatprep.subr.bf16.mxu0 %v2048
    %3412 = vmatpush1.bf16.msra.mxu0 %v2047
    %3413 = vmatprep.subr.bf16.mxu0 %v2039
    %3414 = vmatpush1.bf16.msra.mxu0 %v2038
    %3415 = vmatprep.subr.bf16.mxu0 %v2030
    %3416 = vmatpush1.bf16.msra.mxu0 %v2029
    %3417 = vmatprep.subr.bf16.mxu0 %v2165
    %3418 = vmatpush2.bf16.msra.mxu0 %v2164
    %3419 = vmatprep.subr.bf16.mxu0 %v2156
    %3420 = vmatpush2.bf16.msra.mxu0 %v2155
    %3421 = vmatprep.subr.bf16.mxu0 %v2147
    %3422 = vmatpush2.bf16.msra.mxu0 %v2146
    %3423 = vmatprep.subr.bf16.mxu0 %v2138
    %3424 = vmatpush2.bf16.msra.mxu0 %v2137
    %3425 = vmatprep.subr.bf16.mxu0 %v2129
    %3426 = vmatpush2.bf16.msra.mxu0 %v2128
    %3427 = vmatprep.subr.bf16.mxu0 %v2120
    %3428 = vmatpush2.bf16.msra.mxu0 %v2119
    %3429 = vmatprep.subr.bf16.mxu0 %v2111
    %3430 = vmatpush2.bf16.msra.mxu0 %v2110
    %3431 = vmatprep.subr.bf16.mxu0 %v2102
    %3432 = vmatpush2.bf16.msra.mxu0 %v2101
    %3433 = vmatprep.mubr.bf16.mxu0 %v108
    %3434 = vmatmul.mubr.bf16.gmra.mxu0 %v107
    %v3435 = vpop.f32.mrf.mxu0
    %v3436 = vadd.f32 %v633, %v3435
    %v3437 = vpop.f32.mrf.mxu0
    %v3438 = vadd.f32 %v637, %v3437
    %v3439 = vpop.f32.mrf.mxu0
    %v3440 = vpop.f32.mrf.mxu0
    %3441 = vdwg.mxu0
    %3442 = vmatprep.subr.bf16.mxu0 %v2237
    %3443 = vmatpush1.bf16.msra.mxu0 %v2236
    %3444 = vmatprep.subr.bf16.mxu0 %v2228
    %3445 = vmatpush1.bf16.msra.mxu0 %v2227
    %3446 = vmatprep.subr.bf16.mxu0 %v2219
    %3447 = vmatpush1.bf16.msra.mxu0 %v2218
    %3448 = vmatprep.subr.bf16.mxu0 %v2210
    %3449 = vmatpush1.bf16.msra.mxu0 %v2209
    %3450 = vmatprep.subr.bf16.mxu0 %v2201
    %3451 = vmatpush1.bf16.msra.mxu0 %v2200
    %3452 = vmatprep.subr.bf16.mxu0 %v2192
    %3453 = vmatpush1.bf16.msra.mxu0 %v2191
    %3454 = vmatprep.subr.bf16.mxu0 %v2183
    %3455 = vmatpush1.bf16.msra.mxu0 %v2182
    %3456 = vmatprep.subr.bf16.mxu0 %v2174
    %3457 = vmatpush1.bf16.msra.mxu0 %v2173
    %3458 = vmatprep.subr.bf16.mxu0 %v2309
    %3459 = vmatpush2.bf16.msra.mxu0 %v2308
    %3460 = vmatprep.subr.bf16.mxu0 %v2300
    %3461 = vmatpush2.bf16.msra.mxu0 %v2299
    %3462 = vmatprep.subr.bf16.mxu0 %v2291
    %3463 = vmatpush2.bf16.msra.mxu0 %v2290
    %3464 = vmatprep.subr.bf16.mxu0 %v2282
    %3465 = vmatpush2.bf16.msra.mxu0 %v2281
    %3466 = vmatprep.subr.bf16.mxu0 %v2273
    %3467 = vmatpush2.bf16.msra.mxu0 %v2272
    %3468 = vmatprep.subr.bf16.mxu0 %v2264
    %3469 = vmatpush2.bf16.msra.mxu0 %v2263
    %3470 = vmatprep.subr.bf16.mxu0 %v2255
    %3471 = vmatpush2.bf16.msra.mxu0 %v2254
    %3472 = vmatprep.subr.bf16.mxu0 %v2246
    %3473 = vmatpush2.bf16.msra.mxu0 %v2245
    %3474 = vmatprep.mubr.bf16.mxu0 %v110
    %3475 = vmatmul.mubr.bf16.gmra.mxu0 %v109
    %v3476 = vpop.f32.mrf.mxu0
    %v3477 = vadd.f32 %v3436, %v3476
    %v3478 = vpop.f32.mrf.mxu0
    %v3479 = vadd.f32 %v3438, %v3478
    %v3480 = vpop.f32.mrf.mxu0
    %v3481 = vpop.f32.mrf.mxu0
    %3482 = vdwg.mxu0
    %3483 = vmatprep.subr.bf16.mxu0 %v2381
    %3484 = vmatpush1.bf16.msra.mxu0 %v2380
    %3485 = vmatprep.subr.bf16.mxu0 %v2372
    %3486 = vmatpush1.bf16.msra.mxu0 %v2371
    %3487 = vmatprep.subr.bf16.mxu0 %v2363
    %3488 = vmatpush1.bf16.msra.mxu0 %v2362
    %3489 = vmatprep.subr.bf16.mxu0 %v2354
    %3490 = vmatpush1.bf16.msra.mxu0 %v2353
    %3491 = vmatprep.subr.bf16.mxu0 %v2345
    %3492 = vmatpush1.bf16.msra.mxu0 %v2344
    %3493 = vmatprep.subr.bf16.mxu0 %v2336
    %3494 = vmatpush1.bf16.msra.mxu0 %v2335
    %3495 = vmatprep.subr.bf16.mxu0 %v2327
    %3496 = vmatpush1.bf16.msra.mxu0 %v2326
    %3497 = vmatprep.subr.bf16.mxu0 %v2318
    %3498 = vmatpush1.bf16.msra.mxu0 %v2317
    %3499 = vmatprep.subr.bf16.mxu0 %v2453
    %3500 = vmatpush2.bf16.msra.mxu0 %v2452
    %3501 = vmatprep.subr.bf16.mxu0 %v2444
    %3502 = vmatpush2.bf16.msra.mxu0 %v2443
    %3503 = vmatprep.subr.bf16.mxu0 %v2435
    %3504 = vmatpush2.bf16.msra.mxu0 %v2434
    %3505 = vmatprep.subr.bf16.mxu0 %v2426
    %3506 = vmatpush2.bf16.msra.mxu0 %v2425
    %3507 = vmatprep.subr.bf16.mxu0 %v2417
    %3508 = vmatpush2.bf16.msra.mxu0 %v2416
    %3509 = vmatprep.subr.bf16.mxu0 %v2408
    %3510 = vmatpush2.bf16.msra.mxu0 %v2407
    %3511 = vmatprep.subr.bf16.mxu0 %v2399
    %3512 = vmatpush2.bf16.msra.mxu0 %v2398
    %3513 = vmatprep.subr.bf16.mxu0 %v2390
    %3514 = vmatpush2.bf16.msra.mxu0 %v2389
    %3515 = vmatprep.mubr.bf16.mxu0 %v112
    %3516 = vmatmul.mubr.bf16.gmra.mxu0 %v111
    %v3517 = vpop.f32.mrf.mxu0
    %v3518 = vadd.f32 %v3477, %v3517
    %v3519 = vpop.f32.mrf.mxu0
    %v3520 = vadd.f32 %v3479, %v3519
    %v3521 = vpop.f32.mrf.mxu0
    %v3522 = vpop.f32.mrf.mxu0
    %3523 = vdwg.mxu0
    %3524 = vmatprep.subr.bf16.mxu0 0
    %3525 = vmatpush1.bf16.msra.mxu0 0
    %3526 = vmatprep.subr.bf16.mxu0 0
    %3527 = vmatpush1.bf16.msra.mxu0 0
    %3528 = vmatprep.subr.bf16.mxu0 0
    %3529 = vmatpush1.bf16.msra.mxu0 0
    %3530 = vmatprep.subr.bf16.mxu0 0
    %3531 = vmatpush1.bf16.msra.mxu0 0
    %3532 = vmatprep.subr.bf16.mxu0 0
    %3533 = vmatpush1.bf16.msra.mxu0 0
    %3534 = vmatprep.subr.bf16.mxu0 0
    %3535 = vmatpush1.bf16.msra.mxu0 0
    %3536 = vmatprep.subr.bf16.mxu0 0
    %3537 = vmatpush1.bf16.msra.mxu0 0
    %3538 = vmatprep.subr.bf16.mxu0 %v2462
    %3539 = vmatpush1.bf16.msra.mxu0 %v2461
    %3540 = vmatprep.subr.bf16.mxu0 0
    %3541 = vmatpush2.bf16.msra.mxu0 0
    %3542 = vmatprep.subr.bf16.mxu0 0
    %3543 = vmatpush2.bf16.msra.mxu0 0
    %3544 = vmatprep.subr.bf16.mxu0 0
    %3545 = vmatpush2.bf16.msra.mxu0 0
    %3546 = vmatprep.subr.bf16.mxu0 0
    %3547 = vmatpush2.bf16.msra.mxu0 0
    %3548 = vmatprep.subr.bf16.mxu0 0
    %3549 = vmatpush2.bf16.msra.mxu0 0
    %3550 = vmatprep.subr.bf16.mxu0 0
    %3551 = vmatpush2.bf16.msra.mxu0 0
    %3552 = vmatprep.subr.bf16.mxu0 0
    %3553 = vmatpush2.bf16.msra.mxu0 0
    %3554 = vmatprep.subr.bf16.mxu0 0
    %3555 = vmatpush2.bf16.msra.mxu0 0
    %3556 = vmatprep.mubr.bf16.mxu0 0
    %3557 = vmatmul.mubr.bf16.gmra.mxu0 %v2907
    %v3558 = vpop.f32.mrf.mxu0
    %v3559 = vadd.f32 %v3518, %v3558
    %v3560 = vpop.f32.mrf.mxu0
    %v3561 = vadd.f32 %v3520, %v3560
    %v3562 = vpop.f32.mrf.mxu0
    %v3563 = vpop.f32.mrf.mxu0
    %3564 = vdwg.mxu0
    %3565 = vmatprep.subr.bf16.mxu0 0
    %3566 = vmatpush1.bf16.msra.mxu0 %v2094
    %3567 = vmatprep.subr.bf16.mxu0 0
    %3568 = vmatpush1.bf16.msra.mxu0 %v2085
    %3569 = vmatprep.subr.bf16.mxu0 0
    %3570 = vmatpush1.bf16.msra.mxu0 %v2076
    %3571 = vmatprep.subr.bf16.mxu0 0
    %3572 = vmatpush1.bf16.msra.mxu0 %v2067
    %3573 = vmatprep.subr.bf16.mxu0 0
    %3574 = vmatpush1.bf16.msra.mxu0 %v2058
    %3575 = vmatprep.subr.bf16.mxu0 0
    %3576 = vmatpush1.bf16.msra.mxu0 %v2049
    %3577 = vmatprep.subr.bf16.mxu0 0
    %3578 = vmatpush1.bf16.msra.mxu0 %v2040
    %3579 = vmatprep.subr.bf16.mxu0 0
    %3580 = vmatpush1.bf16.msra.mxu0 %v2031
    %3581 = vmatprep.subr.bf16.mxu0 0
    %3582 = vmatpush2.bf16.msra.mxu0 %v2166
    %3583 = vmatprep.subr.bf16.mxu0 0
    %3584 = vmatpush2.bf16.msra.mxu0 %v2157
    %3585 = vmatprep.subr.bf16.mxu0 0
    %3586 = vmatpush2.bf16.msra.mxu0 %v2148
    %3587 = vmatprep.subr.bf16.mxu0 0
    %3588 = vmatpush2.bf16.msra.mxu0 %v2139
    %3589 = vmatprep.subr.bf16.mxu0 0
    %3590 = vmatpush2.bf16.msra.mxu0 %v2130
    %3591 = vmatprep.subr.bf16.mxu0 0
    %3592 = vmatpush2.bf16.msra.mxu0 %v2121
    %3593 = vmatprep.subr.bf16.mxu0 0
    %3594 = vmatpush2.bf16.msra.mxu0 %v2112
    %3595 = vmatprep.subr.bf16.mxu0 0
    %3596 = vmatpush2.bf16.msra.mxu0 %v2103
    %3597 = vmatprep.mubr.bf16.mxu0 %v108
    %3598 = vmatmul.mubr.bf16.gmra.mxu0 %v107
    %v3599 = vpop.f32.mrf.mxu0
    %v3600 = vadd.f32 %v641, %v3599
    %v3601 = vpop.f32.mrf.mxu0
    %v3602 = vpop.f32.mrf.mxu0
    %v3603 = vpop.f32.mrf.mxu0
    %3604 = vdwg.mxu0
    %3605 = vmatprep.subr.bf16.mxu0 0
    %3606 = vmatpush1.bf16.msra.mxu0 %v2238
    %3607 = vmatprep.subr.bf16.mxu0 0
    %3608 = vmatpush1.bf16.msra.mxu0 %v2229
    %3609 = vmatprep.subr.bf16.mxu0 0
    %3610 = vmatpush1.bf16.msra.mxu0 %v2220
    %3611 = vmatprep.subr.bf16.mxu0 0
    %3612 = vmatpush1.bf16.msra.mxu0 %v2211
    %3613 = vmatprep.subr.bf16.mxu0 0
    %3614 = vmatpush1.bf16.msra.mxu0 %v2202
    %3615 = vmatprep.subr.bf16.mxu0 0
    %3616 = vmatpush1.bf16.msra.mxu0 %v2193
    %3617 = vmatprep.subr.bf16.mxu0 0
    %3618 = vmatpush1.bf16.msra.mxu0 %v2184
    %3619 = vmatprep.subr.bf16.mxu0 0
    %3620 = vmatpush1.bf16.msra.mxu0 %v2175
    %3621 = vmatprep.subr.bf16.mxu0 0
    %3622 = vmatpush2.bf16.msra.mxu0 %v2310
    %3623 = vmatprep.subr.bf16.mxu0 0
    %3624 = vmatpush2.bf16.msra.mxu0 %v2301
    %3625 = vmatprep.subr.bf16.mxu0 0
    %3626 = vmatpush2.bf16.msra.mxu0 %v2292
    %3627 = vmatprep.subr.bf16.mxu0 0
    %3628 = vmatpush2.bf16.msra.mxu0 %v2283
    %3629 = vmatprep.subr.bf16.mxu0 0
    %3630 = vmatpush2.bf16.msra.mxu0 %v2274
    %3631 = vmatprep.subr.bf16.mxu0 0
    %3632 = vmatpush2.bf16.msra.mxu0 %v2265
    %3633 = vmatprep.subr.bf16.mxu0 0
    %3634 = vmatpush2.bf16.msra.mxu0 %v2256
    %3635 = vmatprep.subr.bf16.mxu0 0
    %3636 = vmatpush2.bf16.msra.mxu0 %v2247
    %3637 = vmatprep.mubr.bf16.mxu0 %v110
    %3638 = vmatmul.mubr.bf16.gmra.mxu0 %v109
    %v3639 = vpop.f32.mrf.mxu0
    %v3640 = vadd.f32 %v3600, %v3639
    %v3641 = vpop.f32.mrf.mxu0
    %v3642 = vpop.f32.mrf.mxu0
    %v3643 = vpop.f32.mrf.mxu0
    %3644 = vdwg.mxu0
    %3645 = vmatprep.subr.bf16.mxu0 0
    %3646 = vmatpush1.bf16.msra.mxu0 %v2382
    %3647 = vmatprep.subr.bf16.mxu0 0
    %3648 = vmatpush1.bf16.msra.mxu0 %v2373
    %3649 = vmatprep.subr.bf16.mxu0 0
    %3650 = vmatpush1.bf16.msra.mxu0 %v2364
    %3651 = vmatprep.subr.bf16.mxu0 0
    %3652 = vmatpush1.bf16.msra.mxu0 %v2355
    %3653 = vmatprep.subr.bf16.mxu0 0
    %3654 = vmatpush1.bf16.msra.mxu0 %v2346
    %3655 = vmatprep.subr.bf16.mxu0 0
    %3656 = vmatpush1.bf16.msra.mxu0 %v2337
    %3657 = vmatprep.subr.bf16.mxu0 0
    %3658 = vmatpush1.bf16.msra.mxu0 %v2328
    %3659 = vmatprep.subr.bf16.mxu0 0
    %3660 = vmatpush1.bf16.msra.mxu0 %v2319
    %3661 = vmatprep.subr.bf16.mxu0 0
    %3662 = vmatpush2.bf16.msra.mxu0 %v2454
    %3663 = vmatprep.subr.bf16.mxu0 0
    %3664 = vmatpush2.bf16.msra.mxu0 %v2445
    %3665 = vmatprep.subr.bf16.mxu0 0
    %3666 = vmatpush2.bf16.msra.mxu0 %v2436
    %3667 = vmatprep.subr.bf16.mxu0 0
    %3668 = vmatpush2.bf16.msra.mxu0 %v2427
    %3669 = vmatprep.subr.bf16.mxu0 0
    %3670 = vmatpush2.bf16.msra.mxu0 %v2418
    %3671 = vmatprep.subr.bf16.mxu0 0
    %3672 = vmatpush2.bf16.msra.mxu0 %v2409
    %3673 = vmatprep.subr.bf16.mxu0 0
    %3674 = vmatpush2.bf16.msra.mxu0 %v2400
    %3675 = vmatprep.subr.bf16.mxu0 0
    %3676 = vmatpush2.bf16.msra.mxu0 %v2391
    %3677 = vmatprep.mubr.bf16.mxu0 %v112
    %3678 = vmatmul.mubr.bf16.gmra.mxu0 %v111
    %v3679 = vpop.f32.mrf.mxu0
    %v3680 = vadd.f32 %v3640, %v3679
    %v3681 = vpop.f32.mrf.mxu0
    %v3682 = vpop.f32.mrf.mxu0
    %v3683 = vpop.f32.mrf.mxu0
    %3684 = vdwg.mxu0
    %3685 = vmatprep.subr.bf16.mxu0 0
    %3686 = vmatpush1.bf16.msra.mxu0 0
    %3687 = vmatprep.subr.bf16.mxu0 0
    %3688 = vmatpush1.bf16.msra.mxu0 0
    %3689 = vmatprep.subr.bf16.mxu0 0
    %3690 = vmatpush1.bf16.msra.mxu0 0
    %3691 = vmatprep.subr.bf16.mxu0 0
    %3692 = vmatpush1.bf16.msra.mxu0 0
    %3693 = vmatprep.subr.bf16.mxu0 0
    %3694 = vmatpush1.bf16.msra.mxu0 0
    %3695 = vmatprep.subr.bf16.mxu0 0
    %3696 = vmatpush1.bf16.msra.mxu0 0
    %3697 = vmatprep.subr.bf16.mxu0 0
    %3698 = vmatpush1.bf16.msra.mxu0 0
    %3699 = vmatprep.subr.bf16.mxu0 0
    %3700 = vmatpush1.bf16.msra.mxu0 %v2463
    %3701 = vmatprep.subr.bf16.mxu0 0
    %3702 = vmatpush2.bf16.msra.mxu0 0
    %3703 = vmatprep.subr.bf16.mxu0 0
    %3704 = vmatpush2.bf16.msra.mxu0 0
    %3705 = vmatprep.subr.bf16.mxu0 0
    %3706 = vmatpush2.bf16.msra.mxu0 0
    %3707 = vmatprep.subr.bf16.mxu0 0
    %3708 = vmatpush2.bf16.msra.mxu0 0
    %3709 = vmatprep.subr.bf16.mxu0 0
    %3710 = vmatpush2.bf16.msra.mxu0 0
    %3711 = vmatprep.subr.bf16.mxu0 0
    %3712 = vmatpush2.bf16.msra.mxu0 0
    %3713 = vmatprep.subr.bf16.mxu0 0
    %3714 = vmatpush2.bf16.msra.mxu0 0
    %3715 = vmatprep.subr.bf16.mxu0 0
    %3716 = vmatpush2.bf16.msra.mxu0 0
    %3717 = vmatprep.mubr.bf16.mxu0 0
    %3718 = vmatmul.mubr.bf16.gmra.mxu0 %v2907
    %v3719 = vpop.f32.mrf.mxu0
    %v3720 = vadd.f32 %v3680, %v3719
    %v3721 = vpop.f32.mrf.mxu0
    %v3722 = vpop.f32.mrf.mxu0
    %v3723 = vpop.f32.mrf.mxu0
    %3724 = vdwg.mxu0
    %v3725 = vmax.f32 %v3067, 0.0
    %v3726 = vmax.f32 %v3069, 0.0
    %v3727 = vmax.f32 %v3231, 0.0
    %v3728 = vmax.f32 %v3233, 0.0
    %v3729 = vmax.f32 %v3395, 0.0
    %v3730 = vmax.f32 %v3397, 0.0
    %v3731 = vmax.f32 %v3559, 0.0
    %v3732 = vmax.f32 %v3561, 0.0
    %v3733 = vmax.f32 %v3720, 0.0
    %v3734 = vpack.c.bf16 %v3725, %v3725
    %v3735 = vpack.c.bf16 %v3726, %v3726
    %v3736 = vpack.c.bf16 %v3727, %v3727
    %v3737 = vpack.c.bf16 %v3728, %v3728
    %v3738 = vpack.c.bf16 %v3729, %v3729
    %v3739 = vpack.c.bf16 %v3730, %v3730
    %v3740 = vpack.c.bf16 %v3731, %v3731
    %v3741 = vpack.c.bf16 %v3732, %v3732
    %v3742 = vpack.c.bf16 %v3733, %v3733
    %v3743 = vld [vmem:[%s4] sm:$0xff]
    %v3744 = vld [vmem:[%s4 + $0x8] sm:$0xff]
    %v3745 = vld [vmem:[%s4 + $0x10] sm:$0xff]
    %v3746 = vld [vmem:[%s4 + $0x18] sm:$0xff]
    %v3747 = vld [vmem:[%s4 + $0x20] sm:$0xff]
    %v3748 = vld [vmem:[%s4 + $0x28] sm:$0xff]
    %v3749 = vld [vmem:[%s4 + $0x30] sm:$0xff]
    %v3750 = vld [vmem:[%s4 + $0x38] sm:$0xff]
    %v3751 = vld [vmem:[%s4 + $0x40] sm:$0xff]
    %v3752 = vld [vmem:[%s4 + $0x48] sm:$0xff]
    %v3753 = vld [vmem:[%s4 + $0x50] sm:$0xff]
    %v3754 = vld [vmem:[%s4 + $0x58] sm:$0xff]
    %v3755 = vld [vmem:[%s4 + $0x60] sm:$0xff]
    %v3756 = vld [vmem:[%s4 + $0x68] sm:$0xff]
    %v3757 = vld [vmem:[%s4 + $0x70] sm:$0xff]
    %v3758 = vld [vmem:[%s4 + $0x78] sm:$0xff]
    %v3759 = vld [vmem:[%s4 + $0x80] sm:$0xff]
    %v3760 = vld [vmem:[%s4 + $0x88] sm:$0xff]
    %v3761 = vld [vmem:[%s4 + $0x90] sm:$0xff]
    %v3762 = vld [vmem:[%s4 + $0x98] sm:$0xff]
    %v3763 = vld [vmem:[%s4 + $0xa0] sm:$0xff]
    %v3764 = vld [vmem:[%s4 + $0xa8] sm:$0xff]
    %v3765 = vld [vmem:[%s4 + $0xb0] sm:$0xff]
    %v3766 = vld [vmem:[%s4 + $0xb8] sm:$0xff]
    %v3767 = vld [vmem:[%s4 + $0xc0] sm:$0xff]
    %v3768 = vld [vmem:[%s4 + $0xc8] sm:$0xff]
    %v3769 = vld [vmem:[%s4 + $0xd0] sm:$0xff]
    %v3770 = vld [vmem:[%s4 + $0xd8] sm:$0xff]
    %v3771 = vld [vmem:[%s4 + $0xe0] sm:$0xff]
    %v3772 = vld [vmem:[%s4 + $0xe8] sm:$0xff]
    %v3773 = vld [vmem:[%s4 + $0xf0] sm:$0xff]
    %v3774 = vld [vmem:[%s4 + $0xf8] sm:$0xff]
    %v3775 = vld [vmem:[%s4 + $0x100] sm:$0xff]
    %v3776 = vld [vmem:[%s4 + $0x108] sm:$0xff]
    %v3777 = vld [vmem:[%s4 + $0x110] sm:$0xff]
    %v3778 = vld [vmem:[%s4 + $0x118] sm:$0xff]
    %v3779 = vld [vmem:[%s4 + $0x120] sm:$0xff]
    %v3780 = vld [vmem:[%s4 + $0x128] sm:$0xff]
    %v3781 = vld [vmem:[%s4 + $0x130] sm:$0xff]
    %v3782 = vld [vmem:[%s4 + $0x138] sm:$0xff]
    %v3783 = vld [vmem:[%s4 + $0x140] sm:$0xff]
    %v3784 = vld [vmem:[%s4 + $0x148] sm:$0xff]
    %v3785 = vld [vmem:[%s4 + $0x150] sm:$0xff]
    %v3786 = vld [vmem:[%s4 + $0x158] sm:$0xff]
    %v3787 = vld [vmem:[%s4 + $0x160] sm:$0xff]
    %v3788 = vld [vmem:[%s4 + $0x168] sm:$0xff]
    %v3789 = vld [vmem:[%s4 + $0x170] sm:$0xff]
    %v3790 = vld [vmem:[%s4 + $0x178] sm:$0xff]
    %v3791 = vld [vmem:[%s4 + $0x180] sm:$0xff]
    %v3792 = vld [vmem:[%s4 + $0x188] sm:$0xff]
    %v3793 = vld [vmem:[%s4 + $0x190] sm:$0xff]
    %v3794 = vld [vmem:[%s4 + $0x198] sm:$0xff]
    %v3795 = vld [vmem:[%s4 + $0x1a0] sm:$0xff]
    %v3796 = vld [vmem:[%s4 + $0x1a8] sm:$0xff]
    %v3797 = vld [vmem:[%s4 + $0x1b0] sm:$0xff]
    %v3798 = vld [vmem:[%s4 + $0x1b8] sm:$0xff]
    %v3799 = vld [vmem:[%s4 + $0x1c0] sm:$0xff]
    %v3800 = vld [vmem:[%s4 + $0x1c8] sm:$0xff]
    %v3801 = vld [vmem:[%s4 + $0x1d0] sm:$0xff]
    %v3802 = vld [vmem:[%s4 + $0x1d8] sm:$0xff]
    %v3803 = vld [vmem:[%s4 + $0x1e0] sm:$0xff]
    %v3804 = vld [vmem:[%s4 + $0x1e8] sm:$0xff]
    %v3805 = vld [vmem:[%s4 + $0x1f0] sm:$0xff]
    %v3806 = vld [vmem:[%s4 + $0x1f8] sm:$0xff]
    %v3807 = vld [vmem:[%s4 + $0x200] sm:$0xff]
    %v3808 = vld [vmem:[%s4 + $0x208] sm:$0xff]
    %v3809 = vld [vmem:[%s4 + $0x210] sm:$0xff]
    %v3810 = vld [vmem:[%s4 + $0x218] sm:$0xff]
    %v3811 = vld [vmem:[%s4 + $0x220] sm:$0xff]
    %v3812 = vld [vmem:[%s4 + $0x228] sm:$0xff]
    %v3813 = vld [vmem:[%s4 + $0x230] sm:$0xff]
    %v3814 = vld [vmem:[%s4 + $0x238] sm:$0xff]
    %v3815 = vld [vmem:[%s4 + $0x240] sm:$0xff]
    %v3816 = vld [vmem:[%s4 + $0x248] sm:$0xff]
    %v3817 = vld [vmem:[%s4 + $0x250] sm:$0xff]
    %v3818 = vld [vmem:[%s4 + $0x258] sm:$0xff]
    %v3819 = vld [vmem:[%s4 + $0x260] sm:$0xff]
    %v3820 = vld [vmem:[%s4 + $0x268] sm:$0xff]
    %v3821 = vld [vmem:[%s4 + $0x270] sm:$0xff]
    %v3822 = vld [vmem:[%s4 + $0x278] sm:$0xff]
    %v3823 = vld [vmem:[%s4 + $0x280] sm:$0xff]
    %v3824 = vld [vmem:[%s4 + $0x288] sm:$0xff]
    %v3825 = vld [vmem:[%s4 + $0x290] sm:$0xff]
    %v3826 = vld [vmem:[%s4 + $0x298] sm:$0xff]
    %v3827 = vld [vmem:[%s4 + $0x2a0] sm:$0xff]
    %v3828 = vld [vmem:[%s4 + $0x2a8] sm:$0xff]
    %v3829 = vld [vmem:[%s4 + $0x2b0] sm:$0xff]
    %v3830 = vld [vmem:[%s4 + $0x2b8] sm:$0xff]
    %v3831 = vld [vmem:[%s4 + $0x2c0] sm:$0xff]
    %v3832 = vld [vmem:[%s4 + $0x2c8] sm:$0xff]
    %v3833 = vld [vmem:[%s4 + $0x2d0] sm:$0xff]
    %v3834 = vld [vmem:[%s4 + $0x2d8] sm:$0xff]
    %v3835 = vld [vmem:[%s4 + $0x2e0] sm:$0xff]
    %v3836 = vld [vmem:[%s4 + $0x2e8] sm:$0xff]
    %v3837 = vld [vmem:[%s4 + $0x2f0] sm:$0xff]
    %v3838 = vld [vmem:[%s4 + $0x2f8] sm:$0xff]
    %v3839 = vld [vmem:[%s4 + $0x300] sm:$0xff]
    %v3840 = vld [vmem:[%s4 + $0x308] sm:$0xff]
    %v3841 = vld [vmem:[%s4 + $0x310] sm:$0xff]
    %v3842 = vld [vmem:[%s4 + $0x318] sm:$0xff]
    %v3843 = vld [vmem:[%s4 + $0x320] sm:$0xff]
    %v3844 = vld [vmem:[%s4 + $0x328] sm:$0xff]
    %v3845 = vld [vmem:[%s4 + $0x330] sm:$0xff]
    %v3846 = vld [vmem:[%s4 + $0x338] sm:$0xff]
    %v3847 = vld [vmem:[%s4 + $0x340] sm:$0xff]
    %v3848 = vld [vmem:[%s4 + $0x348] sm:$0xff]
    %v3849 = vld [vmem:[%s4 + $0x350] sm:$0xff]
    %v3850 = vld [vmem:[%s4 + $0x358] sm:$0xff]
    %v3851 = vld [vmem:[%s4 + $0x360] sm:$0xff]
    %v3852 = vld [vmem:[%s4 + $0x368] sm:$0xff]
    %v3853 = vld [vmem:[%s4 + $0x370] sm:$0xff]
    %v3854 = vld [vmem:[%s4 + $0x378] sm:$0xff]
    %v3855 = vld [vmem:[%s4 + $0x380] sm:$0xff]
    %v3856 = vld [vmem:[%s4 + $0x388] sm:$0xff]
    %v3857 = vld [vmem:[%s4 + $0x390] sm:$0xff]
    %v3858 = vld [vmem:[%s4 + $0x398] sm:$0xff]
    %v3859 = vld [vmem:[%s4 + $0x3a0] sm:$0xff]
    %v3860 = vld [vmem:[%s4 + $0x3a8] sm:$0xff]
    %v3861 = vld [vmem:[%s4 + $0x3b0] sm:$0xff]
    %v3862 = vld [vmem:[%s4 + $0x3b8] sm:$0xff]
    %v3863 = vld [vmem:[%s4 + $0x3c0] sm:$0xff]
    %v3864 = vld [vmem:[%s4 + $0x3c8] sm:$0xff]
    %v3865 = vld [vmem:[%s4 + $0x3d0] sm:$0xff]
    %v3866 = vld [vmem:[%s4 + $0x3d8] sm:$0xff]
    %v3867 = vld [vmem:[%s4 + $0x3e0] sm:$0xff]
    %v3868 = vld [vmem:[%s4 + $0x3e8] sm:$0xff]
    %v3869 = vld [vmem:[%s4 + $0x3f0] sm:$0xff]
    %v3870 = vld [vmem:[%s4 + $0x3f8] sm:$0xff]
    %v3871 = vld [vmem:[%s4 + $0x400] sm:$0xff]
    %v3872 = vld [vmem:[%s4 + $0x408] sm:$0xff]
    %v3873 = vld [vmem:[%s4 + $0x410] sm:$0xff]
    %v3874 = vld [vmem:[%s4 + $0x418] sm:$0xff]
    %v3875 = vld [vmem:[%s4 + $0x420] sm:$0xff]
    %v3876 = vld [vmem:[%s4 + $0x428] sm:$0xff]
    %v3877 = vld [vmem:[%s4 + $0x430] sm:$0xff]
    %v3878 = vld [vmem:[%s4 + $0x438] sm:$0xff]
    %v3879 = vld [vmem:[%s4 + $0x440] sm:$0xff]
    %v3880 = vld [vmem:[%s4 + $0x448] sm:$0xff]
    %v3881 = vld [vmem:[%s4 + $0x450] sm:$0xff]
    %v3882 = vld [vmem:[%s4 + $0x458] sm:$0xff]
    %v3883 = vld [vmem:[%s4 + $0x460] sm:$0xff]
    %v3884 = vld [vmem:[%s4 + $0x468] sm:$0xff]
    %v3885 = vld [vmem:[%s4 + $0x470] sm:$0xff]
    %v3886 = vld [vmem:[%s4 + $0x478] sm:$0xff]
    %v3888 = vlaneseq
    %v3889 = vshrl.u32 %v3888, 7
    %v3890 = vsub.s32 0, %v3889
    %v3891 = vrot.slane %v63, %v3890
    %v3892 = vlaneseq
    %v3893 = vshrl.u32 %v3892, 7
    %v3894 = vsub.s32 1, %v3893
    %v3895 = vrot.slane %v63, %v3894
    %v4042 = vunpack.c.l.b16 %v3743
    %v4043 = vunpack.c.h.b16 %v3743
    %v4044 = vunpack.c.l.b16 %v3744
    %v4045 = vunpack.c.h.b16 %v3744
    %v4046 = vunpack.c.l.b16 %v3745
    %v4047 = vunpack.c.h.b16 %v3745
    %v4048 = vunpack.c.l.b16 %v3746
    %v4049 = vunpack.c.h.b16 %v3746
    %v4050 = vunpack.c.l.b16 %v3747
    %v4051 = vunpack.c.h.b16 %v3747
    %v4052 = vunpack.c.l.b16 %v3748
    %v4053 = vunpack.c.h.b16 %v3748
    %v4054 = vunpack.c.l.b16 %v3749
    %v4055 = vunpack.c.h.b16 %v3749
    %v4056 = vunpack.c.l.b16 %v3750
    %v4057 = vunpack.c.h.b16 %v3750
    %v4058 = vunpack.c.l.b16 %v3751
    %v4059 = vunpack.c.h.b16 %v3751
    %v4060 = vunpack.c.l.b16 %v3752
    %v4061 = vunpack.c.h.b16 %v3752
    %v4062 = vunpack.c.l.b16 %v3753
    %v4063 = vunpack.c.h.b16 %v3753
    %v4064 = vunpack.c.l.b16 %v3754
    %v4065 = vunpack.c.h.b16 %v3754
    %v4066 = vunpack.c.l.b16 %v3755
    %v4067 = vunpack.c.h.b16 %v3755
    %v4068 = vunpack.c.l.b16 %v3756
    %v4069 = vunpack.c.h.b16 %v3756
    %v4070 = vunpack.c.l.b16 %v3757
    %v4071 = vunpack.c.h.b16 %v3757
    %v4072 = vunpack.c.l.b16 %v3758
    %v4073 = vunpack.c.h.b16 %v3758
    %v4074 = vunpack.c.l.b16 %v3759
    %v4075 = vunpack.c.h.b16 %v3759
    %v4076 = vunpack.c.l.b16 %v3760
    %v4077 = vunpack.c.h.b16 %v3760
    %v4078 = vunpack.c.l.b16 %v3761
    %v4079 = vunpack.c.h.b16 %v3761
    %v4080 = vunpack.c.l.b16 %v3762
    %v4081 = vunpack.c.h.b16 %v3762
    %v4082 = vunpack.c.l.b16 %v3763
    %v4083 = vunpack.c.h.b16 %v3763
    %v4084 = vunpack.c.l.b16 %v3764
    %v4085 = vunpack.c.h.b16 %v3764
    %v4086 = vunpack.c.l.b16 %v3765
    %v4087 = vunpack.c.h.b16 %v3765
    %v4088 = vunpack.c.l.b16 %v3766
    %v4089 = vunpack.c.h.b16 %v3766
    %v4090 = vunpack.c.l.b16 %v3767
    %v4091 = vunpack.c.h.b16 %v3767
    %v4092 = vunpack.c.l.b16 %v3768
    %v4093 = vunpack.c.h.b16 %v3768
    %v4094 = vunpack.c.l.b16 %v3769
    %v4095 = vunpack.c.h.b16 %v3769
    %v4096 = vunpack.c.l.b16 %v3770
    %v4097 = vunpack.c.h.b16 %v3770
    %v4098 = vunpack.c.l.b16 %v3771
    %v4099 = vunpack.c.h.b16 %v3771
    %v4100 = vunpack.c.l.b16 %v3772
    %v4101 = vunpack.c.h.b16 %v3772
    %v4102 = vunpack.c.l.b16 %v3773
    %v4103 = vunpack.c.h.b16 %v3773
    %v4104 = vunpack.c.l.b16 %v3774
    %v4105 = vunpack.c.h.b16 %v3774
    %v4106 = vunpack.c.l.b16 %v3775
    %v4107 = vunpack.c.h.b16 %v3775
    %v4108 = vunpack.c.l.b16 %v3776
    %v4109 = vunpack.c.h.b16 %v3776
    %v4110 = vunpack.c.l.b16 %v3777
    %v4111 = vunpack.c.h.b16 %v3777
    %v4112 = vunpack.c.l.b16 %v3778
    %v4113 = vunpack.c.h.b16 %v3778
    %v4114 = vunpack.c.l.b16 %v3779
    %v4115 = vunpack.c.h.b16 %v3779
    %v4116 = vunpack.c.l.b16 %v3780
    %v4117 = vunpack.c.h.b16 %v3780
    %v4118 = vunpack.c.l.b16 %v3781
    %v4119 = vunpack.c.h.b16 %v3781
    %v4120 = vunpack.c.l.b16 %v3782
    %v4121 = vunpack.c.h.b16 %v3782
    %v4122 = vunpack.c.l.b16 %v3783
    %v4123 = vunpack.c.h.b16 %v3783
    %v4124 = vunpack.c.l.b16 %v3784
    %v4125 = vunpack.c.h.b16 %v3784
    %v4126 = vunpack.c.l.b16 %v3785
    %v4127 = vunpack.c.h.b16 %v3785
    %v4128 = vunpack.c.l.b16 %v3786
    %v4129 = vunpack.c.h.b16 %v3786
    %v4130 = vunpack.c.l.b16 %v3787
    %v4131 = vunpack.c.h.b16 %v3787
    %v4132 = vunpack.c.l.b16 %v3788
    %v4133 = vunpack.c.h.b16 %v3788
    %v4134 = vunpack.c.l.b16 %v3789
    %v4135 = vunpack.c.h.b16 %v3789
    %v4136 = vunpack.c.l.b16 %v3790
    %v4137 = vunpack.c.h.b16 %v3790
    %v4138 = vunpack.c.l.b16 %v3791
    %v4139 = vunpack.c.h.b16 %v3791
    %v4140 = vunpack.c.l.b16 %v3792
    %v4141 = vunpack.c.h.b16 %v3792
    %v4142 = vunpack.c.l.b16 %v3793
    %v4143 = vunpack.c.h.b16 %v3793
    %v4144 = vunpack.c.l.b16 %v3794
    %v4145 = vunpack.c.h.b16 %v3794
    %v4146 = vunpack.c.l.b16 %v3795
    %v4147 = vunpack.c.h.b16 %v3795
    %v4148 = vunpack.c.l.b16 %v3796
    %v4149 = vunpack.c.h.b16 %v3796
    %v4150 = vunpack.c.l.b16 %v3797
    %v4151 = vunpack.c.h.b16 %v3797
    %v4152 = vunpack.c.l.b16 %v3798
    %v4153 = vunpack.c.h.b16 %v3798
    %v4154 = vunpack.c.l.b16 %v3799
    %v4155 = vunpack.c.h.b16 %v3799
    %v4156 = vunpack.c.l.b16 %v3800
    %v4157 = vunpack.c.h.b16 %v3800
    %v4158 = vunpack.c.l.b16 %v3801
    %v4159 = vunpack.c.h.b16 %v3801
    %v4160 = vunpack.c.l.b16 %v3802
    %v4161 = vunpack.c.h.b16 %v3802
    %v4162 = vunpack.c.l.b16 %v3803
    %v4163 = vunpack.c.h.b16 %v3803
    %v4164 = vunpack.c.l.b16 %v3804
    %v4165 = vunpack.c.h.b16 %v3804
    %v4166 = vunpack.c.l.b16 %v3805
    %v4167 = vunpack.c.h.b16 %v3805
    %v4168 = vunpack.c.l.b16 %v3806
    %v4169 = vunpack.c.h.b16 %v3806
    %v4170 = vunpack.c.l.b16 %v3807
    %v4171 = vunpack.c.h.b16 %v3807
    %v4172 = vunpack.c.l.b16 %v3808
    %v4173 = vunpack.c.h.b16 %v3808
    %v4174 = vunpack.c.l.b16 %v3809
    %v4175 = vunpack.c.h.b16 %v3809
    %v4176 = vunpack.c.l.b16 %v3810
    %v4177 = vunpack.c.h.b16 %v3810
    %v4178 = vunpack.c.l.b16 %v3811
    %v4179 = vunpack.c.h.b16 %v3811
    %v4180 = vunpack.c.l.b16 %v3812
    %v4181 = vunpack.c.h.b16 %v3812
    %v4182 = vunpack.c.l.b16 %v3813
    %v4183 = vunpack.c.h.b16 %v3813
    %v4184 = vunpack.c.l.b16 %v3814
    %v4185 = vunpack.c.h.b16 %v3814
    %v4186 = vunpack.c.l.b16 %v3815
    %v4187 = vunpack.c.h.b16 %v3815
    %v4188 = vunpack.c.l.b16 %v3816
    %v4189 = vunpack.c.h.b16 %v3816
    %v4190 = vunpack.c.l.b16 %v3817
    %v4191 = vunpack.c.h.b16 %v3817
    %v4192 = vunpack.c.l.b16 %v3818
    %v4193 = vunpack.c.h.b16 %v3818
    %v4194 = vunpack.c.l.b16 %v3819
    %v4195 = vunpack.c.h.b16 %v3819
    %v4196 = vunpack.c.l.b16 %v3820
    %v4197 = vunpack.c.h.b16 %v3820
    %v4198 = vunpack.c.l.b16 %v3821
    %v4199 = vunpack.c.h.b16 %v3821
    %v4200 = vunpack.c.l.b16 %v3822
    %v4201 = vunpack.c.h.b16 %v3822
    %v4202 = vunpack.c.l.b16 %v3823
    %v4203 = vunpack.c.h.b16 %v3823
    %v4204 = vunpack.c.l.b16 %v3824
    %v4205 = vunpack.c.h.b16 %v3824
    %v4206 = vunpack.c.l.b16 %v3825
    %v4207 = vunpack.c.h.b16 %v3825
    %v4208 = vunpack.c.l.b16 %v3826
    %v4209 = vunpack.c.h.b16 %v3826
    %v4210 = vunpack.c.l.b16 %v3827
    %v4211 = vunpack.c.h.b16 %v3827
    %v4212 = vunpack.c.l.b16 %v3828
    %v4213 = vunpack.c.h.b16 %v3828
    %v4214 = vunpack.c.l.b16 %v3829
    %v4215 = vunpack.c.h.b16 %v3829
    %v4216 = vunpack.c.l.b16 %v3830
    %v4217 = vunpack.c.h.b16 %v3830
    %v4218 = vunpack.c.l.b16 %v3831
    %v4219 = vunpack.c.h.b16 %v3831
    %v4220 = vunpack.c.l.b16 %v3832
    %v4221 = vunpack.c.h.b16 %v3832
    %v4222 = vunpack.c.l.b16 %v3833
    %v4223 = vunpack.c.h.b16 %v3833
    %v4224 = vunpack.c.l.b16 %v3834
    %v4225 = vunpack.c.h.b16 %v3834
    %v4226 = vunpack.c.l.b16 %v3835
    %v4227 = vunpack.c.h.b16 %v3835
    %v4228 = vunpack.c.l.b16 %v3836
    %v4229 = vunpack.c.h.b16 %v3836
    %v4230 = vunpack.c.l.b16 %v3837
    %v4231 = vunpack.c.h.b16 %v3837
    %v4232 = vunpack.c.l.b16 %v3838
    %v4233 = vunpack.c.h.b16 %v3838
    %v4234 = vunpack.c.l.b16 %v3839
    %v4235 = vunpack.c.h.b16 %v3839
    %v4236 = vunpack.c.l.b16 %v3840
    %v4237 = vunpack.c.h.b16 %v3840
    %v4238 = vunpack.c.l.b16 %v3841
    %v4239 = vunpack.c.h.b16 %v3841
    %v4240 = vunpack.c.l.b16 %v3842
    %v4241 = vunpack.c.h.b16 %v3842
    %v4242 = vunpack.c.l.b16 %v3843
    %v4243 = vunpack.c.h.b16 %v3843
    %v4244 = vunpack.c.l.b16 %v3844
    %v4245 = vunpack.c.h.b16 %v3844
    %v4246 = vunpack.c.l.b16 %v3845
    %v4247 = vunpack.c.h.b16 %v3845
    %v4248 = vunpack.c.l.b16 %v3846
    %v4249 = vunpack.c.h.b16 %v3846
    %v4250 = vunpack.c.l.b16 %v3847
    %v4251 = vunpack.c.h.b16 %v3847
    %v4252 = vunpack.c.l.b16 %v3848
    %v4253 = vunpack.c.h.b16 %v3848
    %v4254 = vunpack.c.l.b16 %v3849
    %v4255 = vunpack.c.h.b16 %v3849
    %v4256 = vunpack.c.l.b16 %v3850
    %v4257 = vunpack.c.h.b16 %v3850
    %v4258 = vunpack.c.l.b16 %v3851
    %v4259 = vunpack.c.h.b16 %v3851
    %v4260 = vunpack.c.l.b16 %v3852
    %v4261 = vunpack.c.h.b16 %v3852
    %v4262 = vunpack.c.l.b16 %v3853
    %v4263 = vunpack.c.h.b16 %v3853
    %v4264 = vunpack.c.l.b16 %v3854
    %v4265 = vunpack.c.h.b16 %v3854
    %v4266 = vunpack.c.l.b16 %v3855
    %v4267 = vunpack.c.h.b16 %v3855
    %v4268 = vunpack.c.l.b16 %v3856
    %v4269 = vunpack.c.h.b16 %v3856
    %v4270 = vunpack.c.l.b16 %v3857
    %v4271 = vunpack.c.h.b16 %v3857
    %v4272 = vunpack.c.l.b16 %v3858
    %v4273 = vunpack.c.h.b16 %v3858
    %v4274 = vunpack.c.l.b16 %v3859
    %v4275 = vunpack.c.h.b16 %v3859
    %v4276 = vunpack.c.l.b16 %v3860
    %v4277 = vunpack.c.h.b16 %v3860
    %v4278 = vunpack.c.l.b16 %v3861
    %v4279 = vunpack.c.h.b16 %v3861
    %v4280 = vunpack.c.l.b16 %v3862
    %v4281 = vunpack.c.h.b16 %v3862
    %v4282 = vunpack.c.l.b16 %v3863
    %v4283 = vunpack.c.h.b16 %v3863
    %v4284 = vunpack.c.l.b16 %v3864
    %v4285 = vunpack.c.h.b16 %v3864
    %v4286 = vunpack.c.l.b16 %v3865
    %v4287 = vunpack.c.h.b16 %v3865
    %v4288 = vunpack.c.l.b16 %v3866
    %v4289 = vunpack.c.h.b16 %v3866
    %v4290 = vunpack.c.l.b16 %v3867
    %v4291 = vunpack.c.h.b16 %v3867
    %v4292 = vunpack.c.l.b16 %v3868
    %v4293 = vunpack.c.h.b16 %v3868
    %v4294 = vunpack.c.l.b16 %v3869
    %v4295 = vunpack.c.h.b16 %v3869
    %v4296 = vunpack.c.l.b16 %v3870
    %v4297 = vunpack.c.h.b16 %v3870
    %v4298 = vunpack.c.l.b16 %v3871
    %v4299 = vunpack.c.h.b16 %v3871
    %v4300 = vunpack.c.l.b16 %v3872
    %v4301 = vunpack.c.h.b16 %v3872
    %v4302 = vunpack.c.l.b16 %v3873
    %v4303 = vunpack.c.h.b16 %v3873
    %v4304 = vunpack.c.l.b16 %v3874
    %v4305 = vunpack.c.h.b16 %v3874
    %v4306 = vunpack.c.l.b16 %v3875
    %v4307 = vunpack.c.h.b16 %v3875
    %v4308 = vunpack.c.l.b16 %v3876
    %v4309 = vunpack.c.h.b16 %v3876
    %v4310 = vunpack.c.l.b16 %v3877
    %v4311 = vunpack.c.h.b16 %v3877
    %v4312 = vunpack.c.l.b16 %v3878
    %v4313 = vunpack.c.h.b16 %v3878
    %v4314 = vunpack.c.l.b16 %v3879
    %v4315 = vunpack.c.h.b16 %v3879
    %v4316 = vunpack.c.l.b16 %v3880
    %v4317 = vunpack.c.h.b16 %v3880
    %v4318 = vunpack.c.l.b16 %v3881
    %v4319 = vunpack.c.h.b16 %v3881
    %v4320 = vunpack.c.l.b16 %v3882
    %v4321 = vunpack.c.h.b16 %v3882
    %v4322 = vunpack.c.l.b16 %v3883
    %v4323 = vunpack.c.h.b16 %v3883
    %v4324 = vunpack.c.l.b16 %v3884
    %v4325 = vunpack.c.h.b16 %v3884
    %v4326 = vunpack.c.l.b16 %v3885
    %v4327 = vunpack.c.h.b16 %v3885
    %v4328 = vunpack.c.l.b16 %v3886
    %v4329 = vunpack.c.h.b16 %v3886
    %v4330 = vpack.c.b16 %v4044, %v4042
    %v4331 = vpack.c.b16 %v4045, %v4043
    %v4332 = vpack.c.b16 %v4048, %v4046
    %v4333 = vpack.c.b16 %v4049, %v4047
    %v4334 = vpack.c.b16 %v4052, %v4050
    %v4335 = vpack.c.b16 %v4053, %v4051
    %v4336 = vpack.c.b16 %v4056, %v4054
    %v4337 = vpack.c.b16 %v4057, %v4055
    %v4338 = vpack.c.b16 %v4060, %v4058
    %v4339 = vpack.c.b16 %v4061, %v4059
    %v4340 = vpack.c.b16 %v4064, %v4062
    %v4341 = vpack.c.b16 %v4065, %v4063
    %v4342 = vpack.c.b16 %v4068, %v4066
    %v4343 = vpack.c.b16 %v4069, %v4067
    %v4344 = vpack.c.b16 %v4072, %v4070
    %v4345 = vpack.c.b16 %v4073, %v4071
    %v4346 = vpack.c.b16 %v4076, %v4074
    %v4347 = vpack.c.b16 %v4077, %v4075
    %v4348 = vpack.c.b16 %v4080, %v4078
    %v4349 = vpack.c.b16 %v4081, %v4079
    %v4350 = vpack.c.b16 %v4084, %v4082
    %v4351 = vpack.c.b16 %v4085, %v4083
    %v4352 = vpack.c.b16 %v4088, %v4086
    %v4353 = vpack.c.b16 %v4089, %v4087
    %v4354 = vpack.c.b16 %v4092, %v4090
    %v4355 = vpack.c.b16 %v4093, %v4091
    %v4356 = vpack.c.b16 %v4096, %v4094
    %v4357 = vpack.c.b16 %v4097, %v4095
    %v4358 = vpack.c.b16 %v4100, %v4098
    %v4359 = vpack.c.b16 %v4101, %v4099
    %v4360 = vpack.c.b16 %v4104, %v4102
    %v4361 = vpack.c.b16 %v4105, %v4103
    %v4362 = vpack.c.b16 %v4108, %v4106
    %v4363 = vpack.c.b16 %v4109, %v4107
    %v4364 = vpack.c.b16 %v4112, %v4110
    %v4365 = vpack.c.b16 %v4113, %v4111
    %v4366 = vpack.c.b16 %v4116, %v4114
    %v4367 = vpack.c.b16 %v4117, %v4115
    %v4368 = vpack.c.b16 %v4120, %v4118
    %v4369 = vpack.c.b16 %v4121, %v4119
    %v4370 = vpack.c.b16 %v4124, %v4122
    %v4371 = vpack.c.b16 %v4125, %v4123
    %v4372 = vpack.c.b16 %v4128, %v4126
    %v4373 = vpack.c.b16 %v4129, %v4127
    %v4374 = vpack.c.b16 %v4132, %v4130
    %v4375 = vpack.c.b16 %v4133, %v4131
    %v4376 = vpack.c.b16 %v4136, %v4134
    %v4377 = vpack.c.b16 %v4137, %v4135
    %v4378 = vpack.c.b16 %v4140, %v4138
    %v4379 = vpack.c.b16 %v4141, %v4139
    %v4380 = vpack.c.b16 %v4144, %v4142
    %v4381 = vpack.c.b16 %v4145, %v4143
    %v4382 = vpack.c.b16 %v4148, %v4146
    %v4383 = vpack.c.b16 %v4149, %v4147
    %v4384 = vpack.c.b16 %v4152, %v4150
    %v4385 = vpack.c.b16 %v4153, %v4151
    %v4386 = vpack.c.b16 %v4156, %v4154
    %v4387 = vpack.c.b16 %v4157, %v4155
    %v4388 = vpack.c.b16 %v4160, %v4158
    %v4389 = vpack.c.b16 %v4161, %v4159
    %v4390 = vpack.c.b16 %v4164, %v4162
    %v4391 = vpack.c.b16 %v4165, %v4163
    %v4392 = vpack.c.b16 %v4168, %v4166
    %v4393 = vpack.c.b16 %v4169, %v4167
    %v4394 = vpack.c.b16 %v4172, %v4170
    %v4395 = vpack.c.b16 %v4173, %v4171
    %v4396 = vpack.c.b16 %v4176, %v4174
    %v4397 = vpack.c.b16 %v4177, %v4175
    %v4398 = vpack.c.b16 %v4180, %v4178
    %v4399 = vpack.c.b16 %v4181, %v4179
    %v4400 = vpack.c.b16 %v4184, %v4182
    %v4401 = vpack.c.b16 %v4185, %v4183
    %v4402 = vpack.c.b16 %v4188, %v4186
    %v4403 = vpack.c.b16 %v4189, %v4187
    %v4404 = vpack.c.b16 %v4192, %v4190
    %v4405 = vpack.c.b16 %v4193, %v4191
    %v4406 = vpack.c.b16 %v4196, %v4194
    %v4407 = vpack.c.b16 %v4197, %v4195
    %v4408 = vpack.c.b16 %v4200, %v4198
    %v4409 = vpack.c.b16 %v4201, %v4199
    %v4410 = vpack.c.b16 %v4204, %v4202
    %v4411 = vpack.c.b16 %v4205, %v4203
    %v4412 = vpack.c.b16 %v4208, %v4206
    %v4413 = vpack.c.b16 %v4209, %v4207
    %v4414 = vpack.c.b16 %v4212, %v4210
    %v4415 = vpack.c.b16 %v4213, %v4211
    %v4416 = vpack.c.b16 %v4216, %v4214
    %v4417 = vpack.c.b16 %v4217, %v4215
    %v4418 = vpack.c.b16 %v4220, %v4218
    %v4419 = vpack.c.b16 %v4221, %v4219
    %v4420 = vpack.c.b16 %v4224, %v4222
    %v4421 = vpack.c.b16 %v4225, %v4223
    %v4422 = vpack.c.b16 %v4228, %v4226
    %v4423 = vpack.c.b16 %v4229, %v4227
    %v4424 = vpack.c.b16 %v4232, %v4230
    %v4425 = vpack.c.b16 %v4233, %v4231
    %v4426 = vpack.c.b16 %v4236, %v4234
    %v4427 = vpack.c.b16 %v4237, %v4235
    %v4428 = vpack.c.b16 %v4240, %v4238
    %v4429 = vpack.c.b16 %v4241, %v4239
    %v4430 = vpack.c.b16 %v4244, %v4242
    %v4431 = vpack.c.b16 %v4245, %v4243
    %v4432 = vpack.c.b16 %v4248, %v4246
    %v4433 = vpack.c.b16 %v4249, %v4247
    %v4434 = vpack.c.b16 %v4252, %v4250
    %v4435 = vpack.c.b16 %v4253, %v4251
    %v4436 = vpack.c.b16 %v4256, %v4254
    %v4437 = vpack.c.b16 %v4257, %v4255
    %v4438 = vpack.c.b16 %v4260, %v4258
    %v4439 = vpack.c.b16 %v4261, %v4259
    %v4440 = vpack.c.b16 %v4264, %v4262
    %v4441 = vpack.c.b16 %v4265, %v4263
    %v4442 = vpack.c.b16 %v4268, %v4266
    %v4443 = vpack.c.b16 %v4269, %v4267
    %v4444 = vpack.c.b16 %v4272, %v4270
    %v4445 = vpack.c.b16 %v4273, %v4271
    %v4446 = vpack.c.b16 %v4276, %v4274
    %v4447 = vpack.c.b16 %v4277, %v4275
    %v4448 = vpack.c.b16 %v4280, %v4278
    %v4449 = vpack.c.b16 %v4281, %v4279
    %v4450 = vpack.c.b16 %v4284, %v4282
    %v4451 = vpack.c.b16 %v4285, %v4283
    %v4452 = vpack.c.b16 %v4288, %v4286
    %v4453 = vpack.c.b16 %v4289, %v4287
    %v4454 = vpack.c.b16 %v4292, %v4290
    %v4455 = vpack.c.b16 %v4293, %v4291
    %v4456 = vpack.c.b16 %v4296, %v4294
    %v4457 = vpack.c.b16 %v4297, %v4295
    %v4458 = vpack.c.b16 %v4300, %v4298
    %v4459 = vpack.c.b16 %v4301, %v4299
    %v4460 = vpack.c.b16 %v4304, %v4302
    %v4461 = vpack.c.b16 %v4305, %v4303
    %v4462 = vpack.c.b16 %v4308, %v4306
    %v4463 = vpack.c.b16 %v4309, %v4307
    %v4464 = vpack.c.b16 %v4312, %v4310
    %v4465 = vpack.c.b16 %v4313, %v4311
    %v4466 = vpack.c.b16 %v4316, %v4314
    %v4467 = vpack.c.b16 %v4317, %v4315
    %v4468 = vpack.c.b16 %v4320, %v4318
    %v4469 = vpack.c.b16 %v4321, %v4319
    %v4470 = vpack.c.b16 %v4324, %v4322
    %v4471 = vpack.c.b16 %v4325, %v4323
    %v4472 = vpack.c.b16 %v4328, %v4326
    %v4473 = vpack.c.b16 %v4329, %v4327
    %4618 = vmatprep.subr.bf16.mxu0 %v4345
    %4619 = vmatpush1.bf16.msra.mxu0 %v4344
    %4620 = vmatprep.subr.bf16.mxu0 %v4343
    %4621 = vmatpush1.bf16.msra.mxu0 %v4342
    %4622 = vmatprep.subr.bf16.mxu0 %v4341
    %4623 = vmatpush1.bf16.msra.mxu0 %v4340
    %4624 = vmatprep.subr.bf16.mxu0 %v4339
    %4625 = vmatpush1.bf16.msra.mxu0 %v4338
    %4626 = vmatprep.subr.bf16.mxu0 %v4337
    %4627 = vmatpush1.bf16.msra.mxu0 %v4336
    %4628 = vmatprep.subr.bf16.mxu0 %v4335
    %4629 = vmatpush1.bf16.msra.mxu0 %v4334
    %4630 = vmatprep.subr.bf16.mxu0 %v4333
    %4631 = vmatpush1.bf16.msra.mxu0 %v4332
    %4632 = vmatprep.subr.bf16.mxu0 %v4331
    %4633 = vmatpush1.bf16.msra.mxu0 %v4330
    %4634 = vmatprep.subr.bf16.mxu0 %v4361
    %4635 = vmatpush2.bf16.msra.mxu0 %v4360
    %4636 = vmatprep.subr.bf16.mxu0 %v4359
    %4637 = vmatpush2.bf16.msra.mxu0 %v4358
    %4638 = vmatprep.subr.bf16.mxu0 %v4357
    %4639 = vmatpush2.bf16.msra.mxu0 %v4356
    %4640 = vmatprep.subr.bf16.mxu0 %v4355
    %4641 = vmatpush2.bf16.msra.mxu0 %v4354
    %4642 = vmatprep.subr.bf16.mxu0 %v4353
    %4643 = vmatpush2.bf16.msra.mxu0 %v4352
    %4644 = vmatprep.subr.bf16.mxu0 %v4351
    %4645 = vmatpush2.bf16.msra.mxu0 %v4350
    %4646 = vmatprep.subr.bf16.mxu0 %v4349
    %4647 = vmatpush2.bf16.msra.mxu0 %v4348
    %4648 = vmatprep.subr.bf16.mxu0 %v4347
    %4649 = vmatpush2.bf16.msra.mxu0 %v4346
    %4650 = vmatprep.mubr.bf16.mxu0 %v3735
    %4651 = vmatmul.mubr.bf16.gmra.mxu0 %v3734
    %v4652 = vpop.f32.mrf.mxu0
    %v4653 = vadd.f32 %v3891, %v4652
    %v4654 = vpop.f32.mrf.mxu0
    %v4655 = vadd.f32 %v3895, %v4654
    %v4656 = vpop.f32.mrf.mxu0
    %v4657 = vpop.f32.mrf.mxu0
    %4658 = vdwg.mxu0
    %4659 = vmatprep.subr.bf16.mxu0 %v4377
    %4660 = vmatpush1.bf16.msra.mxu0 %v4376
    %4661 = vmatprep.subr.bf16.mxu0 %v4375
    %4662 = vmatpush1.bf16.msra.mxu0 %v4374
    %4663 = vmatprep.subr.bf16.mxu0 %v4373
    %4664 = vmatpush1.bf16.msra.mxu0 %v4372
    %4665 = vmatprep.subr.bf16.mxu0 %v4371
    %4666 = vmatpush1.bf16.msra.mxu0 %v4370
    %4667 = vmatprep.subr.bf16.mxu0 %v4369
    %4668 = vmatpush1.bf16.msra.mxu0 %v4368
    %4669 = vmatprep.subr.bf16.mxu0 %v4367
    %4670 = vmatpush1.bf16.msra.mxu0 %v4366
    %4671 = vmatprep.subr.bf16.mxu0 %v4365
    %4672 = vmatpush1.bf16.msra.mxu0 %v4364
    %4673 = vmatprep.subr.bf16.mxu0 %v4363
    %4674 = vmatpush1.bf16.msra.mxu0 %v4362
    %4675 = vmatprep.subr.bf16.mxu0 %v4393
    %4676 = vmatpush2.bf16.msra.mxu0 %v4392
    %4677 = vmatprep.subr.bf16.mxu0 %v4391
    %4678 = vmatpush2.bf16.msra.mxu0 %v4390
    %4679 = vmatprep.subr.bf16.mxu0 %v4389
    %4680 = vmatpush2.bf16.msra.mxu0 %v4388
    %4681 = vmatprep.subr.bf16.mxu0 %v4387
    %4682 = vmatpush2.bf16.msra.mxu0 %v4386
    %4683 = vmatprep.subr.bf16.mxu0 %v4385
    %4684 = vmatpush2.bf16.msra.mxu0 %v4384
    %4685 = vmatprep.subr.bf16.mxu0 %v4383
    %4686 = vmatpush2.bf16.msra.mxu0 %v4382
    %4687 = vmatprep.subr.bf16.mxu0 %v4381
    %4688 = vmatpush2.bf16.msra.mxu0 %v4380
    %4689 = vmatprep.subr.bf16.mxu0 %v4379
    %4690 = vmatpush2.bf16.msra.mxu0 %v4378
    %4691 = vmatprep.mubr.bf16.mxu0 %v3737
    %4692 = vmatmul.mubr.bf16.gmra.mxu0 %v3736
    %v4693 = vpop.f32.mrf.mxu0
    %v4694 = vadd.f32 %v4653, %v4693
    %v4695 = vpop.f32.mrf.mxu0
    %v4696 = vadd.f32 %v4655, %v4695
    %v4697 = vpop.f32.mrf.mxu0
    %v4698 = vpop.f32.mrf.mxu0
    %4699 = vdwg.mxu0
    %4700 = vmatprep.subr.bf16.mxu0 %v4409
    %4701 = vmatpush1.bf16.msra.mxu0 %v4408
    %4702 = vmatprep.subr.bf16.mxu0 %v4407
    %4703 = vmatpush1.bf16.msra.mxu0 %v4406
    %4704 = vmatprep.subr.bf16.mxu0 %v4405
    %4705 = vmatpush1.bf16.msra.mxu0 %v4404
    %4706 = vmatprep.subr.bf16.mxu0 %v4403
    %4707 = vmatpush1.bf16.msra.mxu0 %v4402
    %4708 = vmatprep.subr.bf16.mxu0 %v4401
    %4709 = vmatpush1.bf16.msra.mxu0 %v4400
    %4710 = vmatprep.subr.bf16.mxu0 %v4399
    %4711 = vmatpush1.bf16.msra.mxu0 %v4398
    %4712 = vmatprep.subr.bf16.mxu0 %v4397
    %4713 = vmatpush1.bf16.msra.mxu0 %v4396
    %4714 = vmatprep.subr.bf16.mxu0 %v4395
    %4715 = vmatpush1.bf16.msra.mxu0 %v4394
    %4716 = vmatprep.subr.bf16.mxu0 %v4425
    %4717 = vmatpush2.bf16.msra.mxu0 %v4424
    %4718 = vmatprep.subr.bf16.mxu0 %v4423
    %4719 = vmatpush2.bf16.msra.mxu0 %v4422
    %4720 = vmatprep.subr.bf16.mxu0 %v4421
    %4721 = vmatpush2.bf16.msra.mxu0 %v4420
    %4722 = vmatprep.subr.bf16.mxu0 %v4419
    %4723 = vmatpush2.bf16.msra.mxu0 %v4418
    %4724 = vmatprep.subr.bf16.mxu0 %v4417
    %4725 = vmatpush2.bf16.msra.mxu0 %v4416
    %4726 = vmatprep.subr.bf16.mxu0 %v4415
    %4727 = vmatpush2.bf16.msra.mxu0 %v4414
    %4728 = vmatprep.subr.bf16.mxu0 %v4413
    %4729 = vmatpush2.bf16.msra.mxu0 %v4412
    %4730 = vmatprep.subr.bf16.mxu0 %v4411
    %4731 = vmatpush2.bf16.msra.mxu0 %v4410
    %4732 = vmatprep.mubr.bf16.mxu0 %v3739
    %4733 = vmatmul.mubr.bf16.gmra.mxu0 %v3738
    %v4734 = vpop.f32.mrf.mxu0
    %v4735 = vadd.f32 %v4694, %v4734
    %v4736 = vpop.f32.mrf.mxu0
    %v4737 = vadd.f32 %v4696, %v4736
    %v4738 = vpop.f32.mrf.mxu0
    %v4739 = vpop.f32.mrf.mxu0
    %4740 = vdwg.mxu0
    %4741 = vmatprep.subr.bf16.mxu0 %v4441
    %4742 = vmatpush1.bf16.msra.mxu0 %v4440
    %4743 = vmatprep.subr.bf16.mxu0 %v4439
    %4744 = vmatpush1.bf16.msra.mxu0 %v4438
    %4745 = vmatprep.subr.bf16.mxu0 %v4437
    %4746 = vmatpush1.bf16.msra.mxu0 %v4436
    %4747 = vmatprep.subr.bf16.mxu0 %v4435
    %4748 = vmatpush1.bf16.msra.mxu0 %v4434
    %4749 = vmatprep.subr.bf16.mxu0 %v4433
    %4750 = vmatpush1.bf16.msra.mxu0 %v4432
    %4751 = vmatprep.subr.bf16.mxu0 %v4431
    %4752 = vmatpush1.bf16.msra.mxu0 %v4430
    %4753 = vmatprep.subr.bf16.mxu0 %v4429
    %4754 = vmatpush1.bf16.msra.mxu0 %v4428
    %4755 = vmatprep.subr.bf16.mxu0 %v4427
    %4756 = vmatpush1.bf16.msra.mxu0 %v4426
    %4757 = vmatprep.subr.bf16.mxu0 %v4457
    %4758 = vmatpush2.bf16.msra.mxu0 %v4456
    %4759 = vmatprep.subr.bf16.mxu0 %v4455
    %4760 = vmatpush2.bf16.msra.mxu0 %v4454
    %4761 = vmatprep.subr.bf16.mxu0 %v4453
    %4762 = vmatpush2.bf16.msra.mxu0 %v4452
    %4763 = vmatprep.subr.bf16.mxu0 %v4451
    %4764 = vmatpush2.bf16.msra.mxu0 %v4450
    %4765 = vmatprep.subr.bf16.mxu0 %v4449
    %4766 = vmatpush2.bf16.msra.mxu0 %v4448
    %4767 = vmatprep.subr.bf16.mxu0 %v4447
    %4768 = vmatpush2.bf16.msra.mxu0 %v4446
    %4769 = vmatprep.subr.bf16.mxu0 %v4445
    %4770 = vmatpush2.bf16.msra.mxu0 %v4444
    %4771 = vmatprep.subr.bf16.mxu0 %v4443
    %4772 = vmatpush2.bf16.msra.mxu0 %v4442
    %4773 = vmatprep.mubr.bf16.mxu0 %v3741
    %4774 = vmatmul.mubr.bf16.gmra.mxu0 %v3740
    %v4775 = vpop.f32.mrf.mxu0
    %v4776 = vadd.f32 %v4735, %v4775
    %v4777 = vpop.f32.mrf.mxu0
    %v4778 = vadd.f32 %v4737, %v4777
    %v4779 = vpop.f32.mrf.mxu0
    %v4780 = vpop.f32.mrf.mxu0
    %4781 = vdwg.mxu0
    %4782 = vmatprep.subr.bf16.mxu0 %v4473
    %4783 = vmatpush1.bf16.msra.mxu0 %v4472
    %4784 = vmatprep.subr.bf16.mxu0 %v4471
    %4785 = vmatpush1.bf16.msra.mxu0 %v4470
    %4786 = vmatprep.subr.bf16.mxu0 %v4469
    %4787 = vmatpush1.bf16.msra.mxu0 %v4468
    %4788 = vmatprep.subr.bf16.mxu0 %v4467
    %4789 = vmatpush1.bf16.msra.mxu0 %v4466
    %4790 = vmatprep.subr.bf16.mxu0 %v4465
    %4791 = vmatpush1.bf16.msra.mxu0 %v4464
    %4792 = vmatprep.subr.bf16.mxu0 %v4463
    %4793 = vmatpush1.bf16.msra.mxu0 %v4462
    %4794 = vmatprep.subr.bf16.mxu0 %v4461
    %4795 = vmatpush1.bf16.msra.mxu0 %v4460
    %4796 = vmatprep.subr.bf16.mxu0 %v4459
    %4797 = vmatpush1.bf16.msra.mxu0 %v4458
    %4798 = vmatprep.subr.bf16.mxu0 0
    %4799 = vmatpush2.bf16.msra.mxu0 0
    %4800 = vmatprep.subr.bf16.mxu0 0
    %4801 = vmatpush2.bf16.msra.mxu0 0
    %4802 = vmatprep.subr.bf16.mxu0 0
    %4803 = vmatpush2.bf16.msra.mxu0 0
    %4804 = vmatprep.subr.bf16.mxu0 0
    %4805 = vmatpush2.bf16.msra.mxu0 0
    %4806 = vmatprep.subr.bf16.mxu0 0
    %4807 = vmatpush2.bf16.msra.mxu0 0
    %4808 = vmatprep.subr.bf16.mxu0 0
    %4809 = vmatpush2.bf16.msra.mxu0 0
    %4810 = vmatprep.subr.bf16.mxu0 0
    %4811 = vmatpush2.bf16.msra.mxu0 0
    %4812 = vmatprep.subr.bf16.mxu0 0
    %4813 = vmatpush2.bf16.msra.mxu0 0
    %4814 = vmatprep.mubr.bf16.mxu0 0
    %4815 = vmatmul.mubr.bf16.gmra.mxu0 %v3742
    %v4816 = vpop.f32.mrf.mxu0
    %v4817 = vadd.f32 %v4776, %v4816
    %v4818 = vpop.f32.mrf.mxu0
    %v4819 = vadd.f32 %v4778, %v4818
    %v4820 = vpop.f32.mrf.mxu0
    %v4821 = vpop.f32.mrf.mxu0
    %4822 = vdwg.mxu0
    %v4823 = vmax.f32 %v4817, 0.0
    %v4824 = vmax.f32 %v4819, 0.0
    %v4825 = vpack.c.bf16 %v4823, %v4823
    %v4826 = vpack.c.bf16 %v4824, %v4824
    %v4827 = vld [vmem:[%s6] sm:$0xf]
    %v4828 = vld [vmem:[%s6 + $0x4] sm:$0xf]
    %v4829 = vld [vmem:[%s6 + $0x8] sm:$0xf]
    %v4830 = vld [vmem:[%s6 + $0xc] sm:$0xf]
    %v4831 = vld [vmem:[%s6 + $0x10] sm:$0xf]
    %v4832 = vld [vmem:[%s6 + $0x14] sm:$0xf]
    %v4833 = vld [vmem:[%s6 + $0x18] sm:$0xf]
    %v4834 = vld [vmem:[%s6 + $0x1c] sm:$0xf]
    %v4835 = vld [vmem:[%s6 + $0x20] sm:$0xf]
    %v4836 = vld [vmem:[%s6 + $0x24] sm:$0xf]
    %v4837 = vld [vmem:[%s6 + $0x28] sm:$0xf]
    %v4838 = vld [vmem:[%s6 + $0x2c] sm:$0xf]
    %v4839 = vld [vmem:[%s6 + $0x30] sm:$0xf]
    %v4840 = vld [vmem:[%s6 + $0x34] sm:$0xf]
    %v4841 = vld [vmem:[%s6 + $0x38] sm:$0xf]
    %v4842 = vld [vmem:[%s6 + $0x3c] sm:$0xf]
    %v4843 = vld [vmem:[%s6 + $0x40] sm:$0xf]
    %v4844 = vld [vmem:[%s6 + $0x44] sm:$0xf]
    %v4845 = vld [vmem:[%s6 + $0x48] sm:$0xf]
    %v4846 = vld [vmem:[%s6 + $0x4c] sm:$0xf]
    %v4847 = vld [vmem:[%s6 + $0x50] sm:$0xf]
    %v4848 = vld [vmem:[%s6 + $0x54] sm:$0xf]
    %v4849 = vld [vmem:[%s6 + $0x58] sm:$0xf]
    %v4850 = vld [vmem:[%s6 + $0x5c] sm:$0xf]
    %v4851 = vld [vmem:[%s6 + $0x60] sm:$0xf]
    %v4852 = vld [vmem:[%s6 + $0x64] sm:$0xf]
    %v4853 = vld [vmem:[%s6 + $0x68] sm:$0xf]
    %v4854 = vld [vmem:[%s6 + $0x6c] sm:$0xf]
    %v4855 = vld [vmem:[%s6 + $0x70] sm:$0xf]
    %v4856 = vld [vmem:[%s6 + $0x74] sm:$0xf]
    %v4857 = vld [vmem:[%s6 + $0x78] sm:$0xf]
    %v4858 = vld [vmem:[%s6 + $0x7c] sm:$0xf]
    %v4860 = vlaneseq
    %v4861 = vshrl.u32 %v4860, 7
    %v4862 = vsub.s32 0, %v4861
    %v4863 = vrot.slane %v64, %v4862
    %v4897 = vunpack.c.l.b16 %v4827
    %v4898 = vunpack.c.l.b16 %v4828
    %v4899 = vunpack.c.l.b16 %v4829
    %v4900 = vunpack.c.l.b16 %v4830
    %v4901 = vunpack.c.l.b16 %v4831
    %v4902 = vunpack.c.l.b16 %v4832
    %v4903 = vunpack.c.l.b16 %v4833
    %v4904 = vunpack.c.l.b16 %v4834
    %v4905 = vunpack.c.l.b16 %v4835
    %v4906 = vunpack.c.l.b16 %v4836
    %v4907 = vunpack.c.l.b16 %v4837
    %v4908 = vunpack.c.l.b16 %v4838
    %v4909 = vunpack.c.l.b16 %v4839
    %v4910 = vunpack.c.l.b16 %v4840
    %v4911 = vunpack.c.l.b16 %v4841
    %v4912 = vunpack.c.l.b16 %v4842
    %v4913 = vunpack.c.l.b16 %v4843
    %v4914 = vunpack.c.l.b16 %v4844
    %v4915 = vunpack.c.l.b16 %v4845
    %v4916 = vunpack.c.l.b16 %v4846
    %v4917 = vunpack.c.l.b16 %v4847
    %v4918 = vunpack.c.l.b16 %v4848
    %v4919 = vunpack.c.l.b16 %v4849
    %v4920 = vunpack.c.l.b16 %v4850
    %v4921 = vunpack.c.l.b16 %v4851
    %v4922 = vunpack.c.l.b16 %v4852
    %v4923 = vunpack.c.l.b16 %v4853
    %v4924 = vunpack.c.l.b16 %v4854
    %v4925 = vunpack.c.l.b16 %v4855
    %v4926 = vunpack.c.l.b16 %v4856
    %v4927 = vunpack.c.l.b16 %v4857
    %v4928 = vunpack.c.l.b16 %v4858
    %v4929 = vpack.c.b16 %v4898, %v4897
    %v4930 = vpack.c.b16 %v4900, %v4899
    %v4931 = vpack.c.b16 %v4902, %v4901
    %v4932 = vpack.c.b16 %v4904, %v4903
    %v4933 = vpack.c.b16 %v4906, %v4905
    %v4934 = vpack.c.b16 %v4908, %v4907
    %v4935 = vpack.c.b16 %v4910, %v4909
    %v4936 = vpack.c.b16 %v4912, %v4911
    %v4937 = vpack.c.b16 %v4914, %v4913
    %v4938 = vpack.c.b16 %v4916, %v4915
    %v4939 = vpack.c.b16 %v4918, %v4917
    %v4940 = vpack.c.b16 %v4920, %v4919
    %v4941 = vpack.c.b16 %v4922, %v4921
    %v4942 = vpack.c.b16 %v4924, %v4923
    %v4943 = vpack.c.b16 %v4926, %v4925
    %v4944 = vpack.c.b16 %v4928, %v4927
    %4961 = vmatprep.subr.bf16.mxu0 0
    %4962 = vmatpush1.bf16.msra.mxu0 %v4936
    %4963 = vmatprep.subr.bf16.mxu0 0
    %4964 = vmatpush1.bf16.msra.mxu0 %v4935
    %4965 = vmatprep.subr.bf16.mxu0 0
    %4966 = vmatpush1.bf16.msra.mxu0 %v4934
    %4967 = vmatprep.subr.bf16.mxu0 0
    %4968 = vmatpush1.bf16.msra.mxu0 %v4933
    %4969 = vmatprep.subr.bf16.mxu0 0
    %4970 = vmatpush1.bf16.msra.mxu0 %v4932
    %4971 = vmatprep.subr.bf16.mxu0 0
    %4972 = vmatpush1.bf16.msra.mxu0 %v4931
    %4973 = vmatprep.subr.bf16.mxu0 0
    %4974 = vmatpush1.bf16.msra.mxu0 %v4930
    %4975 = vmatprep.subr.bf16.mxu0 0
    %4976 = vmatpush1.bf16.msra.mxu0 %v4929
    %4977 = vmatprep.subr.bf16.mxu0 0
    %4978 = vmatpush2.bf16.msra.mxu0 %v4944
    %4979 = vmatprep.subr.bf16.mxu0 0
    %4980 = vmatpush2.bf16.msra.mxu0 %v4943
    %4981 = vmatprep.subr.bf16.mxu0 0
    %4982 = vmatpush2.bf16.msra.mxu0 %v4942
    %4983 = vmatprep.subr.bf16.mxu0 0
    %4984 = vmatpush2.bf16.msra.mxu0 %v4941
    %4985 = vmatprep.subr.bf16.mxu0 0
    %4986 = vmatpush2.bf16.msra.mxu0 %v4940
    %4987 = vmatprep.subr.bf16.mxu0 0
    %4988 = vmatpush2.bf16.msra.mxu0 %v4939
    %4989 = vmatprep.subr.bf16.mxu0 0
    %4990 = vmatpush2.bf16.msra.mxu0 %v4938
    %4991 = vmatprep.subr.bf16.mxu0 0
    %4992 = vmatpush2.bf16.msra.mxu0 %v4937
    %4993 = vmatprep.mubr.bf16.mxu0 %v4826
    %4994 = vmatmul.mubr.bf16.gmra.mxu0 %v4825
    %v4995 = vpop.f32.mrf.mxu0
    %v4996 = vadd.f32 %v4863, %v4995
    %v4997 = vpop.f32.mrf.mxu0
    %v4998 = vpop.f32.mrf.mxu0
    %v4999 = vpop.f32.mrf.mxu0
    %5000 = vdwg.mxu0
    %v5001 = vmax.f32 %v4996, 0.0
    %s5002 = sld [smem:[#allocation2]]
    %v5003 = vsub.f32 %v5001, %v5001
    %v5004 = vstv %s5002
    %v5005 = vmul.f32 %v5004, %v5003
    %v5006 = vadd.f32 %v5001, %v5005
    %v5007 = vpack.c.bf16 %v5006, %v5006
    %v5008 = vld [vmem:[%s7] sm:$0xff]
    %v5009 = vld [vmem:[%s7 + $0x8] sm:$0xff]
    %v5010 = vld [vmem:[%s7 + $0x10] sm:$0xff]
    %v5011 = vld [vmem:[%s7 + $0x18] sm:$0xff]
    %v5016 = vunpack.c.l.b16 %v5008
    %v5017 = vunpack.c.h.b16 %v5008
    %v5018 = vunpack.c.l.b16 %v5009
    %v5019 = vunpack.c.h.b16 %v5009
    %v5020 = vunpack.c.l.b16 %v5010
    %v5021 = vunpack.c.h.b16 %v5010
    %v5022 = vunpack.c.l.b16 %v5011
    %v5023 = vunpack.c.h.b16 %v5011
    %v5024 = vpack.c.b16 %v5018, %v5016
    %v5025 = vpack.c.b16 %v5019, %v5017
    %v5026 = vpack.c.b16 %v5022, %v5020
    %v5027 = vpack.c.b16 %v5023, %v5021
    %vm5032 = vcmask 261120
    %v5034 = vsel %vm5032, %v5007, 0
    %5036 = vmatprep.subr.bf16.mxu0 0
    %5037 = vmatpush1.bf16.msra.mxu0 0
    %5038 = vmatprep.subr.bf16.mxu0 0
    %5039 = vmatpush1.bf16.msra.mxu0 0
    %5040 = vmatprep.subr.bf16.mxu0 0
    %5041 = vmatpush1.bf16.msra.mxu0 0
    %5042 = vmatprep.subr.bf16.mxu0 0
    %5043 = vmatpush1.bf16.msra.mxu0 0
    %5044 = vmatprep.subr.bf16.mxu0 0
    %5045 = vmatpush1.bf16.msra.mxu0 0
    %5046 = vmatprep.subr.bf16.mxu0 0
    %5047 = vmatpush1.bf16.msra.mxu0 0
    %5048 = vmatprep.subr.bf16.mxu0 %v5027
    %5049 = vmatpush1.bf16.msra.mxu0 %v5026
    %5050 = vmatprep.subr.bf16.mxu0 %v5025
    %5051 = vmatpush1.bf16.msra.mxu0 %v5024
    %5052 = vmatprep.subr.bf16.mxu0 0
    %5053 = vmatpush2.bf16.msra.mxu0 0
    %5054 = vmatprep.subr.bf16.mxu0 0
    %5055 = vmatpush2.bf16.msra.mxu0 0
    %5056 = vmatprep.subr.bf16.mxu0 0
    %5057 = vmatpush2.bf16.msra.mxu0 0
    %5058 = vmatprep.subr.bf16.mxu0 0
    %5059 = vmatpush2.bf16.msra.mxu0 0
    %5060 = vmatprep.subr.bf16.mxu0 0
    %5061 = vmatpush2.bf16.msra.mxu0 0
    %5062 = vmatprep.subr.bf16.mxu0 0
    %5063 = vmatpush2.bf16.msra.mxu0 0
    %5064 = vmatprep.subr.bf16.mxu0 0
    %5065 = vmatpush2.bf16.msra.mxu0 0
    %5066 = vmatprep.subr.bf16.mxu0 0
    %5067 = vmatpush2.bf16.msra.mxu0 0
    %5068 = vmatprep.mubr.bf16.mxu0 0
    %5069 = vmatmul.mubr.bf16.gmra.mxu0 %v5034
    %v5070 = vpop.f32.mrf.mxu0
    %v5071 = vadd.f32 0.0, %v5070
    %v5072 = vpop.f32.mrf.mxu0
    %v5073 = vadd.f32 0.0, %v5072
    %v5074 = vpop.f32.mrf.mxu0
    %v5075 = vpop.f32.mrf.mxu0
    %5076 = vdwg.mxu0
    %v5077 = vpack.c.bf16 %v5071, %v5071
    %v5078 = vpack.c.bf16 %v5073, %v5073
    %v5079 = vld [vmem:[%s5] sm:$0xff]
    %v5080 = vld [vmem:[%s5 + $0x8] sm:$0xff]
    %v5081 = vld [vmem:[%s5 + $0x10] sm:$0xff]
    %v5082 = vld [vmem:[%s5 + $0x18] sm:$0xff]
    %v5083 = vld [vmem:[%s5 + $0x20] sm:$0xf]
    %v5084 = vld [vmem:[%s5 + $0x24] sm:$0xff]
    %v5085 = vld [vmem:[%s5 + $0x2c] sm:$0xff]
    %v5086 = vld [vmem:[%s5 + $0x34] sm:$0xff]
    %v5087 = vld [vmem:[%s5 + $0x3c] sm:$0xff]
    %v5088 = vld [vmem:[%s5 + $0x44] sm:$0xf]
    %v5089 = vld [vmem:[%s5 + $0x48] sm:$0xff]
    %v5090 = vld [vmem:[%s5 + $0x50] sm:$0xff]
    %v5091 = vld [vmem:[%s5 + $0x58] sm:$0xff]
    %v5092 = vld [vmem:[%s5 + $0x60] sm:$0xff]
    %v5093 = vld [vmem:[%s5 + $0x68] sm:$0xf]
    %v5094 = vld [vmem:[%s5 + $0x6c] sm:$0xff]
    %v5095 = vld [vmem:[%s5 + $0x74] sm:$0xff]
    %v5096 = vld [vmem:[%s5 + $0x7c] sm:$0xff]
    %v5097 = vld [vmem:[%s5 + $0x84] sm:$0xff]
    %v5098 = vld [vmem:[%s5 + $0x8c] sm:$0xf]
    %v5099 = vld [vmem:[%s5 + $0x90] sm:$0xff]
    %v5100 = vld [vmem:[%s5 + $0x98] sm:$0xff]
    %v5101 = vld [vmem:[%s5 + $0xa0] sm:$0xff]
    %v5102 = vld [vmem:[%s5 + $0xa8] sm:$0xff]
    %v5103 = vld [vmem:[%s5 + $0xb0] sm:$0xf]
    %v5104 = vld [vmem:[%s5 + $0xb4] sm:$0xff]
    %v5105 = vld [vmem:[%s5 + $0xbc] sm:$0xff]
    %v5106 = vld [vmem:[%s5 + $0xc4] sm:$0xff]
    %v5107 = vld [vmem:[%s5 + $0xcc] sm:$0xff]
    %v5108 = vld [vmem:[%s5 + $0xd4] sm:$0xf]
    %v5109 = vld [vmem:[%s5 + $0xd8] sm:$0xff]
    %v5110 = vld [vmem:[%s5 + $0xe0] sm:$0xff]
    %v5111 = vld [vmem:[%s5 + $0xe8] sm:$0xff]
    %v5112 = vld [vmem:[%s5 + $0xf0] sm:$0xff]
    %v5113 = vld [vmem:[%s5 + $0xf8] sm:$0xf]
    %v5114 = vld [vmem:[%s5 + $0xfc] sm:$0xff]
    %v5115 = vld [vmem:[%s5 + $0x104] sm:$0xff]
    %v5116 = vld [vmem:[%s5 + $0x10c] sm:$0xff]
    %v5117 = vld [vmem:[%s5 + $0x114] sm:$0xff]
    %v5118 = vld [vmem:[%s5 + $0x11c] sm:$0xf]
    %v5119 = vld [vmem:[%s5 + $0x120] sm:$0xff]
    %v5120 = vld [vmem:[%s5 + $0x128] sm:$0xff]
    %v5121 = vld [vmem:[%s5 + $0x130] sm:$0xff]
    %v5122 = vld [vmem:[%s5 + $0x138] sm:$0xff]
    %v5123 = vld [vmem:[%s5 + $0x140] sm:$0xf]
    %v5124 = vld [vmem:[%s5 + $0x144] sm:$0xff]
    %v5125 = vld [vmem:[%s5 + $0x14c] sm:$0xff]
    %v5126 = vld [vmem:[%s5 + $0x154] sm:$0xff]
    %v5127 = vld [vmem:[%s5 + $0x15c] sm:$0xff]
    %v5128 = vld [vmem:[%s5 + $0x164] sm:$0xf]
    %v5129 = vld [vmem:[%s5 + $0x168] sm:$0xff]
    %v5130 = vld [vmem:[%s5 + $0x170] sm:$0xff]
    %v5131 = vld [vmem:[%s5 + $0x178] sm:$0xff]
    %v5132 = vld [vmem:[%s5 + $0x180] sm:$0xff]
    %v5133 = vld [vmem:[%s5 + $0x188] sm:$0xf]
    %v5134 = vld [vmem:[%s5 + $0x18c] sm:$0xff]
    %v5135 = vld [vmem:[%s5 + $0x194] sm:$0xff]
    %v5136 = vld [vmem:[%s5 + $0x19c] sm:$0xff]
    %v5137 = vld [vmem:[%s5 + $0x1a4] sm:$0xff]
    %v5138 = vld [vmem:[%s5 + $0x1ac] sm:$0xf]
    %v5139 = vld [vmem:[%s5 + $0x1b0] sm:$0xff]
    %v5140 = vld [vmem:[%s5 + $0x1b8] sm:$0xff]
    %v5141 = vld [vmem:[%s5 + $0x1c0] sm:$0xff]
    %v5142 = vld [vmem:[%s5 + $0x1c8] sm:$0xff]
    %v5143 = vld [vmem:[%s5 + $0x1d0] sm:$0xf]
    %v5144 = vld [vmem:[%s5 + $0x1d4] sm:$0xff]
    %v5145 = vld [vmem:[%s5 + $0x1dc] sm:$0xff]
    %v5146 = vld [vmem:[%s5 + $0x1e4] sm:$0xff]
    %v5147 = vld [vmem:[%s5 + $0x1ec] sm:$0xff]
    %v5148 = vld [vmem:[%s5 + $0x1f4] sm:$0xf]
    %v5149 = vld [vmem:[%s5 + $0x1f8] sm:$0xff]
    %v5150 = vld [vmem:[%s5 + $0x200] sm:$0xff]
    %v5151 = vld [vmem:[%s5 + $0x208] sm:$0xff]
    %v5152 = vld [vmem:[%s5 + $0x210] sm:$0xff]
    %v5153 = vld [vmem:[%s5 + $0x218] sm:$0xf]
    %v5154 = vld [vmem:[%s5 + $0x21c] sm:$0xff]
    %v5155 = vld [vmem:[%s5 + $0x224] sm:$0xff]
    %v5156 = vld [vmem:[%s5 + $0x22c] sm:$0xff]
    %v5157 = vld [vmem:[%s5 + $0x234] sm:$0xff]
    %v5158 = vld [vmem:[%s5 + $0x23c] sm:$0xf]
    %v5159 = vld [vmem:[%s5 + $0x240] sm:$0xff]
    %v5160 = vld [vmem:[%s5 + $0x248] sm:$0xff]
    %v5161 = vld [vmem:[%s5 + $0x250] sm:$0xff]
    %v5162 = vld [vmem:[%s5 + $0x258] sm:$0xff]
    %v5163 = vld [vmem:[%s5 + $0x260] sm:$0xf]
    %v5164 = vld [vmem:[%s5 + $0x264] sm:$0xff]
    %v5165 = vld [vmem:[%s5 + $0x26c] sm:$0xff]
    %v5166 = vld [vmem:[%s5 + $0x274] sm:$0xff]
    %v5167 = vld [vmem:[%s5 + $0x27c] sm:$0xff]
    %v5168 = vld [vmem:[%s5 + $0x284] sm:$0xf]
    %v5169 = vld [vmem:[%s5 + $0x288] sm:$0xff]
    %v5170 = vld [vmem:[%s5 + $0x290] sm:$0xff]
    %v5171 = vld [vmem:[%s5 + $0x298] sm:$0xff]
    %v5172 = vld [vmem:[%s5 + $0x2a0] sm:$0xff]
    %v5173 = vld [vmem:[%s5 + $0x2a8] sm:$0xf]
    %v5174 = vld [vmem:[%s5 + $0x2ac] sm:$0xff]
    %v5175 = vld [vmem:[%s5 + $0x2b4] sm:$0xff]
    %v5176 = vld [vmem:[%s5 + $0x2bc] sm:$0xff]
    %v5177 = vld [vmem:[%s5 + $0x2c4] sm:$0xff]
    %v5178 = vld [vmem:[%s5 + $0x2cc] sm:$0xf]
    %v5179 = vld [vmem:[%s5 + $0x2d0] sm:$0xff]
    %v5180 = vld [vmem:[%s5 + $0x2d8] sm:$0xff]
    %v5181 = vld [vmem:[%s5 + $0x2e0] sm:$0xff]
    %v5182 = vld [vmem:[%s5 + $0x2e8] sm:$0xff]
    %v5183 = vld [vmem:[%s5 + $0x2f0] sm:$0xf]
    %v5184 = vld [vmem:[%s5 + $0x2f4] sm:$0xff]
    %v5185 = vld [vmem:[%s5 + $0x2fc] sm:$0xff]
    %v5186 = vld [vmem:[%s5 + $0x304] sm:$0xff]
    %v5187 = vld [vmem:[%s5 + $0x30c] sm:$0xff]
    %v5188 = vld [vmem:[%s5 + $0x314] sm:$0xf]
    %v5189 = vld [vmem:[%s5 + $0x318] sm:$0xff]
    %v5190 = vld [vmem:[%s5 + $0x320] sm:$0xff]
    %v5191 = vld [vmem:[%s5 + $0x328] sm:$0xff]
    %v5192 = vld [vmem:[%s5 + $0x330] sm:$0xff]
    %v5193 = vld [vmem:[%s5 + $0x338] sm:$0xf]
    %v5194 = vld [vmem:[%s5 + $0x33c] sm:$0xff]
    %v5195 = vld [vmem:[%s5 + $0x344] sm:$0xff]
    %v5196 = vld [vmem:[%s5 + $0x34c] sm:$0xff]
    %v5197 = vld [vmem:[%s5 + $0x354] sm:$0xff]
    %v5198 = vld [vmem:[%s5 + $0x35c] sm:$0xf]
    %v5199 = vld [vmem:[%s5 + $0x360] sm:$0xff]
    %v5200 = vld [vmem:[%s5 + $0x368] sm:$0xff]
    %v5201 = vld [vmem:[%s5 + $0x370] sm:$0xff]
    %v5202 = vld [vmem:[%s5 + $0x378] sm:$0xff]
    %v5203 = vld [vmem:[%s5 + $0x380] sm:$0xf]
    %v5204 = vld [vmem:[%s5 + $0x384] sm:$0xff]
    %v5205 = vld [vmem:[%s5 + $0x38c] sm:$0xff]
    %v5206 = vld [vmem:[%s5 + $0x394] sm:$0xff]
    %v5207 = vld [vmem:[%s5 + $0x39c] sm:$0xff]
    %v5208 = vld [vmem:[%s5 + $0x3a4] sm:$0xf]
    %v5209 = vld [vmem:[%s5 + $0x3a8] sm:$0xff]
    %v5210 = vld [vmem:[%s5 + $0x3b0] sm:$0xff]
    %v5211 = vld [vmem:[%s5 + $0x3b8] sm:$0xff]
    %v5212 = vld [vmem:[%s5 + $0x3c0] sm:$0xff]
    %v5213 = vld [vmem:[%s5 + $0x3c8] sm:$0xf]
    %v5214 = vld [vmem:[%s5 + $0x3cc] sm:$0xff]
    %v5215 = vld [vmem:[%s5 + $0x3d4] sm:$0xff]
    %v5216 = vld [vmem:[%s5 + $0x3dc] sm:$0xff]
    %v5217 = vld [vmem:[%s5 + $0x3e4] sm:$0xff]
    %v5218 = vld [vmem:[%s5 + $0x3ec] sm:$0xf]
    %v5219 = vld [vmem:[%s5 + $0x3f0] sm:$0xff]
    %v5220 = vld [vmem:[%s5 + $0x3f8] sm:$0xff]
    %v5221 = vld [vmem:[%s5 + $0x400] sm:$0xff]
    %v5222 = vld [vmem:[%s5 + $0x408] sm:$0xff]
    %v5223 = vld [vmem:[%s5 + $0x410] sm:$0xf]
    %v5224 = vld [vmem:[%s5 + $0x414] sm:$0xff]
    %v5225 = vld [vmem:[%s5 + $0x41c] sm:$0xff]
    %v5226 = vld [vmem:[%s5 + $0x424] sm:$0xff]
    %v5227 = vld [vmem:[%s5 + $0x42c] sm:$0xff]
    %v5228 = vld [vmem:[%s5 + $0x434] sm:$0xf]
    %v5229 = vld [vmem:[%s5 + $0x438] sm:$0xff]
    %v5230 = vld [vmem:[%s5 + $0x440] sm:$0xff]
    %v5231 = vld [vmem:[%s5 + $0x448] sm:$0xff]
    %v5232 = vld [vmem:[%s5 + $0x450] sm:$0xff]
    %v5233 = vld [vmem:[%s5 + $0x458] sm:$0xf]
    %v5234 = vld [vmem:[%s5 + $0x45c] sm:$0xff]
    %v5235 = vld [vmem:[%s5 + $0x464] sm:$0xff]
    %v5236 = vld [vmem:[%s5 + $0x46c] sm:$0xff]
    %v5237 = vld [vmem:[%s5 + $0x474] sm:$0xff]
    %v5238 = vld [vmem:[%s5 + $0x47c] sm:$0xf]
    %v5399 = vunpack.c.l.b16 %v5079
    %v5400 = vunpack.c.h.b16 %v5079
    %v5401 = vunpack.c.l.b16 %v5080
    %v5402 = vunpack.c.h.b16 %v5080
    %v5403 = vunpack.c.l.b16 %v5081
    %v5404 = vunpack.c.h.b16 %v5081
    %v5405 = vunpack.c.l.b16 %v5082
    %v5406 = vunpack.c.h.b16 %v5082
    %v5407 = vunpack.c.l.b16 %v5083
    %v5408 = vunpack.c.l.b16 %v5084
    %v5409 = vunpack.c.h.b16 %v5084
    %v5410 = vunpack.c.l.b16 %v5085
    %v5411 = vunpack.c.h.b16 %v5085
    %v5412 = vunpack.c.l.b16 %v5086
    %v5413 = vunpack.c.h.b16 %v5086
    %v5414 = vunpack.c.l.b16 %v5087
    %v5415 = vunpack.c.h.b16 %v5087
    %v5416 = vunpack.c.l.b16 %v5088
    %v5417 = vunpack.c.l.b16 %v5089
    %v5418 = vunpack.c.h.b16 %v5089
    %v5419 = vunpack.c.l.b16 %v5090
    %v5420 = vunpack.c.h.b16 %v5090
    %v5421 = vunpack.c.l.b16 %v5091
    %v5422 = vunpack.c.h.b16 %v5091
    %v5423 = vunpack.c.l.b16 %v5092
    %v5424 = vunpack.c.h.b16 %v5092
    %v5425 = vunpack.c.l.b16 %v5093
    %v5426 = vunpack.c.l.b16 %v5094
    %v5427 = vunpack.c.h.b16 %v5094
    %v5428 = vunpack.c.l.b16 %v5095
    %v5429 = vunpack.c.h.b16 %v5095
    %v5430 = vunpack.c.l.b16 %v5096
    %v5431 = vunpack.c.h.b16 %v5096
    %v5432 = vunpack.c.l.b16 %v5097
    %v5433 = vunpack.c.h.b16 %v5097
    %v5434 = vunpack.c.l.b16 %v5098
    %v5435 = vunpack.c.l.b16 %v5099
    %v5436 = vunpack.c.h.b16 %v5099
    %v5437 = vunpack.c.l.b16 %v5100
    %v5438 = vunpack.c.h.b16 %v5100
    %v5439 = vunpack.c.l.b16 %v5101
    %v5440 = vunpack.c.h.b16 %v5101
    %v5441 = vunpack.c.l.b16 %v5102
    %v5442 = vunpack.c.h.b16 %v5102
    %v5443 = vunpack.c.l.b16 %v5103
    %v5444 = vunpack.c.l.b16 %v5104
    %v5445 = vunpack.c.h.b16 %v5104
    %v5446 = vunpack.c.l.b16 %v5105
    %v5447 = vunpack.c.h.b16 %v5105
    %v5448 = vunpack.c.l.b16 %v5106
    %v5449 = vunpack.c.h.b16 %v5106
    %v5450 = vunpack.c.l.b16 %v5107
    %v5451 = vunpack.c.h.b16 %v5107
    %v5452 = vunpack.c.l.b16 %v5108
    %v5453 = vunpack.c.l.b16 %v5109
    %v5454 = vunpack.c.h.b16 %v5109
    %v5455 = vunpack.c.l.b16 %v5110
    %v5456 = vunpack.c.h.b16 %v5110
    %v5457 = vunpack.c.l.b16 %v5111
    %v5458 = vunpack.c.h.b16 %v5111
    %v5459 = vunpack.c.l.b16 %v5112
    %v5460 = vunpack.c.h.b16 %v5112
    %v5461 = vunpack.c.l.b16 %v5113
    %v5462 = vunpack.c.l.b16 %v5114
    %v5463 = vunpack.c.h.b16 %v5114
    %v5464 = vunpack.c.l.b16 %v5115
    %v5465 = vunpack.c.h.b16 %v5115
    %v5466 = vunpack.c.l.b16 %v5116
    %v5467 = vunpack.c.h.b16 %v5116
    %v5468 = vunpack.c.l.b16 %v5117
    %v5469 = vunpack.c.h.b16 %v5117
    %v5470 = vunpack.c.l.b16 %v5118
    %v5471 = vunpack.c.l.b16 %v5119
    %v5472 = vunpack.c.h.b16 %v5119
    %v5473 = vunpack.c.l.b16 %v5120
    %v5474 = vunpack.c.h.b16 %v5120
    %v5475 = vunpack.c.l.b16 %v5121
    %v5476 = vunpack.c.h.b16 %v5121
    %v5477 = vunpack.c.l.b16 %v5122
    %v5478 = vunpack.c.h.b16 %v5122
    %v5479 = vunpack.c.l.b16 %v5123
    %v5480 = vunpack.c.l.b16 %v5124
    %v5481 = vunpack.c.h.b16 %v5124
    %v5482 = vunpack.c.l.b16 %v5125
    %v5483 = vunpack.c.h.b16 %v5125
    %v5484 = vunpack.c.l.b16 %v5126
    %v5485 = vunpack.c.h.b16 %v5126
    %v5486 = vunpack.c.l.b16 %v5127
    %v5487 = vunpack.c.h.b16 %v5127
    %v5488 = vunpack.c.l.b16 %v5128
    %v5489 = vunpack.c.l.b16 %v5129
    %v5490 = vunpack.c.h.b16 %v5129
    %v5491 = vunpack.c.l.b16 %v5130
    %v5492 = vunpack.c.h.b16 %v5130
    %v5493 = vunpack.c.l.b16 %v5131
    %v5494 = vunpack.c.h.b16 %v5131
    %v5495 = vunpack.c.l.b16 %v5132
    %v5496 = vunpack.c.h.b16 %v5132
    %v5497 = vunpack.c.l.b16 %v5133
    %v5498 = vunpack.c.l.b16 %v5134
    %v5499 = vunpack.c.h.b16 %v5134
    %v5500 = vunpack.c.l.b16 %v5135
    %v5501 = vunpack.c.h.b16 %v5135
    %v5502 = vunpack.c.l.b16 %v5136
    %v5503 = vunpack.c.h.b16 %v5136
    %v5504 = vunpack.c.l.b16 %v5137
    %v5505 = vunpack.c.h.b16 %v5137
    %v5506 = vunpack.c.l.b16 %v5138
    %v5507 = vunpack.c.l.b16 %v5139
    %v5508 = vunpack.c.h.b16 %v5139
    %v5509 = vunpack.c.l.b16 %v5140
    %v5510 = vunpack.c.h.b16 %v5140
    %v5511 = vunpack.c.l.b16 %v5141
    %v5512 = vunpack.c.h.b16 %v5141
    %v5513 = vunpack.c.l.b16 %v5142
    %v5514 = vunpack.c.h.b16 %v5142
    %v5515 = vunpack.c.l.b16 %v5143
    %v5516 = vunpack.c.l.b16 %v5144
    %v5517 = vunpack.c.h.b16 %v5144
    %v5518 = vunpack.c.l.b16 %v5145
    %v5519 = vunpack.c.h.b16 %v5145
    %v5520 = vunpack.c.l.b16 %v5146
    %v5521 = vunpack.c.h.b16 %v5146
    %v5522 = vunpack.c.l.b16 %v5147
    %v5523 = vunpack.c.h.b16 %v5147
    %v5524 = vunpack.c.l.b16 %v5148
    %v5525 = vunpack.c.l.b16 %v5149
    %v5526 = vunpack.c.h.b16 %v5149
    %v5527 = vunpack.c.l.b16 %v5150
    %v5528 = vunpack.c.h.b16 %v5150
    %v5529 = vunpack.c.l.b16 %v5151
    %v5530 = vunpack.c.h.b16 %v5151
    %v5531 = vunpack.c.l.b16 %v5152
    %v5532 = vunpack.c.h.b16 %v5152
    %v5533 = vunpack.c.l.b16 %v5153
    %v5534 = vunpack.c.l.b16 %v5154
    %v5535 = vunpack.c.h.b16 %v5154
    %v5536 = vunpack.c.l.b16 %v5155
    %v5537 = vunpack.c.h.b16 %v5155
    %v5538 = vunpack.c.l.b16 %v5156
    %v5539 = vunpack.c.h.b16 %v5156
    %v5540 = vunpack.c.l.b16 %v5157
    %v5541 = vunpack.c.h.b16 %v5157
    %v5542 = vunpack.c.l.b16 %v5158
    %v5543 = vunpack.c.l.b16 %v5159
    %v5544 = vunpack.c.h.b16 %v5159
    %v5545 = vunpack.c.l.b16 %v5160
    %v5546 = vunpack.c.h.b16 %v5160
    %v5547 = vunpack.c.l.b16 %v5161
    %v5548 = vunpack.c.h.b16 %v5161
    %v5549 = vunpack.c.l.b16 %v5162
    %v5550 = vunpack.c.h.b16 %v5162
    %v5551 = vunpack.c.l.b16 %v5163
    %v5552 = vunpack.c.l.b16 %v5164
    %v5553 = vunpack.c.h.b16 %v5164
    %v5554 = vunpack.c.l.b16 %v5165
    %v5555 = vunpack.c.h.b16 %v5165
    %v5556 = vunpack.c.l.b16 %v5166
    %v5557 = vunpack.c.h.b16 %v5166
    %v5558 = vunpack.c.l.b16 %v5167
    %v5559 = vunpack.c.h.b16 %v5167
    %v5560 = vunpack.c.l.b16 %v5168
    %v5561 = vunpack.c.l.b16 %v5169
    %v5562 = vunpack.c.h.b16 %v5169
    %v5563 = vunpack.c.l.b16 %v5170
    %v5564 = vunpack.c.h.b16 %v5170
    %v5565 = vunpack.c.l.b16 %v5171
    %v5566 = vunpack.c.h.b16 %v5171
    %v5567 = vunpack.c.l.b16 %v5172
    %v5568 = vunpack.c.h.b16 %v5172
    %v5569 = vunpack.c.l.b16 %v5173
    %v5570 = vunpack.c.l.b16 %v5174
    %v5571 = vunpack.c.h.b16 %v5174
    %v5572 = vunpack.c.l.b16 %v5175
    %v5573 = vunpack.c.h.b16 %v5175
    %v5574 = vunpack.c.l.b16 %v5176
    %v5575 = vunpack.c.h.b16 %v5176
    %v5576 = vunpack.c.l.b16 %v5177
    %v5577 = vunpack.c.h.b16 %v5177
    %v5578 = vunpack.c.l.b16 %v5178
    %v5579 = vunpack.c.l.b16 %v5179
    %v5580 = vunpack.c.h.b16 %v5179
    %v5581 = vunpack.c.l.b16 %v5180
    %v5582 = vunpack.c.h.b16 %v5180
    %v5583 = vunpack.c.l.b16 %v5181
    %v5584 = vunpack.c.h.b16 %v5181
    %v5585 = vunpack.c.l.b16 %v5182
    %v5586 = vunpack.c.h.b16 %v5182
    %v5587 = vunpack.c.l.b16 %v5183
    %v5588 = vunpack.c.l.b16 %v5184
    %v5589 = vunpack.c.h.b16 %v5184
    %v5590 = vunpack.c.l.b16 %v5185
    %v5591 = vunpack.c.h.b16 %v5185
    %v5592 = vunpack.c.l.b16 %v5186
    %v5593 = vunpack.c.h.b16 %v5186
    %v5594 = vunpack.c.l.b16 %v5187
    %v5595 = vunpack.c.h.b16 %v5187
    %v5596 = vunpack.c.l.b16 %v5188
    %v5597 = vunpack.c.l.b16 %v5189
    %v5598 = vunpack.c.h.b16 %v5189
    %v5599 = vunpack.c.l.b16 %v5190
    %v5600 = vunpack.c.h.b16 %v5190
    %v5601 = vunpack.c.l.b16 %v5191
    %v5602 = vunpack.c.h.b16 %v5191
    %v5603 = vunpack.c.l.b16 %v5192
    %v5604 = vunpack.c.h.b16 %v5192
    %v5605 = vunpack.c.l.b16 %v5193
    %v5606 = vunpack.c.l.b16 %v5194
    %v5607 = vunpack.c.h.b16 %v5194
    %v5608 = vunpack.c.l.b16 %v5195
    %v5609 = vunpack.c.h.b16 %v5195
    %v5610 = vunpack.c.l.b16 %v5196
    %v5611 = vunpack.c.h.b16 %v5196
    %v5612 = vunpack.c.l.b16 %v5197
    %v5613 = vunpack.c.h.b16 %v5197
    %v5614 = vunpack.c.l.b16 %v5198
    %v5615 = vunpack.c.l.b16 %v5199
    %v5616 = vunpack.c.h.b16 %v5199
    %v5617 = vunpack.c.l.b16 %v5200
    %v5618 = vunpack.c.h.b16 %v5200
    %v5619 = vunpack.c.l.b16 %v5201
    %v5620 = vunpack.c.h.b16 %v5201
    %v5621 = vunpack.c.l.b16 %v5202
    %v5622 = vunpack.c.h.b16 %v5202
    %v5623 = vunpack.c.l.b16 %v5203
    %v5624 = vunpack.c.l.b16 %v5204
    %v5625 = vunpack.c.h.b16 %v5204
    %v5626 = vunpack.c.l.b16 %v5205
    %v5627 = vunpack.c.h.b16 %v5205
    %v5628 = vunpack.c.l.b16 %v5206
    %v5629 = vunpack.c.h.b16 %v5206
    %v5630 = vunpack.c.l.b16 %v5207
    %v5631 = vunpack.c.h.b16 %v5207
    %v5632 = vunpack.c.l.b16 %v5208
    %v5633 = vunpack.c.l.b16 %v5209
    %v5634 = vunpack.c.h.b16 %v5209
    %v5635 = vunpack.c.l.b16 %v5210
    %v5636 = vunpack.c.h.b16 %v5210
    %v5637 = vunpack.c.l.b16 %v5211
    %v5638 = vunpack.c.h.b16 %v5211
    %v5639 = vunpack.c.l.b16 %v5212
    %v5640 = vunpack.c.h.b16 %v5212
    %v5641 = vunpack.c.l.b16 %v5213
    %v5642 = vunpack.c.l.b16 %v5214
    %v5643 = vunpack.c.h.b16 %v5214
    %v5644 = vunpack.c.l.b16 %v5215
    %v5645 = vunpack.c.h.b16 %v5215
    %v5646 = vunpack.c.l.b16 %v5216
    %v5647 = vunpack.c.h.b16 %v5216
    %v5648 = vunpack.c.l.b16 %v5217
    %v5649 = vunpack.c.h.b16 %v5217
    %v5650 = vunpack.c.l.b16 %v5218
    %v5651 = vunpack.c.l.b16 %v5219
    %v5652 = vunpack.c.h.b16 %v5219
    %v5653 = vunpack.c.l.b16 %v5220
    %v5654 = vunpack.c.h.b16 %v5220
    %v5655 = vunpack.c.l.b16 %v5221
    %v5656 = vunpack.c.h.b16 %v5221
    %v5657 = vunpack.c.l.b16 %v5222
    %v5658 = vunpack.c.h.b16 %v5222
    %v5659 = vunpack.c.l.b16 %v5223
    %v5660 = vunpack.c.l.b16 %v5224
    %v5661 = vunpack.c.h.b16 %v5224
    %v5662 = vunpack.c.l.b16 %v5225
    %v5663 = vunpack.c.h.b16 %v5225
    %v5664 = vunpack.c.l.b16 %v5226
    %v5665 = vunpack.c.h.b16 %v5226
    %v5666 = vunpack.c.l.b16 %v5227
    %v5667 = vunpack.c.h.b16 %v5227
    %v5668 = vunpack.c.l.b16 %v5228
    %v5669 = vunpack.c.l.b16 %v5229
    %v5670 = vunpack.c.h.b16 %v5229
    %v5671 = vunpack.c.l.b16 %v5230
    %v5672 = vunpack.c.h.b16 %v5230
    %v5673 = vunpack.c.l.b16 %v5231
    %v5674 = vunpack.c.h.b16 %v5231
    %v5675 = vunpack.c.l.b16 %v5232
    %v5676 = vunpack.c.h.b16 %v5232
    %v5677 = vunpack.c.l.b16 %v5233
    %v5678 = vunpack.c.l.b16 %v5234
    %v5679 = vunpack.c.h.b16 %v5234
    %v5680 = vunpack.c.l.b16 %v5235
    %v5681 = vunpack.c.h.b16 %v5235
    %v5682 = vunpack.c.l.b16 %v5236
    %v5683 = vunpack.c.h.b16 %v5236
    %v5684 = vunpack.c.l.b16 %v5237
    %v5685 = vunpack.c.h.b16 %v5237
    %v5686 = vunpack.c.l.b16 %v5238
    %v5687 = vpack.c.b16 %v5408, %v5399
    %v5688 = vpack.c.b16 %v5409, %v5400
    %v5689 = vpack.c.b16 %v5410, %v5401
    %v5690 = vpack.c.b16 %v5411, %v5402
    %v5691 = vpack.c.b16 %v5412, %v5403
    %v5692 = vpack.c.b16 %v5413, %v5404
    %v5693 = vpack.c.b16 %v5414, %v5405
    %v5694 = vpack.c.b16 %v5415, %v5406
    %v5695 = vpack.c.b16 %v5416, %v5407
    %v5696 = vpack.c.b16 %v5426, %v5417
    %v5697 = vpack.c.b16 %v5427, %v5418
    %v5698 = vpack.c.b16 %v5428, %v5419
    %v5699 = vpack.c.b16 %v5429, %v5420
    %v5700 = vpack.c.b16 %v5430, %v5421
    %v5701 = vpack.c.b16 %v5431, %v5422
    %v5702 = vpack.c.b16 %v5432, %v5423
    %v5703 = vpack.c.b16 %v5433, %v5424
    %v5704 = vpack.c.b16 %v5434, %v5425
    %v5705 = vpack.c.b16 %v5444, %v5435
    %v5706 = vpack.c.b16 %v5445, %v5436
    %v5707 = vpack.c.b16 %v5446, %v5437
    %v5708 = vpack.c.b16 %v5447, %v5438
    %v5709 = vpack.c.b16 %v5448, %v5439
    %v5710 = vpack.c.b16 %v5449, %v5440
    %v5711 = vpack.c.b16 %v5450, %v5441
    %v5712 = vpack.c.b16 %v5451, %v5442
    %v5713 = vpack.c.b16 %v5452, %v5443
    %v5714 = vpack.c.b16 %v5462, %v5453
    %v5715 = vpack.c.b16 %v5463, %v5454
    %v5716 = vpack.c.b16 %v5464, %v5455
    %v5717 = vpack.c.b16 %v5465, %v5456
    %v5718 = vpack.c.b16 %v5466, %v5457
    %v5719 = vpack.c.b16 %v5467, %v5458
    %v5720 = vpack.c.b16 %v5468, %v5459
    %v5721 = vpack.c.b16 %v5469, %v5460
    %v5722 = vpack.c.b16 %v5470, %v5461
    %v5723 = vpack.c.b16 %v5480, %v5471
    %v5724 = vpack.c.b16 %v5481, %v5472
    %v5725 = vpack.c.b16 %v5482, %v5473
    %v5726 = vpack.c.b16 %v5483, %v5474
    %v5727 = vpack.c.b16 %v5484, %v5475
    %v5728 = vpack.c.b16 %v5485, %v5476
    %v5729 = vpack.c.b16 %v5486, %v5477
    %v5730 = vpack.c.b16 %v5487, %v5478
    %v5731 = vpack.c.b16 %v5488, %v5479
    %v5732 = vpack.c.b16 %v5498, %v5489
    %v5733 = vpack.c.b16 %v5499, %v5490
    %v5734 = vpack.c.b16 %v5500, %v5491
    %v5735 = vpack.c.b16 %v5501, %v5492
    %v5736 = vpack.c.b16 %v5502, %v5493
    %v5737 = vpack.c.b16 %v5503, %v5494
    %v5738 = vpack.c.b16 %v5504, %v5495
    %v5739 = vpack.c.b16 %v5505, %v5496
    %v5740 = vpack.c.b16 %v5506, %v5497
    %v5741 = vpack.c.b16 %v5516, %v5507
    %v5742 = vpack.c.b16 %v5517, %v5508
    %v5743 = vpack.c.b16 %v5518, %v5509
    %v5744 = vpack.c.b16 %v5519, %v5510
    %v5745 = vpack.c.b16 %v5520, %v5511
    %v5746 = vpack.c.b16 %v5521, %v5512
    %v5747 = vpack.c.b16 %v5522, %v5513
    %v5748 = vpack.c.b16 %v5523, %v5514
    %v5749 = vpack.c.b16 %v5524, %v5515
    %v5750 = vpack.c.b16 %v5534, %v5525
    %v5751 = vpack.c.b16 %v5535, %v5526
    %v5752 = vpack.c.b16 %v5536, %v5527
    %v5753 = vpack.c.b16 %v5537, %v5528
    %v5754 = vpack.c.b16 %v5538, %v5529
    %v5755 = vpack.c.b16 %v5539, %v5530
    %v5756 = vpack.c.b16 %v5540, %v5531
    %v5757 = vpack.c.b16 %v5541, %v5532
    %v5758 = vpack.c.b16 %v5542, %v5533
    %v5759 = vpack.c.b16 %v5552, %v5543
    %v5760 = vpack.c.b16 %v5553, %v5544
    %v5761 = vpack.c.b16 %v5554, %v5545
    %v5762 = vpack.c.b16 %v5555, %v5546
    %v5763 = vpack.c.b16 %v5556, %v5547
    %v5764 = vpack.c.b16 %v5557, %v5548
    %v5765 = vpack.c.b16 %v5558, %v5549
    %v5766 = vpack.c.b16 %v5559, %v5550
    %v5767 = vpack.c.b16 %v5560, %v5551
    %v5768 = vpack.c.b16 %v5570, %v5561
    %v5769 = vpack.c.b16 %v5571, %v5562
    %v5770 = vpack.c.b16 %v5572, %v5563
    %v5771 = vpack.c.b16 %v5573, %v5564
    %v5772 = vpack.c.b16 %v5574, %v5565
    %v5773 = vpack.c.b16 %v5575, %v5566
    %v5774 = vpack.c.b16 %v5576, %v5567
    %v5775 = vpack.c.b16 %v5577, %v5568
    %v5776 = vpack.c.b16 %v5578, %v5569
    %v5777 = vpack.c.b16 %v5588, %v5579
    %v5778 = vpack.c.b16 %v5589, %v5580
    %v5779 = vpack.c.b16 %v5590, %v5581
    %v5780 = vpack.c.b16 %v5591, %v5582
    %v5781 = vpack.c.b16 %v5592, %v5583
    %v5782 = vpack.c.b16 %v5593, %v5584
    %v5783 = vpack.c.b16 %v5594, %v5585
    %v5784 = vpack.c.b16 %v5595, %v5586
    %v5785 = vpack.c.b16 %v5596, %v5587
    %v5786 = vpack.c.b16 %v5606, %v5597
    %v5787 = vpack.c.b16 %v5607, %v5598
    %v5788 = vpack.c.b16 %v5608, %v5599
    %v5789 = vpack.c.b16 %v5609, %v5600
    %v5790 = vpack.c.b16 %v5610, %v5601
    %v5791 = vpack.c.b16 %v5611, %v5602
    %v5792 = vpack.c.b16 %v5612, %v5603
    %v5793 = vpack.c.b16 %v5613, %v5604
    %v5794 = vpack.c.b16 %v5614, %v5605
    %v5795 = vpack.c.b16 %v5624, %v5615
    %v5796 = vpack.c.b16 %v5625, %v5616
    %v5797 = vpack.c.b16 %v5626, %v5617
    %v5798 = vpack.c.b16 %v5627, %v5618
    %v5799 = vpack.c.b16 %v5628, %v5619
    %v5800 = vpack.c.b16 %v5629, %v5620
    %v5801 = vpack.c.b16 %v5630, %v5621
    %v5802 = vpack.c.b16 %v5631, %v5622
    %v5803 = vpack.c.b16 %v5632, %v5623
    %v5804 = vpack.c.b16 %v5642, %v5633
    %v5805 = vpack.c.b16 %v5643, %v5634
    %v5806 = vpack.c.b16 %v5644, %v5635
    %v5807 = vpack.c.b16 %v5645, %v5636
    %v5808 = vpack.c.b16 %v5646, %v5637
    %v5809 = vpack.c.b16 %v5647, %v5638
    %v5810 = vpack.c.b16 %v5648, %v5639
    %v5811 = vpack.c.b16 %v5649, %v5640
    %v5812 = vpack.c.b16 %v5650, %v5641
    %v5813 = vpack.c.b16 %v5660, %v5651
    %v5814 = vpack.c.b16 %v5661, %v5652
    %v5815 = vpack.c.b16 %v5662, %v5653
    %v5816 = vpack.c.b16 %v5663, %v5654
    %v5817 = vpack.c.b16 %v5664, %v5655
    %v5818 = vpack.c.b16 %v5665, %v5656
    %v5819 = vpack.c.b16 %v5666, %v5657
    %v5820 = vpack.c.b16 %v5667, %v5658
    %v5821 = vpack.c.b16 %v5668, %v5659
    %v5822 = vpack.c.b16 %v5678, %v5669
    %v5823 = vpack.c.b16 %v5679, %v5670
    %v5824 = vpack.c.b16 %v5680, %v5671
    %v5825 = vpack.c.b16 %v5681, %v5672
    %v5826 = vpack.c.b16 %v5682, %v5673
    %v5827 = vpack.c.b16 %v5683, %v5674
    %v5828 = vpack.c.b16 %v5684, %v5675
    %v5829 = vpack.c.b16 %v5685, %v5676
    %v5830 = vpack.c.b16 %v5686, %v5677
    %5975 = vmatprep.subr.bf16.mxu0 %v5751
    %5976 = vmatpush1.bf16.msra.mxu0 %v5750
    %5977 = vmatprep.subr.bf16.mxu0 %v5742
    %5978 = vmatpush1.bf16.msra.mxu0 %v5741
    %5979 = vmatprep.subr.bf16.mxu0 %v5733
    %5980 = vmatpush1.bf16.msra.mxu0 %v5732
    %5981 = vmatprep.subr.bf16.mxu0 %v5724
    %5982 = vmatpush1.bf16.msra.mxu0 %v5723
    %5983 = vmatprep.subr.bf16.mxu0 %v5715
    %5984 = vmatpush1.bf16.msra.mxu0 %v5714
    %5985 = vmatprep.subr.bf16.mxu0 %v5706
    %5986 = vmatpush1.bf16.msra.mxu0 %v5705
    %5987 = vmatprep.subr.bf16.mxu0 %v5697
    %5988 = vmatpush1.bf16.msra.mxu0 %v5696
    %5989 = vmatprep.subr.bf16.mxu0 %v5688
    %5990 = vmatpush1.bf16.msra.mxu0 %v5687
    %5991 = vmatprep.subr.bf16.mxu0 %v5823
    %5992 = vmatpush2.bf16.msra.mxu0 %v5822
    %5993 = vmatprep.subr.bf16.mxu0 %v5814
    %5994 = vmatpush2.bf16.msra.mxu0 %v5813
    %5995 = vmatprep.subr.bf16.mxu0 %v5805
    %5996 = vmatpush2.bf16.msra.mxu0 %v5804
    %5997 = vmatprep.subr.bf16.mxu0 %v5796
    %5998 = vmatpush2.bf16.msra.mxu0 %v5795
    %5999 = vmatprep.subr.bf16.mxu0 %v5787
    %6000 = vmatpush2.bf16.msra.mxu0 %v5786
    %6001 = vmatprep.subr.bf16.mxu0 %v5778
    %6002 = vmatpush2.bf16.msra.mxu0 %v5777
    %6003 = vmatprep.subr.bf16.mxu0 %v5769
    %6004 = vmatpush2.bf16.msra.mxu0 %v5768
    %6005 = vmatprep.subr.bf16.mxu0 %v5760
    %6006 = vmatpush2.bf16.msra.mxu0 %v5759
    %6007 = vmatprep.mubr.bf16.mxu0 %v5078
    %6008 = vmatmul.mubr.bf16.gmra.mxu0 %v5077
    %v6009 = vpop.f32.mrf.mxu0
    %v6010 = vadd.f32 0.0, %v6009
    %v6011 = vpop.f32.mrf.mxu0
    %v6012 = vadd.f32 0.0, %v6011
    %v6013 = vpop.f32.mrf.mxu0
    %v6014 = vpop.f32.mrf.mxu0
    %6015 = vdwg.mxu0
    %6016 = vmatprep.subr.bf16.mxu0 %v5753
    %6017 = vmatpush1.bf16.msra.mxu0 %v5752
    %6018 = vmatprep.subr.bf16.mxu0 %v5744
    %6019 = vmatpush1.bf16.msra.mxu0 %v5743
    %6020 = vmatprep.subr.bf16.mxu0 %v5735
    %6021 = vmatpush1.bf16.msra.mxu0 %v5734
    %6022 = vmatprep.subr.bf16.mxu0 %v5726
    %6023 = vmatpush1.bf16.msra.mxu0 %v5725
    %6024 = vmatprep.subr.bf16.mxu0 %v5717
    %6025 = vmatpush1.bf16.msra.mxu0 %v5716
    %6026 = vmatprep.subr.bf16.mxu0 %v5708
    %6027 = vmatpush1.bf16.msra.mxu0 %v5707
    %6028 = vmatprep.subr.bf16.mxu0 %v5699
    %6029 = vmatpush1.bf16.msra.mxu0 %v5698
    %6030 = vmatprep.subr.bf16.mxu0 %v5690
    %6031 = vmatpush1.bf16.msra.mxu0 %v5689
    %6032 = vmatprep.subr.bf16.mxu0 %v5825
    %6033 = vmatpush2.bf16.msra.mxu0 %v5824
    %6034 = vmatprep.subr.bf16.mxu0 %v5816
    %6035 = vmatpush2.bf16.msra.mxu0 %v5815
    %6036 = vmatprep.subr.bf16.mxu0 %v5807
    %6037 = vmatpush2.bf16.msra.mxu0 %v5806
    %6038 = vmatprep.subr.bf16.mxu0 %v5798
    %6039 = vmatpush2.bf16.msra.mxu0 %v5797
    %6040 = vmatprep.subr.bf16.mxu0 %v5789
    %6041 = vmatpush2.bf16.msra.mxu0 %v5788
    %6042 = vmatprep.subr.bf16.mxu0 %v5780
    %6043 = vmatpush2.bf16.msra.mxu0 %v5779
    %6044 = vmatprep.subr.bf16.mxu0 %v5771
    %6045 = vmatpush2.bf16.msra.mxu0 %v5770
    %6046 = vmatprep.subr.bf16.mxu0 %v5762
    %6047 = vmatpush2.bf16.msra.mxu0 %v5761
    %6048 = vmatprep.mubr.bf16.mxu0 %v5078
    %6049 = vmatmul.mubr.bf16.gmra.mxu0 %v5077
    %v6050 = vpop.f32.mrf.mxu0
    %v6051 = vadd.f32 0.0, %v6050
    %v6052 = vpop.f32.mrf.mxu0
    %v6053 = vadd.f32 0.0, %v6052
    %v6054 = vpop.f32.mrf.mxu0
    %v6055 = vpop.f32.mrf.mxu0
    %6056 = vdwg.mxu0
    %6057 = vmatprep.subr.bf16.mxu0 %v5755
    %6058 = vmatpush1.bf16.msra.mxu0 %v5754
    %6059 = vmatprep.subr.bf16.mxu0 %v5746
    %6060 = vmatpush1.bf16.msra.mxu0 %v5745
    %6061 = vmatprep.subr.bf16.mxu0 %v5737
    %6062 = vmatpush1.bf16.msra.mxu0 %v5736
    %6063 = vmatprep.subr.bf16.mxu0 %v5728
    %6064 = vmatpush1.bf16.msra.mxu0 %v5727
    %6065 = vmatprep.subr.bf16.mxu0 %v5719
    %6066 = vmatpush1.bf16.msra.mxu0 %v5718
    %6067 = vmatprep.subr.bf16.mxu0 %v5710
    %6068 = vmatpush1.bf16.msra.mxu0 %v5709
    %6069 = vmatprep.subr.bf16.mxu0 %v5701
    %6070 = vmatpush1.bf16.msra.mxu0 %v5700
    %6071 = vmatprep.subr.bf16.mxu0 %v5692
    %6072 = vmatpush1.bf16.msra.mxu0 %v5691
    %6073 = vmatprep.subr.bf16.mxu0 %v5827
    %6074 = vmatpush2.bf16.msra.mxu0 %v5826
    %6075 = vmatprep.subr.bf16.mxu0 %v5818
    %6076 = vmatpush2.bf16.msra.mxu0 %v5817
    %6077 = vmatprep.subr.bf16.mxu0 %v5809
    %6078 = vmatpush2.bf16.msra.mxu0 %v5808
    %6079 = vmatprep.subr.bf16.mxu0 %v5800
    %6080 = vmatpush2.bf16.msra.mxu0 %v5799
    %6081 = vmatprep.subr.bf16.mxu0 %v5791
    %6082 = vmatpush2.bf16.msra.mxu0 %v5790
    %6083 = vmatprep.subr.bf16.mxu0 %v5782
    %6084 = vmatpush2.bf16.msra.mxu0 %v5781
    %6085 = vmatprep.subr.bf16.mxu0 %v5773
    %6086 = vmatpush2.bf16.msra.mxu0 %v5772
    %6087 = vmatprep.subr.bf16.mxu0 %v5764
    %6088 = vmatpush2.bf16.msra.mxu0 %v5763
    %6089 = vmatprep.mubr.bf16.mxu0 %v5078
    %6090 = vmatmul.mubr.bf16.gmra.mxu0 %v5077
    %v6091 = vpop.f32.mrf.mxu0
    %v6092 = vadd.f32 0.0, %v6091
    %v6093 = vpop.f32.mrf.mxu0
    %v6094 = vadd.f32 0.0, %v6093
    %v6095 = vpop.f32.mrf.mxu0
    %v6096 = vpop.f32.mrf.mxu0
    %6097 = vdwg.mxu0
    %6098 = vmatprep.subr.bf16.mxu0 %v5757
    %6099 = vmatpush1.bf16.msra.mxu0 %v5756
    %6100 = vmatprep.subr.bf16.mxu0 %v5748
    %6101 = vmatpush1.bf16.msra.mxu0 %v5747
    %6102 = vmatprep.subr.bf16.mxu0 %v5739
    %6103 = vmatpush1.bf16.msra.mxu0 %v5738
    %6104 = vmatprep.subr.bf16.mxu0 %v5730
    %6105 = vmatpush1.bf16.msra.mxu0 %v5729
    %6106 = vmatprep.subr.bf16.mxu0 %v5721
    %6107 = vmatpush1.bf16.msra.mxu0 %v5720
    %6108 = vmatprep.subr.bf16.mxu0 %v5712
    %6109 = vmatpush1.bf16.msra.mxu0 %v5711
    %6110 = vmatprep.subr.bf16.mxu0 %v5703
    %6111 = vmatpush1.bf16.msra.mxu0 %v5702
    %6112 = vmatprep.subr.bf16.mxu0 %v5694
    %6113 = vmatpush1.bf16.msra.mxu0 %v5693
    %6114 = vmatprep.subr.bf16.mxu0 %v5829
    %6115 = vmatpush2.bf16.msra.mxu0 %v5828
    %6116 = vmatprep.subr.bf16.mxu0 %v5820
    %6117 = vmatpush2.bf16.msra.mxu0 %v5819
    %6118 = vmatprep.subr.bf16.mxu0 %v5811
    %6119 = vmatpush2.bf16.msra.mxu0 %v5810
    %6120 = vmatprep.subr.bf16.mxu0 %v5802
    %6121 = vmatpush2.bf16.msra.mxu0 %v5801
    %6122 = vmatprep.subr.bf16.mxu0 %v5793
    %6123 = vmatpush2.bf16.msra.mxu0 %v5792
    %6124 = vmatprep.subr.bf16.mxu0 %v5784
    %6125 = vmatpush2.bf16.msra.mxu0 %v5783
    %6126 = vmatprep.subr.bf16.mxu0 %v5775
    %6127 = vmatpush2.bf16.msra.mxu0 %v5774
    %6128 = vmatprep.subr.bf16.mxu0 %v5766
    %6129 = vmatpush2.bf16.msra.mxu0 %v5765
    %6130 = vmatprep.mubr.bf16.mxu0 %v5078
    %6131 = vmatmul.mubr.bf16.gmra.mxu0 %v5077
    %v6132 = vpop.f32.mrf.mxu0
    %v6133 = vadd.f32 0.0, %v6132
    %v6134 = vpop.f32.mrf.mxu0
    %v6135 = vadd.f32 0.0, %v6134
    %v6136 = vpop.f32.mrf.mxu0
    %v6137 = vpop.f32.mrf.mxu0
    %6138 = vdwg.mxu0
    %6139 = vmatprep.subr.bf16.mxu0 0
    %6140 = vmatpush1.bf16.msra.mxu0 %v5758
    %6141 = vmatprep.subr.bf16.mxu0 0
    %6142 = vmatpush1.bf16.msra.mxu0 %v5749
    %6143 = vmatprep.subr.bf16.mxu0 0
    %6144 = vmatpush1.bf16.msra.mxu0 %v5740
    %6145 = vmatprep.subr.bf16.mxu0 0
    %6146 = vmatpush1.bf16.msra.mxu0 %v5731
    %6147 = vmatprep.subr.bf16.mxu0 0
    %6148 = vmatpush1.bf16.msra.mxu0 %v5722
    %6149 = vmatprep.subr.bf16.mxu0 0
    %6150 = vmatpush1.bf16.msra.mxu0 %v5713
    %6151 = vmatprep.subr.bf16.mxu0 0
    %6152 = vmatpush1.bf16.msra.mxu0 %v5704
    %6153 = vmatprep.subr.bf16.mxu0 0
    %6154 = vmatpush1.bf16.msra.mxu0 %v5695
    %6155 = vmatprep.subr.bf16.mxu0 0
    %6156 = vmatpush2.bf16.msra.mxu0 %v5830
    %6157 = vmatprep.subr.bf16.mxu0 0
    %6158 = vmatpush2.bf16.msra.mxu0 %v5821
    %6159 = vmatprep.subr.bf16.mxu0 0
    %6160 = vmatpush2.bf16.msra.mxu0 %v5812
    %6161 = vmatprep.subr.bf16.mxu0 0
    %6162 = vmatpush2.bf16.msra.mxu0 %v5803
    %6163 = vmatprep.subr.bf16.mxu0 0
    %6164 = vmatpush2.bf16.msra.mxu0 %v5794
    %6165 = vmatprep.subr.bf16.mxu0 0
    %6166 = vmatpush2.bf16.msra.mxu0 %v5785
    %6167 = vmatprep.subr.bf16.mxu0 0
    %6168 = vmatpush2.bf16.msra.mxu0 %v5776
    %6169 = vmatprep.subr.bf16.mxu0 0
    %6170 = vmatpush2.bf16.msra.mxu0 %v5767
    %6171 = vmatprep.mubr.bf16.mxu0 %v5078
    %6172 = vmatmul.mubr.bf16.gmra.mxu0 %v5077
    %v6173 = vpop.f32.mrf.mxu0
    %v6174 = vadd.f32 0.0, %v6173
    %v6175 = vpop.f32.mrf.mxu0
    %v6176 = vpop.f32.mrf.mxu0
    %v6177 = vpop.f32.mrf.mxu0
    %6178 = vdwg.mxu0
    %v6179 = vpack.c.bf16 %v6010, %v6010
    %v6180 = vpack.c.bf16 %v6012, %v6012
    %v6181 = vpack.c.bf16 %v6051, %v6051
    %v6182 = vpack.c.bf16 %v6053, %v6053
    %v6183 = vpack.c.bf16 %v6092, %v6092
    %v6184 = vpack.c.bf16 %v6094, %v6094
    %v6185 = vpack.c.bf16 %v6133, %v6133
    %v6186 = vpack.c.bf16 %v6135, %v6135
    %v6187 = vpack.c.bf16 %v6174, %v6174
    %v6188 = vld [vmem:[%s3] sm:$0xff]
    %v6189 = vld [vmem:[%s3 + $0x8] sm:$0xff]
    %v6190 = vld [vmem:[%s3 + $0x10] sm:$0xff]
    %v6191 = vld [vmem:[%s3 + $0x18] sm:$0xf]
    %v6192 = vld [vmem:[%s3 + $0x1c] sm:$0xff]
    %v6193 = vld [vmem:[%s3 + $0x24] sm:$0xff]
    %v6194 = vld [vmem:[%s3 + $0x2c] sm:$0xff]
    %v6195 = vld [vmem:[%s3 + $0x34] sm:$0xf]
    %v6196 = vld [vmem:[%s3 + $0x38] sm:$0xff]
    %v6197 = vld [vmem:[%s3 + $0x40] sm:$0xff]
    %v6198 = vld [vmem:[%s3 + $0x48] sm:$0xff]
    %v6199 = vld [vmem:[%s3 + $0x50] sm:$0xf]
    %v6200 = vld [vmem:[%s3 + $0x54] sm:$0xff]
    %v6201 = vld [vmem:[%s3 + $0x5c] sm:$0xff]
    %v6202 = vld [vmem:[%s3 + $0x64] sm:$0xff]
    %v6203 = vld [vmem:[%s3 + $0x6c] sm:$0xf]
    %v6204 = vld [vmem:[%s3 + $0x70] sm:$0xff]
    %v6205 = vld [vmem:[%s3 + $0x78] sm:$0xff]
    %v6206 = vld [vmem:[%s3 + $0x80] sm:$0xff]
    %v6207 = vld [vmem:[%s3 + $0x88] sm:$0xf]
    %v6208 = vld [vmem:[%s3 + $0x8c] sm:$0xff]
    %v6209 = vld [vmem:[%s3 + $0x94] sm:$0xff]
    %v6210 = vld [vmem:[%s3 + $0x9c] sm:$0xff]
    %v6211 = vld [vmem:[%s3 + $0xa4] sm:$0xf]
    %v6212 = vld [vmem:[%s3 + $0xa8] sm:$0xff]
    %v6213 = vld [vmem:[%s3 + $0xb0] sm:$0xff]
    %v6214 = vld [vmem:[%s3 + $0xb8] sm:$0xff]
    %v6215 = vld [vmem:[%s3 + $0xc0] sm:$0xf]
    %v6216 = vld [vmem:[%s3 + $0xc4] sm:$0xff]
    %v6217 = vld [vmem:[%s3 + $0xcc] sm:$0xff]
    %v6218 = vld [vmem:[%s3 + $0xd4] sm:$0xff]
    %v6219 = vld [vmem:[%s3 + $0xdc] sm:$0xf]
    %v6220 = vld [vmem:[%s3 + $0xe0] sm:$0xff]
    %v6221 = vld [vmem:[%s3 + $0xe8] sm:$0xff]
    %v6222 = vld [vmem:[%s3 + $0xf0] sm:$0xff]
    %v6223 = vld [vmem:[%s3 + $0xf8] sm:$0xf]
    %v6224 = vld [vmem:[%s3 + $0xfc] sm:$0xff]
    %v6225 = vld [vmem:[%s3 + $0x104] sm:$0xff]
    %v6226 = vld [vmem:[%s3 + $0x10c] sm:$0xff]
    %v6227 = vld [vmem:[%s3 + $0x114] sm:$0xf]
    %v6228 = vld [vmem:[%s3 + $0x118] sm:$0xff]
    %v6229 = vld [vmem:[%s3 + $0x120] sm:$0xff]
    %v6230 = vld [vmem:[%s3 + $0x128] sm:$0xff]
    %v6231 = vld [vmem:[%s3 + $0x130] sm:$0xf]
    %v6232 = vld [vmem:[%s3 + $0x134] sm:$0xff]
    %v6233 = vld [vmem:[%s3 + $0x13c] sm:$0xff]
    %v6234 = vld [vmem:[%s3 + $0x144] sm:$0xff]
    %v6235 = vld [vmem:[%s3 + $0x14c] sm:$0xf]
    %v6236 = vld [vmem:[%s3 + $0x150] sm:$0xff]
    %v6237 = vld [vmem:[%s3 + $0x158] sm:$0xff]
    %v6238 = vld [vmem:[%s3 + $0x160] sm:$0xff]
    %v6239 = vld [vmem:[%s3 + $0x168] sm:$0xf]
    %v6240 = vld [vmem:[%s3 + $0x16c] sm:$0xff]
    %v6241 = vld [vmem:[%s3 + $0x174] sm:$0xff]
    %v6242 = vld [vmem:[%s3 + $0x17c] sm:$0xff]
    %v6243 = vld [vmem:[%s3 + $0x184] sm:$0xf]
    %v6244 = vld [vmem:[%s3 + $0x188] sm:$0xff]
    %v6245 = vld [vmem:[%s3 + $0x190] sm:$0xff]
    %v6246 = vld [vmem:[%s3 + $0x198] sm:$0xff]
    %v6247 = vld [vmem:[%s3 + $0x1a0] sm:$0xf]
    %v6248 = vld [vmem:[%s3 + $0x1a4] sm:$0xff]
    %v6249 = vld [vmem:[%s3 + $0x1ac] sm:$0xff]
    %v6250 = vld [vmem:[%s3 + $0x1b4] sm:$0xff]
    %v6251 = vld [vmem:[%s3 + $0x1bc] sm:$0xf]
    %v6252 = vld [vmem:[%s3 + $0x1c0] sm:$0xff]
    %v6253 = vld [vmem:[%s3 + $0x1c8] sm:$0xff]
    %v6254 = vld [vmem:[%s3 + $0x1d0] sm:$0xff]
    %v6255 = vld [vmem:[%s3 + $0x1d8] sm:$0xf]
    %v6256 = vld [vmem:[%s3 + $0x1dc] sm:$0xff]
    %v6257 = vld [vmem:[%s3 + $0x1e4] sm:$0xff]
    %v6258 = vld [vmem:[%s3 + $0x1ec] sm:$0xff]
    %v6259 = vld [vmem:[%s3 + $0x1f4] sm:$0xf]
    %v6260 = vld [vmem:[%s3 + $0x1f8] sm:$0xff]
    %v6261 = vld [vmem:[%s3 + $0x200] sm:$0xff]
    %v6262 = vld [vmem:[%s3 + $0x208] sm:$0xff]
    %v6263 = vld [vmem:[%s3 + $0x210] sm:$0xf]
    %v6264 = vld [vmem:[%s3 + $0x214] sm:$0xff]
    %v6265 = vld [vmem:[%s3 + $0x21c] sm:$0xff]
    %v6266 = vld [vmem:[%s3 + $0x224] sm:$0xff]
    %v6267 = vld [vmem:[%s3 + $0x22c] sm:$0xf]
    %v6268 = vld [vmem:[%s3 + $0x230] sm:$0xff]
    %v6269 = vld [vmem:[%s3 + $0x238] sm:$0xff]
    %v6270 = vld [vmem:[%s3 + $0x240] sm:$0xff]
    %v6271 = vld [vmem:[%s3 + $0x248] sm:$0xf]
    %v6272 = vld [vmem:[%s3 + $0x24c] sm:$0xff]
    %v6273 = vld [vmem:[%s3 + $0x254] sm:$0xff]
    %v6274 = vld [vmem:[%s3 + $0x25c] sm:$0xff]
    %v6275 = vld [vmem:[%s3 + $0x264] sm:$0xf]
    %v6276 = vld [vmem:[%s3 + $0x268] sm:$0xff]
    %v6277 = vld [vmem:[%s3 + $0x270] sm:$0xff]
    %v6278 = vld [vmem:[%s3 + $0x278] sm:$0xff]
    %v6279 = vld [vmem:[%s3 + $0x280] sm:$0xf]
    %v6280 = vld [vmem:[%s3 + $0x284] sm:$0xff]
    %v6281 = vld [vmem:[%s3 + $0x28c] sm:$0xff]
    %v6282 = vld [vmem:[%s3 + $0x294] sm:$0xff]
    %v6283 = vld [vmem:[%s3 + $0x29c] sm:$0xf]
    %v6284 = vld [vmem:[%s3 + $0x2a0] sm:$0xff]
    %v6285 = vld [vmem:[%s3 + $0x2a8] sm:$0xff]
    %v6286 = vld [vmem:[%s3 + $0x2b0] sm:$0xff]
    %v6287 = vld [vmem:[%s3 + $0x2b8] sm:$0xf]
    %v6288 = vld [vmem:[%s3 + $0x2bc] sm:$0xff]
    %v6289 = vld [vmem:[%s3 + $0x2c4] sm:$0xff]
    %v6290 = vld [vmem:[%s3 + $0x2cc] sm:$0xff]
    %v6291 = vld [vmem:[%s3 + $0x2d4] sm:$0xf]
    %v6292 = vld [vmem:[%s3 + $0x2d8] sm:$0xff]
    %v6293 = vld [vmem:[%s3 + $0x2e0] sm:$0xff]
    %v6294 = vld [vmem:[%s3 + $0x2e8] sm:$0xff]
    %v6295 = vld [vmem:[%s3 + $0x2f0] sm:$0xf]
    %v6296 = vld [vmem:[%s3 + $0x2f4] sm:$0xff]
    %v6297 = vld [vmem:[%s3 + $0x2fc] sm:$0xff]
    %v6298 = vld [vmem:[%s3 + $0x304] sm:$0xff]
    %v6299 = vld [vmem:[%s3 + $0x30c] sm:$0xf]
    %v6300 = vld [vmem:[%s3 + $0x310] sm:$0xff]
    %v6301 = vld [vmem:[%s3 + $0x318] sm:$0xff]
    %v6302 = vld [vmem:[%s3 + $0x320] sm:$0xff]
    %v6303 = vld [vmem:[%s3 + $0x328] sm:$0xf]
    %v6304 = vld [vmem:[%s3 + $0x32c] sm:$0xff]
    %v6305 = vld [vmem:[%s3 + $0x334] sm:$0xff]
    %v6306 = vld [vmem:[%s3 + $0x33c] sm:$0xff]
    %v6307 = vld [vmem:[%s3 + $0x344] sm:$0xf]
    %v6308 = vld [vmem:[%s3 + $0x348] sm:$0xff]
    %v6309 = vld [vmem:[%s3 + $0x350] sm:$0xff]
    %v6310 = vld [vmem:[%s3 + $0x358] sm:$0xff]
    %v6311 = vld [vmem:[%s3 + $0x360] sm:$0xf]
    %v6312 = vld [vmem:[%s3 + $0x364] sm:$0xff]
    %v6313 = vld [vmem:[%s3 + $0x36c] sm:$0xff]
    %v6314 = vld [vmem:[%s3 + $0x374] sm:$0xff]
    %v6315 = vld [vmem:[%s3 + $0x37c] sm:$0xf]
    %v6316 = vld [vmem:[%s3 + $0x380] sm:$0xff]
    %v6317 = vld [vmem:[%s3 + $0x388] sm:$0xff]
    %v6318 = vld [vmem:[%s3 + $0x390] sm:$0xff]
    %v6319 = vld [vmem:[%s3 + $0x398] sm:$0xf]
    %v6320 = vld [vmem:[%s3 + $0x39c] sm:$0xff]
    %v6321 = vld [vmem:[%s3 + $0x3a4] sm:$0xff]
    %v6322 = vld [vmem:[%s3 + $0x3ac] sm:$0xff]
    %v6323 = vld [vmem:[%s3 + $0x3b4] sm:$0xf]
    %v6324 = vld [vmem:[%s3 + $0x3b8] sm:$0xff]
    %v6325 = vld [vmem:[%s3 + $0x3c0] sm:$0xff]
    %v6326 = vld [vmem:[%s3 + $0x3c8] sm:$0xff]
    %v6327 = vld [vmem:[%s3 + $0x3d0] sm:$0xf]
    %v6328 = vld [vmem:[%s3 + $0x3d4] sm:$0xff]
    %v6329 = vld [vmem:[%s3 + $0x3dc] sm:$0xff]
    %v6330 = vld [vmem:[%s3 + $0x3e4] sm:$0xff]
    %v6331 = vld [vmem:[%s3 + $0x3ec] sm:$0xf]
    %v6332 = vld [vmem:[%s3 + $0x3f0] sm:$0xff]
    %v6333 = vld [vmem:[%s3 + $0x3f8] sm:$0xff]
    %v6334 = vld [vmem:[%s3 + $0x400] sm:$0xff]
    %v6335 = vld [vmem:[%s3 + $0x408] sm:$0xf]
    %v6336 = vld [vmem:[%s3 + $0x40c] sm:$0xff]
    %v6337 = vld [vmem:[%s3 + $0x414] sm:$0xff]
    %v6338 = vld [vmem:[%s3 + $0x41c] sm:$0xff]
    %v6339 = vld [vmem:[%s3 + $0x424] sm:$0xf]
    %v6340 = vld [vmem:[%s3 + $0x428] sm:$0xff]
    %v6341 = vld [vmem:[%s3 + $0x430] sm:$0xff]
    %v6342 = vld [vmem:[%s3 + $0x438] sm:$0xff]
    %v6343 = vld [vmem:[%s3 + $0x440] sm:$0xf]
    %v6344 = vld [vmem:[%s3 + $0x444] sm:$0xff]
    %v6345 = vld [vmem:[%s3 + $0x44c] sm:$0xff]
    %v6346 = vld [vmem:[%s3 + $0x454] sm:$0xff]
    %v6347 = vld [vmem:[%s3 + $0x45c] sm:$0xf]
    %v6348 = vld [vmem:[%s3 + $0x460] sm:$0xff]
    %v6349 = vld [vmem:[%s3 + $0x468] sm:$0xff]
    %v6350 = vld [vmem:[%s3 + $0x470] sm:$0xff]
    %v6351 = vld [vmem:[%s3 + $0x478] sm:$0xf]
    %v6352 = vld [vmem:[%s3 + $0x47c] sm:$0xff]
    %v6353 = vld [vmem:[%s3 + $0x484] sm:$0xff]
    %v6354 = vld [vmem:[%s3 + $0x48c] sm:$0xff]
    %v6355 = vld [vmem:[%s3 + $0x494] sm:$0xf]
    %v6356 = vld [vmem:[%s3 + $0x498] sm:$0xff]
    %v6357 = vld [vmem:[%s3 + $0x4a0] sm:$0xff]
    %v6358 = vld [vmem:[%s3 + $0x4a8] sm:$0xff]
    %v6359 = vld [vmem:[%s3 + $0x4b0] sm:$0xf]
    %v6360 = vld [vmem:[%s3 + $0x4b4] sm:$0xff]
    %v6361 = vld [vmem:[%s3 + $0x4bc] sm:$0xff]
    %v6362 = vld [vmem:[%s3 + $0x4c4] sm:$0xff]
    %v6363 = vld [vmem:[%s3 + $0x4cc] sm:$0xf]
    %v6364 = vld [vmem:[%s3 + $0x4d0] sm:$0xff]
    %v6365 = vld [vmem:[%s3 + $0x4d8] sm:$0xff]
    %v6366 = vld [vmem:[%s3 + $0x4e0] sm:$0xff]
    %v6367 = vld [vmem:[%s3 + $0x4e8] sm:$0xf]
    %v6368 = vld [vmem:[%s3 + $0x4ec] sm:$0xff]
    %v6369 = vld [vmem:[%s3 + $0x4f4] sm:$0xff]
    %v6370 = vld [vmem:[%s3 + $0x4fc] sm:$0xff]
    %v6371 = vld [vmem:[%s3 + $0x504] sm:$0xf]
    %v6372 = vld [vmem:[%s3 + $0x508] sm:$0xff]
    %v6373 = vld [vmem:[%s3 + $0x510] sm:$0xff]
    %v6374 = vld [vmem:[%s3 + $0x518] sm:$0xff]
    %v6375 = vld [vmem:[%s3 + $0x520] sm:$0xf]
    %v6376 = vld [vmem:[%s3 + $0x524] sm:$0xff]
    %v6377 = vld [vmem:[%s3 + $0x52c] sm:$0xff]
    %v6378 = vld [vmem:[%s3 + $0x534] sm:$0xff]
    %v6379 = vld [vmem:[%s3 + $0x53c] sm:$0xf]
    %v6380 = vld [vmem:[%s3 + $0x540] sm:$0xff]
    %v6381 = vld [vmem:[%s3 + $0x548] sm:$0xff]
    %v6382 = vld [vmem:[%s3 + $0x550] sm:$0xff]
    %v6383 = vld [vmem:[%s3 + $0x558] sm:$0xf]
    %v6384 = vld [vmem:[%s3 + $0x55c] sm:$0xff]
    %v6385 = vld [vmem:[%s3 + $0x564] sm:$0xff]
    %v6386 = vld [vmem:[%s3 + $0x56c] sm:$0xff]
    %v6387 = vld [vmem:[%s3 + $0x574] sm:$0xf]
    %v6388 = vld [vmem:[%s3 + $0x578] sm:$0xff]
    %v6389 = vld [vmem:[%s3 + $0x580] sm:$0xff]
    %v6390 = vld [vmem:[%s3 + $0x588] sm:$0xff]
    %v6391 = vld [vmem:[%s3 + $0x590] sm:$0xf]
    %v6392 = vld [vmem:[%s3 + $0x594] sm:$0xff]
    %v6393 = vld [vmem:[%s3 + $0x59c] sm:$0xff]
    %v6394 = vld [vmem:[%s3 + $0x5a4] sm:$0xff]
    %v6395 = vld [vmem:[%s3 + $0x5ac] sm:$0xf]
    %v6396 = vld [vmem:[%s3 + $0x5b0] sm:$0xff]
    %v6397 = vld [vmem:[%s3 + $0x5b8] sm:$0xff]
    %v6398 = vld [vmem:[%s3 + $0x5c0] sm:$0xff]
    %v6399 = vld [vmem:[%s3 + $0x5c8] sm:$0xf]
    %v6400 = vld [vmem:[%s3 + $0x5cc] sm:$0xff]
    %v6401 = vld [vmem:[%s3 + $0x5d4] sm:$0xff]
    %v6402 = vld [vmem:[%s3 + $0x5dc] sm:$0xff]
    %v6403 = vld [vmem:[%s3 + $0x5e4] sm:$0xf]
    %v6404 = vld [vmem:[%s3 + $0x5e8] sm:$0xff]
    %v6405 = vld [vmem:[%s3 + $0x5f0] sm:$0xff]
    %v6406 = vld [vmem:[%s3 + $0x5f8] sm:$0xff]
    %v6407 = vld [vmem:[%s3 + $0x600] sm:$0xf]
    %v6408 = vld [vmem:[%s3 + $0x604] sm:$0xff]
    %v6409 = vld [vmem:[%s3 + $0x60c] sm:$0xff]
    %v6410 = vld [vmem:[%s3 + $0x614] sm:$0xff]
    %v6411 = vld [vmem:[%s3 + $0x61c] sm:$0xf]
    %v6412 = vld [vmem:[%s3 + $0x620] sm:$0xff]
    %v6413 = vld [vmem:[%s3 + $0x628] sm:$0xff]
    %v6414 = vld [vmem:[%s3 + $0x630] sm:$0xff]
    %v6415 = vld [vmem:[%s3 + $0x638] sm:$0xf]
    %v6416 = vld [vmem:[%s3 + $0x63c] sm:$0xff]
    %v6417 = vld [vmem:[%s3 + $0x644] sm:$0xff]
    %v6418 = vld [vmem:[%s3 + $0x64c] sm:$0xff]
    %v6419 = vld [vmem:[%s3 + $0x654] sm:$0xf]
    %v6420 = vld [vmem:[%s3 + $0x658] sm:$0xff]
    %v6421 = vld [vmem:[%s3 + $0x660] sm:$0xff]
    %v6422 = vld [vmem:[%s3 + $0x668] sm:$0xff]
    %v6423 = vld [vmem:[%s3 + $0x670] sm:$0xf]
    %v6424 = vld [vmem:[%s3 + $0x674] sm:$0xff]
    %v6425 = vld [vmem:[%s3 + $0x67c] sm:$0xff]
    %v6426 = vld [vmem:[%s3 + $0x684] sm:$0xff]
    %v6427 = vld [vmem:[%s3 + $0x68c] sm:$0xf]
    %v6428 = vld [vmem:[%s3 + $0x690] sm:$0xff]
    %v6429 = vld [vmem:[%s3 + $0x698] sm:$0xff]
    %v6430 = vld [vmem:[%s3 + $0x6a0] sm:$0xff]
    %v6431 = vld [vmem:[%s3 + $0x6a8] sm:$0xf]
    %v6432 = vld [vmem:[%s3 + $0x6ac] sm:$0xff]
    %v6433 = vld [vmem:[%s3 + $0x6b4] sm:$0xff]
    %v6434 = vld [vmem:[%s3 + $0x6bc] sm:$0xff]
    %v6435 = vld [vmem:[%s3 + $0x6c4] sm:$0xf]
    %v6436 = vld [vmem:[%s3 + $0x6c8] sm:$0xff]
    %v6437 = vld [vmem:[%s3 + $0x6d0] sm:$0xff]
    %v6438 = vld [vmem:[%s3 + $0x6d8] sm:$0xff]
    %v6439 = vld [vmem:[%s3 + $0x6e0] sm:$0xf]
    %v6440 = vld [vmem:[%s3 + $0x6e4] sm:$0xff]
    %v6441 = vld [vmem:[%s3 + $0x6ec] sm:$0xff]
    %v6442 = vld [vmem:[%s3 + $0x6f4] sm:$0xff]
    %v6443 = vld [vmem:[%s3 + $0x6fc] sm:$0xf]
    %v6444 = vld [vmem:[%s3 + $0x700] sm:$0xff]
    %v6445 = vld [vmem:[%s3 + $0x708] sm:$0xff]
    %v6446 = vld [vmem:[%s3 + $0x710] sm:$0xff]
    %v6447 = vld [vmem:[%s3 + $0x718] sm:$0xf]
    %v6448 = vld [vmem:[%s3 + $0x71c] sm:$0xff]
    %v6449 = vld [vmem:[%s3 + $0x724] sm:$0xff]
    %v6450 = vld [vmem:[%s3 + $0x72c] sm:$0xff]
    %v6451 = vld [vmem:[%s3 + $0x734] sm:$0xf]
    %v6452 = vld [vmem:[%s3 + $0x738] sm:$0xff]
    %v6453 = vld [vmem:[%s3 + $0x740] sm:$0xff]
    %v6454 = vld [vmem:[%s3 + $0x748] sm:$0xff]
    %v6455 = vld [vmem:[%s3 + $0x750] sm:$0xf]
    %v6456 = vld [vmem:[%s3 + $0x754] sm:$0xff]
    %v6457 = vld [vmem:[%s3 + $0x75c] sm:$0xff]
    %v6458 = vld [vmem:[%s3 + $0x764] sm:$0xff]
    %v6459 = vld [vmem:[%s3 + $0x76c] sm:$0xf]
    %v6460 = vld [vmem:[%s3 + $0x770] sm:$0xff]
    %v6461 = vld [vmem:[%s3 + $0x778] sm:$0xff]
    %v6462 = vld [vmem:[%s3 + $0x780] sm:$0xff]
    %v6463 = vld [vmem:[%s3 + $0x788] sm:$0xf]
    %v6464 = vld [vmem:[%s3 + $0x78c] sm:$0xff]
    %v6465 = vld [vmem:[%s3 + $0x794] sm:$0xff]
    %v6466 = vld [vmem:[%s3 + $0x79c] sm:$0xff]
    %v6467 = vld [vmem:[%s3 + $0x7a4] sm:$0xf]
    %v6468 = vld [vmem:[%s3 + $0x7a8] sm:$0xff]
    %v6469 = vld [vmem:[%s3 + $0x7b0] sm:$0xff]
    %v6470 = vld [vmem:[%s3 + $0x7b8] sm:$0xff]
    %v6471 = vld [vmem:[%s3 + $0x7c0] sm:$0xf]
    %v6472 = vld [vmem:[%s3 + $0x7c4] sm:$0xff]
    %v6473 = vld [vmem:[%s3 + $0x7cc] sm:$0xff]
    %v6474 = vld [vmem:[%s3 + $0x7d4] sm:$0xff]
    %v6475 = vld [vmem:[%s3 + $0x7dc] sm:$0xf]
    %v6476 = vld [vmem:[%s3 + $0x7e0] sm:$0xff]
    %v6477 = vld [vmem:[%s3 + $0x7e8] sm:$0xff]
    %v6478 = vld [vmem:[%s3 + $0x7f0] sm:$0xff]
    %v6479 = vld [vmem:[%s3 + $0x7f8] sm:$0xf]
    %v6480 = vld [vmem:[%s3 + $0x7fc] sm:$0xff]
    %v6481 = vld [vmem:[%s3 + $0x804] sm:$0xff]
    %v6482 = vld [vmem:[%s3 + $0x80c] sm:$0xff]
    %v6483 = vld [vmem:[%s3 + $0x814] sm:$0xf]
    %v6484 = vld [vmem:[%s3 + $0x818] sm:$0xff]
    %v6485 = vld [vmem:[%s3 + $0x820] sm:$0xff]
    %v6486 = vld [vmem:[%s3 + $0x828] sm:$0xff]
    %v6487 = vld [vmem:[%s3 + $0x830] sm:$0xf]
    %v6488 = vld [vmem:[%s3 + $0x834] sm:$0xff]
    %v6489 = vld [vmem:[%s3 + $0x83c] sm:$0xff]
    %v6490 = vld [vmem:[%s3 + $0x844] sm:$0xff]
    %v6491 = vld [vmem:[%s3 + $0x84c] sm:$0xf]
    %v6492 = vld [vmem:[%s3 + $0x850] sm:$0xff]
    %v6493 = vld [vmem:[%s3 + $0x858] sm:$0xff]
    %v6494 = vld [vmem:[%s3 + $0x860] sm:$0xff]
    %v6495 = vld [vmem:[%s3 + $0x868] sm:$0xf]
    %v6496 = vld [vmem:[%s3 + $0x86c] sm:$0xff]
    %v6497 = vld [vmem:[%s3 + $0x874] sm:$0xff]
    %v6498 = vld [vmem:[%s3 + $0x87c] sm:$0xff]
    %v6499 = vld [vmem:[%s3 + $0x884] sm:$0xf]
    %v6500 = vld [vmem:[%s3 + $0x888] sm:$0xff]
    %v6501 = vld [vmem:[%s3 + $0x890] sm:$0xff]
    %v6502 = vld [vmem:[%s3 + $0x898] sm:$0xff]
    %v6503 = vld [vmem:[%s3 + $0x8a0] sm:$0xf]
    %v6504 = vld [vmem:[%s3 + $0x8a4] sm:$0xff]
    %v6505 = vld [vmem:[%s3 + $0x8ac] sm:$0xff]
    %v6506 = vld [vmem:[%s3 + $0x8b4] sm:$0xff]
    %v6507 = vld [vmem:[%s3 + $0x8bc] sm:$0xf]
    %v6508 = vld [vmem:[%s3 + $0x8c0] sm:$0xff]
    %v6509 = vld [vmem:[%s3 + $0x8c8] sm:$0xff]
    %v6510 = vld [vmem:[%s3 + $0x8d0] sm:$0xff]
    %v6511 = vld [vmem:[%s3 + $0x8d8] sm:$0xf]
    %v6512 = vld [vmem:[%s3 + $0x8dc] sm:$0xff]
    %v6513 = vld [vmem:[%s3 + $0x8e4] sm:$0xff]
    %v6514 = vld [vmem:[%s3 + $0x8ec] sm:$0xff]
    %v6515 = vld [vmem:[%s3 + $0x8f4] sm:$0xf]
    %v6516 = vld [vmem:[%s3 + $0x8f8] sm:$0xff]
    %v6517 = vld [vmem:[%s3 + $0x900] sm:$0xff]
    %v6518 = vld [vmem:[%s3 + $0x908] sm:$0xff]
    %v6519 = vld [vmem:[%s3 + $0x910] sm:$0xf]
    %v6520 = vld [vmem:[%s3 + $0x914] sm:$0xff]
    %v6521 = vld [vmem:[%s3 + $0x91c] sm:$0xff]
    %v6522 = vld [vmem:[%s3 + $0x924] sm:$0xff]
    %v6523 = vld [vmem:[%s3 + $0x92c] sm:$0xf]
    %v6524 = vld [vmem:[%s3 + $0x930] sm:$0xff]
    %v6525 = vld [vmem:[%s3 + $0x938] sm:$0xff]
    %v6526 = vld [vmem:[%s3 + $0x940] sm:$0xff]
    %v6527 = vld [vmem:[%s3 + $0x948] sm:$0xf]
    %v6528 = vld [vmem:[%s3 + $0x94c] sm:$0xff]
    %v6529 = vld [vmem:[%s3 + $0x954] sm:$0xff]
    %v6530 = vld [vmem:[%s3 + $0x95c] sm:$0xff]
    %v6531 = vld [vmem:[%s3 + $0x964] sm:$0xf]
    %v6532 = vld [vmem:[%s3 + $0x968] sm:$0xff]
    %v6533 = vld [vmem:[%s3 + $0x970] sm:$0xff]
    %v6534 = vld [vmem:[%s3 + $0x978] sm:$0xff]
    %v6535 = vld [vmem:[%s3 + $0x980] sm:$0xf]
    %v6536 = vld [vmem:[%s3 + $0x984] sm:$0xff]
    %v6537 = vld [vmem:[%s3 + $0x98c] sm:$0xff]
    %v6538 = vld [vmem:[%s3 + $0x994] sm:$0xff]
    %v6539 = vld [vmem:[%s3 + $0x99c] sm:$0xf]
    %v6540 = vld [vmem:[%s3 + $0x9a0] sm:$0xff]
    %v6541 = vld [vmem:[%s3 + $0x9a8] sm:$0xff]
    %v6542 = vld [vmem:[%s3 + $0x9b0] sm:$0xff]
    %v6543 = vld [vmem:[%s3 + $0x9b8] sm:$0xf]
    %v6544 = vld [vmem:[%s3 + $0x9bc] sm:$0xff]
    %v6545 = vld [vmem:[%s3 + $0x9c4] sm:$0xff]
    %v6546 = vld [vmem:[%s3 + $0x9cc] sm:$0xff]
    %v6547 = vld [vmem:[%s3 + $0x9d4] sm:$0xf]
    %v6548 = vld [vmem:[%s3 + $0x9d8] sm:$0xff]
    %v6549 = vld [vmem:[%s3 + $0x9e0] sm:$0xff]
    %v6550 = vld [vmem:[%s3 + $0x9e8] sm:$0xff]
    %v6551 = vld [vmem:[%s3 + $0x9f0] sm:$0xf]
    %v6552 = vld [vmem:[%s3 + $0x9f4] sm:$0xff]
    %v6553 = vld [vmem:[%s3 + $0x9fc] sm:$0xff]
    %v6554 = vld [vmem:[%s3 + $0xa04] sm:$0xff]
    %v6555 = vld [vmem:[%s3 + $0xa0c] sm:$0xf]
    %v6556 = vld [vmem:[%s3 + $0xa10] sm:$0xff]
    %v6557 = vld [vmem:[%s3 + $0xa18] sm:$0xff]
    %v6558 = vld [vmem:[%s3 + $0xa20] sm:$0xff]
    %v6559 = vld [vmem:[%s3 + $0xa28] sm:$0xf]
    %v6560 = vld [vmem:[%s3 + $0xa2c] sm:$0xff]
    %v6561 = vld [vmem:[%s3 + $0xa34] sm:$0xff]
    %v6562 = vld [vmem:[%s3 + $0xa3c] sm:$0xff]
    %v6563 = vld [vmem:[%s3 + $0xa44] sm:$0xf]
    %v6564 = vld [vmem:[%s3 + $0xa48] sm:$0xff]
    %v6565 = vld [vmem:[%s3 + $0xa50] sm:$0xff]
    %v6566 = vld [vmem:[%s3 + $0xa58] sm:$0xff]
    %v6567 = vld [vmem:[%s3 + $0xa60] sm:$0xf]
    %v6568 = vld [vmem:[%s3 + $0xa64] sm:$0xff]
    %v6569 = vld [vmem:[%s3 + $0xa6c] sm:$0xff]
    %v6570 = vld [vmem:[%s3 + $0xa74] sm:$0xff]
    %v6571 = vld [vmem:[%s3 + $0xa7c] sm:$0xf]
    %v6572 = vld [vmem:[%s3 + $0xa80] sm:$0xff]
    %v6573 = vld [vmem:[%s3 + $0xa88] sm:$0xff]
    %v6574 = vld [vmem:[%s3 + $0xa90] sm:$0xff]
    %v6575 = vld [vmem:[%s3 + $0xa98] sm:$0xf]
    %v6576 = vld [vmem:[%s3 + $0xa9c] sm:$0xff]
    %v6577 = vld [vmem:[%s3 + $0xaa4] sm:$0xff]
    %v6578 = vld [vmem:[%s3 + $0xaac] sm:$0xff]
    %v6579 = vld [vmem:[%s3 + $0xab4] sm:$0xf]
    %v6580 = vld [vmem:[%s3 + $0xab8] sm:$0xff]
    %v6581 = vld [vmem:[%s3 + $0xac0] sm:$0xff]
    %v6582 = vld [vmem:[%s3 + $0xac8] sm:$0xff]
    %v6583 = vld [vmem:[%s3 + $0xad0] sm:$0xf]
    %v6584 = vld [vmem:[%s3 + $0xad4] sm:$0xff]
    %v6585 = vld [vmem:[%s3 + $0xadc] sm:$0xff]
    %v6586 = vld [vmem:[%s3 + $0xae4] sm:$0xff]
    %v6587 = vld [vmem:[%s3 + $0xaec] sm:$0xf]
    %v6588 = vld [vmem:[%s3 + $0xaf0] sm:$0xff]
    %v6589 = vld [vmem:[%s3 + $0xaf8] sm:$0xff]
    %v6590 = vld [vmem:[%s3 + $0xb00] sm:$0xff]
    %v6591 = vld [vmem:[%s3 + $0xb08] sm:$0xf]
    %v6592 = vld [vmem:[%s3 + $0xb0c] sm:$0xff]
    %v6593 = vld [vmem:[%s3 + $0xb14] sm:$0xff]
    %v6594 = vld [vmem:[%s3 + $0xb1c] sm:$0xff]
    %v6595 = vld [vmem:[%s3 + $0xb24] sm:$0xf]
    %v6596 = vld [vmem:[%s3 + $0xb28] sm:$0xff]
    %v6597 = vld [vmem:[%s3 + $0xb30] sm:$0xff]
    %v6598 = vld [vmem:[%s3 + $0xb38] sm:$0xff]
    %v6599 = vld [vmem:[%s3 + $0xb40] sm:$0xf]
    %v6600 = vld [vmem:[%s3 + $0xb44] sm:$0xff]
    %v6601 = vld [vmem:[%s3 + $0xb4c] sm:$0xff]
    %v6602 = vld [vmem:[%s3 + $0xb54] sm:$0xff]
    %v6603 = vld [vmem:[%s3 + $0xb5c] sm:$0xf]
    %v6604 = vld [vmem:[%s3 + $0xb60] sm:$0xff]
    %v6605 = vld [vmem:[%s3 + $0xb68] sm:$0xff]
    %v6606 = vld [vmem:[%s3 + $0xb70] sm:$0xff]
    %v6607 = vld [vmem:[%s3 + $0xb78] sm:$0xf]
    %v6608 = vld [vmem:[%s3 + $0xb7c] sm:$0xff]
    %v6609 = vld [vmem:[%s3 + $0xb84] sm:$0xff]
    %v6610 = vld [vmem:[%s3 + $0xb8c] sm:$0xff]
    %v6611 = vld [vmem:[%s3 + $0xb94] sm:$0xf]
    %v6612 = vld [vmem:[%s3 + $0xb98] sm:$0xff]
    %v6613 = vld [vmem:[%s3 + $0xba0] sm:$0xff]
    %v6614 = vld [vmem:[%s3 + $0xba8] sm:$0xff]
    %v6615 = vld [vmem:[%s3 + $0xbb0] sm:$0xf]
    %v6616 = vld [vmem:[%s3 + $0xbb4] sm:$0xff]
    %v6617 = vld [vmem:[%s3 + $0xbbc] sm:$0xff]
    %v6618 = vld [vmem:[%s3 + $0xbc4] sm:$0xff]
    %v6619 = vld [vmem:[%s3 + $0xbcc] sm:$0xf]
    %v6620 = vld [vmem:[%s3 + $0xbd0] sm:$0xff]
    %v6621 = vld [vmem:[%s3 + $0xbd8] sm:$0xff]
    %v6622 = vld [vmem:[%s3 + $0xbe0] sm:$0xff]
    %v6623 = vld [vmem:[%s3 + $0xbe8] sm:$0xf]
    %v6624 = vld [vmem:[%s3 + $0xbec] sm:$0xff]
    %v6625 = vld [vmem:[%s3 + $0xbf4] sm:$0xff]
    %v6626 = vld [vmem:[%s3 + $0xbfc] sm:$0xff]
    %v6627 = vld [vmem:[%s3 + $0xc04] sm:$0xf]
    %v6628 = vld [vmem:[%s3 + $0xc08] sm:$0xff]
    %v6629 = vld [vmem:[%s3 + $0xc10] sm:$0xff]
    %v6630 = vld [vmem:[%s3 + $0xc18] sm:$0xff]
    %v6631 = vld [vmem:[%s3 + $0xc20] sm:$0xf]
    %v6632 = vld [vmem:[%s3 + $0xc24] sm:$0xff]
    %v6633 = vld [vmem:[%s3 + $0xc2c] sm:$0xff]
    %v6634 = vld [vmem:[%s3 + $0xc34] sm:$0xff]
    %v6635 = vld [vmem:[%s3 + $0xc3c] sm:$0xf]
    %v6636 = vld [vmem:[%s3 + $0xc40] sm:$0xff]
    %v6637 = vld [vmem:[%s3 + $0xc48] sm:$0xff]
    %v6638 = vld [vmem:[%s3 + $0xc50] sm:$0xff]
    %v6639 = vld [vmem:[%s3 + $0xc58] sm:$0xf]
    %v6640 = vld [vmem:[%s3 + $0xc5c] sm:$0xff]
    %v6641 = vld [vmem:[%s3 + $0xc64] sm:$0xff]
    %v6642 = vld [vmem:[%s3 + $0xc6c] sm:$0xff]
    %v6643 = vld [vmem:[%s3 + $0xc74] sm:$0xf]
    %v6644 = vld [vmem:[%s3 + $0xc78] sm:$0xff]
    %v6645 = vld [vmem:[%s3 + $0xc80] sm:$0xff]
    %v6646 = vld [vmem:[%s3 + $0xc88] sm:$0xff]
    %v6647 = vld [vmem:[%s3 + $0xc90] sm:$0xf]
    %v6648 = vld [vmem:[%s3 + $0xc94] sm:$0xff]
    %v6649 = vld [vmem:[%s3 + $0xc9c] sm:$0xff]
    %v6650 = vld [vmem:[%s3 + $0xca4] sm:$0xff]
    %v6651 = vld [vmem:[%s3 + $0xcac] sm:$0xf]
    %v6652 = vld [vmem:[%s3 + $0xcb0] sm:$0xff]
    %v6653 = vld [vmem:[%s3 + $0xcb8] sm:$0xff]
    %v6654 = vld [vmem:[%s3 + $0xcc0] sm:$0xff]
    %v6655 = vld [vmem:[%s3 + $0xcc8] sm:$0xf]
    %v6656 = vld [vmem:[%s3 + $0xccc] sm:$0xff]
    %v6657 = vld [vmem:[%s3 + $0xcd4] sm:$0xff]
    %v6658 = vld [vmem:[%s3 + $0xcdc] sm:$0xff]
    %v6659 = vld [vmem:[%s3 + $0xce4] sm:$0xf]
    %v6660 = vld [vmem:[%s3 + $0xce8] sm:$0xff]
    %v6661 = vld [vmem:[%s3 + $0xcf0] sm:$0xff]
    %v6662 = vld [vmem:[%s3 + $0xcf8] sm:$0xff]
    %v6663 = vld [vmem:[%s3 + $0xd00] sm:$0xf]
    %v6664 = vld [vmem:[%s3 + $0xd04] sm:$0xff]
    %v6665 = vld [vmem:[%s3 + $0xd0c] sm:$0xff]
    %v6666 = vld [vmem:[%s3 + $0xd14] sm:$0xff]
    %v6667 = vld [vmem:[%s3 + $0xd1c] sm:$0xf]
    %v6668 = vld [vmem:[%s3 + $0xd20] sm:$0xff]
    %v6669 = vld [vmem:[%s3 + $0xd28] sm:$0xff]
    %v6670 = vld [vmem:[%s3 + $0xd30] sm:$0xff]
    %v6671 = vld [vmem:[%s3 + $0xd38] sm:$0xf]
    %v6672 = vld [vmem:[%s3 + $0xd3c] sm:$0xff]
    %v6673 = vld [vmem:[%s3 + $0xd44] sm:$0xff]
    %v6674 = vld [vmem:[%s3 + $0xd4c] sm:$0xff]
    %v6675 = vld [vmem:[%s3 + $0xd54] sm:$0xf]
    %v6676 = vld [vmem:[%s3 + $0xd58] sm:$0xff]
    %v6677 = vld [vmem:[%s3 + $0xd60] sm:$0xff]
    %v6678 = vld [vmem:[%s3 + $0xd68] sm:$0xff]
    %v6679 = vld [vmem:[%s3 + $0xd70] sm:$0xf]
    %v6680 = vld [vmem:[%s3 + $0xd74] sm:$0xff]
    %v6681 = vld [vmem:[%s3 + $0xd7c] sm:$0xff]
    %v6682 = vld [vmem:[%s3 + $0xd84] sm:$0xff]
    %v6683 = vld [vmem:[%s3 + $0xd8c] sm:$0xf]
    %v6684 = vld [vmem:[%s3 + $0xd90] sm:$0xff]
    %v6685 = vld [vmem:[%s3 + $0xd98] sm:$0xff]
    %v6686 = vld [vmem:[%s3 + $0xda0] sm:$0xff]
    %v6687 = vld [vmem:[%s3 + $0xda8] sm:$0xf]
    %v6688 = vld [vmem:[%s3 + $0xdac] sm:$0xff]
    %v6689 = vld [vmem:[%s3 + $0xdb4] sm:$0xff]
    %v6690 = vld [vmem:[%s3 + $0xdbc] sm:$0xff]
    %v6691 = vld [vmem:[%s3 + $0xdc4] sm:$0xf]
    %v6692 = vld [vmem:[%s3 + $0xdc8] sm:$0xff]
    %v6693 = vld [vmem:[%s3 + $0xdd0] sm:$0xff]
    %v6694 = vld [vmem:[%s3 + $0xdd8] sm:$0xff]
    %v6695 = vld [vmem:[%s3 + $0xde0] sm:$0xf]
    %v6696 = vld [vmem:[%s3 + $0xde4] sm:$0xff]
    %v6697 = vld [vmem:[%s3 + $0xdec] sm:$0xff]
    %v6698 = vld [vmem:[%s3 + $0xdf4] sm:$0xff]
    %v6699 = vld [vmem:[%s3 + $0xdfc] sm:$0xf]
    %v6700 = vld [vmem:[%s3 + $0xe00] sm:$0xff]
    %v6701 = vld [vmem:[%s3 + $0xe08] sm:$0xff]
    %v6702 = vld [vmem:[%s3 + $0xe10] sm:$0xff]
    %v6703 = vld [vmem:[%s3 + $0xe18] sm:$0xf]
    %v6704 = vld [vmem:[%s3 + $0xe1c] sm:$0xff]
    %v6705 = vld [vmem:[%s3 + $0xe24] sm:$0xff]
    %v6706 = vld [vmem:[%s3 + $0xe2c] sm:$0xff]
    %v6707 = vld [vmem:[%s3 + $0xe34] sm:$0xf]
    %v6708 = vld [vmem:[%s3 + $0xe38] sm:$0xff]
    %v6709 = vld [vmem:[%s3 + $0xe40] sm:$0xff]
    %v6710 = vld [vmem:[%s3 + $0xe48] sm:$0xff]
    %v6711 = vld [vmem:[%s3 + $0xe50] sm:$0xf]
    %v6712 = vld [vmem:[%s3 + $0xe54] sm:$0xff]
    %v6713 = vld [vmem:[%s3 + $0xe5c] sm:$0xff]
    %v6714 = vld [vmem:[%s3 + $0xe64] sm:$0xff]
    %v6715 = vld [vmem:[%s3 + $0xe6c] sm:$0xf]
    %v6716 = vld [vmem:[%s3 + $0xe70] sm:$0xff]
    %v6717 = vld [vmem:[%s3 + $0xe78] sm:$0xff]
    %v6718 = vld [vmem:[%s3 + $0xe80] sm:$0xff]
    %v6719 = vld [vmem:[%s3 + $0xe88] sm:$0xf]
    %v6720 = vld [vmem:[%s3 + $0xe8c] sm:$0xff]
    %v6721 = vld [vmem:[%s3 + $0xe94] sm:$0xff]
    %v6722 = vld [vmem:[%s3 + $0xe9c] sm:$0xff]
    %v6723 = vld [vmem:[%s3 + $0xea4] sm:$0xf]
    %v6724 = vld [vmem:[%s3 + $0xea8] sm:$0xff]
    %v6725 = vld [vmem:[%s3 + $0xeb0] sm:$0xff]
    %v6726 = vld [vmem:[%s3 + $0xeb8] sm:$0xff]
    %v6727 = vld [vmem:[%s3 + $0xec0] sm:$0xf]
    %v6728 = vld [vmem:[%s3 + $0xec4] sm:$0xff]
    %v6729 = vld [vmem:[%s3 + $0xecc] sm:$0xff]
    %v6730 = vld [vmem:[%s3 + $0xed4] sm:$0xff]
    %v6731 = vld [vmem:[%s3 + $0xedc] sm:$0xf]
    %v6732 = vld [vmem:[%s3 + $0xee0] sm:$0xff]
    %v6733 = vld [vmem:[%s3 + $0xee8] sm:$0xff]
    %v6734 = vld [vmem:[%s3 + $0xef0] sm:$0xff]
    %v6735 = vld [vmem:[%s3 + $0xef8] sm:$0xf]
    %v6736 = vld [vmem:[%s3 + $0xefc] sm:$0xff]
    %v6737 = vld [vmem:[%s3 + $0xf04] sm:$0xff]
    %v6738 = vld [vmem:[%s3 + $0xf0c] sm:$0xff]
    %v6739 = vld [vmem:[%s3 + $0xf14] sm:$0xf]
    %v6740 = vld [vmem:[%s3 + $0xf18] sm:$0xff]
    %v6741 = vld [vmem:[%s3 + $0xf20] sm:$0xff]
    %v6742 = vld [vmem:[%s3 + $0xf28] sm:$0xff]
    %v6743 = vld [vmem:[%s3 + $0xf30] sm:$0xf]
    %v6744 = vld [vmem:[%s3 + $0xf34] sm:$0xff]
    %v6745 = vld [vmem:[%s3 + $0xf3c] sm:$0xff]
    %v6746 = vld [vmem:[%s3 + $0xf44] sm:$0xff]
    %v6747 = vld [vmem:[%s3 + $0xf4c] sm:$0xf]
    %v6748 = vld [vmem:[%s3 + $0xf50] sm:$0xff]
    %v6749 = vld [vmem:[%s3 + $0xf58] sm:$0xff]
    %v6750 = vld [vmem:[%s3 + $0xf60] sm:$0xff]
    %v6751 = vld [vmem:[%s3 + $0xf68] sm:$0xf]
    %v6752 = vld [vmem:[%s3 + $0xf6c] sm:$0xff]
    %v6753 = vld [vmem:[%s3 + $0xf74] sm:$0xff]
    %v6754 = vld [vmem:[%s3 + $0xf7c] sm:$0xff]
    %v6755 = vld [vmem:[%s3 + $0xf84] sm:$0xf]
    %v6756 = vld [vmem:[%s3 + $0xf88] sm:$0xff]
    %v6757 = vld [vmem:[%s3 + $0xf90] sm:$0xff]
    %v6758 = vld [vmem:[%s3 + $0xf98] sm:$0xff]
    %v6759 = vld [vmem:[%s3 + $0xfa0] sm:$0xf]
    %v6760 = vld [vmem:[%s3 + $0xfa4] sm:$0xff]
    %v6761 = vld [vmem:[%s3 + $0xfac] sm:$0xff]
    %v6762 = vld [vmem:[%s3 + $0xfb4] sm:$0xff]
    %v6763 = vld [vmem:[%s3 + $0xfbc] sm:$0xf]
    %v7340 = vunpack.c.l.b16 %v6188
    %v7341 = vunpack.c.h.b16 %v6188
    %v7342 = vunpack.c.l.b16 %v6189
    %v7343 = vunpack.c.h.b16 %v6189
    %v7344 = vunpack.c.l.b16 %v6190
    %v7345 = vunpack.c.h.b16 %v6190
    %v7346 = vunpack.c.l.b16 %v6191
    %v7347 = vunpack.c.l.b16 %v6192
    %v7348 = vunpack.c.h.b16 %v6192
    %v7349 = vunpack.c.l.b16 %v6193
    %v7350 = vunpack.c.h.b16 %v6193
    %v7351 = vunpack.c.l.b16 %v6194
    %v7352 = vunpack.c.h.b16 %v6194
    %v7353 = vunpack.c.l.b16 %v6195
    %v7354 = vunpack.c.l.b16 %v6196
    %v7355 = vunpack.c.h.b16 %v6196
    %v7356 = vunpack.c.l.b16 %v6197
    %v7357 = vunpack.c.h.b16 %v6197
    %v7358 = vunpack.c.l.b16 %v6198
    %v7359 = vunpack.c.h.b16 %v6198
    %v7360 = vunpack.c.l.b16 %v6199
    %v7361 = vunpack.c.l.b16 %v6200
    %v7362 = vunpack.c.h.b16 %v6200
    %v7363 = vunpack.c.l.b16 %v6201
    %v7364 = vunpack.c.h.b16 %v6201
    %v7365 = vunpack.c.l.b16 %v6202
    %v7366 = vunpack.c.h.b16 %v6202
    %v7367 = vunpack.c.l.b16 %v6203
    %v7368 = vunpack.c.l.b16 %v6204
    %v7369 = vunpack.c.h.b16 %v6204
    %v7370 = vunpack.c.l.b16 %v6205
    %v7371 = vunpack.c.h.b16 %v6205
    %v7372 = vunpack.c.l.b16 %v6206
    %v7373 = vunpack.c.h.b16 %v6206
    %v7374 = vunpack.c.l.b16 %v6207
    %v7375 = vunpack.c.l.b16 %v6208
    %v7376 = vunpack.c.h.b16 %v6208
    %v7377 = vunpack.c.l.b16 %v6209
    %v7378 = vunpack.c.h.b16 %v6209
    %v7379 = vunpack.c.l.b16 %v6210
    %v7380 = vunpack.c.h.b16 %v6210
    %v7381 = vunpack.c.l.b16 %v6211
    %v7382 = vunpack.c.l.b16 %v6212
    %v7383 = vunpack.c.h.b16 %v6212
    %v7384 = vunpack.c.l.b16 %v6213
    %v7385 = vunpack.c.h.b16 %v6213
    %v7386 = vunpack.c.l.b16 %v6214
    %v7387 = vunpack.c.h.b16 %v6214
    %v7388 = vunpack.c.l.b16 %v6215
    %v7389 = vunpack.c.l.b16 %v6216
    %v7390 = vunpack.c.h.b16 %v6216
    %v7391 = vunpack.c.l.b16 %v6217
    %v7392 = vunpack.c.h.b16 %v6217
    %v7393 = vunpack.c.l.b16 %v6218
    %v7394 = vunpack.c.h.b16 %v6218
    %v7395 = vunpack.c.l.b16 %v6219
    %v7396 = vunpack.c.l.b16 %v6220
    %v7397 = vunpack.c.h.b16 %v6220
    %v7398 = vunpack.c.l.b16 %v6221
    %v7399 = vunpack.c.h.b16 %v6221
    %v7400 = vunpack.c.l.b16 %v6222
    %v7401 = vunpack.c.h.b16 %v6222
    %v7402 = vunpack.c.l.b16 %v6223
    %v7403 = vunpack.c.l.b16 %v6224
    %v7404 = vunpack.c.h.b16 %v6224
    %v7405 = vunpack.c.l.b16 %v6225
    %v7406 = vunpack.c.h.b16 %v6225
    %v7407 = vunpack.c.l.b16 %v6226
    %v7408 = vunpack.c.h.b16 %v6226
    %v7409 = vunpack.c.l.b16 %v6227
    %v7410 = vunpack.c.l.b16 %v6228
    %v7411 = vunpack.c.h.b16 %v6228
    %v7412 = vunpack.c.l.b16 %v6229
    %v7413 = vunpack.c.h.b16 %v6229
    %v7414 = vunpack.c.l.b16 %v6230
    %v7415 = vunpack.c.h.b16 %v6230
    %v7416 = vunpack.c.l.b16 %v6231
    %v7417 = vunpack.c.l.b16 %v6232
    %v7418 = vunpack.c.h.b16 %v6232
    %v7419 = vunpack.c.l.b16 %v6233
    %v7420 = vunpack.c.h.b16 %v6233
    %v7421 = vunpack.c.l.b16 %v6234
    %v7422 = vunpack.c.h.b16 %v6234
    %v7423 = vunpack.c.l.b16 %v6235
    %v7424 = vunpack.c.l.b16 %v6236
    %v7425 = vunpack.c.h.b16 %v6236
    %v7426 = vunpack.c.l.b16 %v6237
    %v7427 = vunpack.c.h.b16 %v6237
    %v7428 = vunpack.c.l.b16 %v6238
    %v7429 = vunpack.c.h.b16 %v6238
    %v7430 = vunpack.c.l.b16 %v6239
    %v7431 = vunpack.c.l.b16 %v6240
    %v7432 = vunpack.c.h.b16 %v6240
    %v7433 = vunpack.c.l.b16 %v6241
    %v7434 = vunpack.c.h.b16 %v6241
    %v7435 = vunpack.c.l.b16 %v6242
    %v7436 = vunpack.c.h.b16 %v6242
    %v7437 = vunpack.c.l.b16 %v6243
    %v7438 = vunpack.c.l.b16 %v6244
    %v7439 = vunpack.c.h.b16 %v6244
    %v7440 = vunpack.c.l.b16 %v6245
    %v7441 = vunpack.c.h.b16 %v6245
    %v7442 = vunpack.c.l.b16 %v6246
    %v7443 = vunpack.c.h.b16 %v6246
    %v7444 = vunpack.c.l.b16 %v6247
    %v7445 = vunpack.c.l.b16 %v6248
    %v7446 = vunpack.c.h.b16 %v6248
    %v7447 = vunpack.c.l.b16 %v6249
    %v7448 = vunpack.c.h.b16 %v6249
    %v7449 = vunpack.c.l.b16 %v6250
    %v7450 = vunpack.c.h.b16 %v6250
    %v7451 = vunpack.c.l.b16 %v6251
    %v7452 = vunpack.c.l.b16 %v6252
    %v7453 = vunpack.c.h.b16 %v6252
    %v7454 = vunpack.c.l.b16 %v6253
    %v7455 = vunpack.c.h.b16 %v6253
    %v7456 = vunpack.c.l.b16 %v6254
    %v7457 = vunpack.c.h.b16 %v6254
    %v7458 = vunpack.c.l.b16 %v6255
    %v7459 = vunpack.c.l.b16 %v6256
    %v7460 = vunpack.c.h.b16 %v6256
    %v7461 = vunpack.c.l.b16 %v6257
    %v7462 = vunpack.c.h.b16 %v6257
    %v7463 = vunpack.c.l.b16 %v6258
    %v7464 = vunpack.c.h.b16 %v6258
    %v7465 = vunpack.c.l.b16 %v6259
    %v7466 = vunpack.c.l.b16 %v6260
    %v7467 = vunpack.c.h.b16 %v6260
    %v7468 = vunpack.c.l.b16 %v6261
    %v7469 = vunpack.c.h.b16 %v6261
    %v7470 = vunpack.c.l.b16 %v6262
    %v7471 = vunpack.c.h.b16 %v6262
    %v7472 = vunpack.c.l.b16 %v6263
    %v7473 = vunpack.c.l.b16 %v6264
    %v7474 = vunpack.c.h.b16 %v6264
    %v7475 = vunpack.c.l.b16 %v6265
    %v7476 = vunpack.c.h.b16 %v6265
    %v7477 = vunpack.c.l.b16 %v6266
    %v7478 = vunpack.c.h.b16 %v6266
    %v7479 = vunpack.c.l.b16 %v6267
    %v7480 = vunpack.c.l.b16 %v6268
    %v7481 = vunpack.c.h.b16 %v6268
    %v7482 = vunpack.c.l.b16 %v6269
    %v7483 = vunpack.c.h.b16 %v6269
    %v7484 = vunpack.c.l.b16 %v6270
    %v7485 = vunpack.c.h.b16 %v6270
    %v7486 = vunpack.c.l.b16 %v6271
    %v7487 = vunpack.c.l.b16 %v6272
    %v7488 = vunpack.c.h.b16 %v6272
    %v7489 = vunpack.c.l.b16 %v6273
    %v7490 = vunpack.c.h.b16 %v6273
    %v7491 = vunpack.c.l.b16 %v6274
    %v7492 = vunpack.c.h.b16 %v6274
    %v7493 = vunpack.c.l.b16 %v6275
    %v7494 = vunpack.c.l.b16 %v6276
    %v7495 = vunpack.c.h.b16 %v6276
    %v7496 = vunpack.c.l.b16 %v6277
    %v7497 = vunpack.c.h.b16 %v6277
    %v7498 = vunpack.c.l.b16 %v6278
    %v7499 = vunpack.c.h.b16 %v6278
    %v7500 = vunpack.c.l.b16 %v6279
    %v7501 = vunpack.c.l.b16 %v6280
    %v7502 = vunpack.c.h.b16 %v6280
    %v7503 = vunpack.c.l.b16 %v6281
    %v7504 = vunpack.c.h.b16 %v6281
    %v7505 = vunpack.c.l.b16 %v6282
    %v7506 = vunpack.c.h.b16 %v6282
    %v7507 = vunpack.c.l.b16 %v6283
    %v7508 = vunpack.c.l.b16 %v6284
    %v7509 = vunpack.c.h.b16 %v6284
    %v7510 = vunpack.c.l.b16 %v6285
    %v7511 = vunpack.c.h.b16 %v6285
    %v7512 = vunpack.c.l.b16 %v6286
    %v7513 = vunpack.c.h.b16 %v6286
    %v7514 = vunpack.c.l.b16 %v6287
    %v7515 = vunpack.c.l.b16 %v6288
    %v7516 = vunpack.c.h.b16 %v6288
    %v7517 = vunpack.c.l.b16 %v6289
    %v7518 = vunpack.c.h.b16 %v6289
    %v7519 = vunpack.c.l.b16 %v6290
    %v7520 = vunpack.c.h.b16 %v6290
    %v7521 = vunpack.c.l.b16 %v6291
    %v7522 = vunpack.c.l.b16 %v6292
    %v7523 = vunpack.c.h.b16 %v6292
    %v7524 = vunpack.c.l.b16 %v6293
    %v7525 = vunpack.c.h.b16 %v6293
    %v7526 = vunpack.c.l.b16 %v6294
    %v7527 = vunpack.c.h.b16 %v6294
    %v7528 = vunpack.c.l.b16 %v6295
    %v7529 = vunpack.c.l.b16 %v6296
    %v7530 = vunpack.c.h.b16 %v6296
    %v7531 = vunpack.c.l.b16 %v6297
    %v7532 = vunpack.c.h.b16 %v6297
    %v7533 = vunpack.c.l.b16 %v6298
    %v7534 = vunpack.c.h.b16 %v6298
    %v7535 = vunpack.c.l.b16 %v6299
    %v7536 = vunpack.c.l.b16 %v6300
    %v7537 = vunpack.c.h.b16 %v6300
    %v7538 = vunpack.c.l.b16 %v6301
    %v7539 = vunpack.c.h.b16 %v6301
    %v7540 = vunpack.c.l.b16 %v6302
    %v7541 = vunpack.c.h.b16 %v6302
    %v7542 = vunpack.c.l.b16 %v6303
    %v7543 = vunpack.c.l.b16 %v6304
    %v7544 = vunpack.c.h.b16 %v6304
    %v7545 = vunpack.c.l.b16 %v6305
    %v7546 = vunpack.c.h.b16 %v6305
    %v7547 = vunpack.c.l.b16 %v6306
    %v7548 = vunpack.c.h.b16 %v6306
    %v7549 = vunpack.c.l.b16 %v6307
    %v7550 = vunpack.c.l.b16 %v6308
    %v7551 = vunpack.c.h.b16 %v6308
    %v7552 = vunpack.c.l.b16 %v6309
    %v7553 = vunpack.c.h.b16 %v6309
    %v7554 = vunpack.c.l.b16 %v6310
    %v7555 = vunpack.c.h.b16 %v6310
    %v7556 = vunpack.c.l.b16 %v6311
    %v7557 = vunpack.c.l.b16 %v6312
    %v7558 = vunpack.c.h.b16 %v6312
    %v7559 = vunpack.c.l.b16 %v6313
    %v7560 = vunpack.c.h.b16 %v6313
    %v7561 = vunpack.c.l.b16 %v6314
    %v7562 = vunpack.c.h.b16 %v6314
    %v7563 = vunpack.c.l.b16 %v6315
    %v7564 = vunpack.c.l.b16 %v6316
    %v7565 = vunpack.c.h.b16 %v6316
    %v7566 = vunpack.c.l.b16 %v6317
    %v7567 = vunpack.c.h.b16 %v6317
    %v7568 = vunpack.c.l.b16 %v6318
    %v7569 = vunpack.c.h.b16 %v6318
    %v7570 = vunpack.c.l.b16 %v6319
    %v7571 = vunpack.c.l.b16 %v6320
    %v7572 = vunpack.c.h.b16 %v6320
    %v7573 = vunpack.c.l.b16 %v6321
    %v7574 = vunpack.c.h.b16 %v6321
    %v7575 = vunpack.c.l.b16 %v6322
    %v7576 = vunpack.c.h.b16 %v6322
    %v7577 = vunpack.c.l.b16 %v6323
    %v7578 = vunpack.c.l.b16 %v6324
    %v7579 = vunpack.c.h.b16 %v6324
    %v7580 = vunpack.c.l.b16 %v6325
    %v7581 = vunpack.c.h.b16 %v6325
    %v7582 = vunpack.c.l.b16 %v6326
    %v7583 = vunpack.c.h.b16 %v6326
    %v7584 = vunpack.c.l.b16 %v6327
    %v7585 = vunpack.c.l.b16 %v6328
    %v7586 = vunpack.c.h.b16 %v6328
    %v7587 = vunpack.c.l.b16 %v6329
    %v7588 = vunpack.c.h.b16 %v6329
    %v7589 = vunpack.c.l.b16 %v6330
    %v7590 = vunpack.c.h.b16 %v6330
    %v7591 = vunpack.c.l.b16 %v6331
    %v7592 = vunpack.c.l.b16 %v6332
    %v7593 = vunpack.c.h.b16 %v6332
    %v7594 = vunpack.c.l.b16 %v6333
    %v7595 = vunpack.c.h.b16 %v6333
    %v7596 = vunpack.c.l.b16 %v6334
    %v7597 = vunpack.c.h.b16 %v6334
    %v7598 = vunpack.c.l.b16 %v6335
    %v7599 = vunpack.c.l.b16 %v6336
    %v7600 = vunpack.c.h.b16 %v6336
    %v7601 = vunpack.c.l.b16 %v6337
    %v7602 = vunpack.c.h.b16 %v6337
    %v7603 = vunpack.c.l.b16 %v6338
    %v7604 = vunpack.c.h.b16 %v6338
    %v7605 = vunpack.c.l.b16 %v6339
    %v7606 = vunpack.c.l.b16 %v6340
    %v7607 = vunpack.c.h.b16 %v6340
    %v7608 = vunpack.c.l.b16 %v6341
    %v7609 = vunpack.c.h.b16 %v6341
    %v7610 = vunpack.c.l.b16 %v6342
    %v7611 = vunpack.c.h.b16 %v6342
    %v7612 = vunpack.c.l.b16 %v6343
    %v7613 = vunpack.c.l.b16 %v6344
    %v7614 = vunpack.c.h.b16 %v6344
    %v7615 = vunpack.c.l.b16 %v6345
    %v7616 = vunpack.c.h.b16 %v6345
    %v7617 = vunpack.c.l.b16 %v6346
    %v7618 = vunpack.c.h.b16 %v6346
    %v7619 = vunpack.c.l.b16 %v6347
    %v7620 = vunpack.c.l.b16 %v6348
    %v7621 = vunpack.c.h.b16 %v6348
    %v7622 = vunpack.c.l.b16 %v6349
    %v7623 = vunpack.c.h.b16 %v6349
    %v7624 = vunpack.c.l.b16 %v6350
    %v7625 = vunpack.c.h.b16 %v6350
    %v7626 = vunpack.c.l.b16 %v6351
    %v7627 = vunpack.c.l.b16 %v6352
    %v7628 = vunpack.c.h.b16 %v6352
    %v7629 = vunpack.c.l.b16 %v6353
    %v7630 = vunpack.c.h.b16 %v6353
    %v7631 = vunpack.c.l.b16 %v6354
    %v7632 = vunpack.c.h.b16 %v6354
    %v7633 = vunpack.c.l.b16 %v6355
    %v7634 = vunpack.c.l.b16 %v6356
    %v7635 = vunpack.c.h.b16 %v6356
    %v7636 = vunpack.c.l.b16 %v6357
    %v7637 = vunpack.c.h.b16 %v6357
    %v7638 = vunpack.c.l.b16 %v6358
    %v7639 = vunpack.c.h.b16 %v6358
    %v7640 = vunpack.c.l.b16 %v6359
    %v7641 = vunpack.c.l.b16 %v6360
    %v7642 = vunpack.c.h.b16 %v6360
    %v7643 = vunpack.c.l.b16 %v6361
    %v7644 = vunpack.c.h.b16 %v6361
    %v7645 = vunpack.c.l.b16 %v6362
    %v7646 = vunpack.c.h.b16 %v6362
    %v7647 = vunpack.c.l.b16 %v6363
    %v7648 = vunpack.c.l.b16 %v6364
    %v7649 = vunpack.c.h.b16 %v6364
    %v7650 = vunpack.c.l.b16 %v6365
    %v7651 = vunpack.c.h.b16 %v6365
    %v7652 = vunpack.c.l.b16 %v6366
    %v7653 = vunpack.c.h.b16 %v6366
    %v7654 = vunpack.c.l.b16 %v6367
    %v7655 = vunpack.c.l.b16 %v6368
    %v7656 = vunpack.c.h.b16 %v6368
    %v7657 = vunpack.c.l.b16 %v6369
    %v7658 = vunpack.c.h.b16 %v6369
    %v7659 = vunpack.c.l.b16 %v6370
    %v7660 = vunpack.c.h.b16 %v6370
    %v7661 = vunpack.c.l.b16 %v6371
    %v7662 = vunpack.c.l.b16 %v6372
    %v7663 = vunpack.c.h.b16 %v6372
    %v7664 = vunpack.c.l.b16 %v6373
    %v7665 = vunpack.c.h.b16 %v6373
    %v7666 = vunpack.c.l.b16 %v6374
    %v7667 = vunpack.c.h.b16 %v6374
    %v7668 = vunpack.c.l.b16 %v6375
    %v7669 = vunpack.c.l.b16 %v6376
    %v7670 = vunpack.c.h.b16 %v6376
    %v7671 = vunpack.c.l.b16 %v6377
    %v7672 = vunpack.c.h.b16 %v6377
    %v7673 = vunpack.c.l.b16 %v6378
    %v7674 = vunpack.c.h.b16 %v6378
    %v7675 = vunpack.c.l.b16 %v6379
    %v7676 = vunpack.c.l.b16 %v6380
    %v7677 = vunpack.c.h.b16 %v6380
    %v7678 = vunpack.c.l.b16 %v6381
    %v7679 = vunpack.c.h.b16 %v6381
    %v7680 = vunpack.c.l.b16 %v6382
    %v7681 = vunpack.c.h.b16 %v6382
    %v7682 = vunpack.c.l.b16 %v6383
    %v7683 = vunpack.c.l.b16 %v6384
    %v7684 = vunpack.c.h.b16 %v6384
    %v7685 = vunpack.c.l.b16 %v6385
    %v7686 = vunpack.c.h.b16 %v6385
    %v7687 = vunpack.c.l.b16 %v6386
    %v7688 = vunpack.c.h.b16 %v6386
    %v7689 = vunpack.c.l.b16 %v6387
    %v7690 = vunpack.c.l.b16 %v6388
    %v7691 = vunpack.c.h.b16 %v6388
    %v7692 = vunpack.c.l.b16 %v6389
    %v7693 = vunpack.c.h.b16 %v6389
    %v7694 = vunpack.c.l.b16 %v6390
    %v7695 = vunpack.c.h.b16 %v6390
    %v7696 = vunpack.c.l.b16 %v6391
    %v7697 = vunpack.c.l.b16 %v6392
    %v7698 = vunpack.c.h.b16 %v6392
    %v7699 = vunpack.c.l.b16 %v6393
    %v7700 = vunpack.c.h.b16 %v6393
    %v7701 = vunpack.c.l.b16 %v6394
    %v7702 = vunpack.c.h.b16 %v6394
    %v7703 = vunpack.c.l.b16 %v6395
    %v7704 = vunpack.c.l.b16 %v6396
    %v7705 = vunpack.c.h.b16 %v6396
    %v7706 = vunpack.c.l.b16 %v6397
    %v7707 = vunpack.c.h.b16 %v6397
    %v7708 = vunpack.c.l.b16 %v6398
    %v7709 = vunpack.c.h.b16 %v6398
    %v7710 = vunpack.c.l.b16 %v6399
    %v7711 = vunpack.c.l.b16 %v6400
    %v7712 = vunpack.c.h.b16 %v6400
    %v7713 = vunpack.c.l.b16 %v6401
    %v7714 = vunpack.c.h.b16 %v6401
    %v7715 = vunpack.c.l.b16 %v6402
    %v7716 = vunpack.c.h.b16 %v6402
    %v7717 = vunpack.c.l.b16 %v6403
    %v7718 = vunpack.c.l.b16 %v6404
    %v7719 = vunpack.c.h.b16 %v6404
    %v7720 = vunpack.c.l.b16 %v6405
    %v7721 = vunpack.c.h.b16 %v6405
    %v7722 = vunpack.c.l.b16 %v6406
    %v7723 = vunpack.c.h.b16 %v6406
    %v7724 = vunpack.c.l.b16 %v6407
    %v7725 = vunpack.c.l.b16 %v6408
    %v7726 = vunpack.c.h.b16 %v6408
    %v7727 = vunpack.c.l.b16 %v6409
    %v7728 = vunpack.c.h.b16 %v6409
    %v7729 = vunpack.c.l.b16 %v6410
    %v7730 = vunpack.c.h.b16 %v6410
    %v7731 = vunpack.c.l.b16 %v6411
    %v7732 = vunpack.c.l.b16 %v6412
    %v7733 = vunpack.c.h.b16 %v6412
    %v7734 = vunpack.c.l.b16 %v6413
    %v7735 = vunpack.c.h.b16 %v6413
    %v7736 = vunpack.c.l.b16 %v6414
    %v7737 = vunpack.c.h.b16 %v6414
    %v7738 = vunpack.c.l.b16 %v6415
    %v7739 = vunpack.c.l.b16 %v6416
    %v7740 = vunpack.c.h.b16 %v6416
    %v7741 = vunpack.c.l.b16 %v6417
    %v7742 = vunpack.c.h.b16 %v6417
    %v7743 = vunpack.c.l.b16 %v6418
    %v7744 = vunpack.c.h.b16 %v6418
    %v7745 = vunpack.c.l.b16 %v6419
    %v7746 = vunpack.c.l.b16 %v6420
    %v7747 = vunpack.c.h.b16 %v6420
    %v7748 = vunpack.c.l.b16 %v6421
    %v7749 = vunpack.c.h.b16 %v6421
    %v7750 = vunpack.c.l.b16 %v6422
    %v7751 = vunpack.c.h.b16 %v6422
    %v7752 = vunpack.c.l.b16 %v6423
    %v7753 = vunpack.c.l.b16 %v6424
    %v7754 = vunpack.c.h.b16 %v6424
    %v7755 = vunpack.c.l.b16 %v6425
    %v7756 = vunpack.c.h.b16 %v6425
    %v7757 = vunpack.c.l.b16 %v6426
    %v7758 = vunpack.c.h.b16 %v6426
    %v7759 = vunpack.c.l.b16 %v6427
    %v7760 = vunpack.c.l.b16 %v6428
    %v7761 = vunpack.c.h.b16 %v6428
    %v7762 = vunpack.c.l.b16 %v6429
    %v7763 = vunpack.c.h.b16 %v6429
    %v7764 = vunpack.c.l.b16 %v6430
    %v7765 = vunpack.c.h.b16 %v6430
    %v7766 = vunpack.c.l.b16 %v6431
    %v7767 = vunpack.c.l.b16 %v6432
    %v7768 = vunpack.c.h.b16 %v6432
    %v7769 = vunpack.c.l.b16 %v6433
    %v7770 = vunpack.c.h.b16 %v6433
    %v7771 = vunpack.c.l.b16 %v6434
    %v7772 = vunpack.c.h.b16 %v6434
    %v7773 = vunpack.c.l.b16 %v6435
    %v7774 = vunpack.c.l.b16 %v6436
    %v7775 = vunpack.c.h.b16 %v6436
    %v7776 = vunpack.c.l.b16 %v6437
    %v7777 = vunpack.c.h.b16 %v6437
    %v7778 = vunpack.c.l.b16 %v6438
    %v7779 = vunpack.c.h.b16 %v6438
    %v7780 = vunpack.c.l.b16 %v6439
    %v7781 = vunpack.c.l.b16 %v6440
    %v7782 = vunpack.c.h.b16 %v6440
    %v7783 = vunpack.c.l.b16 %v6441
    %v7784 = vunpack.c.h.b16 %v6441
    %v7785 = vunpack.c.l.b16 %v6442
    %v7786 = vunpack.c.h.b16 %v6442
    %v7787 = vunpack.c.l.b16 %v6443
    %v7788 = vunpack.c.l.b16 %v6444
    %v7789 = vunpack.c.h.b16 %v6444
    %v7790 = vunpack.c.l.b16 %v6445
    %v7791 = vunpack.c.h.b16 %v6445
    %v7792 = vunpack.c.l.b16 %v6446
    %v7793 = vunpack.c.h.b16 %v6446
    %v7794 = vunpack.c.l.b16 %v6447
    %v7795 = vunpack.c.l.b16 %v6448
    %v7796 = vunpack.c.h.b16 %v6448
    %v7797 = vunpack.c.l.b16 %v6449
    %v7798 = vunpack.c.h.b16 %v6449
    %v7799 = vunpack.c.l.b16 %v6450
    %v7800 = vunpack.c.h.b16 %v6450
    %v7801 = vunpack.c.l.b16 %v6451
    %v7802 = vunpack.c.l.b16 %v6452
    %v7803 = vunpack.c.h.b16 %v6452
    %v7804 = vunpack.c.l.b16 %v6453
    %v7805 = vunpack.c.h.b16 %v6453
    %v7806 = vunpack.c.l.b16 %v6454
    %v7807 = vunpack.c.h.b16 %v6454
    %v7808 = vunpack.c.l.b16 %v6455
    %v7809 = vunpack.c.l.b16 %v6456
    %v7810 = vunpack.c.h.b16 %v6456
    %v7811 = vunpack.c.l.b16 %v6457
    %v7812 = vunpack.c.h.b16 %v6457
    %v7813 = vunpack.c.l.b16 %v6458
    %v7814 = vunpack.c.h.b16 %v6458
    %v7815 = vunpack.c.l.b16 %v6459
    %v7816 = vunpack.c.l.b16 %v6460
    %v7817 = vunpack.c.h.b16 %v6460
    %v7818 = vunpack.c.l.b16 %v6461
    %v7819 = vunpack.c.h.b16 %v6461
    %v7820 = vunpack.c.l.b16 %v6462
    %v7821 = vunpack.c.h.b16 %v6462
    %v7822 = vunpack.c.l.b16 %v6463
    %v7823 = vunpack.c.l.b16 %v6464
    %v7824 = vunpack.c.h.b16 %v6464
    %v7825 = vunpack.c.l.b16 %v6465
    %v7826 = vunpack.c.h.b16 %v6465
    %v7827 = vunpack.c.l.b16 %v6466
    %v7828 = vunpack.c.h.b16 %v6466
    %v7829 = vunpack.c.l.b16 %v6467
    %v7830 = vunpack.c.l.b16 %v6468
    %v7831 = vunpack.c.h.b16 %v6468
    %v7832 = vunpack.c.l.b16 %v6469
    %v7833 = vunpack.c.h.b16 %v6469
    %v7834 = vunpack.c.l.b16 %v6470
    %v7835 = vunpack.c.h.b16 %v6470
    %v7836 = vunpack.c.l.b16 %v6471
    %v7837 = vunpack.c.l.b16 %v6472
    %v7838 = vunpack.c.h.b16 %v6472
    %v7839 = vunpack.c.l.b16 %v6473
    %v7840 = vunpack.c.h.b16 %v6473
    %v7841 = vunpack.c.l.b16 %v6474
    %v7842 = vunpack.c.h.b16 %v6474
    %v7843 = vunpack.c.l.b16 %v6475
    %v7844 = vunpack.c.l.b16 %v6476
    %v7845 = vunpack.c.h.b16 %v6476
    %v7846 = vunpack.c.l.b16 %v6477
    %v7847 = vunpack.c.h.b16 %v6477
    %v7848 = vunpack.c.l.b16 %v6478
    %v7849 = vunpack.c.h.b16 %v6478
    %v7850 = vunpack.c.l.b16 %v6479
    %v7851 = vunpack.c.l.b16 %v6480
    %v7852 = vunpack.c.h.b16 %v6480
    %v7853 = vunpack.c.l.b16 %v6481
    %v7854 = vunpack.c.h.b16 %v6481
    %v7855 = vunpack.c.l.b16 %v6482
    %v7856 = vunpack.c.h.b16 %v6482
    %v7857 = vunpack.c.l.b16 %v6483
    %v7858 = vunpack.c.l.b16 %v6484
    %v7859 = vunpack.c.h.b16 %v6484
    %v7860 = vunpack.c.l.b16 %v6485
    %v7861 = vunpack.c.h.b16 %v6485
    %v7862 = vunpack.c.l.b16 %v6486
    %v7863 = vunpack.c.h.b16 %v6486
    %v7864 = vunpack.c.l.b16 %v6487
    %v7865 = vunpack.c.l.b16 %v6488
    %v7866 = vunpack.c.h.b16 %v6488
    %v7867 = vunpack.c.l.b16 %v6489
    %v7868 = vunpack.c.h.b16 %v6489
    %v7869 = vunpack.c.l.b16 %v6490
    %v7870 = vunpack.c.h.b16 %v6490
    %v7871 = vunpack.c.l.b16 %v6491
    %v7872 = vunpack.c.l.b16 %v6492
    %v7873 = vunpack.c.h.b16 %v6492
    %v7874 = vunpack.c.l.b16 %v6493
    %v7875 = vunpack.c.h.b16 %v6493
    %v7876 = vunpack.c.l.b16 %v6494
    %v7877 = vunpack.c.h.b16 %v6494
    %v7878 = vunpack.c.l.b16 %v6495
    %v7879 = vunpack.c.l.b16 %v6496
    %v7880 = vunpack.c.h.b16 %v6496
    %v7881 = vunpack.c.l.b16 %v6497
    %v7882 = vunpack.c.h.b16 %v6497
    %v7883 = vunpack.c.l.b16 %v6498
    %v7884 = vunpack.c.h.b16 %v6498
    %v7885 = vunpack.c.l.b16 %v6499
    %v7886 = vunpack.c.l.b16 %v6500
    %v7887 = vunpack.c.h.b16 %v6500
    %v7888 = vunpack.c.l.b16 %v6501
    %v7889 = vunpack.c.h.b16 %v6501
    %v7890 = vunpack.c.l.b16 %v6502
    %v7891 = vunpack.c.h.b16 %v6502
    %v7892 = vunpack.c.l.b16 %v6503
    %v7893 = vunpack.c.l.b16 %v6504
    %v7894 = vunpack.c.h.b16 %v6504
    %v7895 = vunpack.c.l.b16 %v6505
    %v7896 = vunpack.c.h.b16 %v6505
    %v7897 = vunpack.c.l.b16 %v6506
    %v7898 = vunpack.c.h.b16 %v6506
    %v7899 = vunpack.c.l.b16 %v6507
    %v7900 = vunpack.c.l.b16 %v6508
    %v7901 = vunpack.c.h.b16 %v6508
    %v7902 = vunpack.c.l.b16 %v6509
    %v7903 = vunpack.c.h.b16 %v6509
    %v7904 = vunpack.c.l.b16 %v6510
    %v7905 = vunpack.c.h.b16 %v6510
    %v7906 = vunpack.c.l.b16 %v6511
    %v7907 = vunpack.c.l.b16 %v6512
    %v7908 = vunpack.c.h.b16 %v6512
    %v7909 = vunpack.c.l.b16 %v6513
    %v7910 = vunpack.c.h.b16 %v6513
    %v7911 = vunpack.c.l.b16 %v6514
    %v7912 = vunpack.c.h.b16 %v6514
    %v7913 = vunpack.c.l.b16 %v6515
    %v7914 = vunpack.c.l.b16 %v6516
    %v7915 = vunpack.c.h.b16 %v6516
    %v7916 = vunpack.c.l.b16 %v6517
    %v7917 = vunpack.c.h.b16 %v6517
    %v7918 = vunpack.c.l.b16 %v6518
    %v7919 = vunpack.c.h.b16 %v6518
    %v7920 = vunpack.c.l.b16 %v6519
    %v7921 = vunpack.c.l.b16 %v6520
    %v7922 = vunpack.c.h.b16 %v6520
    %v7923 = vunpack.c.l.b16 %v6521
    %v7924 = vunpack.c.h.b16 %v6521
    %v7925 = vunpack.c.l.b16 %v6522
    %v7926 = vunpack.c.h.b16 %v6522
    %v7927 = vunpack.c.l.b16 %v6523
    %v7928 = vunpack.c.l.b16 %v6524
    %v7929 = vunpack.c.h.b16 %v6524
    %v7930 = vunpack.c.l.b16 %v6525
    %v7931 = vunpack.c.h.b16 %v6525
    %v7932 = vunpack.c.l.b16 %v6526
    %v7933 = vunpack.c.h.b16 %v6526
    %v7934 = vunpack.c.l.b16 %v6527
    %v7935 = vunpack.c.l.b16 %v6528
    %v7936 = vunpack.c.h.b16 %v6528
    %v7937 = vunpack.c.l.b16 %v6529
    %v7938 = vunpack.c.h.b16 %v6529
    %v7939 = vunpack.c.l.b16 %v6530
    %v7940 = vunpack.c.h.b16 %v6530
    %v7941 = vunpack.c.l.b16 %v6531
    %v7942 = vunpack.c.l.b16 %v6532
    %v7943 = vunpack.c.h.b16 %v6532
    %v7944 = vunpack.c.l.b16 %v6533
    %v7945 = vunpack.c.h.b16 %v6533
    %v7946 = vunpack.c.l.b16 %v6534
    %v7947 = vunpack.c.h.b16 %v6534
    %v7948 = vunpack.c.l.b16 %v6535
    %v7949 = vunpack.c.l.b16 %v6536
    %v7950 = vunpack.c.h.b16 %v6536
    %v7951 = vunpack.c.l.b16 %v6537
    %v7952 = vunpack.c.h.b16 %v6537
    %v7953 = vunpack.c.l.b16 %v6538
    %v7954 = vunpack.c.h.b16 %v6538
    %v7955 = vunpack.c.l.b16 %v6539
    %v7956 = vunpack.c.l.b16 %v6540
    %v7957 = vunpack.c.h.b16 %v6540
    %v7958 = vunpack.c.l.b16 %v6541
    %v7959 = vunpack.c.h.b16 %v6541
    %v7960 = vunpack.c.l.b16 %v6542
    %v7961 = vunpack.c.h.b16 %v6542
    %v7962 = vunpack.c.l.b16 %v6543
    %v7963 = vunpack.c.l.b16 %v6544
    %v7964 = vunpack.c.h.b16 %v6544
    %v7965 = vunpack.c.l.b16 %v6545
    %v7966 = vunpack.c.h.b16 %v6545
    %v7967 = vunpack.c.l.b16 %v6546
    %v7968 = vunpack.c.h.b16 %v6546
    %v7969 = vunpack.c.l.b16 %v6547
    %v7970 = vunpack.c.l.b16 %v6548
    %v7971 = vunpack.c.h.b16 %v6548
    %v7972 = vunpack.c.l.b16 %v6549
    %v7973 = vunpack.c.h.b16 %v6549
    %v7974 = vunpack.c.l.b16 %v6550
    %v7975 = vunpack.c.h.b16 %v6550
    %v7976 = vunpack.c.l.b16 %v6551
    %v7977 = vunpack.c.l.b16 %v6552
    %v7978 = vunpack.c.h.b16 %v6552
    %v7979 = vunpack.c.l.b16 %v6553
    %v7980 = vunpack.c.h.b16 %v6553
    %v7981 = vunpack.c.l.b16 %v6554
    %v7982 = vunpack.c.h.b16 %v6554
    %v7983 = vunpack.c.l.b16 %v6555
    %v7984 = vunpack.c.l.b16 %v6556
    %v7985 = vunpack.c.h.b16 %v6556
    %v7986 = vunpack.c.l.b16 %v6557
    %v7987 = vunpack.c.h.b16 %v6557
    %v7988 = vunpack.c.l.b16 %v6558
    %v7989 = vunpack.c.h.b16 %v6558
    %v7990 = vunpack.c.l.b16 %v6559
    %v7991 = vunpack.c.l.b16 %v6560
    %v7992 = vunpack.c.h.b16 %v6560
    %v7993 = vunpack.c.l.b16 %v6561
    %v7994 = vunpack.c.h.b16 %v6561
    %v7995 = vunpack.c.l.b16 %v6562
    %v7996 = vunpack.c.h.b16 %v6562
    %v7997 = vunpack.c.l.b16 %v6563
    %v7998 = vunpack.c.l.b16 %v6564
    %v7999 = vunpack.c.h.b16 %v6564
    %v8000 = vunpack.c.l.b16 %v6565
    %v8001 = vunpack.c.h.b16 %v6565
    %v8002 = vunpack.c.l.b16 %v6566
    %v8003 = vunpack.c.h.b16 %v6566
    %v8004 = vunpack.c.l.b16 %v6567
    %v8005 = vunpack.c.l.b16 %v6568
    %v8006 = vunpack.c.h.b16 %v6568
    %v8007 = vunpack.c.l.b16 %v6569
    %v8008 = vunpack.c.h.b16 %v6569
    %v8009 = vunpack.c.l.b16 %v6570
    %v8010 = vunpack.c.h.b16 %v6570
    %v8011 = vunpack.c.l.b16 %v6571
    %v8012 = vunpack.c.l.b16 %v6572
    %v8013 = vunpack.c.h.b16 %v6572
    %v8014 = vunpack.c.l.b16 %v6573
    %v8015 = vunpack.c.h.b16 %v6573
    %v8016 = vunpack.c.l.b16 %v6574
    %v8017 = vunpack.c.h.b16 %v6574
    %v8018 = vunpack.c.l.b16 %v6575
    %v8019 = vunpack.c.l.b16 %v6576
    %v8020 = vunpack.c.h.b16 %v6576
    %v8021 = vunpack.c.l.b16 %v6577
    %v8022 = vunpack.c.h.b16 %v6577
    %v8023 = vunpack.c.l.b16 %v6578
    %v8024 = vunpack.c.h.b16 %v6578
    %v8025 = vunpack.c.l.b16 %v6579
    %v8026 = vunpack.c.l.b16 %v6580
    %v8027 = vunpack.c.h.b16 %v6580
    %v8028 = vunpack.c.l.b16 %v6581
    %v8029 = vunpack.c.h.b16 %v6581
    %v8030 = vunpack.c.l.b16 %v6582
    %v8031 = vunpack.c.h.b16 %v6582
    %v8032 = vunpack.c.l.b16 %v6583
    %v8033 = vunpack.c.l.b16 %v6584
    %v8034 = vunpack.c.h.b16 %v6584
    %v8035 = vunpack.c.l.b16 %v6585
    %v8036 = vunpack.c.h.b16 %v6585
    %v8037 = vunpack.c.l.b16 %v6586
    %v8038 = vunpack.c.h.b16 %v6586
    %v8039 = vunpack.c.l.b16 %v6587
    %v8040 = vunpack.c.l.b16 %v6588
    %v8041 = vunpack.c.h.b16 %v6588
    %v8042 = vunpack.c.l.b16 %v6589
    %v8043 = vunpack.c.h.b16 %v6589
    %v8044 = vunpack.c.l.b16 %v6590
    %v8045 = vunpack.c.h.b16 %v6590
    %v8046 = vunpack.c.l.b16 %v6591
    %v8047 = vunpack.c.l.b16 %v6592
    %v8048 = vunpack.c.h.b16 %v6592
    %v8049 = vunpack.c.l.b16 %v6593
    %v8050 = vunpack.c.h.b16 %v6593
    %v8051 = vunpack.c.l.b16 %v6594
    %v8052 = vunpack.c.h.b16 %v6594
    %v8053 = vunpack.c.l.b16 %v6595
    %v8054 = vunpack.c.l.b16 %v6596
    %v8055 = vunpack.c.h.b16 %v6596
    %v8056 = vunpack.c.l.b16 %v6597
    %v8057 = vunpack.c.h.b16 %v6597
    %v8058 = vunpack.c.l.b16 %v6598
    %v8059 = vunpack.c.h.b16 %v6598
    %v8060 = vunpack.c.l.b16 %v6599
    %v8061 = vunpack.c.l.b16 %v6600
    %v8062 = vunpack.c.h.b16 %v6600
    %v8063 = vunpack.c.l.b16 %v6601
    %v8064 = vunpack.c.h.b16 %v6601
    %v8065 = vunpack.c.l.b16 %v6602
    %v8066 = vunpack.c.h.b16 %v6602
    %v8067 = vunpack.c.l.b16 %v6603
    %v8068 = vunpack.c.l.b16 %v6604
    %v8069 = vunpack.c.h.b16 %v6604
    %v8070 = vunpack.c.l.b16 %v6605
    %v8071 = vunpack.c.h.b16 %v6605
    %v8072 = vunpack.c.l.b16 %v6606
    %v8073 = vunpack.c.h.b16 %v6606
    %v8074 = vunpack.c.l.b16 %v6607
    %v8075 = vunpack.c.l.b16 %v6608
    %v8076 = vunpack.c.h.b16 %v6608
    %v8077 = vunpack.c.l.b16 %v6609
    %v8078 = vunpack.c.h.b16 %v6609
    %v8079 = vunpack.c.l.b16 %v6610
    %v8080 = vunpack.c.h.b16 %v6610
    %v8081 = vunpack.c.l.b16 %v6611
    %v8082 = vunpack.c.l.b16 %v6612
    %v8083 = vunpack.c.h.b16 %v6612
    %v8084 = vunpack.c.l.b16 %v6613
    %v8085 = vunpack.c.h.b16 %v6613
    %v8086 = vunpack.c.l.b16 %v6614
    %v8087 = vunpack.c.h.b16 %v6614
    %v8088 = vunpack.c.l.b16 %v6615
    %v8089 = vunpack.c.l.b16 %v6616
    %v8090 = vunpack.c.h.b16 %v6616
    %v8091 = vunpack.c.l.b16 %v6617
    %v8092 = vunpack.c.h.b16 %v6617
    %v8093 = vunpack.c.l.b16 %v6618
    %v8094 = vunpack.c.h.b16 %v6618
    %v8095 = vunpack.c.l.b16 %v6619
    %v8096 = vunpack.c.l.b16 %v6620
    %v8097 = vunpack.c.h.b16 %v6620
    %v8098 = vunpack.c.l.b16 %v6621
    %v8099 = vunpack.c.h.b16 %v6621
    %v8100 = vunpack.c.l.b16 %v6622
    %v8101 = vunpack.c.h.b16 %v6622
    %v8102 = vunpack.c.l.b16 %v6623
    %v8103 = vunpack.c.l.b16 %v6624
    %v8104 = vunpack.c.h.b16 %v6624
    %v8105 = vunpack.c.l.b16 %v6625
    %v8106 = vunpack.c.h.b16 %v6625
    %v8107 = vunpack.c.l.b16 %v6626
    %v8108 = vunpack.c.h.b16 %v6626
    %v8109 = vunpack.c.l.b16 %v6627
    %v8110 = vunpack.c.l.b16 %v6628
    %v8111 = vunpack.c.h.b16 %v6628
    %v8112 = vunpack.c.l.b16 %v6629
    %v8113 = vunpack.c.h.b16 %v6629
    %v8114 = vunpack.c.l.b16 %v6630
    %v8115 = vunpack.c.h.b16 %v6630
    %v8116 = vunpack.c.l.b16 %v6631
    %v8117 = vunpack.c.l.b16 %v6632
    %v8118 = vunpack.c.h.b16 %v6632
    %v8119 = vunpack.c.l.b16 %v6633
    %v8120 = vunpack.c.h.b16 %v6633
    %v8121 = vunpack.c.l.b16 %v6634
    %v8122 = vunpack.c.h.b16 %v6634
    %v8123 = vunpack.c.l.b16 %v6635
    %v8124 = vunpack.c.l.b16 %v6636
    %v8125 = vunpack.c.h.b16 %v6636
    %v8126 = vunpack.c.l.b16 %v6637
    %v8127 = vunpack.c.h.b16 %v6637
    %v8128 = vunpack.c.l.b16 %v6638
    %v8129 = vunpack.c.h.b16 %v6638
    %v8130 = vunpack.c.l.b16 %v6639
    %v8131 = vunpack.c.l.b16 %v6640
    %v8132 = vunpack.c.h.b16 %v6640
    %v8133 = vunpack.c.l.b16 %v6641
    %v8134 = vunpack.c.h.b16 %v6641
    %v8135 = vunpack.c.l.b16 %v6642
    %v8136 = vunpack.c.h.b16 %v6642
    %v8137 = vunpack.c.l.b16 %v6643
    %v8138 = vunpack.c.l.b16 %v6644
    %v8139 = vunpack.c.h.b16 %v6644
    %v8140 = vunpack.c.l.b16 %v6645
    %v8141 = vunpack.c.h.b16 %v6645
    %v8142 = vunpack.c.l.b16 %v6646
    %v8143 = vunpack.c.h.b16 %v6646
    %v8144 = vunpack.c.l.b16 %v6647
    %v8145 = vunpack.c.l.b16 %v6648
    %v8146 = vunpack.c.h.b16 %v6648
    %v8147 = vunpack.c.l.b16 %v6649
    %v8148 = vunpack.c.h.b16 %v6649
    %v8149 = vunpack.c.l.b16 %v6650
    %v8150 = vunpack.c.h.b16 %v6650
    %v8151 = vunpack.c.l.b16 %v6651
    %v8152 = vunpack.c.l.b16 %v6652
    %v8153 = vunpack.c.h.b16 %v6652
    %v8154 = vunpack.c.l.b16 %v6653
    %v8155 = vunpack.c.h.b16 %v6653
    %v8156 = vunpack.c.l.b16 %v6654
    %v8157 = vunpack.c.h.b16 %v6654
    %v8158 = vunpack.c.l.b16 %v6655
    %v8159 = vunpack.c.l.b16 %v6656
    %v8160 = vunpack.c.h.b16 %v6656
    %v8161 = vunpack.c.l.b16 %v6657
    %v8162 = vunpack.c.h.b16 %v6657
    %v8163 = vunpack.c.l.b16 %v6658
    %v8164 = vunpack.c.h.b16 %v6658
    %v8165 = vunpack.c.l.b16 %v6659
    %v8166 = vunpack.c.l.b16 %v6660
    %v8167 = vunpack.c.h.b16 %v6660
    %v8168 = vunpack.c.l.b16 %v6661
    %v8169 = vunpack.c.h.b16 %v6661
    %v8170 = vunpack.c.l.b16 %v6662
    %v8171 = vunpack.c.h.b16 %v6662
    %v8172 = vunpack.c.l.b16 %v6663
    %v8173 = vunpack.c.l.b16 %v6664
    %v8174 = vunpack.c.h.b16 %v6664
    %v8175 = vunpack.c.l.b16 %v6665
    %v8176 = vunpack.c.h.b16 %v6665
    %v8177 = vunpack.c.l.b16 %v6666
    %v8178 = vunpack.c.h.b16 %v6666
    %v8179 = vunpack.c.l.b16 %v6667
    %v8180 = vunpack.c.l.b16 %v6668
    %v8181 = vunpack.c.h.b16 %v6668
    %v8182 = vunpack.c.l.b16 %v6669
    %v8183 = vunpack.c.h.b16 %v6669
    %v8184 = vunpack.c.l.b16 %v6670
    %v8185 = vunpack.c.h.b16 %v6670
    %v8186 = vunpack.c.l.b16 %v6671
    %v8187 = vunpack.c.l.b16 %v6672
    %v8188 = vunpack.c.h.b16 %v6672
    %v8189 = vunpack.c.l.b16 %v6673
    %v8190 = vunpack.c.h.b16 %v6673
    %v8191 = vunpack.c.l.b16 %v6674
    %v8192 = vunpack.c.h.b16 %v6674
    %v8193 = vunpack.c.l.b16 %v6675
    %v8194 = vunpack.c.l.b16 %v6676
    %v8195 = vunpack.c.h.b16 %v6676
    %v8196 = vunpack.c.l.b16 %v6677
    %v8197 = vunpack.c.h.b16 %v6677
    %v8198 = vunpack.c.l.b16 %v6678
    %v8199 = vunpack.c.h.b16 %v6678
    %v8200 = vunpack.c.l.b16 %v6679
    %v8201 = vunpack.c.l.b16 %v6680
    %v8202 = vunpack.c.h.b16 %v6680
    %v8203 = vunpack.c.l.b16 %v6681
    %v8204 = vunpack.c.h.b16 %v6681
    %v8205 = vunpack.c.l.b16 %v6682
    %v8206 = vunpack.c.h.b16 %v6682
    %v8207 = vunpack.c.l.b16 %v6683
    %v8208 = vunpack.c.l.b16 %v6684
    %v8209 = vunpack.c.h.b16 %v6684
    %v8210 = vunpack.c.l.b16 %v6685
    %v8211 = vunpack.c.h.b16 %v6685
    %v8212 = vunpack.c.l.b16 %v6686
    %v8213 = vunpack.c.h.b16 %v6686
    %v8214 = vunpack.c.l.b16 %v6687
    %v8215 = vunpack.c.l.b16 %v6688
    %v8216 = vunpack.c.h.b16 %v6688
    %v8217 = vunpack.c.l.b16 %v6689
    %v8218 = vunpack.c.h.b16 %v6689
    %v8219 = vunpack.c.l.b16 %v6690
    %v8220 = vunpack.c.h.b16 %v6690
    %v8221 = vunpack.c.l.b16 %v6691
    %v8222 = vunpack.c.l.b16 %v6692
    %v8223 = vunpack.c.h.b16 %v6692
    %v8224 = vunpack.c.l.b16 %v6693
    %v8225 = vunpack.c.h.b16 %v6693
    %v8226 = vunpack.c.l.b16 %v6694
    %v8227 = vunpack.c.h.b16 %v6694
    %v8228 = vunpack.c.l.b16 %v6695
    %v8229 = vunpack.c.l.b16 %v6696
    %v8230 = vunpack.c.h.b16 %v6696
    %v8231 = vunpack.c.l.b16 %v6697
    %v8232 = vunpack.c.h.b16 %v6697
    %v8233 = vunpack.c.l.b16 %v6698
    %v8234 = vunpack.c.h.b16 %v6698
    %v8235 = vunpack.c.l.b16 %v6699
    %v8236 = vunpack.c.l.b16 %v6700
    %v8237 = vunpack.c.h.b16 %v6700
    %v8238 = vunpack.c.l.b16 %v6701
    %v8239 = vunpack.c.h.b16 %v6701
    %v8240 = vunpack.c.l.b16 %v6702
    %v8241 = vunpack.c.h.b16 %v6702
    %v8242 = vunpack.c.l.b16 %v6703
    %v8243 = vunpack.c.l.b16 %v6704
    %v8244 = vunpack.c.h.b16 %v6704
    %v8245 = vunpack.c.l.b16 %v6705
    %v8246 = vunpack.c.h.b16 %v6705
    %v8247 = vunpack.c.l.b16 %v6706
    %v8248 = vunpack.c.h.b16 %v6706
    %v8249 = vunpack.c.l.b16 %v6707
    %v8250 = vunpack.c.l.b16 %v6708
    %v8251 = vunpack.c.h.b16 %v6708
    %v8252 = vunpack.c.l.b16 %v6709
    %v8253 = vunpack.c.h.b16 %v6709
    %v8254 = vunpack.c.l.b16 %v6710
    %v8255 = vunpack.c.h.b16 %v6710
    %v8256 = vunpack.c.l.b16 %v6711
    %v8257 = vunpack.c.l.b16 %v6712
    %v8258 = vunpack.c.h.b16 %v6712
    %v8259 = vunpack.c.l.b16 %v6713
    %v8260 = vunpack.c.h.b16 %v6713
    %v8261 = vunpack.c.l.b16 %v6714
    %v8262 = vunpack.c.h.b16 %v6714
    %v8263 = vunpack.c.l.b16 %v6715
    %v8264 = vunpack.c.l.b16 %v6716
    %v8265 = vunpack.c.h.b16 %v6716
    %v8266 = vunpack.c.l.b16 %v6717
    %v8267 = vunpack.c.h.b16 %v6717
    %v8268 = vunpack.c.l.b16 %v6718
    %v8269 = vunpack.c.h.b16 %v6718
    %v8270 = vunpack.c.l.b16 %v6719
    %v8271 = vunpack.c.l.b16 %v6720
    %v8272 = vunpack.c.h.b16 %v6720
    %v8273 = vunpack.c.l.b16 %v6721
    %v8274 = vunpack.c.h.b16 %v6721
    %v8275 = vunpack.c.l.b16 %v6722
    %v8276 = vunpack.c.h.b16 %v6722
    %v8277 = vunpack.c.l.b16 %v6723
    %v8278 = vunpack.c.l.b16 %v6724
    %v8279 = vunpack.c.h.b16 %v6724
    %v8280 = vunpack.c.l.b16 %v6725
    %v8281 = vunpack.c.h.b16 %v6725
    %v8282 = vunpack.c.l.b16 %v6726
    %v8283 = vunpack.c.h.b16 %v6726
    %v8284 = vunpack.c.l.b16 %v6727
    %v8285 = vunpack.c.l.b16 %v6728
    %v8286 = vunpack.c.h.b16 %v6728
    %v8287 = vunpack.c.l.b16 %v6729
    %v8288 = vunpack.c.h.b16 %v6729
    %v8289 = vunpack.c.l.b16 %v6730
    %v8290 = vunpack.c.h.b16 %v6730
    %v8291 = vunpack.c.l.b16 %v6731
    %v8292 = vunpack.c.l.b16 %v6732
    %v8293 = vunpack.c.h.b16 %v6732
    %v8294 = vunpack.c.l.b16 %v6733
    %v8295 = vunpack.c.h.b16 %v6733
    %v8296 = vunpack.c.l.b16 %v6734
    %v8297 = vunpack.c.h.b16 %v6734
    %v8298 = vunpack.c.l.b16 %v6735
    %v8299 = vunpack.c.l.b16 %v6736
    %v8300 = vunpack.c.h.b16 %v6736
    %v8301 = vunpack.c.l.b16 %v6737
    %v8302 = vunpack.c.h.b16 %v6737
    %v8303 = vunpack.c.l.b16 %v6738
    %v8304 = vunpack.c.h.b16 %v6738
    %v8305 = vunpack.c.l.b16 %v6739
    %v8306 = vunpack.c.l.b16 %v6740
    %v8307 = vunpack.c.h.b16 %v6740
    %v8308 = vunpack.c.l.b16 %v6741
    %v8309 = vunpack.c.h.b16 %v6741
    %v8310 = vunpack.c.l.b16 %v6742
    %v8311 = vunpack.c.h.b16 %v6742
    %v8312 = vunpack.c.l.b16 %v6743
    %v8313 = vunpack.c.l.b16 %v6744
    %v8314 = vunpack.c.h.b16 %v6744
    %v8315 = vunpack.c.l.b16 %v6745
    %v8316 = vunpack.c.h.b16 %v6745
    %v8317 = vunpack.c.l.b16 %v6746
    %v8318 = vunpack.c.h.b16 %v6746
    %v8319 = vunpack.c.l.b16 %v6747
    %v8320 = vunpack.c.l.b16 %v6748
    %v8321 = vunpack.c.h.b16 %v6748
    %v8322 = vunpack.c.l.b16 %v6749
    %v8323 = vunpack.c.h.b16 %v6749
    %v8324 = vunpack.c.l.b16 %v6750
    %v8325 = vunpack.c.h.b16 %v6750
    %v8326 = vunpack.c.l.b16 %v6751
    %v8327 = vunpack.c.l.b16 %v6752
    %v8328 = vunpack.c.h.b16 %v6752
    %v8329 = vunpack.c.l.b16 %v6753
    %v8330 = vunpack.c.h.b16 %v6753
    %v8331 = vunpack.c.l.b16 %v6754
    %v8332 = vunpack.c.h.b16 %v6754
    %v8333 = vunpack.c.l.b16 %v6755
    %v8334 = vunpack.c.l.b16 %v6756
    %v8335 = vunpack.c.h.b16 %v6756
    %v8336 = vunpack.c.l.b16 %v6757
    %v8337 = vunpack.c.h.b16 %v6757
    %v8338 = vunpack.c.l.b16 %v6758
    %v8339 = vunpack.c.h.b16 %v6758
    %v8340 = vunpack.c.l.b16 %v6759
    %v8341 = vunpack.c.l.b16 %v6760
    %v8342 = vunpack.c.h.b16 %v6760
    %v8343 = vunpack.c.l.b16 %v6761
    %v8344 = vunpack.c.h.b16 %v6761
    %v8345 = vunpack.c.l.b16 %v6762
    %v8346 = vunpack.c.h.b16 %v6762
    %v8347 = vunpack.c.l.b16 %v6763
    %v8348 = vpack.c.b16 %v7347, %v7340
    %v8349 = vpack.c.b16 %v7348, %v7341
    %v8350 = vpack.c.b16 %v7349, %v7342
    %v8351 = vpack.c.b16 %v7350, %v7343
    %v8352 = vpack.c.b16 %v7351, %v7344
    %v8353 = vpack.c.b16 %v7352, %v7345
    %v8354 = vpack.c.b16 %v7353, %v7346
    %v8355 = vpack.c.b16 %v7361, %v7354
    %v8356 = vpack.c.b16 %v7362, %v7355
    %v8357 = vpack.c.b16 %v7363, %v7356
    %v8358 = vpack.c.b16 %v7364, %v7357
    %v8359 = vpack.c.b16 %v7365, %v7358
    %v8360 = vpack.c.b16 %v7366, %v7359
    %v8361 = vpack.c.b16 %v7367, %v7360
    %v8362 = vpack.c.b16 %v7375, %v7368
    %v8363 = vpack.c.b16 %v7376, %v7369
    %v8364 = vpack.c.b16 %v7377, %v7370
    %v8365 = vpack.c.b16 %v7378, %v7371
    %v8366 = vpack.c.b16 %v7379, %v7372
    %v8367 = vpack.c.b16 %v7380, %v7373
    %v8368 = vpack.c.b16 %v7381, %v7374
    %v8369 = vpack.c.b16 %v7389, %v7382
    %v8370 = vpack.c.b16 %v7390, %v7383
    %v8371 = vpack.c.b16 %v7391, %v7384
    %v8372 = vpack.c.b16 %v7392, %v7385
    %v8373 = vpack.c.b16 %v7393, %v7386
    %v8374 = vpack.c.b16 %v7394, %v7387
    %v8375 = vpack.c.b16 %v7395, %v7388
    %v8376 = vpack.c.b16 %v7403, %v7396
    %v8377 = vpack.c.b16 %v7404, %v7397
    %v8378 = vpack.c.b16 %v7405, %v7398
    %v8379 = vpack.c.b16 %v7406, %v7399
    %v8380 = vpack.c.b16 %v7407, %v7400
    %v8381 = vpack.c.b16 %v7408, %v7401
    %v8382 = vpack.c.b16 %v7409, %v7402
    %v8383 = vpack.c.b16 %v7417, %v7410
    %v8384 = vpack.c.b16 %v7418, %v7411
    %v8385 = vpack.c.b16 %v7419, %v7412
    %v8386 = vpack.c.b16 %v7420, %v7413
    %v8387 = vpack.c.b16 %v7421, %v7414
    %v8388 = vpack.c.b16 %v7422, %v7415
    %v8389 = vpack.c.b16 %v7423, %v7416
    %v8390 = vpack.c.b16 %v7431, %v7424
    %v8391 = vpack.c.b16 %v7432, %v7425
    %v8392 = vpack.c.b16 %v7433, %v7426
    %v8393 = vpack.c.b16 %v7434, %v7427
    %v8394 = vpack.c.b16 %v7435, %v7428
    %v8395 = vpack.c.b16 %v7436, %v7429
    %v8396 = vpack.c.b16 %v7437, %v7430
    %v8397 = vpack.c.b16 %v7445, %v7438
    %v8398 = vpack.c.b16 %v7446, %v7439
    %v8399 = vpack.c.b16 %v7447, %v7440
    %v8400 = vpack.c.b16 %v7448, %v7441
    %v8401 = vpack.c.b16 %v7449, %v7442
    %v8402 = vpack.c.b16 %v7450, %v7443
    %v8403 = vpack.c.b16 %v7451, %v7444
    %v8404 = vpack.c.b16 %v7459, %v7452
    %v8405 = vpack.c.b16 %v7460, %v7453
    %v8406 = vpack.c.b16 %v7461, %v7454
    %v8407 = vpack.c.b16 %v7462, %v7455
    %v8408 = vpack.c.b16 %v7463, %v7456
    %v8409 = vpack.c.b16 %v7464, %v7457
    %v8410 = vpack.c.b16 %v7465, %v7458
    %v8411 = vpack.c.b16 %v7473, %v7466
    %v8412 = vpack.c.b16 %v7474, %v7467
    %v8413 = vpack.c.b16 %v7475, %v7468
    %v8414 = vpack.c.b16 %v7476, %v7469
    %v8415 = vpack.c.b16 %v7477, %v7470
    %v8416 = vpack.c.b16 %v7478, %v7471
    %v8417 = vpack.c.b16 %v7479, %v7472
    %v8418 = vpack.c.b16 %v7487, %v7480
    %v8419 = vpack.c.b16 %v7488, %v7481
    %v8420 = vpack.c.b16 %v7489, %v7482
    %v8421 = vpack.c.b16 %v7490, %v7483
    %v8422 = vpack.c.b16 %v7491, %v7484
    %v8423 = vpack.c.b16 %v7492, %v7485
    %v8424 = vpack.c.b16 %v7493, %v7486
    %v8425 = vpack.c.b16 %v7501, %v7494
    %v8426 = vpack.c.b16 %v7502, %v7495
    %v8427 = vpack.c.b16 %v7503, %v7496
    %v8428 = vpack.c.b16 %v7504, %v7497
    %v8429 = vpack.c.b16 %v7505, %v7498
    %v8430 = vpack.c.b16 %v7506, %v7499
    %v8431 = vpack.c.b16 %v7507, %v7500
    %v8432 = vpack.c.b16 %v7515, %v7508
    %v8433 = vpack.c.b16 %v7516, %v7509
    %v8434 = vpack.c.b16 %v7517, %v7510
    %v8435 = vpack.c.b16 %v7518, %v7511
    %v8436 = vpack.c.b16 %v7519, %v7512
    %v8437 = vpack.c.b16 %v7520, %v7513
    %v8438 = vpack.c.b16 %v7521, %v7514
    %v8439 = vpack.c.b16 %v7529, %v7522
    %v8440 = vpack.c.b16 %v7530, %v7523
    %v8441 = vpack.c.b16 %v7531, %v7524
    %v8442 = vpack.c.b16 %v7532, %v7525
    %v8443 = vpack.c.b16 %v7533, %v7526
    %v8444 = vpack.c.b16 %v7534, %v7527
    %v8445 = vpack.c.b16 %v7535, %v7528
    %v8446 = vpack.c.b16 %v7543, %v7536
    %v8447 = vpack.c.b16 %v7544, %v7537
    %v8448 = vpack.c.b16 %v7545, %v7538
    %v8449 = vpack.c.b16 %v7546, %v7539
    %v8450 = vpack.c.b16 %v7547, %v7540
    %v8451 = vpack.c.b16 %v7548, %v7541
    %v8452 = vpack.c.b16 %v7549, %v7542
    %v8453 = vpack.c.b16 %v7557, %v7550
    %v8454 = vpack.c.b16 %v7558, %v7551
    %v8455 = vpack.c.b16 %v7559, %v7552
    %v8456 = vpack.c.b16 %v7560, %v7553
    %v8457 = vpack.c.b16 %v7561, %v7554
    %v8458 = vpack.c.b16 %v7562, %v7555
    %v8459 = vpack.c.b16 %v7563, %v7556
    %v8460 = vpack.c.b16 %v7571, %v7564
    %v8461 = vpack.c.b16 %v7572, %v7565
    %v8462 = vpack.c.b16 %v7573, %v7566
    %v8463 = vpack.c.b16 %v7574, %v7567
    %v8464 = vpack.c.b16 %v7575, %v7568
    %v8465 = vpack.c.b16 %v7576, %v7569
    %v8466 = vpack.c.b16 %v7577, %v7570
    %v8467 = vpack.c.b16 %v7585, %v7578
    %v8468 = vpack.c.b16 %v7586, %v7579
    %v8469 = vpack.c.b16 %v7587, %v7580
    %v8470 = vpack.c.b16 %v7588, %v7581
    %v8471 = vpack.c.b16 %v7589, %v7582
    %v8472 = vpack.c.b16 %v7590, %v7583
    %v8473 = vpack.c.b16 %v7591, %v7584
    %v8474 = vpack.c.b16 %v7599, %v7592
    %v8475 = vpack.c.b16 %v7600, %v7593
    %v8476 = vpack.c.b16 %v7601, %v7594
    %v8477 = vpack.c.b16 %v7602, %v7595
    %v8478 = vpack.c.b16 %v7603, %v7596
    %v8479 = vpack.c.b16 %v7604, %v7597
    %v8480 = vpack.c.b16 %v7605, %v7598
    %v8481 = vpack.c.b16 %v7613, %v7606
    %v8482 = vpack.c.b16 %v7614, %v7607
    %v8483 = vpack.c.b16 %v7615, %v7608
    %v8484 = vpack.c.b16 %v7616, %v7609
    %v8485 = vpack.c.b16 %v7617, %v7610
    %v8486 = vpack.c.b16 %v7618, %v7611
    %v8487 = vpack.c.b16 %v7619, %v7612
    %v8488 = vpack.c.b16 %v7627, %v7620
    %v8489 = vpack.c.b16 %v7628, %v7621
    %v8490 = vpack.c.b16 %v7629, %v7622
    %v8491 = vpack.c.b16 %v7630, %v7623
    %v8492 = vpack.c.b16 %v7631, %v7624
    %v8493 = vpack.c.b16 %v7632, %v7625
    %v8494 = vpack.c.b16 %v7633, %v7626
    %v8495 = vpack.c.b16 %v7641, %v7634
    %v8496 = vpack.c.b16 %v7642, %v7635
    %v8497 = vpack.c.b16 %v7643, %v7636
    %v8498 = vpack.c.b16 %v7644, %v7637
    %v8499 = vpack.c.b16 %v7645, %v7638
    %v8500 = vpack.c.b16 %v7646, %v7639
    %v8501 = vpack.c.b16 %v7647, %v7640
    %v8502 = vpack.c.b16 %v7655, %v7648
    %v8503 = vpack.c.b16 %v7656, %v7649
    %v8504 = vpack.c.b16 %v7657, %v7650
    %v8505 = vpack.c.b16 %v7658, %v7651
    %v8506 = vpack.c.b16 %v7659, %v7652
    %v8507 = vpack.c.b16 %v7660, %v7653
    %v8508 = vpack.c.b16 %v7661, %v7654
    %v8509 = vpack.c.b16 %v7669, %v7662
    %v8510 = vpack.c.b16 %v7670, %v7663
    %v8511 = vpack.c.b16 %v7671, %v7664
    %v8512 = vpack.c.b16 %v7672, %v7665
    %v8513 = vpack.c.b16 %v7673, %v7666
    %v8514 = vpack.c.b16 %v7674, %v7667
    %v8515 = vpack.c.b16 %v7675, %v7668
    %v8516 = vpack.c.b16 %v7683, %v7676
    %v8517 = vpack.c.b16 %v7684, %v7677
    %v8518 = vpack.c.b16 %v7685, %v7678
    %v8519 = vpack.c.b16 %v7686, %v7679
    %v8520 = vpack.c.b16 %v7687, %v7680
    %v8521 = vpack.c.b16 %v7688, %v7681
    %v8522 = vpack.c.b16 %v7689, %v7682
    %v8523 = vpack.c.b16 %v7697, %v7690
    %v8524 = vpack.c.b16 %v7698, %v7691
    %v8525 = vpack.c.b16 %v7699, %v7692
    %v8526 = vpack.c.b16 %v7700, %v7693
    %v8527 = vpack.c.b16 %v7701, %v7694
    %v8528 = vpack.c.b16 %v7702, %v7695
    %v8529 = vpack.c.b16 %v7703, %v7696
    %v8530 = vpack.c.b16 %v7711, %v7704
    %v8531 = vpack.c.b16 %v7712, %v7705
    %v8532 = vpack.c.b16 %v7713, %v7706
    %v8533 = vpack.c.b16 %v7714, %v7707
    %v8534 = vpack.c.b16 %v7715, %v7708
    %v8535 = vpack.c.b16 %v7716, %v7709
    %v8536 = vpack.c.b16 %v7717, %v7710
    %v8537 = vpack.c.b16 %v7725, %v7718
    %v8538 = vpack.c.b16 %v7726, %v7719
    %v8539 = vpack.c.b16 %v7727, %v7720
    %v8540 = vpack.c.b16 %v7728, %v7721
    %v8541 = vpack.c.b16 %v7729, %v7722
    %v8542 = vpack.c.b16 %v7730, %v7723
    %v8543 = vpack.c.b16 %v7731, %v7724
    %v8544 = vpack.c.b16 %v7739, %v7732
    %v8545 = vpack.c.b16 %v7740, %v7733
    %v8546 = vpack.c.b16 %v7741, %v7734
    %v8547 = vpack.c.b16 %v7742, %v7735
    %v8548 = vpack.c.b16 %v7743, %v7736
    %v8549 = vpack.c.b16 %v7744, %v7737
    %v8550 = vpack.c.b16 %v7745, %v7738
    %v8551 = vpack.c.b16 %v7753, %v7746
    %v8552 = vpack.c.b16 %v7754, %v7747
    %v8553 = vpack.c.b16 %v7755, %v7748
    %v8554 = vpack.c.b16 %v7756, %v7749
    %v8555 = vpack.c.b16 %v7757, %v7750
    %v8556 = vpack.c.b16 %v7758, %v7751
    %v8557 = vpack.c.b16 %v7759, %v7752
    %v8558 = vpack.c.b16 %v7767, %v7760
    %v8559 = vpack.c.b16 %v7768, %v7761
    %v8560 = vpack.c.b16 %v7769, %v7762
    %v8561 = vpack.c.b16 %v7770, %v7763
    %v8562 = vpack.c.b16 %v7771, %v7764
    %v8563 = vpack.c.b16 %v7772, %v7765
    %v8564 = vpack.c.b16 %v7773, %v7766
    %v8565 = vpack.c.b16 %v7781, %v7774
    %v8566 = vpack.c.b16 %v7782, %v7775
    %v8567 = vpack.c.b16 %v7783, %v7776
    %v8568 = vpack.c.b16 %v7784, %v7777
    %v8569 = vpack.c.b16 %v7785, %v7778
    %v8570 = vpack.c.b16 %v7786, %v7779
    %v8571 = vpack.c.b16 %v7787, %v7780
    %v8572 = vpack.c.b16 %v7795, %v7788
    %v8573 = vpack.c.b16 %v7796, %v7789
    %v8574 = vpack.c.b16 %v7797, %v7790
    %v8575 = vpack.c.b16 %v7798, %v7791
    %v8576 = vpack.c.b16 %v7799, %v7792
    %v8577 = vpack.c.b16 %v7800, %v7793
    %v8578 = vpack.c.b16 %v7801, %v7794
    %v8579 = vpack.c.b16 %v7809, %v7802
    %v8580 = vpack.c.b16 %v7810, %v7803
    %v8581 = vpack.c.b16 %v7811, %v7804
    %v8582 = vpack.c.b16 %v7812, %v7805
    %v8583 = vpack.c.b16 %v7813, %v7806
    %v8584 = vpack.c.b16 %v7814, %v7807
    %v8585 = vpack.c.b16 %v7815, %v7808
    %v8586 = vpack.c.b16 %v7823, %v7816
    %v8587 = vpack.c.b16 %v7824, %v7817
    %v8588 = vpack.c.b16 %v7825, %v7818
    %v8589 = vpack.c.b16 %v7826, %v7819
    %v8590 = vpack.c.b16 %v7827, %v7820
    %v8591 = vpack.c.b16 %v7828, %v7821
    %v8592 = vpack.c.b16 %v7829, %v7822
    %v8593 = vpack.c.b16 %v7837, %v7830
    %v8594 = vpack.c.b16 %v7838, %v7831
    %v8595 = vpack.c.b16 %v7839, %v7832
    %v8596 = vpack.c.b16 %v7840, %v7833
    %v8597 = vpack.c.b16 %v7841, %v7834
    %v8598 = vpack.c.b16 %v7842, %v7835
    %v8599 = vpack.c.b16 %v7843, %v7836
    %v8600 = vpack.c.b16 %v7851, %v7844
    %v8601 = vpack.c.b16 %v7852, %v7845
    %v8602 = vpack.c.b16 %v7853, %v7846
    %v8603 = vpack.c.b16 %v7854, %v7847
    %v8604 = vpack.c.b16 %v7855, %v7848
    %v8605 = vpack.c.b16 %v7856, %v7849
    %v8606 = vpack.c.b16 %v7857, %v7850
    %v8607 = vpack.c.b16 %v7865, %v7858
    %v8608 = vpack.c.b16 %v7866, %v7859
    %v8609 = vpack.c.b16 %v7867, %v7860
    %v8610 = vpack.c.b16 %v7868, %v7861
    %v8611 = vpack.c.b16 %v7869, %v7862
    %v8612 = vpack.c.b16 %v7870, %v7863
    %v8613 = vpack.c.b16 %v7871, %v7864
    %v8614 = vpack.c.b16 %v7879, %v7872
    %v8615 = vpack.c.b16 %v7880, %v7873
    %v8616 = vpack.c.b16 %v7881, %v7874
    %v8617 = vpack.c.b16 %v7882, %v7875
    %v8618 = vpack.c.b16 %v7883, %v7876
    %v8619 = vpack.c.b16 %v7884, %v7877
    %v8620 = vpack.c.b16 %v7885, %v7878
    %v8621 = vpack.c.b16 %v7893, %v7886
    %v8622 = vpack.c.b16 %v7894, %v7887
    %v8623 = vpack.c.b16 %v7895, %v7888
    %v8624 = vpack.c.b16 %v7896, %v7889
    %v8625 = vpack.c.b16 %v7897, %v7890
    %v8626 = vpack.c.b16 %v7898, %v7891
    %v8627 = vpack.c.b16 %v7899, %v7892
    %v8628 = vpack.c.b16 %v7907, %v7900
    %v8629 = vpack.c.b16 %v7908, %v7901
    %v8630 = vpack.c.b16 %v7909, %v7902
    %v8631 = vpack.c.b16 %v7910, %v7903
    %v8632 = vpack.c.b16 %v7911, %v7904
    %v8633 = vpack.c.b16 %v7912, %v7905
    %v8634 = vpack.c.b16 %v7913, %v7906
    %v8635 = vpack.c.b16 %v7921, %v7914
    %v8636 = vpack.c.b16 %v7922, %v7915
    %v8637 = vpack.c.b16 %v7923, %v7916
    %v8638 = vpack.c.b16 %v7924, %v7917
    %v8639 = vpack.c.b16 %v7925, %v7918
    %v8640 = vpack.c.b16 %v7926, %v7919
    %v8641 = vpack.c.b16 %v7927, %v7920
    %v8642 = vpack.c.b16 %v7935, %v7928
    %v8643 = vpack.c.b16 %v7936, %v7929
    %v8644 = vpack.c.b16 %v7937, %v7930
    %v8645 = vpack.c.b16 %v7938, %v7931
    %v8646 = vpack.c.b16 %v7939, %v7932
    %v8647 = vpack.c.b16 %v7940, %v7933
    %v8648 = vpack.c.b16 %v7941, %v7934
    %v8649 = vpack.c.b16 %v7949, %v7942
    %v8650 = vpack.c.b16 %v7950, %v7943
    %v8651 = vpack.c.b16 %v7951, %v7944
    %v8652 = vpack.c.b16 %v7952, %v7945
    %v8653 = vpack.c.b16 %v7953, %v7946
    %v8654 = vpack.c.b16 %v7954, %v7947
    %v8655 = vpack.c.b16 %v7955, %v7948
    %v8656 = vpack.c.b16 %v7963, %v7956
    %v8657 = vpack.c.b16 %v7964, %v7957
    %v8658 = vpack.c.b16 %v7965, %v7958
    %v8659 = vpack.c.b16 %v7966, %v7959
    %v8660 = vpack.c.b16 %v7967, %v7960
    %v8661 = vpack.c.b16 %v7968, %v7961
    %v8662 = vpack.c.b16 %v7969, %v7962
    %v8663 = vpack.c.b16 %v7977, %v7970
    %v8664 = vpack.c.b16 %v7978, %v7971
    %v8665 = vpack.c.b16 %v7979, %v7972
    %v8666 = vpack.c.b16 %v7980, %v7973
    %v8667 = vpack.c.b16 %v7981, %v7974
    %v8668 = vpack.c.b16 %v7982, %v7975
    %v8669 = vpack.c.b16 %v7983, %v7976
    %v8670 = vpack.c.b16 %v7991, %v7984
    %v8671 = vpack.c.b16 %v7992, %v7985
    %v8672 = vpack.c.b16 %v7993, %v7986
    %v8673 = vpack.c.b16 %v7994, %v7987
    %v8674 = vpack.c.b16 %v7995, %v7988
    %v8675 = vpack.c.b16 %v7996, %v7989
    %v8676 = vpack.c.b16 %v7997, %v7990
    %v8677 = vpack.c.b16 %v8005, %v7998
    %v8678 = vpack.c.b16 %v8006, %v7999
    %v8679 = vpack.c.b16 %v8007, %v8000
    %v8680 = vpack.c.b16 %v8008, %v8001
    %v8681 = vpack.c.b16 %v8009, %v8002
    %v8682 = vpack.c.b16 %v8010, %v8003
    %v8683 = vpack.c.b16 %v8011, %v8004
    %v8684 = vpack.c.b16 %v8019, %v8012
    %v8685 = vpack.c.b16 %v8020, %v8013
    %v8686 = vpack.c.b16 %v8021, %v8014
    %v8687 = vpack.c.b16 %v8022, %v8015
    %v8688 = vpack.c.b16 %v8023, %v8016
    %v8689 = vpack.c.b16 %v8024, %v8017
    %v8690 = vpack.c.b16 %v8025, %v8018
    %v8691 = vpack.c.b16 %v8033, %v8026
    %v8692 = vpack.c.b16 %v8034, %v8027
    %v8693 = vpack.c.b16 %v8035, %v8028
    %v8694 = vpack.c.b16 %v8036, %v8029
    %v8695 = vpack.c.b16 %v8037, %v8030
    %v8696 = vpack.c.b16 %v8038, %v8031
    %v8697 = vpack.c.b16 %v8039, %v8032
    %v8698 = vpack.c.b16 %v8047, %v8040
    %v8699 = vpack.c.b16 %v8048, %v8041
    %v8700 = vpack.c.b16 %v8049, %v8042
    %v8701 = vpack.c.b16 %v8050, %v8043
    %v8702 = vpack.c.b16 %v8051, %v8044
    %v8703 = vpack.c.b16 %v8052, %v8045
    %v8704 = vpack.c.b16 %v8053, %v8046
    %v8705 = vpack.c.b16 %v8061, %v8054
    %v8706 = vpack.c.b16 %v8062, %v8055
    %v8707 = vpack.c.b16 %v8063, %v8056
    %v8708 = vpack.c.b16 %v8064, %v8057
    %v8709 = vpack.c.b16 %v8065, %v8058
    %v8710 = vpack.c.b16 %v8066, %v8059
    %v8711 = vpack.c.b16 %v8067, %v8060
    %v8712 = vpack.c.b16 %v8075, %v8068
    %v8713 = vpack.c.b16 %v8076, %v8069
    %v8714 = vpack.c.b16 %v8077, %v8070
    %v8715 = vpack.c.b16 %v8078, %v8071
    %v8716 = vpack.c.b16 %v8079, %v8072
    %v8717 = vpack.c.b16 %v8080, %v8073
    %v8718 = vpack.c.b16 %v8081, %v8074
    %v8719 = vpack.c.b16 %v8089, %v8082
    %v8720 = vpack.c.b16 %v8090, %v8083
    %v8721 = vpack.c.b16 %v8091, %v8084
    %v8722 = vpack.c.b16 %v8092, %v8085
    %v8723 = vpack.c.b16 %v8093, %v8086
    %v8724 = vpack.c.b16 %v8094, %v8087
    %v8725 = vpack.c.b16 %v8095, %v8088
    %v8726 = vpack.c.b16 %v8103, %v8096
    %v8727 = vpack.c.b16 %v8104, %v8097
    %v8728 = vpack.c.b16 %v8105, %v8098
    %v8729 = vpack.c.b16 %v8106, %v8099
    %v8730 = vpack.c.b16 %v8107, %v8100
    %v8731 = vpack.c.b16 %v8108, %v8101
    %v8732 = vpack.c.b16 %v8109, %v8102
    %v8733 = vpack.c.b16 %v8117, %v8110
    %v8734 = vpack.c.b16 %v8118, %v8111
    %v8735 = vpack.c.b16 %v8119, %v8112
    %v8736 = vpack.c.b16 %v8120, %v8113
    %v8737 = vpack.c.b16 %v8121, %v8114
    %v8738 = vpack.c.b16 %v8122, %v8115
    %v8739 = vpack.c.b16 %v8123, %v8116
    %v8740 = vpack.c.b16 %v8131, %v8124
    %v8741 = vpack.c.b16 %v8132, %v8125
    %v8742 = vpack.c.b16 %v8133, %v8126
    %v8743 = vpack.c.b16 %v8134, %v8127
    %v8744 = vpack.c.b16 %v8135, %v8128
    %v8745 = vpack.c.b16 %v8136, %v8129
    %v8746 = vpack.c.b16 %v8137, %v8130
    %v8747 = vpack.c.b16 %v8145, %v8138
    %v8748 = vpack.c.b16 %v8146, %v8139
    %v8749 = vpack.c.b16 %v8147, %v8140
    %v8750 = vpack.c.b16 %v8148, %v8141
    %v8751 = vpack.c.b16 %v8149, %v8142
    %v8752 = vpack.c.b16 %v8150, %v8143
    %v8753 = vpack.c.b16 %v8151, %v8144
    %v8754 = vpack.c.b16 %v8159, %v8152
    %v8755 = vpack.c.b16 %v8160, %v8153
    %v8756 = vpack.c.b16 %v8161, %v8154
    %v8757 = vpack.c.b16 %v8162, %v8155
    %v8758 = vpack.c.b16 %v8163, %v8156
    %v8759 = vpack.c.b16 %v8164, %v8157
    %v8760 = vpack.c.b16 %v8165, %v8158
    %v8761 = vpack.c.b16 %v8173, %v8166
    %v8762 = vpack.c.b16 %v8174, %v8167
    %v8763 = vpack.c.b16 %v8175, %v8168
    %v8764 = vpack.c.b16 %v8176, %v8169
    %v8765 = vpack.c.b16 %v8177, %v8170
    %v8766 = vpack.c.b16 %v8178, %v8171
    %v8767 = vpack.c.b16 %v8179, %v8172
    %v8768 = vpack.c.b16 %v8187, %v8180
    %v8769 = vpack.c.b16 %v8188, %v8181
    %v8770 = vpack.c.b16 %v8189, %v8182
    %v8771 = vpack.c.b16 %v8190, %v8183
    %v8772 = vpack.c.b16 %v8191, %v8184
    %v8773 = vpack.c.b16 %v8192, %v8185
    %v8774 = vpack.c.b16 %v8193, %v8186
    %v8775 = vpack.c.b16 %v8201, %v8194
    %v8776 = vpack.c.b16 %v8202, %v8195
    %v8777 = vpack.c.b16 %v8203, %v8196
    %v8778 = vpack.c.b16 %v8204, %v8197
    %v8779 = vpack.c.b16 %v8205, %v8198
    %v8780 = vpack.c.b16 %v8206, %v8199
    %v8781 = vpack.c.b16 %v8207, %v8200
    %v8782 = vpack.c.b16 %v8215, %v8208
    %v8783 = vpack.c.b16 %v8216, %v8209
    %v8784 = vpack.c.b16 %v8217, %v8210
    %v8785 = vpack.c.b16 %v8218, %v8211
    %v8786 = vpack.c.b16 %v8219, %v8212
    %v8787 = vpack.c.b16 %v8220, %v8213
    %v8788 = vpack.c.b16 %v8221, %v8214
    %v8789 = vpack.c.b16 %v8229, %v8222
    %v8790 = vpack.c.b16 %v8230, %v8223
    %v8791 = vpack.c.b16 %v8231, %v8224
    %v8792 = vpack.c.b16 %v8232, %v8225
    %v8793 = vpack.c.b16 %v8233, %v8226
    %v8794 = vpack.c.b16 %v8234, %v8227
    %v8795 = vpack.c.b16 %v8235, %v8228
    %v8796 = vpack.c.b16 %v8243, %v8236
    %v8797 = vpack.c.b16 %v8244, %v8237
    %v8798 = vpack.c.b16 %v8245, %v8238
    %v8799 = vpack.c.b16 %v8246, %v8239
    %v8800 = vpack.c.b16 %v8247, %v8240
    %v8801 = vpack.c.b16 %v8248, %v8241
    %v8802 = vpack.c.b16 %v8249, %v8242
    %v8803 = vpack.c.b16 %v8257, %v8250
    %v8804 = vpack.c.b16 %v8258, %v8251
    %v8805 = vpack.c.b16 %v8259, %v8252
    %v8806 = vpack.c.b16 %v8260, %v8253
    %v8807 = vpack.c.b16 %v8261, %v8254
    %v8808 = vpack.c.b16 %v8262, %v8255
    %v8809 = vpack.c.b16 %v8263, %v8256
    %v8810 = vpack.c.b16 %v8271, %v8264
    %v8811 = vpack.c.b16 %v8272, %v8265
    %v8812 = vpack.c.b16 %v8273, %v8266
    %v8813 = vpack.c.b16 %v8274, %v8267
    %v8814 = vpack.c.b16 %v8275, %v8268
    %v8815 = vpack.c.b16 %v8276, %v8269
    %v8816 = vpack.c.b16 %v8277, %v8270
    %v8817 = vpack.c.b16 %v8285, %v8278
    %v8818 = vpack.c.b16 %v8286, %v8279
    %v8819 = vpack.c.b16 %v8287, %v8280
    %v8820 = vpack.c.b16 %v8288, %v8281
    %v8821 = vpack.c.b16 %v8289, %v8282
    %v8822 = vpack.c.b16 %v8290, %v8283
    %v8823 = vpack.c.b16 %v8291, %v8284
    %v8824 = vpack.c.b16 %v8299, %v8292
    %v8825 = vpack.c.b16 %v8300, %v8293
    %v8826 = vpack.c.b16 %v8301, %v8294
    %v8827 = vpack.c.b16 %v8302, %v8295
    %v8828 = vpack.c.b16 %v8303, %v8296
    %v8829 = vpack.c.b16 %v8304, %v8297
    %v8830 = vpack.c.b16 %v8305, %v8298
    %v8831 = vpack.c.b16 %v8313, %v8306
    %v8832 = vpack.c.b16 %v8314, %v8307
    %v8833 = vpack.c.b16 %v8315, %v8308
    %v8834 = vpack.c.b16 %v8316, %v8309
    %v8835 = vpack.c.b16 %v8317, %v8310
    %v8836 = vpack.c.b16 %v8318, %v8311
    %v8837 = vpack.c.b16 %v8319, %v8312
    %v8838 = vpack.c.b16 %v8327, %v8320
    %v8839 = vpack.c.b16 %v8328, %v8321
    %v8840 = vpack.c.b16 %v8329, %v8322
    %v8841 = vpack.c.b16 %v8330, %v8323
    %v8842 = vpack.c.b16 %v8331, %v8324
    %v8843 = vpack.c.b16 %v8332, %v8325
    %v8844 = vpack.c.b16 %v8333, %v8326
    %v8845 = vpack.c.b16 %v8341, %v8334
    %v8846 = vpack.c.b16 %v8342, %v8335
    %v8847 = vpack.c.b16 %v8343, %v8336
    %v8848 = vpack.c.b16 %v8344, %v8337
    %v8849 = vpack.c.b16 %v8345, %v8338
    %v8850 = vpack.c.b16 %v8346, %v8339
    %v8851 = vpack.c.b16 %v8347, %v8340
    %9356 = vmatprep.subr.bf16.mxu0 %v8398
    %9357 = vmatpush1.bf16.msra.mxu0 %v8397
    %9358 = vmatprep.subr.bf16.mxu0 %v8391
    %9359 = vmatpush1.bf16.msra.mxu0 %v8390
    %9360 = vmatprep.subr.bf16.mxu0 %v8384
    %9361 = vmatpush1.bf16.msra.mxu0 %v8383
    %9362 = vmatprep.subr.bf16.mxu0 %v8377
    %9363 = vmatpush1.bf16.msra.mxu0 %v8376
    %9364 = vmatprep.subr.bf16.mxu0 %v8370
    %9365 = vmatpush1.bf16.msra.mxu0 %v8369
    %9366 = vmatprep.subr.bf16.mxu0 %v8363
    %9367 = vmatpush1.bf16.msra.mxu0 %v8362
    %9368 = vmatprep.subr.bf16.mxu0 %v8356
    %9369 = vmatpush1.bf16.msra.mxu0 %v8355
    %9370 = vmatprep.subr.bf16.mxu0 %v8349
    %9371 = vmatpush1.bf16.msra.mxu0 %v8348
    %9372 = vmatprep.subr.bf16.mxu0 %v8454
    %9373 = vmatpush2.bf16.msra.mxu0 %v8453
    %9374 = vmatprep.subr.bf16.mxu0 %v8447
    %9375 = vmatpush2.bf16.msra.mxu0 %v8446
    %9376 = vmatprep.subr.bf16.mxu0 %v8440
    %9377 = vmatpush2.bf16.msra.mxu0 %v8439
    %9378 = vmatprep.subr.bf16.mxu0 %v8433
    %9379 = vmatpush2.bf16.msra.mxu0 %v8432
    %9380 = vmatprep.subr.bf16.mxu0 %v8426
    %9381 = vmatpush2.bf16.msra.mxu0 %v8425
    %9382 = vmatprep.subr.bf16.mxu0 %v8419
    %9383 = vmatpush2.bf16.msra.mxu0 %v8418
    %9384 = vmatprep.subr.bf16.mxu0 %v8412
    %9385 = vmatpush2.bf16.msra.mxu0 %v8411
    %9386 = vmatprep.subr.bf16.mxu0 %v8405
    %9387 = vmatpush2.bf16.msra.mxu0 %v8404
    %9388 = vmatprep.mubr.bf16.mxu0 %v6180
    %9389 = vmatmul.mubr.bf16.gmra.mxu0 %v6179
    %v9390 = vpop.f32.mrf.mxu0
    %v9391 = vadd.f32 0.0, %v9390
    %v9392 = vpop.f32.mrf.mxu0
    %v9393 = vadd.f32 0.0, %v9392
    %v9394 = vpop.f32.mrf.mxu0
    %v9395 = vpop.f32.mrf.mxu0
    %9396 = vdwg.mxu0
    %9397 = vmatprep.subr.bf16.mxu0 %v8510
    %9398 = vmatpush1.bf16.msra.mxu0 %v8509
    %9399 = vmatprep.subr.bf16.mxu0 %v8503
    %9400 = vmatpush1.bf16.msra.mxu0 %v8502
    %9401 = vmatprep.subr.bf16.mxu0 %v8496
    %9402 = vmatpush1.bf16.msra.mxu0 %v8495
    %9403 = vmatprep.subr.bf16.mxu0 %v8489
    %9404 = vmatpush1.bf16.msra.mxu0 %v8488
    %9405 = vmatprep.subr.bf16.mxu0 %v8482
    %9406 = vmatpush1.bf16.msra.mxu0 %v8481
    %9407 = vmatprep.subr.bf16.mxu0 %v8475
    %9408 = vmatpush1.bf16.msra.mxu0 %v8474
    %9409 = vmatprep.subr.bf16.mxu0 %v8468
    %9410 = vmatpush1.bf16.msra.mxu0 %v8467
    %9411 = vmatprep.subr.bf16.mxu0 %v8461
    %9412 = vmatpush1.bf16.msra.mxu0 %v8460
    %9413 = vmatprep.subr.bf16.mxu0 %v8566
    %9414 = vmatpush2.bf16.msra.mxu0 %v8565
    %9415 = vmatprep.subr.bf16.mxu0 %v8559
    %9416 = vmatpush2.bf16.msra.mxu0 %v8558
    %9417 = vmatprep.subr.bf16.mxu0 %v8552
    %9418 = vmatpush2.bf16.msra.mxu0 %v8551
    %9419 = vmatprep.subr.bf16.mxu0 %v8545
    %9420 = vmatpush2.bf16.msra.mxu0 %v8544
    %9421 = vmatprep.subr.bf16.mxu0 %v8538
    %9422 = vmatpush2.bf16.msra.mxu0 %v8537
    %9423 = vmatprep.subr.bf16.mxu0 %v8531
    %9424 = vmatpush2.bf16.msra.mxu0 %v8530
    %9425 = vmatprep.subr.bf16.mxu0 %v8524
    %9426 = vmatpush2.bf16.msra.mxu0 %v8523
    %9427 = vmatprep.subr.bf16.mxu0 %v8517
    %9428 = vmatpush2.bf16.msra.mxu0 %v8516
    %9429 = vmatprep.mubr.bf16.mxu0 %v6182
    %9430 = vmatmul.mubr.bf16.gmra.mxu0 %v6181
    %v9431 = vpop.f32.mrf.mxu0
    %v9432 = vadd.f32 %v9391, %v9431
    %v9433 = vpop.f32.mrf.mxu0
    %v9434 = vadd.f32 %v9393, %v9433
    %v9435 = vpop.f32.mrf.mxu0
    %v9436 = vpop.f32.mrf.mxu0
    %9437 = vdwg.mxu0
    %9438 = vmatprep.subr.bf16.mxu0 %v8622
    %9439 = vmatpush1.bf16.msra.mxu0 %v8621
    %9440 = vmatprep.subr.bf16.mxu0 %v8615
    %9441 = vmatpush1.bf16.msra.mxu0 %v8614
    %9442 = vmatprep.subr.bf16.mxu0 %v8608
    %9443 = vmatpush1.bf16.msra.mxu0 %v8607
    %9444 = vmatprep.subr.bf16.mxu0 %v8601
    %9445 = vmatpush1.bf16.msra.mxu0 %v8600
    %9446 = vmatprep.subr.bf16.mxu0 %v8594
    %9447 = vmatpush1.bf16.msra.mxu0 %v8593
    %9448 = vmatprep.subr.bf16.mxu0 %v8587
    %9449 = vmatpush1.bf16.msra.mxu0 %v8586
    %9450 = vmatprep.subr.bf16.mxu0 %v8580
    %9451 = vmatpush1.bf16.msra.mxu0 %v8579
    %9452 = vmatprep.subr.bf16.mxu0 %v8573
    %9453 = vmatpush1.bf16.msra.mxu0 %v8572
    %9454 = vmatprep.subr.bf16.mxu0 %v8678
    %9455 = vmatpush2.bf16.msra.mxu0 %v8677
    %9456 = vmatprep.subr.bf16.mxu0 %v8671
    %9457 = vmatpush2.bf16.msra.mxu0 %v8670
    %9458 = vmatprep.subr.bf16.mxu0 %v8664
    %9459 = vmatpush2.bf16.msra.mxu0 %v8663
    %9460 = vmatprep.subr.bf16.mxu0 %v8657
    %9461 = vmatpush2.bf16.msra.mxu0 %v8656
    %9462 = vmatprep.subr.bf16.mxu0 %v8650
    %9463 = vmatpush2.bf16.msra.mxu0 %v8649
    %9464 = vmatprep.subr.bf16.mxu0 %v8643
    %9465 = vmatpush2.bf16.msra.mxu0 %v8642
    %9466 = vmatprep.subr.bf16.mxu0 %v8636
    %9467 = vmatpush2.bf16.msra.mxu0 %v8635
    %9468 = vmatprep.subr.bf16.mxu0 %v8629
    %9469 = vmatpush2.bf16.msra.mxu0 %v8628
    %9470 = vmatprep.mubr.bf16.mxu0 %v6184
    %9471 = vmatmul.mubr.bf16.gmra.mxu0 %v6183
    %v9472 = vpop.f32.mrf.mxu0
    %v9473 = vadd.f32 %v9432, %v9472
    %v9474 = vpop.f32.mrf.mxu0
    %v9475 = vadd.f32 %v9434, %v9474
    %v9476 = vpop.f32.mrf.mxu0
    %v9477 = vpop.f32.mrf.mxu0
    %9478 = vdwg.mxu0
    %9479 = vmatprep.subr.bf16.mxu0 %v8734
    %9480 = vmatpush1.bf16.msra.mxu0 %v8733
    %9481 = vmatprep.subr.bf16.mxu0 %v8727
    %9482 = vmatpush1.bf16.msra.mxu0 %v8726
    %9483 = vmatprep.subr.bf16.mxu0 %v8720
    %9484 = vmatpush1.bf16.msra.mxu0 %v8719
    %9485 = vmatprep.subr.bf16.mxu0 %v8713
    %9486 = vmatpush1.bf16.msra.mxu0 %v8712
    %9487 = vmatprep.subr.bf16.mxu0 %v8706
    %9488 = vmatpush1.bf16.msra.mxu0 %v8705
    %9489 = vmatprep.subr.bf16.mxu0 %v8699
    %9490 = vmatpush1.bf16.msra.mxu0 %v8698
    %9491 = vmatprep.subr.bf16.mxu0 %v8692
    %9492 = vmatpush1.bf16.msra.mxu0 %v8691
    %9493 = vmatprep.subr.bf16.mxu0 %v8685
    %9494 = vmatpush1.bf16.msra.mxu0 %v8684
    %9495 = vmatprep.subr.bf16.mxu0 %v8790
    %9496 = vmatpush2.bf16.msra.mxu0 %v8789
    %9497 = vmatprep.subr.bf16.mxu0 %v8783
    %9498 = vmatpush2.bf16.msra.mxu0 %v8782
    %9499 = vmatprep.subr.bf16.mxu0 %v8776
    %9500 = vmatpush2.bf16.msra.mxu0 %v8775
    %9501 = vmatprep.subr.bf16.mxu0 %v8769
    %9502 = vmatpush2.bf16.msra.mxu0 %v8768
    %9503 = vmatprep.subr.bf16.mxu0 %v8762
    %9504 = vmatpush2.bf16.msra.mxu0 %v8761
    %9505 = vmatprep.subr.bf16.mxu0 %v8755
    %9506 = vmatpush2.bf16.msra.mxu0 %v8754
    %9507 = vmatprep.subr.bf16.mxu0 %v8748
    %9508 = vmatpush2.bf16.msra.mxu0 %v8747
    %9509 = vmatprep.subr.bf16.mxu0 %v8741
    %9510 = vmatpush2.bf16.msra.mxu0 %v8740
    %9511 = vmatprep.mubr.bf16.mxu0 %v6186
    %9512 = vmatmul.mubr.bf16.gmra.mxu0 %v6185
    %v9513 = vpop.f32.mrf.mxu0
    %v9514 = vadd.f32 %v9473, %v9513
    %v9515 = vpop.f32.mrf.mxu0
    %v9516 = vadd.f32 %v9475, %v9515
    %v9517 = vpop.f32.mrf.mxu0
    %v9518 = vpop.f32.mrf.mxu0
    %9519 = vdwg.mxu0
    %9520 = vmatprep.subr.bf16.mxu0 %v8846
    %9521 = vmatpush1.bf16.msra.mxu0 %v8845
    %9522 = vmatprep.subr.bf16.mxu0 %v8839
    %9523 = vmatpush1.bf16.msra.mxu0 %v8838
    %9524 = vmatprep.subr.bf16.mxu0 %v8832
    %9525 = vmatpush1.bf16.msra.mxu0 %v8831
    %9526 = vmatprep.subr.bf16.mxu0 %v8825
    %9527 = vmatpush1.bf16.msra.mxu0 %v8824
    %9528 = vmatprep.subr.bf16.mxu0 %v8818
    %9529 = vmatpush1.bf16.msra.mxu0 %v8817
    %9530 = vmatprep.subr.bf16.mxu0 %v8811
    %9531 = vmatpush1.bf16.msra.mxu0 %v8810
    %9532 = vmatprep.subr.bf16.mxu0 %v8804
    %9533 = vmatpush1.bf16.msra.mxu0 %v8803
    %9534 = vmatprep.subr.bf16.mxu0 %v8797
    %9535 = vmatpush1.bf16.msra.mxu0 %v8796
    %9536 = vmatprep.subr.bf16.mxu0 0
    %9537 = vmatpush2.bf16.msra.mxu0 0
    %9538 = vmatprep.subr.bf16.mxu0 0
    %9539 = vmatpush2.bf16.msra.mxu0 0
    %9540 = vmatprep.subr.bf16.mxu0 0
    %9541 = vmatpush2.bf16.msra.mxu0 0
    %9542 = vmatprep.subr.bf16.mxu0 0
    %9543 = vmatpush2.bf16.msra.mxu0 0
    %9544 = vmatprep.subr.bf16.mxu0 0
    %9545 = vmatpush2.bf16.msra.mxu0 0
    %9546 = vmatprep.subr.bf16.mxu0 0
    %9547 = vmatpush2.bf16.msra.mxu0 0
    %9548 = vmatprep.subr.bf16.mxu0 0
    %9549 = vmatpush2.bf16.msra.mxu0 0
    %9550 = vmatprep.subr.bf16.mxu0 0
    %9551 = vmatpush2.bf16.msra.mxu0 0
    %9552 = vmatprep.mubr.bf16.mxu0 0
    %9553 = vmatmul.mubr.bf16.gmra.mxu0 %v6187
    %v9554 = vpop.f32.mrf.mxu0
    %v9555 = vadd.f32 %v9514, %v9554
    %v9556 = vpop.f32.mrf.mxu0
    %v9557 = vadd.f32 %v9516, %v9556
    %v9558 = vpop.f32.mrf.mxu0
    %v9559 = vpop.f32.mrf.mxu0
    %9560 = vdwg.mxu0
    %9561 = vmatprep.subr.bf16.mxu0 %v8400
    %9562 = vmatpush1.bf16.msra.mxu0 %v8399
    %9563 = vmatprep.subr.bf16.mxu0 %v8393
    %9564 = vmatpush1.bf16.msra.mxu0 %v8392
    %9565 = vmatprep.subr.bf16.mxu0 %v8386
    %9566 = vmatpush1.bf16.msra.mxu0 %v8385
    %9567 = vmatprep.subr.bf16.mxu0 %v8379
    %9568 = vmatpush1.bf16.msra.mxu0 %v8378
    %9569 = vmatprep.subr.bf16.mxu0 %v8372
    %9570 = vmatpush1.bf16.msra.mxu0 %v8371
    %9571 = vmatprep.subr.bf16.mxu0 %v8365
    %9572 = vmatpush1.bf16.msra.mxu0 %v8364
    %9573 = vmatprep.subr.bf16.mxu0 %v8358
    %9574 = vmatpush1.bf16.msra.mxu0 %v8357
    %9575 = vmatprep.subr.bf16.mxu0 %v8351
    %9576 = vmatpush1.bf16.msra.mxu0 %v8350
    %9577 = vmatprep.subr.bf16.mxu0 %v8456
    %9578 = vmatpush2.bf16.msra.mxu0 %v8455
    %9579 = vmatprep.subr.bf16.mxu0 %v8449
    %9580 = vmatpush2.bf16.msra.mxu0 %v8448
    %9581 = vmatprep.subr.bf16.mxu0 %v8442
    %9582 = vmatpush2.bf16.msra.mxu0 %v8441
    %9583 = vmatprep.subr.bf16.mxu0 %v8435
    %9584 = vmatpush2.bf16.msra.mxu0 %v8434
    %9585 = vmatprep.subr.bf16.mxu0 %v8428
    %9586 = vmatpush2.bf16.msra.mxu0 %v8427
    %9587 = vmatprep.subr.bf16.mxu0 %v8421
    %9588 = vmatpush2.bf16.msra.mxu0 %v8420
    %9589 = vmatprep.subr.bf16.mxu0 %v8414
    %9590 = vmatpush2.bf16.msra.mxu0 %v8413
    %9591 = vmatprep.subr.bf16.mxu0 %v8407
    %9592 = vmatpush2.bf16.msra.mxu0 %v8406
    %9593 = vmatprep.mubr.bf16.mxu0 %v6180
    %9594 = vmatmul.mubr.bf16.gmra.mxu0 %v6179
    %v9595 = vpop.f32.mrf.mxu0
    %v9596 = vadd.f32 0.0, %v9595
    %v9597 = vpop.f32.mrf.mxu0
    %v9598 = vadd.f32 0.0, %v9597
    %v9599 = vpop.f32.mrf.mxu0
    %v9600 = vpop.f32.mrf.mxu0
    %9601 = vdwg.mxu0
    %9602 = vmatprep.subr.bf16.mxu0 %v8512
    %9603 = vmatpush1.bf16.msra.mxu0 %v8511
    %9604 = vmatprep.subr.bf16.mxu0 %v8505
    %9605 = vmatpush1.bf16.msra.mxu0 %v8504
    %9606 = vmatprep.subr.bf16.mxu0 %v8498
    %9607 = vmatpush1.bf16.msra.mxu0 %v8497
    %9608 = vmatprep.subr.bf16.mxu0 %v8491
    %9609 = vmatpush1.bf16.msra.mxu0 %v8490
    %9610 = vmatprep.subr.bf16.mxu0 %v8484
    %9611 = vmatpush1.bf16.msra.mxu0 %v8483
    %9612 = vmatprep.subr.bf16.mxu0 %v8477
    %9613 = vmatpush1.bf16.msra.mxu0 %v8476
    %9614 = vmatprep.subr.bf16.mxu0 %v8470
    %9615 = vmatpush1.bf16.msra.mxu0 %v8469
    %9616 = vmatprep.subr.bf16.mxu0 %v8463
    %9617 = vmatpush1.bf16.msra.mxu0 %v8462
    %9618 = vmatprep.subr.bf16.mxu0 %v8568
    %9619 = vmatpush2.bf16.msra.mxu0 %v8567
    %9620 = vmatprep.subr.bf16.mxu0 %v8561
    %9621 = vmatpush2.bf16.msra.mxu0 %v8560
    %9622 = vmatprep.subr.bf16.mxu0 %v8554
    %9623 = vmatpush2.bf16.msra.mxu0 %v8553
    %9624 = vmatprep.subr.bf16.mxu0 %v8547
    %9625 = vmatpush2.bf16.msra.mxu0 %v8546
    %9626 = vmatprep.subr.bf16.mxu0 %v8540
    %9627 = vmatpush2.bf16.msra.mxu0 %v8539
    %9628 = vmatprep.subr.bf16.mxu0 %v8533
    %9629 = vmatpush2.bf16.msra.mxu0 %v8532
    %9630 = vmatprep.subr.bf16.mxu0 %v8526
    %9631 = vmatpush2.bf16.msra.mxu0 %v8525
    %9632 = vmatprep.subr.bf16.mxu0 %v8519
    %9633 = vmatpush2.bf16.msra.mxu0 %v8518
    %9634 = vmatprep.mubr.bf16.mxu0 %v6182
    %9635 = vmatmul.mubr.bf16.gmra.mxu0 %v6181
    %v9636 = vpop.f32.mrf.mxu0
    %v9637 = vadd.f32 %v9596, %v9636
    %v9638 = vpop.f32.mrf.mxu0
    %v9639 = vadd.f32 %v9598, %v9638
    %v9640 = vpop.f32.mrf.mxu0
    %v9641 = vpop.f32.mrf.mxu0
    %9642 = vdwg.mxu0
    %9643 = vmatprep.subr.bf16.mxu0 %v8624
    %9644 = vmatpush1.bf16.msra.mxu0 %v8623
    %9645 = vmatprep.subr.bf16.mxu0 %v8617
    %9646 = vmatpush1.bf16.msra.mxu0 %v8616
    %9647 = vmatprep.subr.bf16.mxu0 %v8610
    %9648 = vmatpush1.bf16.msra.mxu0 %v8609
    %9649 = vmatprep.subr.bf16.mxu0 %v8603
    %9650 = vmatpush1.bf16.msra.mxu0 %v8602
    %9651 = vmatprep.subr.bf16.mxu0 %v8596
    %9652 = vmatpush1.bf16.msra.mxu0 %v8595
    %9653 = vmatprep.subr.bf16.mxu0 %v8589
    %9654 = vmatpush1.bf16.msra.mxu0 %v8588
    %9655 = vmatprep.subr.bf16.mxu0 %v8582
    %9656 = vmatpush1.bf16.msra.mxu0 %v8581
    %9657 = vmatprep.subr.bf16.mxu0 %v8575
    %9658 = vmatpush1.bf16.msra.mxu0 %v8574
    %9659 = vmatprep.subr.bf16.mxu0 %v8680
    %9660 = vmatpush2.bf16.msra.mxu0 %v8679
    %9661 = vmatprep.subr.bf16.mxu0 %v8673
    %9662 = vmatpush2.bf16.msra.mxu0 %v8672
    %9663 = vmatprep.subr.bf16.mxu0 %v8666
    %9664 = vmatpush2.bf16.msra.mxu0 %v8665
    %9665 = vmatprep.subr.bf16.mxu0 %v8659
    %9666 = vmatpush2.bf16.msra.mxu0 %v8658
    %9667 = vmatprep.subr.bf16.mxu0 %v8652
    %9668 = vmatpush2.bf16.msra.mxu0 %v8651
    %9669 = vmatprep.subr.bf16.mxu0 %v8645
    %9670 = vmatpush2.bf16.msra.mxu0 %v8644
    %9671 = vmatprep.subr.bf16.mxu0 %v8638
    %9672 = vmatpush2.bf16.msra.mxu0 %v8637
    %9673 = vmatprep.subr.bf16.mxu0 %v8631
    %9674 = vmatpush2.bf16.msra.mxu0 %v8630
    %9675 = vmatprep.mubr.bf16.mxu0 %v6184
    %9676 = vmatmul.mubr.bf16.gmra.mxu0 %v6183
    %v9677 = vpop.f32.mrf.mxu0
    %v9678 = vadd.f32 %v9637, %v9677
    %v9679 = vpop.f32.mrf.mxu0
    %v9680 = vadd.f32 %v9639, %v9679
    %v9681 = vpop.f32.mrf.mxu0
    %v9682 = vpop.f32.mrf.mxu0
    %9683 = vdwg.mxu0
    %9684 = vmatprep.subr.bf16.mxu0 %v8736
    %9685 = vmatpush1.bf16.msra.mxu0 %v8735
    %9686 = vmatprep.subr.bf16.mxu0 %v8729
    %9687 = vmatpush1.bf16.msra.mxu0 %v8728
    %9688 = vmatprep.subr.bf16.mxu0 %v8722
    %9689 = vmatpush1.bf16.msra.mxu0 %v8721
    %9690 = vmatprep.subr.bf16.mxu0 %v8715
    %9691 = vmatpush1.bf16.msra.mxu0 %v8714
    %9692 = vmatprep.subr.bf16.mxu0 %v8708
    %9693 = vmatpush1.bf16.msra.mxu0 %v8707
    %9694 = vmatprep.subr.bf16.mxu0 %v8701
    %9695 = vmatpush1.bf16.msra.mxu0 %v8700
    %9696 = vmatprep.subr.bf16.mxu0 %v8694
    %9697 = vmatpush1.bf16.msra.mxu0 %v8693
    %9698 = vmatprep.subr.bf16.mxu0 %v8687
    %9699 = vmatpush1.bf16.msra.mxu0 %v8686
    %9700 = vmatprep.subr.bf16.mxu0 %v8792
    %9701 = vmatpush2.bf16.msra.mxu0 %v8791
    %9702 = vmatprep.subr.bf16.mxu0 %v8785
    %9703 = vmatpush2.bf16.msra.mxu0 %v8784
    %9704 = vmatprep.subr.bf16.mxu0 %v8778
    %9705 = vmatpush2.bf16.msra.mxu0 %v8777
    %9706 = vmatprep.subr.bf16.mxu0 %v8771
    %9707 = vmatpush2.bf16.msra.mxu0 %v8770
    %9708 = vmatprep.subr.bf16.mxu0 %v8764
    %9709 = vmatpush2.bf16.msra.mxu0 %v8763
    %9710 = vmatprep.subr.bf16.mxu0 %v8757
    %9711 = vmatpush2.bf16.msra.mxu0 %v8756
    %9712 = vmatprep.subr.bf16.mxu0 %v8750
    %9713 = vmatpush2.bf16.msra.mxu0 %v8749
    %9714 = vmatprep.subr.bf16.mxu0 %v8743
    %9715 = vmatpush2.bf16.msra.mxu0 %v8742
    %9716 = vmatprep.mubr.bf16.mxu0 %v6186
    %9717 = vmatmul.mubr.bf16.gmra.mxu0 %v6185
    %v9718 = vpop.f32.mrf.mxu0
    %v9719 = vadd.f32 %v9678, %v9718
    %v9720 = vpop.f32.mrf.mxu0
    %v9721 = vadd.f32 %v9680, %v9720
    %v9722 = vpop.f32.mrf.mxu0
    %v9723 = vpop.f32.mrf.mxu0
    %9724 = vdwg.mxu0
    %9725 = vmatprep.subr.bf16.mxu0 %v8848
    %9726 = vmatpush1.bf16.msra.mxu0 %v8847
    %9727 = vmatprep.subr.bf16.mxu0 %v8841
    %9728 = vmatpush1.bf16.msra.mxu0 %v8840
    %9729 = vmatprep.subr.bf16.mxu0 %v8834
    %9730 = vmatpush1.bf16.msra.mxu0 %v8833
    %9731 = vmatprep.subr.bf16.mxu0 %v8827
    %9732 = vmatpush1.bf16.msra.mxu0 %v8826
    %9733 = vmatprep.subr.bf16.mxu0 %v8820
    %9734 = vmatpush1.bf16.msra.mxu0 %v8819
    %9735 = vmatprep.subr.bf16.mxu0 %v8813
    %9736 = vmatpush1.bf16.msra.mxu0 %v8812
    %9737 = vmatprep.subr.bf16.mxu0 %v8806
    %9738 = vmatpush1.bf16.msra.mxu0 %v8805
    %9739 = vmatprep.subr.bf16.mxu0 %v8799
    %9740 = vmatpush1.bf16.msra.mxu0 %v8798
    %9741 = vmatprep.subr.bf16.mxu0 0
    %9742 = vmatpush2.bf16.msra.mxu0 0
    %9743 = vmatprep.subr.bf16.mxu0 0
    %9744 = vmatpush2.bf16.msra.mxu0 0
    %9745 = vmatprep.subr.bf16.mxu0 0
    %9746 = vmatpush2.bf16.msra.mxu0 0
    %9747 = vmatprep.subr.bf16.mxu0 0
    %9748 = vmatpush2.bf16.msra.mxu0 0
    %9749 = vmatprep.subr.bf16.mxu0 0
    %9750 = vmatpush2.bf16.msra.mxu0 0
    %9751 = vmatprep.subr.bf16.mxu0 0
    %9752 = vmatpush2.bf16.msra.mxu0 0
    %9753 = vmatprep.subr.bf16.mxu0 0
    %9754 = vmatpush2.bf16.msra.mxu0 0
    %9755 = vmatprep.subr.bf16.mxu0 0
    %9756 = vmatpush2.bf16.msra.mxu0 0
    %9757 = vmatprep.mubr.bf16.mxu0 0
    %9758 = vmatmul.mubr.bf16.gmra.mxu0 %v6187
    %v9759 = vpop.f32.mrf.mxu0
    %v9760 = vadd.f32 %v9719, %v9759
    %v9761 = vpop.f32.mrf.mxu0
    %v9762 = vadd.f32 %v9721, %v9761
    %v9763 = vpop.f32.mrf.mxu0
    %v9764 = vpop.f32.mrf.mxu0
    %9765 = vdwg.mxu0
    %9766 = vmatprep.subr.bf16.mxu0 %v8402
    %9767 = vmatpush1.bf16.msra.mxu0 %v8401
    %9768 = vmatprep.subr.bf16.mxu0 %v8395
    %9769 = vmatpush1.bf16.msra.mxu0 %v8394
    %9770 = vmatprep.subr.bf16.mxu0 %v8388
    %9771 = vmatpush1.bf16.msra.mxu0 %v8387
    %9772 = vmatprep.subr.bf16.mxu0 %v8381
    %9773 = vmatpush1.bf16.msra.mxu0 %v8380
    %9774 = vmatprep.subr.bf16.mxu0 %v8374
    %9775 = vmatpush1.bf16.msra.mxu0 %v8373
    %9776 = vmatprep.subr.bf16.mxu0 %v8367
    %9777 = vmatpush1.bf16.msra.mxu0 %v8366
    %9778 = vmatprep.subr.bf16.mxu0 %v8360
    %9779 = vmatpush1.bf16.msra.mxu0 %v8359
    %9780 = vmatprep.subr.bf16.mxu0 %v8353
    %9781 = vmatpush1.bf16.msra.mxu0 %v8352
    %9782 = vmatprep.subr.bf16.mxu0 %v8458
    %9783 = vmatpush2.bf16.msra.mxu0 %v8457
    %9784 = vmatprep.subr.bf16.mxu0 %v8451
    %9785 = vmatpush2.bf16.msra.mxu0 %v8450
    %9786 = vmatprep.subr.bf16.mxu0 %v8444
    %9787 = vmatpush2.bf16.msra.mxu0 %v8443
    %9788 = vmatprep.subr.bf16.mxu0 %v8437
    %9789 = vmatpush2.bf16.msra.mxu0 %v8436
    %9790 = vmatprep.subr.bf16.mxu0 %v8430
    %9791 = vmatpush2.bf16.msra.mxu0 %v8429
    %9792 = vmatprep.subr.bf16.mxu0 %v8423
    %9793 = vmatpush2.bf16.msra.mxu0 %v8422
    %9794 = vmatprep.subr.bf16.mxu0 %v8416
    %9795 = vmatpush2.bf16.msra.mxu0 %v8415
    %9796 = vmatprep.subr.bf16.mxu0 %v8409
    %9797 = vmatpush2.bf16.msra.mxu0 %v8408
    %9798 = vmatprep.mubr.bf16.mxu0 %v6180
    %9799 = vmatmul.mubr.bf16.gmra.mxu0 %v6179
    %v9800 = vpop.f32.mrf.mxu0
    %v9801 = vadd.f32 0.0, %v9800
    %v9802 = vpop.f32.mrf.mxu0
    %v9803 = vadd.f32 0.0, %v9802
    %v9804 = vpop.f32.mrf.mxu0
    %v9805 = vpop.f32.mrf.mxu0
    %9806 = vdwg.mxu0
    %9807 = vmatprep.subr.bf16.mxu0 %v8514
    %9808 = vmatpush1.bf16.msra.mxu0 %v8513
    %9809 = vmatprep.subr.bf16.mxu0 %v8507
    %9810 = vmatpush1.bf16.msra.mxu0 %v8506
    %9811 = vmatprep.subr.bf16.mxu0 %v8500
    %9812 = vmatpush1.bf16.msra.mxu0 %v8499
    %9813 = vmatprep.subr.bf16.mxu0 %v8493
    %9814 = vmatpush1.bf16.msra.mxu0 %v8492
    %9815 = vmatprep.subr.bf16.mxu0 %v8486
    %9816 = vmatpush1.bf16.msra.mxu0 %v8485
    %9817 = vmatprep.subr.bf16.mxu0 %v8479
    %9818 = vmatpush1.bf16.msra.mxu0 %v8478
    %9819 = vmatprep.subr.bf16.mxu0 %v8472
    %9820 = vmatpush1.bf16.msra.mxu0 %v8471
    %9821 = vmatprep.subr.bf16.mxu0 %v8465
    %9822 = vmatpush1.bf16.msra.mxu0 %v8464
    %9823 = vmatprep.subr.bf16.mxu0 %v8570
    %9824 = vmatpush2.bf16.msra.mxu0 %v8569
    %9825 = vmatprep.subr.bf16.mxu0 %v8563
    %9826 = vmatpush2.bf16.msra.mxu0 %v8562
    %9827 = vmatprep.subr.bf16.mxu0 %v8556
    %9828 = vmatpush2.bf16.msra.mxu0 %v8555
    %9829 = vmatprep.subr.bf16.mxu0 %v8549
    %9830 = vmatpush2.bf16.msra.mxu0 %v8548
    %9831 = vmatprep.subr.bf16.mxu0 %v8542
    %9832 = vmatpush2.bf16.msra.mxu0 %v8541
    %9833 = vmatprep.subr.bf16.mxu0 %v8535
    %9834 = vmatpush2.bf16.msra.mxu0 %v8534
    %9835 = vmatprep.subr.bf16.mxu0 %v8528
    %9836 = vmatpush2.bf16.msra.mxu0 %v8527
    %9837 = vmatprep.subr.bf16.mxu0 %v8521
    %9838 = vmatpush2.bf16.msra.mxu0 %v8520
    %9839 = vmatprep.mubr.bf16.mxu0 %v6182
    %9840 = vmatmul.mubr.bf16.gmra.mxu0 %v6181
    %v9841 = vpop.f32.mrf.mxu0
    %v9842 = vadd.f32 %v9801, %v9841
    %v9843 = vpop.f32.mrf.mxu0
    %v9844 = vadd.f32 %v9803, %v9843
    %v9845 = vpop.f32.mrf.mxu0
    %v9846 = vpop.f32.mrf.mxu0
    %9847 = vdwg.mxu0
    %9848 = vmatprep.subr.bf16.mxu0 %v8626
    %9849 = vmatpush1.bf16.msra.mxu0 %v8625
    %9850 = vmatprep.subr.bf16.mxu0 %v8619
    %9851 = vmatpush1.bf16.msra.mxu0 %v8618
    %9852 = vmatprep.subr.bf16.mxu0 %v8612
    %9853 = vmatpush1.bf16.msra.mxu0 %v8611
    %9854 = vmatprep.subr.bf16.mxu0 %v8605
    %9855 = vmatpush1.bf16.msra.mxu0 %v8604
    %9856 = vmatprep.subr.bf16.mxu0 %v8598
    %9857 = vmatpush1.bf16.msra.mxu0 %v8597
    %9858 = vmatprep.subr.bf16.mxu0 %v8591
    %9859 = vmatpush1.bf16.msra.mxu0 %v8590
    %9860 = vmatprep.subr.bf16.mxu0 %v8584
    %9861 = vmatpush1.bf16.msra.mxu0 %v8583
    %9862 = vmatprep.subr.bf16.mxu0 %v8577
    %9863 = vmatpush1.bf16.msra.mxu0 %v8576
    %9864 = vmatprep.subr.bf16.mxu0 %v8682
    %9865 = vmatpush2.bf16.msra.mxu0 %v8681
    %9866 = vmatprep.subr.bf16.mxu0 %v8675
    %9867 = vmatpush2.bf16.msra.mxu0 %v8674
    %9868 = vmatprep.subr.bf16.mxu0 %v8668
    %9869 = vmatpush2.bf16.msra.mxu0 %v8667
    %9870 = vmatprep.subr.bf16.mxu0 %v8661
    %9871 = vmatpush2.bf16.msra.mxu0 %v8660
    %9872 = vmatprep.subr.bf16.mxu0 %v8654
    %9873 = vmatpush2.bf16.msra.mxu0 %v8653
    %9874 = vmatprep.subr.bf16.mxu0 %v8647
    %9875 = vmatpush2.bf16.msra.mxu0 %v8646
    %9876 = vmatprep.subr.bf16.mxu0 %v8640
    %9877 = vmatpush2.bf16.msra.mxu0 %v8639
    %9878 = vmatprep.subr.bf16.mxu0 %v8633
    %9879 = vmatpush2.bf16.msra.mxu0 %v8632
    %9880 = vmatprep.mubr.bf16.mxu0 %v6184
    %9881 = vmatmul.mubr.bf16.gmra.mxu0 %v6183
    %v9882 = vpop.f32.mrf.mxu0
    %v9883 = vadd.f32 %v9842, %v9882
    %v9884 = vpop.f32.mrf.mxu0
    %v9885 = vadd.f32 %v9844, %v9884
    %v9886 = vpop.f32.mrf.mxu0
    %v9887 = vpop.f32.mrf.mxu0
    %9888 = vdwg.mxu0
    %9889 = vmatprep.subr.bf16.mxu0 %v8738
    %9890 = vmatpush1.bf16.msra.mxu0 %v8737
    %9891 = vmatprep.subr.bf16.mxu0 %v8731
    %9892 = vmatpush1.bf16.msra.mxu0 %v8730
    %9893 = vmatprep.subr.bf16.mxu0 %v8724
    %9894 = vmatpush1.bf16.msra.mxu0 %v8723
    %9895 = vmatprep.subr.bf16.mxu0 %v8717
    %9896 = vmatpush1.bf16.msra.mxu0 %v8716
    %9897 = vmatprep.subr.bf16.mxu0 %v8710
    %9898 = vmatpush1.bf16.msra.mxu0 %v8709
    %9899 = vmatprep.subr.bf16.mxu0 %v8703
    %9900 = vmatpush1.bf16.msra.mxu0 %v8702
    %9901 = vmatprep.subr.bf16.mxu0 %v8696
    %9902 = vmatpush1.bf16.msra.mxu0 %v8695
    %9903 = vmatprep.subr.bf16.mxu0 %v8689
    %9904 = vmatpush1.bf16.msra.mxu0 %v8688
    %9905 = vmatprep.subr.bf16.mxu0 %v8794
    %9906 = vmatpush2.bf16.msra.mxu0 %v8793
    %9907 = vmatprep.subr.bf16.mxu0 %v8787
    %9908 = vmatpush2.bf16.msra.mxu0 %v8786
    %9909 = vmatprep.subr.bf16.mxu0 %v8780
    %9910 = vmatpush2.bf16.msra.mxu0 %v8779
    %9911 = vmatprep.subr.bf16.mxu0 %v8773
    %9912 = vmatpush2.bf16.msra.mxu0 %v8772
    %9913 = vmatprep.subr.bf16.mxu0 %v8766
    %9914 = vmatpush2.bf16.msra.mxu0 %v8765
    %9915 = vmatprep.subr.bf16.mxu0 %v8759
    %9916 = vmatpush2.bf16.msra.mxu0 %v8758
    %9917 = vmatprep.subr.bf16.mxu0 %v8752
    %9918 = vmatpush2.bf16.msra.mxu0 %v8751
    %9919 = vmatprep.subr.bf16.mxu0 %v8745
    %9920 = vmatpush2.bf16.msra.mxu0 %v8744
    %9921 = vmatprep.mubr.bf16.mxu0 %v6186
    %9922 = vmatmul.mubr.bf16.gmra.mxu0 %v6185
    %v9923 = vpop.f32.mrf.mxu0
    %v9924 = vadd.f32 %v9883, %v9923
    %v9925 = vpop.f32.mrf.mxu0
    %v9926 = vadd.f32 %v9885, %v9925
    %v9927 = vpop.f32.mrf.mxu0
    %v9928 = vpop.f32.mrf.mxu0
    %9929 = vdwg.mxu0
    %9930 = vmatprep.subr.bf16.mxu0 %v8850
    %9931 = vmatpush1.bf16.msra.mxu0 %v8849
    %9932 = vmatprep.subr.bf16.mxu0 %v8843
    %9933 = vmatpush1.bf16.msra.mxu0 %v8842
    %9934 = vmatprep.subr.bf16.mxu0 %v8836
    %9935 = vmatpush1.bf16.msra.mxu0 %v8835
    %9936 = vmatprep.subr.bf16.mxu0 %v8829
    %9937 = vmatpush1.bf16.msra.mxu0 %v8828
    %9938 = vmatprep.subr.bf16.mxu0 %v8822
    %9939 = vmatpush1.bf16.msra.mxu0 %v8821
    %9940 = vmatprep.subr.bf16.mxu0 %v8815
    %9941 = vmatpush1.bf16.msra.mxu0 %v8814
    %9942 = vmatprep.subr.bf16.mxu0 %v8808
    %9943 = vmatpush1.bf16.msra.mxu0 %v8807
    %9944 = vmatprep.subr.bf16.mxu0 %v8801
    %9945 = vmatpush1.bf16.msra.mxu0 %v8800
    %9946 = vmatprep.subr.bf16.mxu0 0
    %9947 = vmatpush2.bf16.msra.mxu0 0
    %9948 = vmatprep.subr.bf16.mxu0 0
    %9949 = vmatpush2.bf16.msra.mxu0 0
    %9950 = vmatprep.subr.bf16.mxu0 0
    %9951 = vmatpush2.bf16.msra.mxu0 0
    %9952 = vmatprep.subr.bf16.mxu0 0
    %9953 = vmatpush2.bf16.msra.mxu0 0
    %9954 = vmatprep.subr.bf16.mxu0 0
    %9955 = vmatpush2.bf16.msra.mxu0 0
    %9956 = vmatprep.subr.bf16.mxu0 0
    %9957 = vmatpush2.bf16.msra.mxu0 0
    %9958 = vmatprep.subr.bf16.mxu0 0
    %9959 = vmatpush2.bf16.msra.mxu0 0
    %9960 = vmatprep.subr.bf16.mxu0 0
    %9961 = vmatpush2.bf16.msra.mxu0 0
    %9962 = vmatprep.mubr.bf16.mxu0 0
    %9963 = vmatmul.mubr.bf16.gmra.mxu0 %v6187
    %v9964 = vpop.f32.mrf.mxu0
    %v9965 = vadd.f32 %v9924, %v9964
    %v9966 = vpop.f32.mrf.mxu0
    %v9967 = vadd.f32 %v9926, %v9966
    %v9968 = vpop.f32.mrf.mxu0
    %v9969 = vpop.f32.mrf.mxu0
    %9970 = vdwg.mxu0
    %9971 = vmatprep.subr.bf16.mxu0 0
    %9972 = vmatpush1.bf16.msra.mxu0 %v8403
    %9973 = vmatprep.subr.bf16.mxu0 0
    %9974 = vmatpush1.bf16.msra.mxu0 %v8396
    %9975 = vmatprep.subr.bf16.mxu0 0
    %9976 = vmatpush1.bf16.msra.mxu0 %v8389
    %9977 = vmatprep.subr.bf16.mxu0 0
    %9978 = vmatpush1.bf16.msra.mxu0 %v8382
    %9979 = vmatprep.subr.bf16.mxu0 0
    %9980 = vmatpush1.bf16.msra.mxu0 %v8375
    %9981 = vmatprep.subr.bf16.mxu0 0
    %9982 = vmatpush1.bf16.msra.mxu0 %v8368
    %9983 = vmatprep.subr.bf16.mxu0 0
    %9984 = vmatpush1.bf16.msra.mxu0 %v8361
    %9985 = vmatprep.subr.bf16.mxu0 0
    %9986 = vmatpush1.bf16.msra.mxu0 %v8354
    %9987 = vmatprep.subr.bf16.mxu0 0
    %9988 = vmatpush2.bf16.msra.mxu0 %v8459
    %9989 = vmatprep.subr.bf16.mxu0 0
    %9990 = vmatpush2.bf16.msra.mxu0 %v8452
    %9991 = vmatprep.subr.bf16.mxu0 0
    %9992 = vmatpush2.bf16.msra.mxu0 %v8445
    %9993 = vmatprep.subr.bf16.mxu0 0
    %9994 = vmatpush2.bf16.msra.mxu0 %v8438
    %9995 = vmatprep.subr.bf16.mxu0 0
    %9996 = vmatpush2.bf16.msra.mxu0 %v8431
    %9997 = vmatprep.subr.bf16.mxu0 0
    %9998 = vmatpush2.bf16.msra.mxu0 %v8424
    %9999 = vmatprep.subr.bf16.mxu0 0
    %10000 = vmatpush2.bf16.msra.mxu0 %v8417
    %10001 = vmatprep.subr.bf16.mxu0 0
    %10002 = vmatpush2.bf16.msra.mxu0 %v8410
    %10003 = vmatprep.mubr.bf16.mxu0 %v6180
    %10004 = vmatmul.mubr.bf16.gmra.mxu0 %v6179
    %v10005 = vpop.f32.mrf.mxu0
    %v10006 = vadd.f32 0.0, %v10005
    %v10007 = vpop.f32.mrf.mxu0
    %v10008 = vpop.f32.mrf.mxu0
    %v10009 = vpop.f32.mrf.mxu0
    %10010 = vdwg.mxu0
    %10011 = vmatprep.subr.bf16.mxu0 0
    %10012 = vmatpush1.bf16.msra.mxu0 %v8515
    %10013 = vmatprep.subr.bf16.mxu0 0
    %10014 = vmatpush1.bf16.msra.mxu0 %v8508
    %10015 = vmatprep.subr.bf16.mxu0 0
    %10016 = vmatpush1.bf16.msra.mxu0 %v8501
    %10017 = vmatprep.subr.bf16.mxu0 0
    %10018 = vmatpush1.bf16.msra.mxu0 %v8494
    %10019 = vmatprep.subr.bf16.mxu0 0
    %10020 = vmatpush1.bf16.msra.mxu0 %v8487
    %10021 = vmatprep.subr.bf16.mxu0 0
    %10022 = vmatpush1.bf16.msra.mxu0 %v8480
    %10023 = vmatprep.subr.bf16.mxu0 0
    %10024 = vmatpush1.bf16.msra.mxu0 %v8473
    %10025 = vmatprep.subr.bf16.mxu0 0
    %10026 = vmatpush1.bf16.msra.mxu0 %v8466
    %10027 = vmatprep.subr.bf16.mxu0 0
    %10028 = vmatpush2.bf16.msra.mxu0 %v8571
    %10029 = vmatprep.subr.bf16.mxu0 0
    %10030 = vmatpush2.bf16.msra.mxu0 %v8564
    %10031 = vmatprep.subr.bf16.mxu0 0
    %10032 = vmatpush2.bf16.msra.mxu0 %v8557
    %10033 = vmatprep.subr.bf16.mxu0 0
    %10034 = vmatpush2.bf16.msra.mxu0 %v8550
    %10035 = vmatprep.subr.bf16.mxu0 0
    %10036 = vmatpush2.bf16.msra.mxu0 %v8543
    %10037 = vmatprep.subr.bf16.mxu0 0
    %10038 = vmatpush2.bf16.msra.mxu0 %v8536
    %10039 = vmatprep.subr.bf16.mxu0 0
    %10040 = vmatpush2.bf16.msra.mxu0 %v8529
    %10041 = vmatprep.subr.bf16.mxu0 0
    %10042 = vmatpush2.bf16.msra.mxu0 %v8522
    %10043 = vmatprep.mubr.bf16.mxu0 %v6182
    %10044 = vmatmul.mubr.bf16.gmra.mxu0 %v6181
    %v10045 = vpop.f32.mrf.mxu0
    %v10046 = vadd.f32 %v10006, %v10045
    %v10047 = vpop.f32.mrf.mxu0
    %v10048 = vpop.f32.mrf.mxu0
    %v10049 = vpop.f32.mrf.mxu0
    %10050 = vdwg.mxu0
    %10051 = vmatprep.subr.bf16.mxu0 0
    %10052 = vmatpush1.bf16.msra.mxu0 %v8627
    %10053 = vmatprep.subr.bf16.mxu0 0
    %10054 = vmatpush1.bf16.msra.mxu0 %v8620
    %10055 = vmatprep.subr.bf16.mxu0 0
    %10056 = vmatpush1.bf16.msra.mxu0 %v8613
    %10057 = vmatprep.subr.bf16.mxu0 0
    %10058 = vmatpush1.bf16.msra.mxu0 %v8606
    %10059 = vmatprep.subr.bf16.mxu0 0
    %10060 = vmatpush1.bf16.msra.mxu0 %v8599
    %10061 = vmatprep.subr.bf16.mxu0 0
    %10062 = vmatpush1.bf16.msra.mxu0 %v8592
    %10063 = vmatprep.subr.bf16.mxu0 0
    %10064 = vmatpush1.bf16.msra.mxu0 %v8585
    %10065 = vmatprep.subr.bf16.mxu0 0
    %10066 = vmatpush1.bf16.msra.mxu0 %v8578
    %10067 = vmatprep.subr.bf16.mxu0 0
    %10068 = vmatpush2.bf16.msra.mxu0 %v8683
    %10069 = vmatprep.subr.bf16.mxu0 0
    %10070 = vmatpush2.bf16.msra.mxu0 %v8676
    %10071 = vmatprep.subr.bf16.mxu0 0
    %10072 = vmatpush2.bf16.msra.mxu0 %v8669
    %10073 = vmatprep.subr.bf16.mxu0 0
    %10074 = vmatpush2.bf16.msra.mxu0 %v8662
    %10075 = vmatprep.subr.bf16.mxu0 0
    %10076 = vmatpush2.bf16.msra.mxu0 %v8655
    %10077 = vmatprep.subr.bf16.mxu0 0
    %10078 = vmatpush2.bf16.msra.mxu0 %v8648
    %10079 = vmatprep.subr.bf16.mxu0 0
    %10080 = vmatpush2.bf16.msra.mxu0 %v8641
    %10081 = vmatprep.subr.bf16.mxu0 0
    %10082 = vmatpush2.bf16.msra.mxu0 %v8634
    %10083 = vmatprep.mubr.bf16.mxu0 %v6184
    %10084 = vmatmul.mubr.bf16.gmra.mxu0 %v6183
    %v10085 = vpop.f32.mrf.mxu0
    %v10086 = vadd.f32 %v10046, %v10085
    %v10087 = vpop.f32.mrf.mxu0
    %v10088 = vpop.f32.mrf.mxu0
    %v10089 = vpop.f32.mrf.mxu0
    %10090 = vdwg.mxu0
    %10091 = vmatprep.subr.bf16.mxu0 0
    %10092 = vmatpush1.bf16.msra.mxu0 %v8739
    %10093 = vmatprep.subr.bf16.mxu0 0
    %10094 = vmatpush1.bf16.msra.mxu0 %v8732
    %10095 = vmatprep.subr.bf16.mxu0 0
    %10096 = vmatpush1.bf16.msra.mxu0 %v8725
    %10097 = vmatprep.subr.bf16.mxu0 0
    %10098 = vmatpush1.bf16.msra.mxu0 %v8718
    %10099 = vmatprep.subr.bf16.mxu0 0
    %10100 = vmatpush1.bf16.msra.mxu0 %v8711
    %10101 = vmatprep.subr.bf16.mxu0 0
    %10102 = vmatpush1.bf16.msra.mxu0 %v8704
    %10103 = vmatprep.subr.bf16.mxu0 0
    %10104 = vmatpush1.bf16.msra.mxu0 %v8697
    %10105 = vmatprep.subr.bf16.mxu0 0
    %10106 = vmatpush1.bf16.msra.mxu0 %v8690
    %10107 = vmatprep.subr.bf16.mxu0 0
    %10108 = vmatpush2.bf16.msra.mxu0 %v8795
    %10109 = vmatprep.subr.bf16.mxu0 0
    %10110 = vmatpush2.bf16.msra.mxu0 %v8788
    %10111 = vmatprep.subr.bf16.mxu0 0
    %10112 = vmatpush2.bf16.msra.mxu0 %v8781
    %10113 = vmatprep.subr.bf16.mxu0 0
    %10114 = vmatpush2.bf16.msra.mxu0 %v8774
    %10115 = vmatprep.subr.bf16.mxu0 0
    %10116 = vmatpush2.bf16.msra.mxu0 %v8767
    %10117 = vmatprep.subr.bf16.mxu0 0
    %10118 = vmatpush2.bf16.msra.mxu0 %v8760
    %10119 = vmatprep.subr.bf16.mxu0 0
    %10120 = vmatpush2.bf16.msra.mxu0 %v8753
    %10121 = vmatprep.subr.bf16.mxu0 0
    %10122 = vmatpush2.bf16.msra.mxu0 %v8746
    %10123 = vmatprep.mubr.bf16.mxu0 %v6186
    %10124 = vmatmul.mubr.bf16.gmra.mxu0 %v6185
    %v10125 = vpop.f32.mrf.mxu0
    %v10126 = vadd.f32 %v10086, %v10125
    %v10127 = vpop.f32.mrf.mxu0
    %v10128 = vpop.f32.mrf.mxu0
    %v10129 = vpop.f32.mrf.mxu0
    %10130 = vdwg.mxu0
    %10131 = vmatprep.subr.bf16.mxu0 0
    %10132 = vmatpush1.bf16.msra.mxu0 %v8851
    %10133 = vmatprep.subr.bf16.mxu0 0
    %10134 = vmatpush1.bf16.msra.mxu0 %v8844
    %10135 = vmatprep.subr.bf16.mxu0 0
    %10136 = vmatpush1.bf16.msra.mxu0 %v8837
    %10137 = vmatprep.subr.bf16.mxu0 0
    %10138 = vmatpush1.bf16.msra.mxu0 %v8830
    %10139 = vmatprep.subr.bf16.mxu0 0
    %10140 = vmatpush1.bf16.msra.mxu0 %v8823
    %10141 = vmatprep.subr.bf16.mxu0 0
    %10142 = vmatpush1.bf16.msra.mxu0 %v8816
    %10143 = vmatprep.subr.bf16.mxu0 0
    %10144 = vmatpush1.bf16.msra.mxu0 %v8809
    %10145 = vmatprep.subr.bf16.mxu0 0
    %10146 = vmatpush1.bf16.msra.mxu0 %v8802
    %10147 = vmatprep.subr.bf16.mxu0 0
    %10148 = vmatpush2.bf16.msra.mxu0 0
    %10149 = vmatprep.subr.bf16.mxu0 0
    %10150 = vmatpush2.bf16.msra.mxu0 0
    %10151 = vmatprep.subr.bf16.mxu0 0
    %10152 = vmatpush2.bf16.msra.mxu0 0
    %10153 = vmatprep.subr.bf16.mxu0 0
    %10154 = vmatpush2.bf16.msra.mxu0 0
    %10155 = vmatprep.subr.bf16.mxu0 0
    %10156 = vmatpush2.bf16.msra.mxu0 0
    %10157 = vmatprep.subr.bf16.mxu0 0
    %10158 = vmatpush2.bf16.msra.mxu0 0
    %10159 = vmatprep.subr.bf16.mxu0 0
    %10160 = vmatpush2.bf16.msra.mxu0 0
    %10161 = vmatprep.subr.bf16.mxu0 0
    %10162 = vmatpush2.bf16.msra.mxu0 0
    %10163 = vmatprep.mubr.bf16.mxu0 0
    %10164 = vmatmul.mubr.bf16.gmra.mxu0 %v6187
    %v10165 = vpop.f32.mrf.mxu0
    %v10166 = vadd.f32 %v10126, %v10165
    %v10167 = vpop.f32.mrf.mxu0
    %v10168 = vpop.f32.mrf.mxu0
    %v10169 = vpop.f32.mrf.mxu0
    %10170 = vdwg.mxu0
    %v10171 = vsub.f32 %v9555, %v74
    %v10172 = vsub.f32 %v9557, %v82
    %v10173 = vsub.f32 %v9760, %v81
    %v10174 = vsub.f32 %v9762, %v83
    %v10175 = vsub.f32 %v9965, %v91
    %v10176 = vsub.f32 %v9967, %v99
    %v10177 = vsub.f32 %v10166, %v98
    %v10178 = vpack.c.bf16 %v10171, %v10171
    %v10179 = vpack.c.bf16 %v10172, %v10172
    %v10180 = vpack.c.bf16 %v10173, %v10173
    %v10181 = vpack.c.bf16 %v10174, %v10174
    %v10182 = vpack.c.bf16 %v10175, %v10175
    %v10183 = vpack.c.bf16 %v10176, %v10176
    %v10184 = vpack.c.bf16 %v10177, %v10177
    %v10186 = vsel %vm2905, %v10184, 0
    %10188 = vmatprep.subr.bf16.mxu0 %v2087
    %10189 = vmatpush1.bf16.msra.mxu0 %v2086
    %10190 = vmatprep.subr.bf16.mxu0 %v2078
    %10191 = vmatpush1.bf16.msra.mxu0 %v2077
    %10192 = vmatprep.subr.bf16.mxu0 %v2069
    %10193 = vmatpush1.bf16.msra.mxu0 %v2068
    %10194 = vmatprep.subr.bf16.mxu0 %v2060
    %10195 = vmatpush1.bf16.msra.mxu0 %v2059
    %10196 = vmatprep.subr.bf16.mxu0 %v2051
    %10197 = vmatpush1.bf16.msra.mxu0 %v2050
    %10198 = vmatprep.subr.bf16.mxu0 %v2042
    %10199 = vmatpush1.bf16.msra.mxu0 %v2041
    %10200 = vmatprep.subr.bf16.mxu0 %v2033
    %10201 = vmatpush1.bf16.msra.mxu0 %v2032
    %10202 = vmatprep.subr.bf16.mxu0 %v2024
    %10203 = vmatpush1.bf16.msra.mxu0 %v2023
    %10204 = vmatprep.subr.bf16.mxu0 %v2159
    %10205 = vmatpush2.bf16.msra.mxu0 %v2158
    %10206 = vmatprep.subr.bf16.mxu0 %v2150
    %10207 = vmatpush2.bf16.msra.mxu0 %v2149
    %10208 = vmatprep.subr.bf16.mxu0 %v2141
    %10209 = vmatpush2.bf16.msra.mxu0 %v2140
    %10210 = vmatprep.subr.bf16.mxu0 %v2132
    %10211 = vmatpush2.bf16.msra.mxu0 %v2131
    %10212 = vmatprep.subr.bf16.mxu0 %v2123
    %10213 = vmatpush2.bf16.msra.mxu0 %v2122
    %10214 = vmatprep.subr.bf16.mxu0 %v2114
    %10215 = vmatpush2.bf16.msra.mxu0 %v2113
    %10216 = vmatprep.subr.bf16.mxu0 %v2105
    %10217 = vmatpush2.bf16.msra.mxu0 %v2104
    %10218 = vmatprep.subr.bf16.mxu0 %v2096
    %10219 = vmatpush2.bf16.msra.mxu0 %v2095
    %10220 = vmatprep.mubr.bf16.mxu0 %v10179
    %10221 = vmatmul.mubr.bf16.gmra.mxu0 %v10178
    %v10222 = vpop.f32.mrf.mxu0
    %v10223 = vadd.f32 0.0, %v10222
    %v10224 = vpop.f32.mrf.mxu0
    %v10225 = vadd.f32 0.0, %v10224
    %v10226 = vpop.f32.mrf.mxu0
    %v10227 = vpop.f32.mrf.mxu0
    %10228 = vdwg.mxu0
    %10229 = vmatprep.subr.bf16.mxu0 %v2231
    %10230 = vmatpush1.bf16.msra.mxu0 %v2230
    %10231 = vmatprep.subr.bf16.mxu0 %v2222
    %10232 = vmatpush1.bf16.msra.mxu0 %v2221
    %10233 = vmatprep.subr.bf16.mxu0 %v2213
    %10234 = vmatpush1.bf16.msra.mxu0 %v2212
    %10235 = vmatprep.subr.bf16.mxu0 %v2204
    %10236 = vmatpush1.bf16.msra.mxu0 %v2203
    %10237 = vmatprep.subr.bf16.mxu0 %v2195
    %10238 = vmatpush1.bf16.msra.mxu0 %v2194
    %10239 = vmatprep.subr.bf16.mxu0 %v2186
    %10240 = vmatpush1.bf16.msra.mxu0 %v2185
    %10241 = vmatprep.subr.bf16.mxu0 %v2177
    %10242 = vmatpush1.bf16.msra.mxu0 %v2176
    %10243 = vmatprep.subr.bf16.mxu0 %v2168
    %10244 = vmatpush1.bf16.msra.mxu0 %v2167
    %10245 = vmatprep.subr.bf16.mxu0 %v2303
    %10246 = vmatpush2.bf16.msra.mxu0 %v2302
    %10247 = vmatprep.subr.bf16.mxu0 %v2294
    %10248 = vmatpush2.bf16.msra.mxu0 %v2293
    %10249 = vmatprep.subr.bf16.mxu0 %v2285
    %10250 = vmatpush2.bf16.msra.mxu0 %v2284
    %10251 = vmatprep.subr.bf16.mxu0 %v2276
    %10252 = vmatpush2.bf16.msra.mxu0 %v2275
    %10253 = vmatprep.subr.bf16.mxu0 %v2267
    %10254 = vmatpush2.bf16.msra.mxu0 %v2266
    %10255 = vmatprep.subr.bf16.mxu0 %v2258
    %10256 = vmatpush2.bf16.msra.mxu0 %v2257
    %10257 = vmatprep.subr.bf16.mxu0 %v2249
    %10258 = vmatpush2.bf16.msra.mxu0 %v2248
    %10259 = vmatprep.subr.bf16.mxu0 %v2240
    %10260 = vmatpush2.bf16.msra.mxu0 %v2239
    %10261 = vmatprep.mubr.bf16.mxu0 %v10181
    %10262 = vmatmul.mubr.bf16.gmra.mxu0 %v10180
    %v10263 = vpop.f32.mrf.mxu0
    %v10264 = vadd.f32 %v10223, %v10263
    %v10265 = vpop.f32.mrf.mxu0
    %v10266 = vadd.f32 %v10225, %v10265
    %v10267 = vpop.f32.mrf.mxu0
    %v10268 = vpop.f32.mrf.mxu0
    %10269 = vdwg.mxu0
    %10270 = vmatprep.subr.bf16.mxu0 %v2375
    %10271 = vmatpush1.bf16.msra.mxu0 %v2374
    %10272 = vmatprep.subr.bf16.mxu0 %v2366
    %10273 = vmatpush1.bf16.msra.mxu0 %v2365
    %10274 = vmatprep.subr.bf16.mxu0 %v2357
    %10275 = vmatpush1.bf16.msra.mxu0 %v2356
    %10276 = vmatprep.subr.bf16.mxu0 %v2348
    %10277 = vmatpush1.bf16.msra.mxu0 %v2347
    %10278 = vmatprep.subr.bf16.mxu0 %v2339
    %10279 = vmatpush1.bf16.msra.mxu0 %v2338
    %10280 = vmatprep.subr.bf16.mxu0 %v2330
    %10281 = vmatpush1.bf16.msra.mxu0 %v2329
    %10282 = vmatprep.subr.bf16.mxu0 %v2321
    %10283 = vmatpush1.bf16.msra.mxu0 %v2320
    %10284 = vmatprep.subr.bf16.mxu0 %v2312
    %10285 = vmatpush1.bf16.msra.mxu0 %v2311
    %10286 = vmatprep.subr.bf16.mxu0 %v2447
    %10287 = vmatpush2.bf16.msra.mxu0 %v2446
    %10288 = vmatprep.subr.bf16.mxu0 %v2438
    %10289 = vmatpush2.bf16.msra.mxu0 %v2437
    %10290 = vmatprep.subr.bf16.mxu0 %v2429
    %10291 = vmatpush2.bf16.msra.mxu0 %v2428
    %10292 = vmatprep.subr.bf16.mxu0 %v2420
    %10293 = vmatpush2.bf16.msra.mxu0 %v2419
    %10294 = vmatprep.subr.bf16.mxu0 %v2411
    %10295 = vmatpush2.bf16.msra.mxu0 %v2410
    %10296 = vmatprep.subr.bf16.mxu0 %v2402
    %10297 = vmatpush2.bf16.msra.mxu0 %v2401
    %10298 = vmatprep.subr.bf16.mxu0 %v2393
    %10299 = vmatpush2.bf16.msra.mxu0 %v2392
    %10300 = vmatprep.subr.bf16.mxu0 %v2384
    %10301 = vmatpush2.bf16.msra.mxu0 %v2383
    %10302 = vmatprep.mubr.bf16.mxu0 %v10183
    %10303 = vmatmul.mubr.bf16.gmra.mxu0 %v10182
    %v10304 = vpop.f32.mrf.mxu0
    %v10305 = vadd.f32 %v10264, %v10304
    %v10306 = vpop.f32.mrf.mxu0
    %v10307 = vadd.f32 %v10266, %v10306
    %v10308 = vpop.f32.mrf.mxu0
    %v10309 = vpop.f32.mrf.mxu0
    %10310 = vdwg.mxu0
    %10311 = vmatprep.subr.bf16.mxu0 0
    %10312 = vmatpush1.bf16.msra.mxu0 0
    %10313 = vmatprep.subr.bf16.mxu0 0
    %10314 = vmatpush1.bf16.msra.mxu0 0
    %10315 = vmatprep.subr.bf16.mxu0 0
    %10316 = vmatpush1.bf16.msra.mxu0 0
    %10317 = vmatprep.subr.bf16.mxu0 0
    %10318 = vmatpush1.bf16.msra.mxu0 0
    %10319 = vmatprep.subr.bf16.mxu0 0
    %10320 = vmatpush1.bf16.msra.mxu0 0
    %10321 = vmatprep.subr.bf16.mxu0 0
    %10322 = vmatpush1.bf16.msra.mxu0 0
    %10323 = vmatprep.subr.bf16.mxu0 0
    %10324 = vmatpush1.bf16.msra.mxu0 0
    %10325 = vmatprep.subr.bf16.mxu0 %v2456
    %10326 = vmatpush1.bf16.msra.mxu0 %v2455
    %10327 = vmatprep.subr.bf16.mxu0 0
    %10328 = vmatpush2.bf16.msra.mxu0 0
    %10329 = vmatprep.subr.bf16.mxu0 0
    %10330 = vmatpush2.bf16.msra.mxu0 0
    %10331 = vmatprep.subr.bf16.mxu0 0
    %10332 = vmatpush2.bf16.msra.mxu0 0
    %10333 = vmatprep.subr.bf16.mxu0 0
    %10334 = vmatpush2.bf16.msra.mxu0 0
    %10335 = vmatprep.subr.bf16.mxu0 0
    %10336 = vmatpush2.bf16.msra.mxu0 0
    %10337 = vmatprep.subr.bf16.mxu0 0
    %10338 = vmatpush2.bf16.msra.mxu0 0
    %10339 = vmatprep.subr.bf16.mxu0 0
    %10340 = vmatpush2.bf16.msra.mxu0 0
    %10341 = vmatprep.subr.bf16.mxu0 0
    %10342 = vmatpush2.bf16.msra.mxu0 0
    %10343 = vmatprep.mubr.bf16.mxu0 0
    %10344 = vmatmul.mubr.bf16.gmra.mxu0 %v10186
    %v10345 = vpop.f32.mrf.mxu0
    %v10346 = vadd.f32 %v10305, %v10345
    %v10347 = vpop.f32.mrf.mxu0
    %v10348 = vadd.f32 %v10307, %v10347
    %v10349 = vpop.f32.mrf.mxu0
    %v10350 = vpop.f32.mrf.mxu0
    %10351 = vdwg.mxu0
    %10352 = vmatprep.subr.bf16.mxu0 %v2089
    %10353 = vmatpush1.bf16.msra.mxu0 %v2088
    %10354 = vmatprep.subr.bf16.mxu0 %v2080
    %10355 = vmatpush1.bf16.msra.mxu0 %v2079
    %10356 = vmatprep.subr.bf16.mxu0 %v2071
    %10357 = vmatpush1.bf16.msra.mxu0 %v2070
    %10358 = vmatprep.subr.bf16.mxu0 %v2062
    %10359 = vmatpush1.bf16.msra.mxu0 %v2061
    %10360 = vmatprep.subr.bf16.mxu0 %v2053
    %10361 = vmatpush1.bf16.msra.mxu0 %v2052
    %10362 = vmatprep.subr.bf16.mxu0 %v2044
    %10363 = vmatpush1.bf16.msra.mxu0 %v2043
    %10364 = vmatprep.subr.bf16.mxu0 %v2035
    %10365 = vmatpush1.bf16.msra.mxu0 %v2034
    %10366 = vmatprep.subr.bf16.mxu0 %v2026
    %10367 = vmatpush1.bf16.msra.mxu0 %v2025
    %10368 = vmatprep.subr.bf16.mxu0 %v2161
    %10369 = vmatpush2.bf16.msra.mxu0 %v2160
    %10370 = vmatprep.subr.bf16.mxu0 %v2152
    %10371 = vmatpush2.bf16.msra.mxu0 %v2151
    %10372 = vmatprep.subr.bf16.mxu0 %v2143
    %10373 = vmatpush2.bf16.msra.mxu0 %v2142
    %10374 = vmatprep.subr.bf16.mxu0 %v2134
    %10375 = vmatpush2.bf16.msra.mxu0 %v2133
    %10376 = vmatprep.subr.bf16.mxu0 %v2125
    %10377 = vmatpush2.bf16.msra.mxu0 %v2124
    %10378 = vmatprep.subr.bf16.mxu0 %v2116
    %10379 = vmatpush2.bf16.msra.mxu0 %v2115
    %10380 = vmatprep.subr.bf16.mxu0 %v2107
    %10381 = vmatpush2.bf16.msra.mxu0 %v2106
    %10382 = vmatprep.subr.bf16.mxu0 %v2098
    %10383 = vmatpush2.bf16.msra.mxu0 %v2097
    %10384 = vmatprep.mubr.bf16.mxu0 %v10179
    %10385 = vmatmul.mubr.bf16.gmra.mxu0 %v10178
    %v10386 = vpop.f32.mrf.mxu0
    %v10387 = vadd.f32 0.0, %v10386
    %v10388 = vpop.f32.mrf.mxu0
    %v10389 = vadd.f32 0.0, %v10388
    %v10390 = vpop.f32.mrf.mxu0
    %v10391 = vpop.f32.mrf.mxu0
    %10392 = vdwg.mxu0
    %10393 = vmatprep.subr.bf16.mxu0 %v2233
    %10394 = vmatpush1.bf16.msra.mxu0 %v2232
    %10395 = vmatprep.subr.bf16.mxu0 %v2224
    %10396 = vmatpush1.bf16.msra.mxu0 %v2223
    %10397 = vmatprep.subr.bf16.mxu0 %v2215
    %10398 = vmatpush1.bf16.msra.mxu0 %v2214
    %10399 = vmatprep.subr.bf16.mxu0 %v2206
    %10400 = vmatpush1.bf16.msra.mxu0 %v2205
    %10401 = vmatprep.subr.bf16.mxu0 %v2197
    %10402 = vmatpush1.bf16.msra.mxu0 %v2196
    %10403 = vmatprep.subr.bf16.mxu0 %v2188
    %10404 = vmatpush1.bf16.msra.mxu0 %v2187
    %10405 = vmatprep.subr.bf16.mxu0 %v2179
    %10406 = vmatpush1.bf16.msra.mxu0 %v2178
    %10407 = vmatprep.subr.bf16.mxu0 %v2170
    %10408 = vmatpush1.bf16.msra.mxu0 %v2169
    %10409 = vmatprep.subr.bf16.mxu0 %v2305
    %10410 = vmatpush2.bf16.msra.mxu0 %v2304
    %10411 = vmatprep.subr.bf16.mxu0 %v2296
    %10412 = vmatpush2.bf16.msra.mxu0 %v2295
    %10413 = vmatprep.subr.bf16.mxu0 %v2287
    %10414 = vmatpush2.bf16.msra.mxu0 %v2286
    %10415 = vmatprep.subr.bf16.mxu0 %v2278
    %10416 = vmatpush2.bf16.msra.mxu0 %v2277
    %10417 = vmatprep.subr.bf16.mxu0 %v2269
    %10418 = vmatpush2.bf16.msra.mxu0 %v2268
    %10419 = vmatprep.subr.bf16.mxu0 %v2260
    %10420 = vmatpush2.bf16.msra.mxu0 %v2259
    %10421 = vmatprep.subr.bf16.mxu0 %v2251
    %10422 = vmatpush2.bf16.msra.mxu0 %v2250
    %10423 = vmatprep.subr.bf16.mxu0 %v2242
    %10424 = vmatpush2.bf16.msra.mxu0 %v2241
    %10425 = vmatprep.mubr.bf16.mxu0 %v10181
    %10426 = vmatmul.mubr.bf16.gmra.mxu0 %v10180
    %v10427 = vpop.f32.mrf.mxu0
    %v10428 = vadd.f32 %v10387, %v10427
    %v10429 = vpop.f32.mrf.mxu0
    %v10430 = vadd.f32 %v10389, %v10429
    %v10431 = vpop.f32.mrf.mxu0
    %v10432 = vpop.f32.mrf.mxu0
    %10433 = vdwg.mxu0
    %10434 = vmatprep.subr.bf16.mxu0 %v2377
    %10435 = vmatpush1.bf16.msra.mxu0 %v2376
    %10436 = vmatprep.subr.bf16.mxu0 %v2368
    %10437 = vmatpush1.bf16.msra.mxu0 %v2367
    %10438 = vmatprep.subr.bf16.mxu0 %v2359
    %10439 = vmatpush1.bf16.msra.mxu0 %v2358
    %10440 = vmatprep.subr.bf16.mxu0 %v2350
    %10441 = vmatpush1.bf16.msra.mxu0 %v2349
    %10442 = vmatprep.subr.bf16.mxu0 %v2341
    %10443 = vmatpush1.bf16.msra.mxu0 %v2340
    %10444 = vmatprep.subr.bf16.mxu0 %v2332
    %10445 = vmatpush1.bf16.msra.mxu0 %v2331
    %10446 = vmatprep.subr.bf16.mxu0 %v2323
    %10447 = vmatpush1.bf16.msra.mxu0 %v2322
    %10448 = vmatprep.subr.bf16.mxu0 %v2314
    %10449 = vmatpush1.bf16.msra.mxu0 %v2313
    %10450 = vmatprep.subr.bf16.mxu0 %v2449
    %10451 = vmatpush2.bf16.msra.mxu0 %v2448
    %10452 = vmatprep.subr.bf16.mxu0 %v2440
    %10453 = vmatpush2.bf16.msra.mxu0 %v2439
    %10454 = vmatprep.subr.bf16.mxu0 %v2431
    %10455 = vmatpush2.bf16.msra.mxu0 %v2430
    %10456 = vmatprep.subr.bf16.mxu0 %v2422
    %10457 = vmatpush2.bf16.msra.mxu0 %v2421
    %10458 = vmatprep.subr.bf16.mxu0 %v2413
    %10459 = vmatpush2.bf16.msra.mxu0 %v2412
    %10460 = vmatprep.subr.bf16.mxu0 %v2404
    %10461 = vmatpush2.bf16.msra.mxu0 %v2403
    %10462 = vmatprep.subr.bf16.mxu0 %v2395
    %10463 = vmatpush2.bf16.msra.mxu0 %v2394
    %10464 = vmatprep.subr.bf16.mxu0 %v2386
    %10465 = vmatpush2.bf16.msra.mxu0 %v2385
    %10466 = vmatprep.mubr.bf16.mxu0 %v10183
    %10467 = vmatmul.mubr.bf16.gmra.mxu0 %v10182
    %v10468 = vpop.f32.mrf.mxu0
    %v10469 = vadd.f32 %v10428, %v10468
    %v10470 = vpop.f32.mrf.mxu0
    %v10471 = vadd.f32 %v10430, %v10470
    %v10472 = vpop.f32.mrf.mxu0
    %v10473 = vpop.f32.mrf.mxu0
    %10474 = vdwg.mxu0
    %10475 = vmatprep.subr.bf16.mxu0 0
    %10476 = vmatpush1.bf16.msra.mxu0 0
    %10477 = vmatprep.subr.bf16.mxu0 0
    %10478 = vmatpush1.bf16.msra.mxu0 0
    %10479 = vmatprep.subr.bf16.mxu0 0
    %10480 = vmatpush1.bf16.msra.mxu0 0
    %10481 = vmatprep.subr.bf16.mxu0 0
    %10482 = vmatpush1.bf16.msra.mxu0 0
    %10483 = vmatprep.subr.bf16.mxu0 0
    %10484 = vmatpush1.bf16.msra.mxu0 0
    %10485 = vmatprep.subr.bf16.mxu0 0
    %10486 = vmatpush1.bf16.msra.mxu0 0
    %10487 = vmatprep.subr.bf16.mxu0 0
    %10488 = vmatpush1.bf16.msra.mxu0 0
    %10489 = vmatprep.subr.bf16.mxu0 %v2458
    %10490 = vmatpush1.bf16.msra.mxu0 %v2457
    %10491 = vmatprep.subr.bf16.mxu0 0
    %10492 = vmatpush2.bf16.msra.mxu0 0
    %10493 = vmatprep.subr.bf16.mxu0 0
    %10494 = vmatpush2.bf16.msra.mxu0 0
    %10495 = vmatprep.subr.bf16.mxu0 0
    %10496 = vmatpush2.bf16.msra.mxu0 0
    %10497 = vmatprep.subr.bf16.mxu0 0
    %10498 = vmatpush2.bf16.msra.mxu0 0
    %10499 = vmatprep.subr.bf16.mxu0 0
    %10500 = vmatpush2.bf16.msra.mxu0 0
    %10501 = vmatprep.subr.bf16.mxu0 0
    %10502 = vmatpush2.bf16.msra.mxu0 0
    %10503 = vmatprep.subr.bf16.mxu0 0
    %10504 = vmatpush2.bf16.msra.mxu0 0
    %10505 = vmatprep.subr.bf16.mxu0 0
    %10506 = vmatpush2.bf16.msra.mxu0 0
    %10507 = vmatprep.mubr.bf16.mxu0 0
    %10508 = vmatmul.mubr.bf16.gmra.mxu0 %v10186
    %v10509 = vpop.f32.mrf.mxu0
    %v10510 = vadd.f32 %v10469, %v10509
    %v10511 = vpop.f32.mrf.mxu0
    %v10512 = vadd.f32 %v10471, %v10511
    %v10513 = vpop.f32.mrf.mxu0
    %v10514 = vpop.f32.mrf.mxu0
    %10515 = vdwg.mxu0
    %10516 = vmatprep.subr.bf16.mxu0 %v2091
    %10517 = vmatpush1.bf16.msra.mxu0 %v2090
    %10518 = vmatprep.subr.bf16.mxu0 %v2082
    %10519 = vmatpush1.bf16.msra.mxu0 %v2081
    %10520 = vmatprep.subr.bf16.mxu0 %v2073
    %10521 = vmatpush1.bf16.msra.mxu0 %v2072
    %10522 = vmatprep.subr.bf16.mxu0 %v2064
    %10523 = vmatpush1.bf16.msra.mxu0 %v2063
    %10524 = vmatprep.subr.bf16.mxu0 %v2055
    %10525 = vmatpush1.bf16.msra.mxu0 %v2054
    %10526 = vmatprep.subr.bf16.mxu0 %v2046
    %10527 = vmatpush1.bf16.msra.mxu0 %v2045
    %10528 = vmatprep.subr.bf16.mxu0 %v2037
    %10529 = vmatpush1.bf16.msra.mxu0 %v2036
    %10530 = vmatprep.subr.bf16.mxu0 %v2028
    %10531 = vmatpush1.bf16.msra.mxu0 %v2027
    %10532 = vmatprep.subr.bf16.mxu0 %v2163
    %10533 = vmatpush2.bf16.msra.mxu0 %v2162
    %10534 = vmatprep.subr.bf16.mxu0 %v2154
    %10535 = vmatpush2.bf16.msra.mxu0 %v2153
    %10536 = vmatprep.subr.bf16.mxu0 %v2145
    %10537 = vmatpush2.bf16.msra.mxu0 %v2144
    %10538 = vmatprep.subr.bf16.mxu0 %v2136
    %10539 = vmatpush2.bf16.msra.mxu0 %v2135
    %10540 = vmatprep.subr.bf16.mxu0 %v2127
    %10541 = vmatpush2.bf16.msra.mxu0 %v2126
    %10542 = vmatprep.subr.bf16.mxu0 %v2118
    %10543 = vmatpush2.bf16.msra.mxu0 %v2117
    %10544 = vmatprep.subr.bf16.mxu0 %v2109
    %10545 = vmatpush2.bf16.msra.mxu0 %v2108
    %10546 = vmatprep.subr.bf16.mxu0 %v2100
    %10547 = vmatpush2.bf16.msra.mxu0 %v2099
    %10548 = vmatprep.mubr.bf16.mxu0 %v10179
    %10549 = vmatmul.mubr.bf16.gmra.mxu0 %v10178
    %v10550 = vpop.f32.mrf.mxu0
    %v10551 = vadd.f32 0.0, %v10550
    %v10552 = vpop.f32.mrf.mxu0
    %v10553 = vadd.f32 0.0, %v10552
    %v10554 = vpop.f32.mrf.mxu0
    %v10555 = vpop.f32.mrf.mxu0
    %10556 = vdwg.mxu0
    %10557 = vmatprep.subr.bf16.mxu0 %v2235
    %10558 = vmatpush1.bf16.msra.mxu0 %v2234
    %10559 = vmatprep.subr.bf16.mxu0 %v2226
    %10560 = vmatpush1.bf16.msra.mxu0 %v2225
    %10561 = vmatprep.subr.bf16.mxu0 %v2217
    %10562 = vmatpush1.bf16.msra.mxu0 %v2216
    %10563 = vmatprep.subr.bf16.mxu0 %v2208
    %10564 = vmatpush1.bf16.msra.mxu0 %v2207
    %10565 = vmatprep.subr.bf16.mxu0 %v2199
    %10566 = vmatpush1.bf16.msra.mxu0 %v2198
    %10567 = vmatprep.subr.bf16.mxu0 %v2190
    %10568 = vmatpush1.bf16.msra.mxu0 %v2189
    %10569 = vmatprep.subr.bf16.mxu0 %v2181
    %10570 = vmatpush1.bf16.msra.mxu0 %v2180
    %10571 = vmatprep.subr.bf16.mxu0 %v2172
    %10572 = vmatpush1.bf16.msra.mxu0 %v2171
    %10573 = vmatprep.subr.bf16.mxu0 %v2307
    %10574 = vmatpush2.bf16.msra.mxu0 %v2306
    %10575 = vmatprep.subr.bf16.mxu0 %v2298
    %10576 = vmatpush2.bf16.msra.mxu0 %v2297
    %10577 = vmatprep.subr.bf16.mxu0 %v2289
    %10578 = vmatpush2.bf16.msra.mxu0 %v2288
    %10579 = vmatprep.subr.bf16.mxu0 %v2280
    %10580 = vmatpush2.bf16.msra.mxu0 %v2279
    %10581 = vmatprep.subr.bf16.mxu0 %v2271
    %10582 = vmatpush2.bf16.msra.mxu0 %v2270
    %10583 = vmatprep.subr.bf16.mxu0 %v2262
    %10584 = vmatpush2.bf16.msra.mxu0 %v2261
    %10585 = vmatprep.subr.bf16.mxu0 %v2253
    %10586 = vmatpush2.bf16.msra.mxu0 %v2252
    %10587 = vmatprep.subr.bf16.mxu0 %v2244
    %10588 = vmatpush2.bf16.msra.mxu0 %v2243
    %10589 = vmatprep.mubr.bf16.mxu0 %v10181
    %10590 = vmatmul.mubr.bf16.gmra.mxu0 %v10180
    %v10591 = vpop.f32.mrf.mxu0
    %v10592 = vadd.f32 %v10551, %v10591
    %v10593 = vpop.f32.mrf.mxu0
    %v10594 = vadd.f32 %v10553, %v10593
    %v10595 = vpop.f32.mrf.mxu0
    %v10596 = vpop.f32.mrf.mxu0
    %10597 = vdwg.mxu0
    %10598 = vmatprep.subr.bf16.mxu0 %v2379
    %10599 = vmatpush1.bf16.msra.mxu0 %v2378
    %10600 = vmatprep.subr.bf16.mxu0 %v2370
    %10601 = vmatpush1.bf16.msra.mxu0 %v2369
    %10602 = vmatprep.subr.bf16.mxu0 %v2361
    %10603 = vmatpush1.bf16.msra.mxu0 %v2360
    %10604 = vmatprep.subr.bf16.mxu0 %v2352
    %10605 = vmatpush1.bf16.msra.mxu0 %v2351
    %10606 = vmatprep.subr.bf16.mxu0 %v2343
    %10607 = vmatpush1.bf16.msra.mxu0 %v2342
    %10608 = vmatprep.subr.bf16.mxu0 %v2334
    %10609 = vmatpush1.bf16.msra.mxu0 %v2333
    %10610 = vmatprep.subr.bf16.mxu0 %v2325
    %10611 = vmatpush1.bf16.msra.mxu0 %v2324
    %10612 = vmatprep.subr.bf16.mxu0 %v2316
    %10613 = vmatpush1.bf16.msra.mxu0 %v2315
    %10614 = vmatprep.subr.bf16.mxu0 %v2451
    %10615 = vmatpush2.bf16.msra.mxu0 %v2450
    %10616 = vmatprep.subr.bf16.mxu0 %v2442
    %10617 = vmatpush2.bf16.msra.mxu0 %v2441
    %10618 = vmatprep.subr.bf16.mxu0 %v2433
    %10619 = vmatpush2.bf16.msra.mxu0 %v2432
    %10620 = vmatprep.subr.bf16.mxu0 %v2424
    %10621 = vmatpush2.bf16.msra.mxu0 %v2423
    %10622 = vmatprep.subr.bf16.mxu0 %v2415
    %10623 = vmatpush2.bf16.msra.mxu0 %v2414
    %10624 = vmatprep.subr.bf16.mxu0 %v2406
    %10625 = vmatpush2.bf16.msra.mxu0 %v2405
    %10626 = vmatprep.subr.bf16.mxu0 %v2397
    %10627 = vmatpush2.bf16.msra.mxu0 %v2396
    %10628 = vmatprep.subr.bf16.mxu0 %v2388
    %10629 = vmatpush2.bf16.msra.mxu0 %v2387
    %10630 = vmatprep.mubr.bf16.mxu0 %v10183
    %10631 = vmatmul.mubr.bf16.gmra.mxu0 %v10182
    %v10632 = vpop.f32.mrf.mxu0
    %v10633 = vadd.f32 %v10592, %v10632
    %v10634 = vpop.f32.mrf.mxu0
    %v10635 = vadd.f32 %v10594, %v10634
    %v10636 = vpop.f32.mrf.mxu0
    %v10637 = vpop.f32.mrf.mxu0
    %10638 = vdwg.mxu0
    %10639 = vmatprep.subr.bf16.mxu0 0
    %10640 = vmatpush1.bf16.msra.mxu0 0
    %10641 = vmatprep.subr.bf16.mxu0 0
    %10642 = vmatpush1.bf16.msra.mxu0 0
    %10643 = vmatprep.subr.bf16.mxu0 0
    %10644 = vmatpush1.bf16.msra.mxu0 0
    %10645 = vmatprep.subr.bf16.mxu0 0
    %10646 = vmatpush1.bf16.msra.mxu0 0
    %10647 = vmatprep.subr.bf16.mxu0 0
    %10648 = vmatpush1.bf16.msra.mxu0 0
    %10649 = vmatprep.subr.bf16.mxu0 0
    %10650 = vmatpush1.bf16.msra.mxu0 0
    %10651 = vmatprep.subr.bf16.mxu0 0
    %10652 = vmatpush1.bf16.msra.mxu0 0
    %10653 = vmatprep.subr.bf16.mxu0 %v2460
    %10654 = vmatpush1.bf16.msra.mxu0 %v2459
    %10655 = vmatprep.subr.bf16.mxu0 0
    %10656 = vmatpush2.bf16.msra.mxu0 0
    %10657 = vmatprep.subr.bf16.mxu0 0
    %10658 = vmatpush2.bf16.msra.mxu0 0
    %10659 = vmatprep.subr.bf16.mxu0 0
    %10660 = vmatpush2.bf16.msra.mxu0 0
    %10661 = vmatprep.subr.bf16.mxu0 0
    %10662 = vmatpush2.bf16.msra.mxu0 0
    %10663 = vmatprep.subr.bf16.mxu0 0
    %10664 = vmatpush2.bf16.msra.mxu0 0
    %10665 = vmatprep.subr.bf16.mxu0 0
    %10666 = vmatpush2.bf16.msra.mxu0 0
    %10667 = vmatprep.subr.bf16.mxu0 0
    %10668 = vmatpush2.bf16.msra.mxu0 0
    %10669 = vmatprep.subr.bf16.mxu0 0
    %10670 = vmatpush2.bf16.msra.mxu0 0
    %10671 = vmatprep.mubr.bf16.mxu0 0
    %10672 = vmatmul.mubr.bf16.gmra.mxu0 %v10186
    %v10673 = vpop.f32.mrf.mxu0
    %v10674 = vadd.f32 %v10633, %v10673
    %v10675 = vpop.f32.mrf.mxu0
    %v10676 = vadd.f32 %v10635, %v10675
    %v10677 = vpop.f32.mrf.mxu0
    %v10678 = vpop.f32.mrf.mxu0
    %10679 = vdwg.mxu0
    %10680 = vmatprep.subr.bf16.mxu0 %v2093
    %10681 = vmatpush1.bf16.msra.mxu0 %v2092
    %10682 = vmatprep.subr.bf16.mxu0 %v2084
    %10683 = vmatpush1.bf16.msra.mxu0 %v2083
    %10684 = vmatprep.subr.bf16.mxu0 %v2075
    %10685 = vmatpush1.bf16.msra.mxu0 %v2074
    %10686 = vmatprep.subr.bf16.mxu0 %v2066
    %10687 = vmatpush1.bf16.msra.mxu0 %v2065
    %10688 = vmatprep.subr.bf16.mxu0 %v2057
    %10689 = vmatpush1.bf16.msra.mxu0 %v2056
    %10690 = vmatprep.subr.bf16.mxu0 %v2048
    %10691 = vmatpush1.bf16.msra.mxu0 %v2047
    %10692 = vmatprep.subr.bf16.mxu0 %v2039
    %10693 = vmatpush1.bf16.msra.mxu0 %v2038
    %10694 = vmatprep.subr.bf16.mxu0 %v2030
    %10695 = vmatpush1.bf16.msra.mxu0 %v2029
    %10696 = vmatprep.subr.bf16.mxu0 %v2165
    %10697 = vmatpush2.bf16.msra.mxu0 %v2164
    %10698 = vmatprep.subr.bf16.mxu0 %v2156
    %10699 = vmatpush2.bf16.msra.mxu0 %v2155
    %10700 = vmatprep.subr.bf16.mxu0 %v2147
    %10701 = vmatpush2.bf16.msra.mxu0 %v2146
    %10702 = vmatprep.subr.bf16.mxu0 %v2138
    %10703 = vmatpush2.bf16.msra.mxu0 %v2137
    %10704 = vmatprep.subr.bf16.mxu0 %v2129
    %10705 = vmatpush2.bf16.msra.mxu0 %v2128
    %10706 = vmatprep.subr.bf16.mxu0 %v2120
    %10707 = vmatpush2.bf16.msra.mxu0 %v2119
    %10708 = vmatprep.subr.bf16.mxu0 %v2111
    %10709 = vmatpush2.bf16.msra.mxu0 %v2110
    %10710 = vmatprep.subr.bf16.mxu0 %v2102
    %10711 = vmatpush2.bf16.msra.mxu0 %v2101
    %10712 = vmatprep.mubr.bf16.mxu0 %v10179
    %10713 = vmatmul.mubr.bf16.gmra.mxu0 %v10178
    %v10714 = vpop.f32.mrf.mxu0
    %v10715 = vadd.f32 0.0, %v10714
    %v10716 = vpop.f32.mrf.mxu0
    %v10717 = vadd.f32 0.0, %v10716
    %v10718 = vpop.f32.mrf.mxu0
    %v10719 = vpop.f32.mrf.mxu0
    %10720 = vdwg.mxu0
    %10721 = vmatprep.subr.bf16.mxu0 %v2237
    %10722 = vmatpush1.bf16.msra.mxu0 %v2236
    %10723 = vmatprep.subr.bf16.mxu0 %v2228
    %10724 = vmatpush1.bf16.msra.mxu0 %v2227
    %10725 = vmatprep.subr.bf16.mxu0 %v2219
    %10726 = vmatpush1.bf16.msra.mxu0 %v2218
    %10727 = vmatprep.subr.bf16.mxu0 %v2210
    %10728 = vmatpush1.bf16.msra.mxu0 %v2209
    %10729 = vmatprep.subr.bf16.mxu0 %v2201
    %10730 = vmatpush1.bf16.msra.mxu0 %v2200
    %10731 = vmatprep.subr.bf16.mxu0 %v2192
    %10732 = vmatpush1.bf16.msra.mxu0 %v2191
    %10733 = vmatprep.subr.bf16.mxu0 %v2183
    %10734 = vmatpush1.bf16.msra.mxu0 %v2182
    %10735 = vmatprep.subr.bf16.mxu0 %v2174
    %10736 = vmatpush1.bf16.msra.mxu0 %v2173
    %10737 = vmatprep.subr.bf16.mxu0 %v2309
    %10738 = vmatpush2.bf16.msra.mxu0 %v2308
    %10739 = vmatprep.subr.bf16.mxu0 %v2300
    %10740 = vmatpush2.bf16.msra.mxu0 %v2299
    %10741 = vmatprep.subr.bf16.mxu0 %v2291
    %10742 = vmatpush2.bf16.msra.mxu0 %v2290
    %10743 = vmatprep.subr.bf16.mxu0 %v2282
    %10744 = vmatpush2.bf16.msra.mxu0 %v2281
    %10745 = vmatprep.subr.bf16.mxu0 %v2273
    %10746 = vmatpush2.bf16.msra.mxu0 %v2272
    %10747 = vmatprep.subr.bf16.mxu0 %v2264
    %10748 = vmatpush2.bf16.msra.mxu0 %v2263
    %10749 = vmatprep.subr.bf16.mxu0 %v2255
    %10750 = vmatpush2.bf16.msra.mxu0 %v2254
    %10751 = vmatprep.subr.bf16.mxu0 %v2246
    %10752 = vmatpush2.bf16.msra.mxu0 %v2245
    %10753 = vmatprep.mubr.bf16.mxu0 %v10181
    %10754 = vmatmul.mubr.bf16.gmra.mxu0 %v10180
    %v10755 = vpop.f32.mrf.mxu0
    %v10756 = vadd.f32 %v10715, %v10755
    %v10757 = vpop.f32.mrf.mxu0
    %v10758 = vadd.f32 %v10717, %v10757
    %v10759 = vpop.f32.mrf.mxu0
    %v10760 = vpop.f32.mrf.mxu0
    %10761 = vdwg.mxu0
    %10762 = vmatprep.subr.bf16.mxu0 %v2381
    %10763 = vmatpush1.bf16.msra.mxu0 %v2380
    %10764 = vmatprep.subr.bf16.mxu0 %v2372
    %10765 = vmatpush1.bf16.msra.mxu0 %v2371
    %10766 = vmatprep.subr.bf16.mxu0 %v2363
    %10767 = vmatpush1.bf16.msra.mxu0 %v2362
    %10768 = vmatprep.subr.bf16.mxu0 %v2354
    %10769 = vmatpush1.bf16.msra.mxu0 %v2353
    %10770 = vmatprep.subr.bf16.mxu0 %v2345
    %10771 = vmatpush1.bf16.msra.mxu0 %v2344
    %10772 = vmatprep.subr.bf16.mxu0 %v2336
    %10773 = vmatpush1.bf16.msra.mxu0 %v2335
    %10774 = vmatprep.subr.bf16.mxu0 %v2327
    %10775 = vmatpush1.bf16.msra.mxu0 %v2326
    %10776 = vmatprep.subr.bf16.mxu0 %v2318
    %10777 = vmatpush1.bf16.msra.mxu0 %v2317
    %10778 = vmatprep.subr.bf16.mxu0 %v2453
    %10779 = vmatpush2.bf16.msra.mxu0 %v2452
    %10780 = vmatprep.subr.bf16.mxu0 %v2444
    %10781 = vmatpush2.bf16.msra.mxu0 %v2443
    %10782 = vmatprep.subr.bf16.mxu0 %v2435
    %10783 = vmatpush2.bf16.msra.mxu0 %v2434
    %10784 = vmatprep.subr.bf16.mxu0 %v2426
    %10785 = vmatpush2.bf16.msra.mxu0 %v2425
    %10786 = vmatprep.subr.bf16.mxu0 %v2417
    %10787 = vmatpush2.bf16.msra.mxu0 %v2416
    %10788 = vmatprep.subr.bf16.mxu0 %v2408
    %10789 = vmatpush2.bf16.msra.mxu0 %v2407
    %10790 = vmatprep.subr.bf16.mxu0 %v2399
    %10791 = vmatpush2.bf16.msra.mxu0 %v2398
    %10792 = vmatprep.subr.bf16.mxu0 %v2390
    %10793 = vmatpush2.bf16.msra.mxu0 %v2389
    %10794 = vmatprep.mubr.bf16.mxu0 %v10183
    %10795 = vmatmul.mubr.bf16.gmra.mxu0 %v10182
    %v10796 = vpop.f32.mrf.mxu0
    %v10797 = vadd.f32 %v10756, %v10796
    %v10798 = vpop.f32.mrf.mxu0
    %v10799 = vadd.f32 %v10758, %v10798
    %v10800 = vpop.f32.mrf.mxu0
    %v10801 = vpop.f32.mrf.mxu0
    %10802 = vdwg.mxu0
    %10803 = vmatprep.subr.bf16.mxu0 0
    %10804 = vmatpush1.bf16.msra.mxu0 0
    %10805 = vmatprep.subr.bf16.mxu0 0
    %10806 = vmatpush1.bf16.msra.mxu0 0
    %10807 = vmatprep.subr.bf16.mxu0 0
    %10808 = vmatpush1.bf16.msra.mxu0 0
    %10809 = vmatprep.subr.bf16.mxu0 0
    %10810 = vmatpush1.bf16.msra.mxu0 0
    %10811 = vmatprep.subr.bf16.mxu0 0
    %10812 = vmatpush1.bf16.msra.mxu0 0
    %10813 = vmatprep.subr.bf16.mxu0 0
    %10814 = vmatpush1.bf16.msra.mxu0 0
    %10815 = vmatprep.subr.bf16.mxu0 0
    %10816 = vmatpush1.bf16.msra.mxu0 0
    %10817 = vmatprep.subr.bf16.mxu0 %v2462
    %10818 = vmatpush1.bf16.msra.mxu0 %v2461
    %10819 = vmatprep.subr.bf16.mxu0 0
    %10820 = vmatpush2.bf16.msra.mxu0 0
    %10821 = vmatprep.subr.bf16.mxu0 0
    %10822 = vmatpush2.bf16.msra.mxu0 0
    %10823 = vmatprep.subr.bf16.mxu0 0
    %10824 = vmatpush2.bf16.msra.mxu0 0
    %10825 = vmatprep.subr.bf16.mxu0 0
    %10826 = vmatpush2.bf16.msra.mxu0 0
    %10827 = vmatprep.subr.bf16.mxu0 0
    %10828 = vmatpush2.bf16.msra.mxu0 0
    %10829 = vmatprep.subr.bf16.mxu0 0
    %10830 = vmatpush2.bf16.msra.mxu0 0
    %10831 = vmatprep.subr.bf16.mxu0 0
    %10832 = vmatpush2.bf16.msra.mxu0 0
    %10833 = vmatprep.subr.bf16.mxu0 0
    %10834 = vmatpush2.bf16.msra.mxu0 0
    %10835 = vmatprep.mubr.bf16.mxu0 0
    %10836 = vmatmul.mubr.bf16.gmra.mxu0 %v10186
    %v10837 = vpop.f32.mrf.mxu0
    %v10838 = vadd.f32 %v10797, %v10837
    %v10839 = vpop.f32.mrf.mxu0
    %v10840 = vadd.f32 %v10799, %v10839
    %v10841 = vpop.f32.mrf.mxu0
    %v10842 = vpop.f32.mrf.mxu0
    %10843 = vdwg.mxu0
    %10844 = vmatprep.subr.bf16.mxu0 0
    %10845 = vmatpush1.bf16.msra.mxu0 %v2094
    %10846 = vmatprep.subr.bf16.mxu0 0
    %10847 = vmatpush1.bf16.msra.mxu0 %v2085
    %10848 = vmatprep.subr.bf16.mxu0 0
    %10849 = vmatpush1.bf16.msra.mxu0 %v2076
    %10850 = vmatprep.subr.bf16.mxu0 0
    %10851 = vmatpush1.bf16.msra.mxu0 %v2067
    %10852 = vmatprep.subr.bf16.mxu0 0
    %10853 = vmatpush1.bf16.msra.mxu0 %v2058
    %10854 = vmatprep.subr.bf16.mxu0 0
    %10855 = vmatpush1.bf16.msra.mxu0 %v2049
    %10856 = vmatprep.subr.bf16.mxu0 0
    %10857 = vmatpush1.bf16.msra.mxu0 %v2040
    %10858 = vmatprep.subr.bf16.mxu0 0
    %10859 = vmatpush1.bf16.msra.mxu0 %v2031
    %10860 = vmatprep.subr.bf16.mxu0 0
    %10861 = vmatpush2.bf16.msra.mxu0 %v2166
    %10862 = vmatprep.subr.bf16.mxu0 0
    %10863 = vmatpush2.bf16.msra.mxu0 %v2157
    %10864 = vmatprep.subr.bf16.mxu0 0
    %10865 = vmatpush2.bf16.msra.mxu0 %v2148
    %10866 = vmatprep.subr.bf16.mxu0 0
    %10867 = vmatpush2.bf16.msra.mxu0 %v2139
    %10868 = vmatprep.subr.bf16.mxu0 0
    %10869 = vmatpush2.bf16.msra.mxu0 %v2130
    %10870 = vmatprep.subr.bf16.mxu0 0
    %10871 = vmatpush2.bf16.msra.mxu0 %v2121
    %10872 = vmatprep.subr.bf16.mxu0 0
    %10873 = vmatpush2.bf16.msra.mxu0 %v2112
    %10874 = vmatprep.subr.bf16.mxu0 0
    %10875 = vmatpush2.bf16.msra.mxu0 %v2103
    %10876 = vmatprep.mubr.bf16.mxu0 %v10179
    %10877 = vmatmul.mubr.bf16.gmra.mxu0 %v10178
    %v10878 = vpop.f32.mrf.mxu0
    %v10879 = vadd.f32 0.0, %v10878
    %v10880 = vpop.f32.mrf.mxu0
    %v10881 = vpop.f32.mrf.mxu0
    %v10882 = vpop.f32.mrf.mxu0
    %10883 = vdwg.mxu0
    %10884 = vmatprep.subr.bf16.mxu0 0
    %10885 = vmatpush1.bf16.msra.mxu0 %v2238
    %10886 = vmatprep.subr.bf16.mxu0 0
    %10887 = vmatpush1.bf16.msra.mxu0 %v2229
    %10888 = vmatprep.subr.bf16.mxu0 0
    %10889 = vmatpush1.bf16.msra.mxu0 %v2220
    %10890 = vmatprep.subr.bf16.mxu0 0
    %10891 = vmatpush1.bf16.msra.mxu0 %v2211
    %10892 = vmatprep.subr.bf16.mxu0 0
    %10893 = vmatpush1.bf16.msra.mxu0 %v2202
    %10894 = vmatprep.subr.bf16.mxu0 0
    %10895 = vmatpush1.bf16.msra.mxu0 %v2193
    %10896 = vmatprep.subr.bf16.mxu0 0
    %10897 = vmatpush1.bf16.msra.mxu0 %v2184
    %10898 = vmatprep.subr.bf16.mxu0 0
    %10899 = vmatpush1.bf16.msra.mxu0 %v2175
    %10900 = vmatprep.subr.bf16.mxu0 0
    %10901 = vmatpush2.bf16.msra.mxu0 %v2310
    %10902 = vmatprep.subr.bf16.mxu0 0
    %10903 = vmatpush2.bf16.msra.mxu0 %v2301
    %10904 = vmatprep.subr.bf16.mxu0 0
    %10905 = vmatpush2.bf16.msra.mxu0 %v2292
    %10906 = vmatprep.subr.bf16.mxu0 0
    %10907 = vmatpush2.bf16.msra.mxu0 %v2283
    %10908 = vmatprep.subr.bf16.mxu0 0
    %10909 = vmatpush2.bf16.msra.mxu0 %v2274
    %10910 = vmatprep.subr.bf16.mxu0 0
    %10911 = vmatpush2.bf16.msra.mxu0 %v2265
    %10912 = vmatprep.subr.bf16.mxu0 0
    %10913 = vmatpush2.bf16.msra.mxu0 %v2256
    %10914 = vmatprep.subr.bf16.mxu0 0
    %10915 = vmatpush2.bf16.msra.mxu0 %v2247
    %10916 = vmatprep.mubr.bf16.mxu0 %v10181
    %10917 = vmatmul.mubr.bf16.gmra.mxu0 %v10180
    %v10918 = vpop.f32.mrf.mxu0
    %v10919 = vadd.f32 %v10879, %v10918
    %v10920 = vpop.f32.mrf.mxu0
    %v10921 = vpop.f32.mrf.mxu0
    %v10922 = vpop.f32.mrf.mxu0
    %10923 = vdwg.mxu0
    %10924 = vmatprep.subr.bf16.mxu0 0
    %10925 = vmatpush1.bf16.msra.mxu0 %v2382
    %10926 = vmatprep.subr.bf16.mxu0 0
    %10927 = vmatpush1.bf16.msra.mxu0 %v2373
    %10928 = vmatprep.subr.bf16.mxu0 0
    %10929 = vmatpush1.bf16.msra.mxu0 %v2364
    %10930 = vmatprep.subr.bf16.mxu0 0
    %10931 = vmatpush1.bf16.msra.mxu0 %v2355
    %10932 = vmatprep.subr.bf16.mxu0 0
    %10933 = vmatpush1.bf16.msra.mxu0 %v2346
    %10934 = vmatprep.subr.bf16.mxu0 0
    %10935 = vmatpush1.bf16.msra.mxu0 %v2337
    %10936 = vmatprep.subr.bf16.mxu0 0
    %10937 = vmatpush1.bf16.msra.mxu0 %v2328
    %10938 = vmatprep.subr.bf16.mxu0 0
    %10939 = vmatpush1.bf16.msra.mxu0 %v2319
    %10940 = vmatprep.subr.bf16.mxu0 0
    %10941 = vmatpush2.bf16.msra.mxu0 %v2454
    %10942 = vmatprep.subr.bf16.mxu0 0
    %10943 = vmatpush2.bf16.msra.mxu0 %v2445
    %10944 = vmatprep.subr.bf16.mxu0 0
    %10945 = vmatpush2.bf16.msra.mxu0 %v2436
    %10946 = vmatprep.subr.bf16.mxu0 0
    %10947 = vmatpush2.bf16.msra.mxu0 %v2427
    %10948 = vmatprep.subr.bf16.mxu0 0
    %10949 = vmatpush2.bf16.msra.mxu0 %v2418
    %10950 = vmatprep.subr.bf16.mxu0 0
    %10951 = vmatpush2.bf16.msra.mxu0 %v2409
    %10952 = vmatprep.subr.bf16.mxu0 0
    %10953 = vmatpush2.bf16.msra.mxu0 %v2400
    %10954 = vmatprep.subr.bf16.mxu0 0
    %10955 = vmatpush2.bf16.msra.mxu0 %v2391
    %10956 = vmatprep.mubr.bf16.mxu0 %v10183
    %10957 = vmatmul.mubr.bf16.gmra.mxu0 %v10182
    %v10958 = vpop.f32.mrf.mxu0
    %v10959 = vadd.f32 %v10919, %v10958
    %v10960 = vpop.f32.mrf.mxu0
    %v10961 = vpop.f32.mrf.mxu0
    %v10962 = vpop.f32.mrf.mxu0
    %10963 = vdwg.mxu0
    %10964 = vmatprep.subr.bf16.mxu0 0
    %10965 = vmatpush1.bf16.msra.mxu0 0
    %10966 = vmatprep.subr.bf16.mxu0 0
    %10967 = vmatpush1.bf16.msra.mxu0 0
    %10968 = vmatprep.subr.bf16.mxu0 0
    %10969 = vmatpush1.bf16.msra.mxu0 0
    %10970 = vmatprep.subr.bf16.mxu0 0
    %10971 = vmatpush1.bf16.msra.mxu0 0
    %10972 = vmatprep.subr.bf16.mxu0 0
    %10973 = vmatpush1.bf16.msra.mxu0 0
    %10974 = vmatprep.subr.bf16.mxu0 0
    %10975 = vmatpush1.bf16.msra.mxu0 0
    %10976 = vmatprep.subr.bf16.mxu0 0
    %10977 = vmatpush1.bf16.msra.mxu0 0
    %10978 = vmatprep.subr.bf16.mxu0 0
    %10979 = vmatpush1.bf16.msra.mxu0 %v2463
    %10980 = vmatprep.subr.bf16.mxu0 0
    %10981 = vmatpush2.bf16.msra.mxu0 0
    %10982 = vmatprep.subr.bf16.mxu0 0
    %10983 = vmatpush2.bf16.msra.mxu0 0
    %10984 = vmatprep.subr.bf16.mxu0 0
    %10985 = vmatpush2.bf16.msra.mxu0 0
    %10986 = vmatprep.subr.bf16.mxu0 0
    %10987 = vmatpush2.bf16.msra.mxu0 0
    %10988 = vmatprep.subr.bf16.mxu0 0
    %10989 = vmatpush2.bf16.msra.mxu0 0
    %10990 = vmatprep.subr.bf16.mxu0 0
    %10991 = vmatpush2.bf16.msra.mxu0 0
    %10992 = vmatprep.subr.bf16.mxu0 0
    %10993 = vmatpush2.bf16.msra.mxu0 0
    %10994 = vmatprep.subr.bf16.mxu0 0
    %10995 = vmatpush2.bf16.msra.mxu0 0
    %10996 = vmatprep.mubr.bf16.mxu0 0
    %10997 = vmatmul.mubr.bf16.gmra.mxu0 %v10186
    %v10998 = vpop.f32.mrf.mxu0
    %v10999 = vadd.f32 %v10959, %v10998
    %v11000 = vpop.f32.mrf.mxu0
    %v11001 = vpop.f32.mrf.mxu0
    %v11002 = vpop.f32.mrf.mxu0
    %11003 = vdwg.mxu0
    %v11004 = vsub.f32 %v6010, %v10346
    %v11005 = vsub.f32 %v6012, %v10348
    %v11006 = vsub.f32 %v6051, %v10510
    %v11007 = vsub.f32 %v6053, %v10512
    %v11008 = vsub.f32 %v6092, %v10674
    %v11009 = vsub.f32 %v6094, %v10676
    %v11010 = vsub.f32 %v6133, %v10838
    %v11011 = vsub.f32 %v6135, %v10840
    %v11012 = vsub.f32 %v6174, %v10999
    %v11013 = vadd.f32 %v11004, %v609
    %v11014 = vadd.f32 %v11005, %v613
    %v11015 = vadd.f32 %v11006, %v617
    %v11016 = vadd.f32 %v11007, %v621
    %v11017 = vadd.f32 %v11008, %v625
    %v11018 = vadd.f32 %v11009, %v629
    %v11019 = vadd.f32 %v11010, %v633
    %v11020 = vadd.f32 %v11011, %v637
    %v11021 = vadd.f32 %v11012, %v641
    %v11022 = vmax.f32 %v11013, 0.0
    %v11023 = vmax.f32 %v11014, 0.0
    %v11024 = vmax.f32 %v11015, 0.0
    %v11025 = vmax.f32 %v11016, 0.0
    %v11026 = vmax.f32 %v11017, 0.0
    %v11027 = vmax.f32 %v11018, 0.0
    %v11028 = vmax.f32 %v11019, 0.0
    %v11029 = vmax.f32 %v11020, 0.0
    %v11030 = vmax.f32 %v11021, 0.0
    %v11031 = vsub.f32 %v6010, %v11022
    %v11032 = vsub.f32 %v6012, %v11023
    %v11033 = vsub.f32 %v6051, %v11024
    %v11034 = vsub.f32 %v6053, %v11025
    %v11035 = vsub.f32 %v6092, %v11026
    %v11036 = vsub.f32 %v6094, %v11027
    %v11037 = vsub.f32 %v6133, %v11028
    %v11038 = vsub.f32 %v6135, %v11029
    %v11039 = vsub.f32 %v6174, %v11030
    %v11040 = vpack.c.bf16 %v11031, %v11031
    %v11041 = vpack.c.bf16 %v11032, %v11032
    %v11042 = vpack.c.bf16 %v11033, %v11033
    %v11043 = vpack.c.bf16 %v11034, %v11034
    %v11044 = vpack.c.bf16 %v11035, %v11035
    %v11045 = vpack.c.bf16 %v11036, %v11036
    %v11046 = vpack.c.bf16 %v11037, %v11037
    %v11047 = vpack.c.bf16 %v11038, %v11038
    %v11048 = vpack.c.bf16 %v11039, %v11039
    %11049 = vmatprep.subr.bf16.mxu0 %v4345
    %11050 = vmatpush1.bf16.msra.mxu0 %v4344
    %11051 = vmatprep.subr.bf16.mxu0 %v4343
    %11052 = vmatpush1.bf16.msra.mxu0 %v4342
    %11053 = vmatprep.subr.bf16.mxu0 %v4341
    %11054 = vmatpush1.bf16.msra.mxu0 %v4340
    %11055 = vmatprep.subr.bf16.mxu0 %v4339
    %11056 = vmatpush1.bf16.msra.mxu0 %v4338
    %11057 = vmatprep.subr.bf16.mxu0 %v4337
    %11058 = vmatpush1.bf16.msra.mxu0 %v4336
    %11059 = vmatprep.subr.bf16.mxu0 %v4335
    %11060 = vmatpush1.bf16.msra.mxu0 %v4334
    %11061 = vmatprep.subr.bf16.mxu0 %v4333
    %11062 = vmatpush1.bf16.msra.mxu0 %v4332
    %11063 = vmatprep.subr.bf16.mxu0 %v4331
    %11064 = vmatpush1.bf16.msra.mxu0 %v4330
    %11065 = vmatprep.subr.bf16.mxu0 %v4361
    %11066 = vmatpush2.bf16.msra.mxu0 %v4360
    %11067 = vmatprep.subr.bf16.mxu0 %v4359
    %11068 = vmatpush2.bf16.msra.mxu0 %v4358
    %11069 = vmatprep.subr.bf16.mxu0 %v4357
    %11070 = vmatpush2.bf16.msra.mxu0 %v4356
    %11071 = vmatprep.subr.bf16.mxu0 %v4355
    %11072 = vmatpush2.bf16.msra.mxu0 %v4354
    %11073 = vmatprep.subr.bf16.mxu0 %v4353
    %11074 = vmatpush2.bf16.msra.mxu0 %v4352
    %11075 = vmatprep.subr.bf16.mxu0 %v4351
    %11076 = vmatpush2.bf16.msra.mxu0 %v4350
    %11077 = vmatprep.subr.bf16.mxu0 %v4349
    %11078 = vmatpush2.bf16.msra.mxu0 %v4348
    %11079 = vmatprep.subr.bf16.mxu0 %v4347
    %11080 = vmatpush2.bf16.msra.mxu0 %v4346
    %11081 = vmatprep.mubr.bf16.mxu0 %v11041
    %11082 = vmatmul.mubr.bf16.gmra.mxu0 %v11040
    %v11083 = vpop.f32.mrf.mxu0
    %v11084 = vadd.f32 0.0, %v11083
    %v11085 = vpop.f32.mrf.mxu0
    %v11086 = vadd.f32 0.0, %v11085
    %v11087 = vpop.f32.mrf.mxu0
    %v11088 = vpop.f32.mrf.mxu0
    %11089 = vdwg.mxu0
    %11090 = vmatprep.subr.bf16.mxu0 %v4377
    %11091 = vmatpush1.bf16.msra.mxu0 %v4376
    %11092 = vmatprep.subr.bf16.mxu0 %v4375
    %11093 = vmatpush1.bf16.msra.mxu0 %v4374
    %11094 = vmatprep.subr.bf16.mxu0 %v4373
    %11095 = vmatpush1.bf16.msra.mxu0 %v4372
    %11096 = vmatprep.subr.bf16.mxu0 %v4371
    %11097 = vmatpush1.bf16.msra.mxu0 %v4370
    %11098 = vmatprep.subr.bf16.mxu0 %v4369
    %11099 = vmatpush1.bf16.msra.mxu0 %v4368
    %11100 = vmatprep.subr.bf16.mxu0 %v4367
    %11101 = vmatpush1.bf16.msra.mxu0 %v4366
    %11102 = vmatprep.subr.bf16.mxu0 %v4365
    %11103 = vmatpush1.bf16.msra.mxu0 %v4364
    %11104 = vmatprep.subr.bf16.mxu0 %v4363
    %11105 = vmatpush1.bf16.msra.mxu0 %v4362
    %11106 = vmatprep.subr.bf16.mxu0 %v4393
    %11107 = vmatpush2.bf16.msra.mxu0 %v4392
    %11108 = vmatprep.subr.bf16.mxu0 %v4391
    %11109 = vmatpush2.bf16.msra.mxu0 %v4390
    %11110 = vmatprep.subr.bf16.mxu0 %v4389
    %11111 = vmatpush2.bf16.msra.mxu0 %v4388
    %11112 = vmatprep.subr.bf16.mxu0 %v4387
    %11113 = vmatpush2.bf16.msra.mxu0 %v4386
    %11114 = vmatprep.subr.bf16.mxu0 %v4385
    %11115 = vmatpush2.bf16.msra.mxu0 %v4384
    %11116 = vmatprep.subr.bf16.mxu0 %v4383
    %11117 = vmatpush2.bf16.msra.mxu0 %v4382
    %11118 = vmatprep.subr.bf16.mxu0 %v4381
    %11119 = vmatpush2.bf16.msra.mxu0 %v4380
    %11120 = vmatprep.subr.bf16.mxu0 %v4379
    %11121 = vmatpush2.bf16.msra.mxu0 %v4378
    %11122 = vmatprep.mubr.bf16.mxu0 %v11043
    %11123 = vmatmul.mubr.bf16.gmra.mxu0 %v11042
    %v11124 = vpop.f32.mrf.mxu0
    %v11125 = vadd.f32 %v11084, %v11124
    %v11126 = vpop.f32.mrf.mxu0
    %v11127 = vadd.f32 %v11086, %v11126
    %v11128 = vpop.f32.mrf.mxu0
    %v11129 = vpop.f32.mrf.mxu0
    %11130 = vdwg.mxu0
    %11131 = vmatprep.subr.bf16.mxu0 %v4409
    %11132 = vmatpush1.bf16.msra.mxu0 %v4408
    %11133 = vmatprep.subr.bf16.mxu0 %v4407
    %11134 = vmatpush1.bf16.msra.mxu0 %v4406
    %11135 = vmatprep.subr.bf16.mxu0 %v4405
    %11136 = vmatpush1.bf16.msra.mxu0 %v4404
    %11137 = vmatprep.subr.bf16.mxu0 %v4403
    %11138 = vmatpush1.bf16.msra.mxu0 %v4402
    %11139 = vmatprep.subr.bf16.mxu0 %v4401
    %11140 = vmatpush1.bf16.msra.mxu0 %v4400
    %11141 = vmatprep.subr.bf16.mxu0 %v4399
    %11142 = vmatpush1.bf16.msra.mxu0 %v4398
    %11143 = vmatprep.subr.bf16.mxu0 %v4397
    %11144 = vmatpush1.bf16.msra.mxu0 %v4396
    %11145 = vmatprep.subr.bf16.mxu0 %v4395
    %11146 = vmatpush1.bf16.msra.mxu0 %v4394
    %11147 = vmatprep.subr.bf16.mxu0 %v4425
    %11148 = vmatpush2.bf16.msra.mxu0 %v4424
    %11149 = vmatprep.subr.bf16.mxu0 %v4423
    %11150 = vmatpush2.bf16.msra.mxu0 %v4422
    %11151 = vmatprep.subr.bf16.mxu0 %v4421
    %11152 = vmatpush2.bf16.msra.mxu0 %v4420
    %11153 = vmatprep.subr.bf16.mxu0 %v4419
    %11154 = vmatpush2.bf16.msra.mxu0 %v4418
    %11155 = vmatprep.subr.bf16.mxu0 %v4417
    %11156 = vmatpush2.bf16.msra.mxu0 %v4416
    %11157 = vmatprep.subr.bf16.mxu0 %v4415
    %11158 = vmatpush2.bf16.msra.mxu0 %v4414
    %11159 = vmatprep.subr.bf16.mxu0 %v4413
    %11160 = vmatpush2.bf16.msra.mxu0 %v4412
    %11161 = vmatprep.subr.bf16.mxu0 %v4411
    %11162 = vmatpush2.bf16.msra.mxu0 %v4410
    %11163 = vmatprep.mubr.bf16.mxu0 %v11045
    %11164 = vmatmul.mubr.bf16.gmra.mxu0 %v11044
    %v11165 = vpop.f32.mrf.mxu0
    %v11166 = vadd.f32 %v11125, %v11165
    %v11167 = vpop.f32.mrf.mxu0
    %v11168 = vadd.f32 %v11127, %v11167
    %v11169 = vpop.f32.mrf.mxu0
    %v11170 = vpop.f32.mrf.mxu0
    %11171 = vdwg.mxu0
    %11172 = vmatprep.subr.bf16.mxu0 %v4441
    %11173 = vmatpush1.bf16.msra.mxu0 %v4440
    %11174 = vmatprep.subr.bf16.mxu0 %v4439
    %11175 = vmatpush1.bf16.msra.mxu0 %v4438
    %11176 = vmatprep.subr.bf16.mxu0 %v4437
    %11177 = vmatpush1.bf16.msra.mxu0 %v4436
    %11178 = vmatprep.subr.bf16.mxu0 %v4435
    %11179 = vmatpush1.bf16.msra.mxu0 %v4434
    %11180 = vmatprep.subr.bf16.mxu0 %v4433
    %11181 = vmatpush1.bf16.msra.mxu0 %v4432
    %11182 = vmatprep.subr.bf16.mxu0 %v4431
    %11183 = vmatpush1.bf16.msra.mxu0 %v4430
    %11184 = vmatprep.subr.bf16.mxu0 %v4429
    %11185 = vmatpush1.bf16.msra.mxu0 %v4428
    %11186 = vmatprep.subr.bf16.mxu0 %v4427
    %11187 = vmatpush1.bf16.msra.mxu0 %v4426
    %11188 = vmatprep.subr.bf16.mxu0 %v4457
    %11189 = vmatpush2.bf16.msra.mxu0 %v4456
    %11190 = vmatprep.subr.bf16.mxu0 %v4455
    %11191 = vmatpush2.bf16.msra.mxu0 %v4454
    %11192 = vmatprep.subr.bf16.mxu0 %v4453
    %11193 = vmatpush2.bf16.msra.mxu0 %v4452
    %11194 = vmatprep.subr.bf16.mxu0 %v4451
    %11195 = vmatpush2.bf16.msra.mxu0 %v4450
    %11196 = vmatprep.subr.bf16.mxu0 %v4449
    %11197 = vmatpush2.bf16.msra.mxu0 %v4448
    %11198 = vmatprep.subr.bf16.mxu0 %v4447
    %11199 = vmatpush2.bf16.msra.mxu0 %v4446
    %11200 = vmatprep.subr.bf16.mxu0 %v4445
    %11201 = vmatpush2.bf16.msra.mxu0 %v4444
    %11202 = vmatprep.subr.bf16.mxu0 %v4443
    %11203 = vmatpush2.bf16.msra.mxu0 %v4442
    %11204 = vmatprep.mubr.bf16.mxu0 %v11047
    %11205 = vmatmul.mubr.bf16.gmra.mxu0 %v11046
    %v11206 = vpop.f32.mrf.mxu0
    %v11207 = vadd.f32 %v11166, %v11206
    %v11208 = vpop.f32.mrf.mxu0
    %v11209 = vadd.f32 %v11168, %v11208
    %v11210 = vpop.f32.mrf.mxu0
    %v11211 = vpop.f32.mrf.mxu0
    %11212 = vdwg.mxu0
    %11213 = vmatprep.subr.bf16.mxu0 %v4473
    %11214 = vmatpush1.bf16.msra.mxu0 %v4472
    %11215 = vmatprep.subr.bf16.mxu0 %v4471
    %11216 = vmatpush1.bf16.msra.mxu0 %v4470
    %11217 = vmatprep.subr.bf16.mxu0 %v4469
    %11218 = vmatpush1.bf16.msra.mxu0 %v4468
    %11219 = vmatprep.subr.bf16.mxu0 %v4467
    %11220 = vmatpush1.bf16.msra.mxu0 %v4466
    %11221 = vmatprep.subr.bf16.mxu0 %v4465
    %11222 = vmatpush1.bf16.msra.mxu0 %v4464
    %11223 = vmatprep.subr.bf16.mxu0 %v4463
    %11224 = vmatpush1.bf16.msra.mxu0 %v4462
    %11225 = vmatprep.subr.bf16.mxu0 %v4461
    %11226 = vmatpush1.bf16.msra.mxu0 %v4460
    %11227 = vmatprep.subr.bf16.mxu0 %v4459
    %11228 = vmatpush1.bf16.msra.mxu0 %v4458
    %11229 = vmatprep.subr.bf16.mxu0 0
    %11230 = vmatpush2.bf16.msra.mxu0 0
    %11231 = vmatprep.subr.bf16.mxu0 0
    %11232 = vmatpush2.bf16.msra.mxu0 0
    %11233 = vmatprep.subr.bf16.mxu0 0
    %11234 = vmatpush2.bf16.msra.mxu0 0
    %11235 = vmatprep.subr.bf16.mxu0 0
    %11236 = vmatpush2.bf16.msra.mxu0 0
    %11237 = vmatprep.subr.bf16.mxu0 0
    %11238 = vmatpush2.bf16.msra.mxu0 0
    %11239 = vmatprep.subr.bf16.mxu0 0
    %11240 = vmatpush2.bf16.msra.mxu0 0
    %11241 = vmatprep.subr.bf16.mxu0 0
    %11242 = vmatpush2.bf16.msra.mxu0 0
    %11243 = vmatprep.subr.bf16.mxu0 0
    %11244 = vmatpush2.bf16.msra.mxu0 0
    %11245 = vmatprep.mubr.bf16.mxu0 0
    %11246 = vmatmul.mubr.bf16.gmra.mxu0 %v11048
    %v11247 = vpop.f32.mrf.mxu0
    %v11248 = vadd.f32 %v11207, %v11247
    %v11249 = vpop.f32.mrf.mxu0
    %v11250 = vadd.f32 %v11209, %v11249
    %v11251 = vpop.f32.mrf.mxu0
    %v11252 = vpop.f32.mrf.mxu0
    %11253 = vdwg.mxu0
    %v11254 = vsub.f32 %v5071, %v11248
    %v11255 = vsub.f32 %v5073, %v11250
    %v11256 = vadd.f32 %v11254, %v3891
    %v11257 = vadd.f32 %v11255, %v3895
    %v11258 = vmax.f32 %v11256, 0.0
    %v11259 = vmax.f32 %v11257, 0.0
    %v11260 = vsub.f32 %v5071, %v11258
    %v11261 = vsub.f32 %v5073, %v11259
    %v11262 = vpack.c.bf16 %v11260, %v11260
    %v11263 = vpack.c.bf16 %v11261, %v11261
    %11264 = vmatprep.subr.bf16.mxu0 0
    %11265 = vmatpush1.bf16.msra.mxu0 %v4936
    %11266 = vmatprep.subr.bf16.mxu0 0
    %11267 = vmatpush1.bf16.msra.mxu0 %v4935
    %11268 = vmatprep.subr.bf16.mxu0 0
    %11269 = vmatpush1.bf16.msra.mxu0 %v4934
    %11270 = vmatprep.subr.bf16.mxu0 0
    %11271 = vmatpush1.bf16.msra.mxu0 %v4933
    %11272 = vmatprep.subr.bf16.mxu0 0
    %11273 = vmatpush1.bf16.msra.mxu0 %v4932
    %11274 = vmatprep.subr.bf16.mxu0 0
    %11275 = vmatpush1.bf16.msra.mxu0 %v4931
    %11276 = vmatprep.subr.bf16.mxu0 0
    %11277 = vmatpush1.bf16.msra.mxu0 %v4930
    %11278 = vmatprep.subr.bf16.mxu0 0
    %11279 = vmatpush1.bf16.msra.mxu0 %v4929
    %11280 = vmatprep.subr.bf16.mxu0 0
    %11281 = vmatpush2.bf16.msra.mxu0 %v4944
    %11282 = vmatprep.subr.bf16.mxu0 0
    %11283 = vmatpush2.bf16.msra.mxu0 %v4943
    %11284 = vmatprep.subr.bf16.mxu0 0
    %11285 = vmatpush2.bf16.msra.mxu0 %v4942
    %11286 = vmatprep.subr.bf16.mxu0 0
    %11287 = vmatpush2.bf16.msra.mxu0 %v4941
    %11288 = vmatprep.subr.bf16.mxu0 0
    %11289 = vmatpush2.bf16.msra.mxu0 %v4940
    %11290 = vmatprep.subr.bf16.mxu0 0
    %11291 = vmatpush2.bf16.msra.mxu0 %v4939
    %11292 = vmatprep.subr.bf16.mxu0 0
    %11293 = vmatpush2.bf16.msra.mxu0 %v4938
    %11294 = vmatprep.subr.bf16.mxu0 0
    %11295 = vmatpush2.bf16.msra.mxu0 %v4937
    %11296 = vmatprep.mubr.bf16.mxu0 %v11263
    %11297 = vmatmul.mubr.bf16.gmra.mxu0 %v11262
    %v11298 = vpop.f32.mrf.mxu0
    %v11299 = vadd.f32 0.0, %v11298
    %v11300 = vpop.f32.mrf.mxu0
    %v11301 = vpop.f32.mrf.mxu0
    %v11302 = vpop.f32.mrf.mxu0
    %11303 = vdwg.mxu0
    %v11304 = vsub.f32 %v5006, %v11299
    %v11305 = vadd.f32 %v11304, %v4863
    %v11306 = vmax.f32 %v11305, 0.0
    %s11307 = sld [smem:[#allocation2 + $0x1]]
    %v11308 = vsub.f32 %v11306, %v5001
    %v11309 = vstv %s11307
    %v11310 = vmul.f32 %v11309, %v11308
    %v11311 = vadd.f32 %v11306, %v11310
    %v11312 = vpack.c.bf16 %v11311, %v11311
    %v11314 = vsel %vm5032, %v11312, 0
    %11316 = vmatprep.subr.bf16.mxu0 0
    %11317 = vmatpush1.bf16.msra.mxu0 0
    %11318 = vmatprep.subr.bf16.mxu0 0
    %11319 = vmatpush1.bf16.msra.mxu0 0
    %11320 = vmatprep.subr.bf16.mxu0 0
    %11321 = vmatpush1.bf16.msra.mxu0 0
    %11322 = vmatprep.subr.bf16.mxu0 0
    %11323 = vmatpush1.bf16.msra.mxu0 0
    %11324 = vmatprep.subr.bf16.mxu0 0
    %11325 = vmatpush1.bf16.msra.mxu0 0
    %11326 = vmatprep.subr.bf16.mxu0 0
    %11327 = vmatpush1.bf16.msra.mxu0 0
    %11328 = vmatprep.subr.bf16.mxu0 %v5027
    %11329 = vmatpush1.bf16.msra.mxu0 %v5026
    %11330 = vmatprep.subr.bf16.mxu0 %v5025
    %11331 = vmatpush1.bf16.msra.mxu0 %v5024
    %11332 = vmatprep.subr.bf16.mxu0 0
    %11333 = vmatpush2.bf16.msra.mxu0 0
    %11334 = vmatprep.subr.bf16.mxu0 0
    %11335 = vmatpush2.bf16.msra.mxu0 0
    %11336 = vmatprep.subr.bf16.mxu0 0
    %11337 = vmatpush2.bf16.msra.mxu0 0
    %11338 = vmatprep.subr.bf16.mxu0 0
    %11339 = vmatpush2.bf16.msra.mxu0 0
    %11340 = vmatprep.subr.bf16.mxu0 0
    %11341 = vmatpush2.bf16.msra.mxu0 0
    %11342 = vmatprep.subr.bf16.mxu0 0
    %11343 = vmatpush2.bf16.msra.mxu0 0
    %11344 = vmatprep.subr.bf16.mxu0 0
    %11345 = vmatpush2.bf16.msra.mxu0 0
    %11346 = vmatprep.subr.bf16.mxu0 0
    %11347 = vmatpush2.bf16.msra.mxu0 0
    %11348 = vmatprep.mubr.bf16.mxu0 0
    %11349 = vmatmul.mubr.bf16.gmra.mxu0 %v11314
    %v11350 = vpop.f32.mrf.mxu0
    %v11351 = vadd.f32 0.0, %v11350
    %v11352 = vpop.f32.mrf.mxu0
    %v11353 = vadd.f32 0.0, %v11352
    %v11354 = vpop.f32.mrf.mxu0
    %v11355 = vpop.f32.mrf.mxu0
    %11356 = vdwg.mxu0
    %v11357 = vpack.c.bf16 %v11351, %v11351
    %v11358 = vpack.c.bf16 %v11353, %v11353
    %11359 = vmatprep.subr.bf16.mxu0 %v5751
    %11360 = vmatpush1.bf16.msra.mxu0 %v5750
    %11361 = vmatprep.subr.bf16.mxu0 %v5742
    %11362 = vmatpush1.bf16.msra.mxu0 %v5741
    %11363 = vmatprep.subr.bf16.mxu0 %v5733
    %11364 = vmatpush1.bf16.msra.mxu0 %v5732
    %11365 = vmatprep.subr.bf16.mxu0 %v5724
    %11366 = vmatpush1.bf16.msra.mxu0 %v5723
    %11367 = vmatprep.subr.bf16.mxu0 %v5715
    %11368 = vmatpush1.bf16.msra.mxu0 %v5714
    %11369 = vmatprep.subr.bf16.mxu0 %v5706
    %11370 = vmatpush1.bf16.msra.mxu0 %v5705
    %11371 = vmatprep.subr.bf16.mxu0 %v5697
    %11372 = vmatpush1.bf16.msra.mxu0 %v5696
    %11373 = vmatprep.subr.bf16.mxu0 %v5688
    %11374 = vmatpush1.bf16.msra.mxu0 %v5687
    %11375 = vmatprep.subr.bf16.mxu0 %v5823
    %11376 = vmatpush2.bf16.msra.mxu0 %v5822
    %11377 = vmatprep.subr.bf16.mxu0 %v5814
    %11378 = vmatpush2.bf16.msra.mxu0 %v5813
    %11379 = vmatprep.subr.bf16.mxu0 %v5805
    %11380 = vmatpush2.bf16.msra.mxu0 %v5804
    %11381 = vmatprep.subr.bf16.mxu0 %v5796
    %11382 = vmatpush2.bf16.msra.mxu0 %v5795
    %11383 = vmatprep.subr.bf16.mxu0 %v5787
    %11384 = vmatpush2.bf16.msra.mxu0 %v5786
    %11385 = vmatprep.subr.bf16.mxu0 %v5778
    %11386 = vmatpush2.bf16.msra.mxu0 %v5777
    %11387 = vmatprep.subr.bf16.mxu0 %v5769
    %11388 = vmatpush2.bf16.msra.mxu0 %v5768
    %11389 = vmatprep.subr.bf16.mxu0 %v5760
    %11390 = vmatpush2.bf16.msra.mxu0 %v5759
    %11391 = vmatprep.mubr.bf16.mxu0 %v11358
    %11392 = vmatmul.mubr.bf16.gmra.mxu0 %v11357
    %v11393 = vpop.f32.mrf.mxu0
    %v11394 = vadd.f32 0.0, %v11393
    %v11395 = vpop.f32.mrf.mxu0
    %v11396 = vadd.f32 0.0, %v11395
    %v11397 = vpop.f32.mrf.mxu0
    %v11398 = vpop.f32.mrf.mxu0
    %11399 = vdwg.mxu0
    %11400 = vmatprep.subr.bf16.mxu0 %v5753
    %11401 = vmatpush1.bf16.msra.mxu0 %v5752
    %11402 = vmatprep.subr.bf16.mxu0 %v5744
    %11403 = vmatpush1.bf16.msra.mxu0 %v5743
    %11404 = vmatprep.subr.bf16.mxu0 %v5735
    %11405 = vmatpush1.bf16.msra.mxu0 %v5734
    %11406 = vmatprep.subr.bf16.mxu0 %v5726
    %11407 = vmatpush1.bf16.msra.mxu0 %v5725
    %11408 = vmatprep.subr.bf16.mxu0 %v5717
    %11409 = vmatpush1.bf16.msra.mxu0 %v5716
    %11410 = vmatprep.subr.bf16.mxu0 %v5708
    %11411 = vmatpush1.bf16.msra.mxu0 %v5707
    %11412 = vmatprep.subr.bf16.mxu0 %v5699
    %11413 = vmatpush1.bf16.msra.mxu0 %v5698
    %11414 = vmatprep.subr.bf16.mxu0 %v5690
    %11415 = vmatpush1.bf16.msra.mxu0 %v5689
    %11416 = vmatprep.subr.bf16.mxu0 %v5825
    %11417 = vmatpush2.bf16.msra.mxu0 %v5824
    %11418 = vmatprep.subr.bf16.mxu0 %v5816
    %11419 = vmatpush2.bf16.msra.mxu0 %v5815
    %11420 = vmatprep.subr.bf16.mxu0 %v5807
    %11421 = vmatpush2.bf16.msra.mxu0 %v5806
    %11422 = vmatprep.subr.bf16.mxu0 %v5798
    %11423 = vmatpush2.bf16.msra.mxu0 %v5797
    %11424 = vmatprep.subr.bf16.mxu0 %v5789
    %11425 = vmatpush2.bf16.msra.mxu0 %v5788
    %11426 = vmatprep.subr.bf16.mxu0 %v5780
    %11427 = vmatpush2.bf16.msra.mxu0 %v5779
    %11428 = vmatprep.subr.bf16.mxu0 %v5771
    %11429 = vmatpush2.bf16.msra.mxu0 %v5770
    %11430 = vmatprep.subr.bf16.mxu0 %v5762
    %11431 = vmatpush2.bf16.msra.mxu0 %v5761
    %11432 = vmatprep.mubr.bf16.mxu0 %v11358
    %11433 = vmatmul.mubr.bf16.gmra.mxu0 %v11357
    %v11434 = vpop.f32.mrf.mxu0
    %v11435 = vadd.f32 0.0, %v11434
    %v11436 = vpop.f32.mrf.mxu0
    %v11437 = vadd.f32 0.0, %v11436
    %v11438 = vpop.f32.mrf.mxu0
    %v11439 = vpop.f32.mrf.mxu0
    %11440 = vdwg.mxu0
    %11441 = vmatprep.subr.bf16.mxu0 %v5755
    %11442 = vmatpush1.bf16.msra.mxu0 %v5754
    %11443 = vmatprep.subr.bf16.mxu0 %v5746
    %11444 = vmatpush1.bf16.msra.mxu0 %v5745
    %11445 = vmatprep.subr.bf16.mxu0 %v5737
    %11446 = vmatpush1.bf16.msra.mxu0 %v5736
    %11447 = vmatprep.subr.bf16.mxu0 %v5728
    %11448 = vmatpush1.bf16.msra.mxu0 %v5727
    %11449 = vmatprep.subr.bf16.mxu0 %v5719
    %11450 = vmatpush1.bf16.msra.mxu0 %v5718
    %11451 = vmatprep.subr.bf16.mxu0 %v5710
    %11452 = vmatpush1.bf16.msra.mxu0 %v5709
    %11453 = vmatprep.subr.bf16.mxu0 %v5701
    %11454 = vmatpush1.bf16.msra.mxu0 %v5700
    %11455 = vmatprep.subr.bf16.mxu0 %v5692
    %11456 = vmatpush1.bf16.msra.mxu0 %v5691
    %11457 = vmatprep.subr.bf16.mxu0 %v5827
    %11458 = vmatpush2.bf16.msra.mxu0 %v5826
    %11459 = vmatprep.subr.bf16.mxu0 %v5818
    %11460 = vmatpush2.bf16.msra.mxu0 %v5817
    %11461 = vmatprep.subr.bf16.mxu0 %v5809
    %11462 = vmatpush2.bf16.msra.mxu0 %v5808
    %11463 = vmatprep.subr.bf16.mxu0 %v5800
    %11464 = vmatpush2.bf16.msra.mxu0 %v5799
    %11465 = vmatprep.subr.bf16.mxu0 %v5791
    %11466 = vmatpush2.bf16.msra.mxu0 %v5790
    %11467 = vmatprep.subr.bf16.mxu0 %v5782
    %11468 = vmatpush2.bf16.msra.mxu0 %v5781
    %11469 = vmatprep.subr.bf16.mxu0 %v5773
    %11470 = vmatpush2.bf16.msra.mxu0 %v5772
    %11471 = vmatprep.subr.bf16.mxu0 %v5764
    %11472 = vmatpush2.bf16.msra.mxu0 %v5763
    %11473 = vmatprep.mubr.bf16.mxu0 %v11358
    %11474 = vmatmul.mubr.bf16.gmra.mxu0 %v11357
    %v11475 = vpop.f32.mrf.mxu0
    %v11476 = vadd.f32 0.0, %v11475
    %v11477 = vpop.f32.mrf.mxu0
    %v11478 = vadd.f32 0.0, %v11477
    %v11479 = vpop.f32.mrf.mxu0
    %v11480 = vpop.f32.mrf.mxu0
    %11481 = vdwg.mxu0
    %11482 = vmatprep.subr.bf16.mxu0 %v5757
    %11483 = vmatpush1.bf16.msra.mxu0 %v5756
    %11484 = vmatprep.subr.bf16.mxu0 %v5748
    %11485 = vmatpush1.bf16.msra.mxu0 %v5747
    %11486 = vmatprep.subr.bf16.mxu0 %v5739
    %11487 = vmatpush1.bf16.msra.mxu0 %v5738
    %11488 = vmatprep.subr.bf16.mxu0 %v5730
    %11489 = vmatpush1.bf16.msra.mxu0 %v5729
    %11490 = vmatprep.subr.bf16.mxu0 %v5721
    %11491 = vmatpush1.bf16.msra.mxu0 %v5720
    %11492 = vmatprep.subr.bf16.mxu0 %v5712
    %11493 = vmatpush1.bf16.msra.mxu0 %v5711
    %11494 = vmatprep.subr.bf16.mxu0 %v5703
    %11495 = vmatpush1.bf16.msra.mxu0 %v5702
    %11496 = vmatprep.subr.bf16.mxu0 %v5694
    %11497 = vmatpush1.bf16.msra.mxu0 %v5693
    %11498 = vmatprep.subr.bf16.mxu0 %v5829
    %11499 = vmatpush2.bf16.msra.mxu0 %v5828
    %11500 = vmatprep.subr.bf16.mxu0 %v5820
    %11501 = vmatpush2.bf16.msra.mxu0 %v5819
    %11502 = vmatprep.subr.bf16.mxu0 %v5811
    %11503 = vmatpush2.bf16.msra.mxu0 %v5810
    %11504 = vmatprep.subr.bf16.mxu0 %v5802
    %11505 = vmatpush2.bf16.msra.mxu0 %v5801
    %11506 = vmatprep.subr.bf16.mxu0 %v5793
    %11507 = vmatpush2.bf16.msra.mxu0 %v5792
    %11508 = vmatprep.subr.bf16.mxu0 %v5784
    %11509 = vmatpush2.bf16.msra.mxu0 %v5783
    %11510 = vmatprep.subr.bf16.mxu0 %v5775
    %11511 = vmatpush2.bf16.msra.mxu0 %v5774
    %11512 = vmatprep.subr.bf16.mxu0 %v5766
    %11513 = vmatpush2.bf16.msra.mxu0 %v5765
    %11514 = vmatprep.mubr.bf16.mxu0 %v11358
    %11515 = vmatmul.mubr.bf16.gmra.mxu0 %v11357
    %v11516 = vpop.f32.mrf.mxu0
    %v11517 = vadd.f32 0.0, %v11516
    %v11518 = vpop.f32.mrf.mxu0
    %v11519 = vadd.f32 0.0, %v11518
    %v11520 = vpop.f32.mrf.mxu0
    %v11521 = vpop.f32.mrf.mxu0
    %11522 = vdwg.mxu0
    %11523 = vmatprep.subr.bf16.mxu0 0
    %11524 = vmatpush1.bf16.msra.mxu0 %v5758
    %11525 = vmatprep.subr.bf16.mxu0 0
    %11526 = vmatpush1.bf16.msra.mxu0 %v5749
    %11527 = vmatprep.subr.bf16.mxu0 0
    %11528 = vmatpush1.bf16.msra.mxu0 %v5740
    %11529 = vmatprep.subr.bf16.mxu0 0
    %11530 = vmatpush1.bf16.msra.mxu0 %v5731
    %11531 = vmatprep.subr.bf16.mxu0 0
    %11532 = vmatpush1.bf16.msra.mxu0 %v5722
    %11533 = vmatprep.subr.bf16.mxu0 0
    %11534 = vmatpush1.bf16.msra.mxu0 %v5713
    %11535 = vmatprep.subr.bf16.mxu0 0
    %11536 = vmatpush1.bf16.msra.mxu0 %v5704
    %11537 = vmatprep.subr.bf16.mxu0 0
    %11538 = vmatpush1.bf16.msra.mxu0 %v5695
    %11539 = vmatprep.subr.bf16.mxu0 0
    %11540 = vmatpush2.bf16.msra.mxu0 %v5830
    %11541 = vmatprep.subr.bf16.mxu0 0
    %11542 = vmatpush2.bf16.msra.mxu0 %v5821
    %11543 = vmatprep.subr.bf16.mxu0 0
    %11544 = vmatpush2.bf16.msra.mxu0 %v5812
    %11545 = vmatprep.subr.bf16.mxu0 0
    %11546 = vmatpush2.bf16.msra.mxu0 %v5803
    %11547 = vmatprep.subr.bf16.mxu0 0
    %11548 = vmatpush2.bf16.msra.mxu0 %v5794
    %11549 = vmatprep.subr.bf16.mxu0 0
    %11550 = vmatpush2.bf16.msra.mxu0 %v5785
    %11551 = vmatprep.subr.bf16.mxu0 0
    %11552 = vmatpush2.bf16.msra.mxu0 %v5776
    %11553 = vmatprep.subr.bf16.mxu0 0
    %11554 = vmatpush2.bf16.msra.mxu0 %v5767
    %11555 = vmatprep.mubr.bf16.mxu0 %v11358
    %11556 = vmatmul.mubr.bf16.gmra.mxu0 %v11357
    %v11557 = vpop.f32.mrf.mxu0
    %v11558 = vadd.f32 0.0, %v11557
    %v11559 = vpop.f32.mrf.mxu0
    %v11560 = vpop.f32.mrf.mxu0
    %v11561 = vpop.f32.mrf.mxu0
    %11562 = vdwg.mxu0
    %v11563 = vpack.c.bf16 %v11394, %v11394
    %v11564 = vpack.c.bf16 %v11396, %v11396
    %v11565 = vpack.c.bf16 %v11435, %v11435
    %v11566 = vpack.c.bf16 %v11437, %v11437
    %v11567 = vpack.c.bf16 %v11476, %v11476
    %v11568 = vpack.c.bf16 %v11478, %v11478
    %v11569 = vpack.c.bf16 %v11517, %v11517
    %v11570 = vpack.c.bf16 %v11519, %v11519
    %v11571 = vpack.c.bf16 %v11558, %v11558
    %11572 = vmatprep.subr.bf16.mxu0 %v8398
    %11573 = vmatpush1.bf16.msra.mxu0 %v8397
    %11574 = vmatprep.subr.bf16.mxu0 %v8391
    %11575 = vmatpush1.bf16.msra.mxu0 %v8390
    %11576 = vmatprep.subr.bf16.mxu0 %v8384
    %11577 = vmatpush1.bf16.msra.mxu0 %v8383
    %11578 = vmatprep.subr.bf16.mxu0 %v8377
    %11579 = vmatpush1.bf16.msra.mxu0 %v8376
    %11580 = vmatprep.subr.bf16.mxu0 %v8370
    %11581 = vmatpush1.bf16.msra.mxu0 %v8369
    %11582 = vmatprep.subr.bf16.mxu0 %v8363
    %11583 = vmatpush1.bf16.msra.mxu0 %v8362
    %11584 = vmatprep.subr.bf16.mxu0 %v8356
    %11585 = vmatpush1.bf16.msra.mxu0 %v8355
    %11586 = vmatprep.subr.bf16.mxu0 %v8349
    %11587 = vmatpush1.bf16.msra.mxu0 %v8348
    %11588 = vmatprep.subr.bf16.mxu0 %v8454
    %11589 = vmatpush2.bf16.msra.mxu0 %v8453
    %11590 = vmatprep.subr.bf16.mxu0 %v8447
    %11591 = vmatpush2.bf16.msra.mxu0 %v8446
    %11592 = vmatprep.subr.bf16.mxu0 %v8440
    %11593 = vmatpush2.bf16.msra.mxu0 %v8439
    %11594 = vmatprep.subr.bf16.mxu0 %v8433
    %11595 = vmatpush2.bf16.msra.mxu0 %v8432
    %11596 = vmatprep.subr.bf16.mxu0 %v8426
    %11597 = vmatpush2.bf16.msra.mxu0 %v8425
    %11598 = vmatprep.subr.bf16.mxu0 %v8419
    %11599 = vmatpush2.bf16.msra.mxu0 %v8418
    %11600 = vmatprep.subr.bf16.mxu0 %v8412
    %11601 = vmatpush2.bf16.msra.mxu0 %v8411
    %11602 = vmatprep.subr.bf16.mxu0 %v8405
    %11603 = vmatpush2.bf16.msra.mxu0 %v8404
    %11604 = vmatprep.mubr.bf16.mxu0 %v11564
    %11605 = vmatmul.mubr.bf16.gmra.mxu0 %v11563
    %v11606 = vpop.f32.mrf.mxu0
    %v11607 = vadd.f32 0.0, %v11606
    %v11608 = vpop.f32.mrf.mxu0
    %v11609 = vadd.f32 0.0, %v11608
    %v11610 = vpop.f32.mrf.mxu0
    %v11611 = vpop.f32.mrf.mxu0
    %11612 = vdwg.mxu0
    %11613 = vmatprep.subr.bf16.mxu0 %v8510
    %11614 = vmatpush1.bf16.msra.mxu0 %v8509
    %11615 = vmatprep.subr.bf16.mxu0 %v8503
    %11616 = vmatpush1.bf16.msra.mxu0 %v8502
    %11617 = vmatprep.subr.bf16.mxu0 %v8496
    %11618 = vmatpush1.bf16.msra.mxu0 %v8495
    %11619 = vmatprep.subr.bf16.mxu0 %v8489
    %11620 = vmatpush1.bf16.msra.mxu0 %v8488
    %11621 = vmatprep.subr.bf16.mxu0 %v8482
    %11622 = vmatpush1.bf16.msra.mxu0 %v8481
    %11623 = vmatprep.subr.bf16.mxu0 %v8475
    %11624 = vmatpush1.bf16.msra.mxu0 %v8474
    %11625 = vmatprep.subr.bf16.mxu0 %v8468
    %11626 = vmatpush1.bf16.msra.mxu0 %v8467
    %11627 = vmatprep.subr.bf16.mxu0 %v8461
    %11628 = vmatpush1.bf16.msra.mxu0 %v8460
    %11629 = vmatprep.subr.bf16.mxu0 %v8566
    %11630 = vmatpush2.bf16.msra.mxu0 %v8565
    %11631 = vmatprep.subr.bf16.mxu0 %v8559
    %11632 = vmatpush2.bf16.msra.mxu0 %v8558
    %11633 = vmatprep.subr.bf16.mxu0 %v8552
    %11634 = vmatpush2.bf16.msra.mxu0 %v8551
    %11635 = vmatprep.subr.bf16.mxu0 %v8545
    %11636 = vmatpush2.bf16.msra.mxu0 %v8544
    %11637 = vmatprep.subr.bf16.mxu0 %v8538
    %11638 = vmatpush2.bf16.msra.mxu0 %v8537
    %11639 = vmatprep.subr.bf16.mxu0 %v8531
    %11640 = vmatpush2.bf16.msra.mxu0 %v8530
    %11641 = vmatprep.subr.bf16.mxu0 %v8524
    %11642 = vmatpush2.bf16.msra.mxu0 %v8523
    %11643 = vmatprep.subr.bf16.mxu0 %v8517
    %11644 = vmatpush2.bf16.msra.mxu0 %v8516
    %11645 = vmatprep.mubr.bf16.mxu0 %v11566
    %11646 = vmatmul.mubr.bf16.gmra.mxu0 %v11565
    %v11647 = vpop.f32.mrf.mxu0
    %v11648 = vadd.f32 %v11607, %v11647
    %v11649 = vpop.f32.mrf.mxu0
    %v11650 = vadd.f32 %v11609, %v11649
    %v11651 = vpop.f32.mrf.mxu0
    %v11652 = vpop.f32.mrf.mxu0
    %11653 = vdwg.mxu0
    %11654 = vmatprep.subr.bf16.mxu0 %v8622
    %11655 = vmatpush1.bf16.msra.mxu0 %v8621
    %11656 = vmatprep.subr.bf16.mxu0 %v8615
    %11657 = vmatpush1.bf16.msra.mxu0 %v8614
    %11658 = vmatprep.subr.bf16.mxu0 %v8608
    %11659 = vmatpush1.bf16.msra.mxu0 %v8607
    %11660 = vmatprep.subr.bf16.mxu0 %v8601
    %11661 = vmatpush1.bf16.msra.mxu0 %v8600
    %11662 = vmatprep.subr.bf16.mxu0 %v8594
    %11663 = vmatpush1.bf16.msra.mxu0 %v8593
    %11664 = vmatprep.subr.bf16.mxu0 %v8587
    %11665 = vmatpush1.bf16.msra.mxu0 %v8586
    %11666 = vmatprep.subr.bf16.mxu0 %v8580
    %11667 = vmatpush1.bf16.msra.mxu0 %v8579
    %11668 = vmatprep.subr.bf16.mxu0 %v8573
    %11669 = vmatpush1.bf16.msra.mxu0 %v8572
    %11670 = vmatprep.subr.bf16.mxu0 %v8678
    %11671 = vmatpush2.bf16.msra.mxu0 %v8677
    %11672 = vmatprep.subr.bf16.mxu0 %v8671
    %11673 = vmatpush2.bf16.msra.mxu0 %v8670
    %11674 = vmatprep.subr.bf16.mxu0 %v8664
    %11675 = vmatpush2.bf16.msra.mxu0 %v8663
    %11676 = vmatprep.subr.bf16.mxu0 %v8657
    %11677 = vmatpush2.bf16.msra.mxu0 %v8656
    %11678 = vmatprep.subr.bf16.mxu0 %v8650
    %11679 = vmatpush2.bf16.msra.mxu0 %v8649
    %11680 = vmatprep.subr.bf16.mxu0 %v8643
    %11681 = vmatpush2.bf16.msra.mxu0 %v8642
    %11682 = vmatprep.subr.bf16.mxu0 %v8636
    %11683 = vmatpush2.bf16.msra.mxu0 %v8635
    %11684 = vmatprep.subr.bf16.mxu0 %v8629
    %11685 = vmatpush2.bf16.msra.mxu0 %v8628
    %11686 = vmatprep.mubr.bf16.mxu0 %v11568
    %11687 = vmatmul.mubr.bf16.gmra.mxu0 %v11567
    %v11688 = vpop.f32.mrf.mxu0
    %v11689 = vadd.f32 %v11648, %v11688
    %v11690 = vpop.f32.mrf.mxu0
    %v11691 = vadd.f32 %v11650, %v11690
    %v11692 = vpop.f32.mrf.mxu0
    %v11693 = vpop.f32.mrf.mxu0
    %11694 = vdwg.mxu0
    %11695 = vmatprep.subr.bf16.mxu0 %v8734
    %11696 = vmatpush1.bf16.msra.mxu0 %v8733
    %11697 = vmatprep.subr.bf16.mxu0 %v8727
    %11698 = vmatpush1.bf16.msra.mxu0 %v8726
    %11699 = vmatprep.subr.bf16.mxu0 %v8720
    %11700 = vmatpush1.bf16.msra.mxu0 %v8719
    %11701 = vmatprep.subr.bf16.mxu0 %v8713
    %11702 = vmatpush1.bf16.msra.mxu0 %v8712
    %11703 = vmatprep.subr.bf16.mxu0 %v8706
    %11704 = vmatpush1.bf16.msra.mxu0 %v8705
    %11705 = vmatprep.subr.bf16.mxu0 %v8699
    %11706 = vmatpush1.bf16.msra.mxu0 %v8698
    %11707 = vmatprep.subr.bf16.mxu0 %v8692
    %11708 = vmatpush1.bf16.msra.mxu0 %v8691
    %11709 = vmatprep.subr.bf16.mxu0 %v8685
    %11710 = vmatpush1.bf16.msra.mxu0 %v8684
    %11711 = vmatprep.subr.bf16.mxu0 %v8790
    %11712 = vmatpush2.bf16.msra.mxu0 %v8789
    %11713 = vmatprep.subr.bf16.mxu0 %v8783
    %11714 = vmatpush2.bf16.msra.mxu0 %v8782
    %11715 = vmatprep.subr.bf16.mxu0 %v8776
    %11716 = vmatpush2.bf16.msra.mxu0 %v8775
    %11717 = vmatprep.subr.bf16.mxu0 %v8769
    %11718 = vmatpush2.bf16.msra.mxu0 %v8768
    %11719 = vmatprep.subr.bf16.mxu0 %v8762
    %11720 = vmatpush2.bf16.msra.mxu0 %v8761
    %11721 = vmatprep.subr.bf16.mxu0 %v8755
    %11722 = vmatpush2.bf16.msra.mxu0 %v8754
    %11723 = vmatprep.subr.bf16.mxu0 %v8748
    %11724 = vmatpush2.bf16.msra.mxu0 %v8747
    %11725 = vmatprep.subr.bf16.mxu0 %v8741
    %11726 = vmatpush2.bf16.msra.mxu0 %v8740
    %11727 = vmatprep.mubr.bf16.mxu0 %v11570
    %11728 = vmatmul.mubr.bf16.gmra.mxu0 %v11569
    %v11729 = vpop.f32.mrf.mxu0
    %v11730 = vadd.f32 %v11689, %v11729
    %v11731 = vpop.f32.mrf.mxu0
    %v11732 = vadd.f32 %v11691, %v11731
    %v11733 = vpop.f32.mrf.mxu0
    %v11734 = vpop.f32.mrf.mxu0
    %11735 = vdwg.mxu0
    %11736 = vmatprep.subr.bf16.mxu0 %v8846
    %11737 = vmatpush1.bf16.msra.mxu0 %v8845
    %11738 = vmatprep.subr.bf16.mxu0 %v8839
    %11739 = vmatpush1.bf16.msra.mxu0 %v8838
    %11740 = vmatprep.subr.bf16.mxu0 %v8832
    %11741 = vmatpush1.bf16.msra.mxu0 %v8831
    %11742 = vmatprep.subr.bf16.mxu0 %v8825
    %11743 = vmatpush1.bf16.msra.mxu0 %v8824
    %11744 = vmatprep.subr.bf16.mxu0 %v8818
    %11745 = vmatpush1.bf16.msra.mxu0 %v8817
    %11746 = vmatprep.subr.bf16.mxu0 %v8811
    %11747 = vmatpush1.bf16.msra.mxu0 %v8810
    %11748 = vmatprep.subr.bf16.mxu0 %v8804
    %11749 = vmatpush1.bf16.msra.mxu0 %v8803
    %11750 = vmatprep.subr.bf16.mxu0 %v8797
    %11751 = vmatpush1.bf16.msra.mxu0 %v8796
    %11752 = vmatprep.subr.bf16.mxu0 0
    %11753 = vmatpush2.bf16.msra.mxu0 0
    %11754 = vmatprep.subr.bf16.mxu0 0
    %11755 = vmatpush2.bf16.msra.mxu0 0
    %11756 = vmatprep.subr.bf16.mxu0 0
    %11757 = vmatpush2.bf16.msra.mxu0 0
    %11758 = vmatprep.subr.bf16.mxu0 0
    %11759 = vmatpush2.bf16.msra.mxu0 0
    %11760 = vmatprep.subr.bf16.mxu0 0
    %11761 = vmatpush2.bf16.msra.mxu0 0
    %11762 = vmatprep.subr.bf16.mxu0 0
    %11763 = vmatpush2.bf16.msra.mxu0 0
    %11764 = vmatprep.subr.bf16.mxu0 0
    %11765 = vmatpush2.bf16.msra.mxu0 0
    %11766 = vmatprep.subr.bf16.mxu0 0
    %11767 = vmatpush2.bf16.msra.mxu0 0
    %11768 = vmatprep.mubr.bf16.mxu0 0
    %11769 = vmatmul.mubr.bf16.gmra.mxu0 %v11571
    %v11770 = vpop.f32.mrf.mxu0
    %v11771 = vadd.f32 %v11730, %v11770
    %v11772 = vpop.f32.mrf.mxu0
    %v11773 = vadd.f32 %v11732, %v11772
    %v11774 = vpop.f32.mrf.mxu0
    %v11775 = vpop.f32.mrf.mxu0
    %11776 = vdwg.mxu0
    %11777 = vmatprep.subr.bf16.mxu0 %v8400
    %11778 = vmatpush1.bf16.msra.mxu0 %v8399
    %11779 = vmatprep.subr.bf16.mxu0 %v8393
    %11780 = vmatpush1.bf16.msra.mxu0 %v8392
    %11781 = vmatprep.subr.bf16.mxu0 %v8386
    %11782 = vmatpush1.bf16.msra.mxu0 %v8385
    %11783 = vmatprep.subr.bf16.mxu0 %v8379
    %11784 = vmatpush1.bf16.msra.mxu0 %v8378
    %11785 = vmatprep.subr.bf16.mxu0 %v8372
    %11786 = vmatpush1.bf16.msra.mxu0 %v8371
    %11787 = vmatprep.subr.bf16.mxu0 %v8365
    %11788 = vmatpush1.bf16.msra.mxu0 %v8364
    %11789 = vmatprep.subr.bf16.mxu0 %v8358
    %11790 = vmatpush1.bf16.msra.mxu0 %v8357
    %11791 = vmatprep.subr.bf16.mxu0 %v8351
    %11792 = vmatpush1.bf16.msra.mxu0 %v8350
    %11793 = vmatprep.subr.bf16.mxu0 %v8456
    %11794 = vmatpush2.bf16.msra.mxu0 %v8455
    %11795 = vmatprep.subr.bf16.mxu0 %v8449
    %11796 = vmatpush2.bf16.msra.mxu0 %v8448
    %11797 = vmatprep.subr.bf16.mxu0 %v8442
    %11798 = vmatpush2.bf16.msra.mxu0 %v8441
    %11799 = vmatprep.subr.bf16.mxu0 %v8435
    %11800 = vmatpush2.bf16.msra.mxu0 %v8434
    %11801 = vmatprep.subr.bf16.mxu0 %v8428
    %11802 = vmatpush2.bf16.msra.mxu0 %v8427
    %11803 = vmatprep.subr.bf16.mxu0 %v8421
    %11804 = vmatpush2.bf16.msra.mxu0 %v8420
    %11805 = vmatprep.subr.bf16.mxu0 %v8414
    %11806 = vmatpush2.bf16.msra.mxu0 %v8413
    %11807 = vmatprep.subr.bf16.mxu0 %v8407
    %11808 = vmatpush2.bf16.msra.mxu0 %v8406
    %11809 = vmatprep.mubr.bf16.mxu0 %v11564
    %11810 = vmatmul.mubr.bf16.gmra.mxu0 %v11563
    %v11811 = vpop.f32.mrf.mxu0
    %v11812 = vadd.f32 0.0, %v11811
    %v11813 = vpop.f32.mrf.mxu0
    %v11814 = vadd.f32 0.0, %v11813
    %v11815 = vpop.f32.mrf.mxu0
    %v11816 = vpop.f32.mrf.mxu0
    %11817 = vdwg.mxu0
    %11818 = vmatprep.subr.bf16.mxu0 %v8512
    %11819 = vmatpush1.bf16.msra.mxu0 %v8511
    %11820 = vmatprep.subr.bf16.mxu0 %v8505
    %11821 = vmatpush1.bf16.msra.mxu0 %v8504
    %11822 = vmatprep.subr.bf16.mxu0 %v8498
    %11823 = vmatpush1.bf16.msra.mxu0 %v8497
    %11824 = vmatprep.subr.bf16.mxu0 %v8491
    %11825 = vmatpush1.bf16.msra.mxu0 %v8490
    %11826 = vmatprep.subr.bf16.mxu0 %v8484
    %11827 = vmatpush1.bf16.msra.mxu0 %v8483
    %11828 = vmatprep.subr.bf16.mxu0 %v8477
    %11829 = vmatpush1.bf16.msra.mxu0 %v8476
    %11830 = vmatprep.subr.bf16.mxu0 %v8470
    %11831 = vmatpush1.bf16.msra.mxu0 %v8469
    %11832 = vmatprep.subr.bf16.mxu0 %v8463
    %11833 = vmatpush1.bf16.msra.mxu0 %v8462
    %11834 = vmatprep.subr.bf16.mxu0 %v8568
    %11835 = vmatpush2.bf16.msra.mxu0 %v8567
    %11836 = vmatprep.subr.bf16.mxu0 %v8561
    %11837 = vmatpush2.bf16.msra.mxu0 %v8560
    %11838 = vmatprep.subr.bf16.mxu0 %v8554
    %11839 = vmatpush2.bf16.msra.mxu0 %v8553
    %11840 = vmatprep.subr.bf16.mxu0 %v8547
    %11841 = vmatpush2.bf16.msra.mxu0 %v8546
    %11842 = vmatprep.subr.bf16.mxu0 %v8540
    %11843 = vmatpush2.bf16.msra.mxu0 %v8539
    %11844 = vmatprep.subr.bf16.mxu0 %v8533
    %11845 = vmatpush2.bf16.msra.mxu0 %v8532
    %11846 = vmatprep.subr.bf16.mxu0 %v8526
    %11847 = vmatpush2.bf16.msra.mxu0 %v8525
    %11848 = vmatprep.subr.bf16.mxu0 %v8519
    %11849 = vmatpush2.bf16.msra.mxu0 %v8518
    %11850 = vmatprep.mubr.bf16.mxu0 %v11566
    %11851 = vmatmul.mubr.bf16.gmra.mxu0 %v11565
    %v11852 = vpop.f32.mrf.mxu0
    %v11853 = vadd.f32 %v11812, %v11852
    %v11854 = vpop.f32.mrf.mxu0
    %v11855 = vadd.f32 %v11814, %v11854
    %v11856 = vpop.f32.mrf.mxu0
    %v11857 = vpop.f32.mrf.mxu0
    %11858 = vdwg.mxu0
    %11859 = vmatprep.subr.bf16.mxu0 %v8624
    %11860 = vmatpush1.bf16.msra.mxu0 %v8623
    %11861 = vmatprep.subr.bf16.mxu0 %v8617
    %11862 = vmatpush1.bf16.msra.mxu0 %v8616
    %11863 = vmatprep.subr.bf16.mxu0 %v8610
    %11864 = vmatpush1.bf16.msra.mxu0 %v8609
    %11865 = vmatprep.subr.bf16.mxu0 %v8603
    %11866 = vmatpush1.bf16.msra.mxu0 %v8602
    %11867 = vmatprep.subr.bf16.mxu0 %v8596
    %11868 = vmatpush1.bf16.msra.mxu0 %v8595
    %11869 = vmatprep.subr.bf16.mxu0 %v8589
    %11870 = vmatpush1.bf16.msra.mxu0 %v8588
    %11871 = vmatprep.subr.bf16.mxu0 %v8582
    %11872 = vmatpush1.bf16.msra.mxu0 %v8581
    %11873 = vmatprep.subr.bf16.mxu0 %v8575
    %11874 = vmatpush1.bf16.msra.mxu0 %v8574
    %11875 = vmatprep.subr.bf16.mxu0 %v8680
    %11876 = vmatpush2.bf16.msra.mxu0 %v8679
    %11877 = vmatprep.subr.bf16.mxu0 %v8673
    %11878 = vmatpush2.bf16.msra.mxu0 %v8672
    %11879 = vmatprep.subr.bf16.mxu0 %v8666
    %11880 = vmatpush2.bf16.msra.mxu0 %v8665
    %11881 = vmatprep.subr.bf16.mxu0 %v8659
    %11882 = vmatpush2.bf16.msra.mxu0 %v8658
    %11883 = vmatprep.subr.bf16.mxu0 %v8652
    %11884 = vmatpush2.bf16.msra.mxu0 %v8651
    %11885 = vmatprep.subr.bf16.mxu0 %v8645
    %11886 = vmatpush2.bf16.msra.mxu0 %v8644
    %11887 = vmatprep.subr.bf16.mxu0 %v8638
    %11888 = vmatpush2.bf16.msra.mxu0 %v8637
    %11889 = vmatprep.subr.bf16.mxu0 %v8631
    %11890 = vmatpush2.bf16.msra.mxu0 %v8630
    %11891 = vmatprep.mubr.bf16.mxu0 %v11568
    %11892 = vmatmul.mubr.bf16.gmra.mxu0 %v11567
    %v11893 = vpop.f32.mrf.mxu0
    %v11894 = vadd.f32 %v11853, %v11893
    %v11895 = vpop.f32.mrf.mxu0
    %v11896 = vadd.f32 %v11855, %v11895
    %v11897 = vpop.f32.mrf.mxu0
    %v11898 = vpop.f32.mrf.mxu0
    %11899 = vdwg.mxu0
    %11900 = vmatprep.subr.bf16.mxu0 %v8736
    %11901 = vmatpush1.bf16.msra.mxu0 %v8735
    %11902 = vmatprep.subr.bf16.mxu0 %v8729
    %11903 = vmatpush1.bf16.msra.mxu0 %v8728
    %11904 = vmatprep.subr.bf16.mxu0 %v8722
    %11905 = vmatpush1.bf16.msra.mxu0 %v8721
    %11906 = vmatprep.subr.bf16.mxu0 %v8715
    %11907 = vmatpush1.bf16.msra.mxu0 %v8714
    %11908 = vmatprep.subr.bf16.mxu0 %v8708
    %11909 = vmatpush1.bf16.msra.mxu0 %v8707
    %11910 = vmatprep.subr.bf16.mxu0 %v8701
    %11911 = vmatpush1.bf16.msra.mxu0 %v8700
    %11912 = vmatprep.subr.bf16.mxu0 %v8694
    %11913 = vmatpush1.bf16.msra.mxu0 %v8693
    %11914 = vmatprep.subr.bf16.mxu0 %v8687
    %11915 = vmatpush1.bf16.msra.mxu0 %v8686
    %11916 = vmatprep.subr.bf16.mxu0 %v8792
    %11917 = vmatpush2.bf16.msra.mxu0 %v8791
    %11918 = vmatprep.subr.bf16.mxu0 %v8785
    %11919 = vmatpush2.bf16.msra.mxu0 %v8784
    %11920 = vmatprep.subr.bf16.mxu0 %v8778
    %11921 = vmatpush2.bf16.msra.mxu0 %v8777
    %11922 = vmatprep.subr.bf16.mxu0 %v8771
    %11923 = vmatpush2.bf16.msra.mxu0 %v8770
    %11924 = vmatprep.subr.bf16.mxu0 %v8764
    %11925 = vmatpush2.bf16.msra.mxu0 %v8763
    %11926 = vmatprep.subr.bf16.mxu0 %v8757
    %11927 = vmatpush2.bf16.msra.mxu0 %v8756
    %11928 = vmatprep.subr.bf16.mxu0 %v8750
    %11929 = vmatpush2.bf16.msra.mxu0 %v8749
    %11930 = vmatprep.subr.bf16.mxu0 %v8743
    %11931 = vmatpush2.bf16.msra.mxu0 %v8742
    %11932 = vmatprep.mubr.bf16.mxu0 %v11570
    %11933 = vmatmul.mubr.bf16.gmra.mxu0 %v11569
    %v11934 = vpop.f32.mrf.mxu0
    %v11935 = vadd.f32 %v11894, %v11934
    %v11936 = vpop.f32.mrf.mxu0
    %v11937 = vadd.f32 %v11896, %v11936
    %v11938 = vpop.f32.mrf.mxu0
    %v11939 = vpop.f32.mrf.mxu0
    %11940 = vdwg.mxu0
    %11941 = vmatprep.subr.bf16.mxu0 %v8848
    %11942 = vmatpush1.bf16.msra.mxu0 %v8847
    %11943 = vmatprep.subr.bf16.mxu0 %v8841
    %11944 = vmatpush1.bf16.msra.mxu0 %v8840
    %11945 = vmatprep.subr.bf16.mxu0 %v8834
    %11946 = vmatpush1.bf16.msra.mxu0 %v8833
    %11947 = vmatprep.subr.bf16.mxu0 %v8827
    %11948 = vmatpush1.bf16.msra.mxu0 %v8826
    %11949 = vmatprep.subr.bf16.mxu0 %v8820
    %11950 = vmatpush1.bf16.msra.mxu0 %v8819
    %11951 = vmatprep.subr.bf16.mxu0 %v8813
    %11952 = vmatpush1.bf16.msra.mxu0 %v8812
    %11953 = vmatprep.subr.bf16.mxu0 %v8806
    %11954 = vmatpush1.bf16.msra.mxu0 %v8805
    %11955 = vmatprep.subr.bf16.mxu0 %v8799
    %11956 = vmatpush1.bf16.msra.mxu0 %v8798
    %11957 = vmatprep.subr.bf16.mxu0 0
    %11958 = vmatpush2.bf16.msra.mxu0 0
    %11959 = vmatprep.subr.bf16.mxu0 0
    %11960 = vmatpush2.bf16.msra.mxu0 0
    %11961 = vmatprep.subr.bf16.mxu0 0
    %11962 = vmatpush2.bf16.msra.mxu0 0
    %11963 = vmatprep.subr.bf16.mxu0 0
    %11964 = vmatpush2.bf16.msra.mxu0 0
    %11965 = vmatprep.subr.bf16.mxu0 0
    %11966 = vmatpush2.bf16.msra.mxu0 0
    %11967 = vmatprep.subr.bf16.mxu0 0
    %11968 = vmatpush2.bf16.msra.mxu0 0
    %11969 = vmatprep.subr.bf16.mxu0 0
    %11970 = vmatpush2.bf16.msra.mxu0 0
    %11971 = vmatprep.subr.bf16.mxu0 0
    %11972 = vmatpush2.bf16.msra.mxu0 0
    %11973 = vmatprep.mubr.bf16.mxu0 0
    %11974 = vmatmul.mubr.bf16.gmra.mxu0 %v11571
    %v11975 = vpop.f32.mrf.mxu0
    %v11976 = vadd.f32 %v11935, %v11975
    %v11977 = vpop.f32.mrf.mxu0
    %v11978 = vadd.f32 %v11937, %v11977
    %v11979 = vpop.f32.mrf.mxu0
    %v11980 = vpop.f32.mrf.mxu0
    %11981 = vdwg.mxu0
    %11982 = vmatprep.subr.bf16.mxu0 %v8402
    %11983 = vmatpush1.bf16.msra.mxu0 %v8401
    %11984 = vmatprep.subr.bf16.mxu0 %v8395
    %11985 = vmatpush1.bf16.msra.mxu0 %v8394
    %11986 = vmatprep.subr.bf16.mxu0 %v8388
    %11987 = vmatpush1.bf16.msra.mxu0 %v8387
    %11988 = vmatprep.subr.bf16.mxu0 %v8381
    %11989 = vmatpush1.bf16.msra.mxu0 %v8380
    %11990 = vmatprep.subr.bf16.mxu0 %v8374
    %11991 = vmatpush1.bf16.msra.mxu0 %v8373
    %11992 = vmatprep.subr.bf16.mxu0 %v8367
    %11993 = vmatpush1.bf16.msra.mxu0 %v8366
    %11994 = vmatprep.subr.bf16.mxu0 %v8360
    %11995 = vmatpush1.bf16.msra.mxu0 %v8359
    %11996 = vmatprep.subr.bf16.mxu0 %v8353
    %11997 = vmatpush1.bf16.msra.mxu0 %v8352
    %11998 = vmatprep.subr.bf16.mxu0 %v8458
    %11999 = vmatpush2.bf16.msra.mxu0 %v8457
    %12000 = vmatprep.subr.bf16.mxu0 %v8451
    %12001 = vmatpush2.bf16.msra.mxu0 %v8450
    %12002 = vmatprep.subr.bf16.mxu0 %v8444
    %12003 = vmatpush2.bf16.msra.mxu0 %v8443
    %12004 = vmatprep.subr.bf16.mxu0 %v8437
    %12005 = vmatpush2.bf16.msra.mxu0 %v8436
    %12006 = vmatprep.subr.bf16.mxu0 %v8430
    %12007 = vmatpush2.bf16.msra.mxu0 %v8429
    %12008 = vmatprep.subr.bf16.mxu0 %v8423
    %12009 = vmatpush2.bf16.msra.mxu0 %v8422
    %12010 = vmatprep.subr.bf16.mxu0 %v8416
    %12011 = vmatpush2.bf16.msra.mxu0 %v8415
    %12012 = vmatprep.subr.bf16.mxu0 %v8409
    %12013 = vmatpush2.bf16.msra.mxu0 %v8408
    %12014 = vmatprep.mubr.bf16.mxu0 %v11564
    %12015 = vmatmul.mubr.bf16.gmra.mxu0 %v11563
    %v12016 = vpop.f32.mrf.mxu0
    %v12017 = vadd.f32 0.0, %v12016
    %v12018 = vpop.f32.mrf.mxu0
    %v12019 = vadd.f32 0.0, %v12018
    %v12020 = vpop.f32.mrf.mxu0
    %v12021 = vpop.f32.mrf.mxu0
    %12022 = vdwg.mxu0
    %12023 = vmatprep.subr.bf16.mxu0 %v8514
    %12024 = vmatpush1.bf16.msra.mxu0 %v8513
    %12025 = vmatprep.subr.bf16.mxu0 %v8507
    %12026 = vmatpush1.bf16.msra.mxu0 %v8506
    %12027 = vmatprep.subr.bf16.mxu0 %v8500
    %12028 = vmatpush1.bf16.msra.mxu0 %v8499
    %12029 = vmatprep.subr.bf16.mxu0 %v8493
    %12030 = vmatpush1.bf16.msra.mxu0 %v8492
    %12031 = vmatprep.subr.bf16.mxu0 %v8486
    %12032 = vmatpush1.bf16.msra.mxu0 %v8485
    %12033 = vmatprep.subr.bf16.mxu0 %v8479
    %12034 = vmatpush1.bf16.msra.mxu0 %v8478
    %12035 = vmatprep.subr.bf16.mxu0 %v8472
    %12036 = vmatpush1.bf16.msra.mxu0 %v8471
    %12037 = vmatprep.subr.bf16.mxu0 %v8465
    %12038 = vmatpush1.bf16.msra.mxu0 %v8464
    %12039 = vmatprep.subr.bf16.mxu0 %v8570
    %12040 = vmatpush2.bf16.msra.mxu0 %v8569
    %12041 = vmatprep.subr.bf16.mxu0 %v8563
    %12042 = vmatpush2.bf16.msra.mxu0 %v8562
    %12043 = vmatprep.subr.bf16.mxu0 %v8556
    %12044 = vmatpush2.bf16.msra.mxu0 %v8555
    %12045 = vmatprep.subr.bf16.mxu0 %v8549
    %12046 = vmatpush2.bf16.msra.mxu0 %v8548
    %12047 = vmatprep.subr.bf16.mxu0 %v8542
    %12048 = vmatpush2.bf16.msra.mxu0 %v8541
    %12049 = vmatprep.subr.bf16.mxu0 %v8535
    %12050 = vmatpush2.bf16.msra.mxu0 %v8534
    %12051 = vmatprep.subr.bf16.mxu0 %v8528
    %12052 = vmatpush2.bf16.msra.mxu0 %v8527
    %12053 = vmatprep.subr.bf16.mxu0 %v8521
    %12054 = vmatpush2.bf16.msra.mxu0 %v8520
    %12055 = vmatprep.mubr.bf16.mxu0 %v11566
    %12056 = vmatmul.mubr.bf16.gmra.mxu0 %v11565
    %v12057 = vpop.f32.mrf.mxu0
    %v12058 = vadd.f32 %v12017, %v12057
    %v12059 = vpop.f32.mrf.mxu0
    %v12060 = vadd.f32 %v12019, %v12059
    %v12061 = vpop.f32.mrf.mxu0
    %v12062 = vpop.f32.mrf.mxu0
    %12063 = vdwg.mxu0
    %12064 = vmatprep.subr.bf16.mxu0 %v8626
    %12065 = vmatpush1.bf16.msra.mxu0 %v8625
    %12066 = vmatprep.subr.bf16.mxu0 %v8619
    %12067 = vmatpush1.bf16.msra.mxu0 %v8618
    %12068 = vmatprep.subr.bf16.mxu0 %v8612
    %12069 = vmatpush1.bf16.msra.mxu0 %v8611
    %12070 = vmatprep.subr.bf16.mxu0 %v8605
    %12071 = vmatpush1.bf16.msra.mxu0 %v8604
    %12072 = vmatprep.subr.bf16.mxu0 %v8598
    %12073 = vmatpush1.bf16.msra.mxu0 %v8597
    %12074 = vmatprep.subr.bf16.mxu0 %v8591
    %12075 = vmatpush1.bf16.msra.mxu0 %v8590
    %12076 = vmatprep.subr.bf16.mxu0 %v8584
    %12077 = vmatpush1.bf16.msra.mxu0 %v8583
    %12078 = vmatprep.subr.bf16.mxu0 %v8577
    %12079 = vmatpush1.bf16.msra.mxu0 %v8576
    %12080 = vmatprep.subr.bf16.mxu0 %v8682
    %12081 = vmatpush2.bf16.msra.mxu0 %v8681
    %12082 = vmatprep.subr.bf16.mxu0 %v8675
    %12083 = vmatpush2.bf16.msra.mxu0 %v8674
    %12084 = vmatprep.subr.bf16.mxu0 %v8668
    %12085 = vmatpush2.bf16.msra.mxu0 %v8667
    %12086 = vmatprep.subr.bf16.mxu0 %v8661
    %12087 = vmatpush2.bf16.msra.mxu0 %v8660
    %12088 = vmatprep.subr.bf16.mxu0 %v8654
    %12089 = vmatpush2.bf16.msra.mxu0 %v8653
    %12090 = vmatprep.subr.bf16.mxu0 %v8647
    %12091 = vmatpush2.bf16.msra.mxu0 %v8646
    %12092 = vmatprep.subr.bf16.mxu0 %v8640
    %12093 = vmatpush2.bf16.msra.mxu0 %v8639
    %12094 = vmatprep.subr.bf16.mxu0 %v8633
    %12095 = vmatpush2.bf16.msra.mxu0 %v8632
    %12096 = vmatprep.mubr.bf16.mxu0 %v11568
    %12097 = vmatmul.mubr.bf16.gmra.mxu0 %v11567
    %v12098 = vpop.f32.mrf.mxu0
    %v12099 = vadd.f32 %v12058, %v12098
    %v12100 = vpop.f32.mrf.mxu0
    %v12101 = vadd.f32 %v12060, %v12100
    %v12102 = vpop.f32.mrf.mxu0
    %v12103 = vpop.f32.mrf.mxu0
    %12104 = vdwg.mxu0
    %12105 = vmatprep.subr.bf16.mxu0 %v8738
    %12106 = vmatpush1.bf16.msra.mxu0 %v8737
    %12107 = vmatprep.subr.bf16.mxu0 %v8731
    %12108 = vmatpush1.bf16.msra.mxu0 %v8730
    %12109 = vmatprep.subr.bf16.mxu0 %v8724
    %12110 = vmatpush1.bf16.msra.mxu0 %v8723
    %12111 = vmatprep.subr.bf16.mxu0 %v8717
    %12112 = vmatpush1.bf16.msra.mxu0 %v8716
    %12113 = vmatprep.subr.bf16.mxu0 %v8710
    %12114 = vmatpush1.bf16.msra.mxu0 %v8709
    %12115 = vmatprep.subr.bf16.mxu0 %v8703
    %12116 = vmatpush1.bf16.msra.mxu0 %v8702
    %12117 = vmatprep.subr.bf16.mxu0 %v8696
    %12118 = vmatpush1.bf16.msra.mxu0 %v8695
    %12119 = vmatprep.subr.bf16.mxu0 %v8689
    %12120 = vmatpush1.bf16.msra.mxu0 %v8688
    %12121 = vmatprep.subr.bf16.mxu0 %v8794
    %12122 = vmatpush2.bf16.msra.mxu0 %v8793
    %12123 = vmatprep.subr.bf16.mxu0 %v8787
    %12124 = vmatpush2.bf16.msra.mxu0 %v8786
    %12125 = vmatprep.subr.bf16.mxu0 %v8780
    %12126 = vmatpush2.bf16.msra.mxu0 %v8779
    %12127 = vmatprep.subr.bf16.mxu0 %v8773
    %12128 = vmatpush2.bf16.msra.mxu0 %v8772
    %12129 = vmatprep.subr.bf16.mxu0 %v8766
    %12130 = vmatpush2.bf16.msra.mxu0 %v8765
    %12131 = vmatprep.subr.bf16.mxu0 %v8759
    %12132 = vmatpush2.bf16.msra.mxu0 %v8758
    %12133 = vmatprep.subr.bf16.mxu0 %v8752
    %12134 = vmatpush2.bf16.msra.mxu0 %v8751
    %12135 = vmatprep.subr.bf16.mxu0 %v8745
    %12136 = vmatpush2.bf16.msra.mxu0 %v8744
    %12137 = vmatprep.mubr.bf16.mxu0 %v11570
    %12138 = vmatmul.mubr.bf16.gmra.mxu0 %v11569
    %v12139 = vpop.f32.mrf.mxu0
    %v12140 = vadd.f32 %v12099, %v12139
    %v12141 = vpop.f32.mrf.mxu0
    %v12142 = vadd.f32 %v12101, %v12141
    %v12143 = vpop.f32.mrf.mxu0
    %v12144 = vpop.f32.mrf.mxu0
    %12145 = vdwg.mxu0
    %12146 = vmatprep.subr.bf16.mxu0 %v8850
    %12147 = vmatpush1.bf16.msra.mxu0 %v8849
    %12148 = vmatprep.subr.bf16.mxu0 %v8843
    %12149 = vmatpush1.bf16.msra.mxu0 %v8842
    %12150 = vmatprep.subr.bf16.mxu0 %v8836
    %12151 = vmatpush1.bf16.msra.mxu0 %v8835
    %12152 = vmatprep.subr.bf16.mxu0 %v8829
    %12153 = vmatpush1.bf16.msra.mxu0 %v8828
    %12154 = vmatprep.subr.bf16.mxu0 %v8822
    %12155 = vmatpush1.bf16.msra.mxu0 %v8821
    %12156 = vmatprep.subr.bf16.mxu0 %v8815
    %12157 = vmatpush1.bf16.msra.mxu0 %v8814
    %12158 = vmatprep.subr.bf16.mxu0 %v8808
    %12159 = vmatpush1.bf16.msra.mxu0 %v8807
    %12160 = vmatprep.subr.bf16.mxu0 %v8801
    %12161 = vmatpush1.bf16.msra.mxu0 %v8800
    %12162 = vmatprep.subr.bf16.mxu0 0
    %12163 = vmatpush2.bf16.msra.mxu0 0
    %12164 = vmatprep.subr.bf16.mxu0 0
    %12165 = vmatpush2.bf16.msra.mxu0 0
    %12166 = vmatprep.subr.bf16.mxu0 0
    %12167 = vmatpush2.bf16.msra.mxu0 0
    %12168 = vmatprep.subr.bf16.mxu0 0
    %12169 = vmatpush2.bf16.msra.mxu0 0
    %12170 = vmatprep.subr.bf16.mxu0 0
    %12171 = vmatpush2.bf16.msra.mxu0 0
    %12172 = vmatprep.subr.bf16.mxu0 0
    %12173 = vmatpush2.bf16.msra.mxu0 0
    %12174 = vmatprep.subr.bf16.mxu0 0
    %12175 = vmatpush2.bf16.msra.mxu0 0
    %12176 = vmatprep.subr.bf16.mxu0 0
    %12177 = vmatpush2.bf16.msra.mxu0 0
    %12178 = vmatprep.mubr.bf16.mxu0 0
    %12179 = vmatmul.mubr.bf16.gmra.mxu0 %v11571
    %v12180 = vpop.f32.mrf.mxu0
    %v12181 = vadd.f32 %v12140, %v12180
    %v12182 = vpop.f32.mrf.mxu0
    %v12183 = vadd.f32 %v12142, %v12182
    %v12184 = vpop.f32.mrf.mxu0
    %v12185 = vpop.f32.mrf.mxu0
    %12186 = vdwg.mxu0
    %12187 = vmatprep.subr.bf16.mxu0 0
    %12188 = vmatpush1.bf16.msra.mxu0 %v8403
    %12189 = vmatprep.subr.bf16.mxu0 0
    %12190 = vmatpush1.bf16.msra.mxu0 %v8396
    %12191 = vmatprep.subr.bf16.mxu0 0
    %12192 = vmatpush1.bf16.msra.mxu0 %v8389
    %12193 = vmatprep.subr.bf16.mxu0 0
    %12194 = vmatpush1.bf16.msra.mxu0 %v8382
    %12195 = vmatprep.subr.bf16.mxu0 0
    %12196 = vmatpush1.bf16.msra.mxu0 %v8375
    %12197 = vmatprep.subr.bf16.mxu0 0
    %12198 = vmatpush1.bf16.msra.mxu0 %v8368
    %12199 = vmatprep.subr.bf16.mxu0 0
    %12200 = vmatpush1.bf16.msra.mxu0 %v8361
    %12201 = vmatprep.subr.bf16.mxu0 0
    %12202 = vmatpush1.bf16.msra.mxu0 %v8354
    %12203 = vmatprep.subr.bf16.mxu0 0
    %12204 = vmatpush2.bf16.msra.mxu0 %v8459
    %12205 = vmatprep.subr.bf16.mxu0 0
    %12206 = vmatpush2.bf16.msra.mxu0 %v8452
    %12207 = vmatprep.subr.bf16.mxu0 0
    %12208 = vmatpush2.bf16.msra.mxu0 %v8445
    %12209 = vmatprep.subr.bf16.mxu0 0
    %12210 = vmatpush2.bf16.msra.mxu0 %v8438
    %12211 = vmatprep.subr.bf16.mxu0 0
    %12212 = vmatpush2.bf16.msra.mxu0 %v8431
    %12213 = vmatprep.subr.bf16.mxu0 0
    %12214 = vmatpush2.bf16.msra.mxu0 %v8424
    %12215 = vmatprep.subr.bf16.mxu0 0
    %12216 = vmatpush2.bf16.msra.mxu0 %v8417
    %12217 = vmatprep.subr.bf16.mxu0 0
    %12218 = vmatpush2.bf16.msra.mxu0 %v8410
    %12219 = vmatprep.mubr.bf16.mxu0 %v11564
    %12220 = vmatmul.mubr.bf16.gmra.mxu0 %v11563
    %v12221 = vpop.f32.mrf.mxu0
    %v12222 = vadd.f32 0.0, %v12221
    %v12223 = vpop.f32.mrf.mxu0
    %v12224 = vpop.f32.mrf.mxu0
    %v12225 = vpop.f32.mrf.mxu0
    %12226 = vdwg.mxu0
    %12227 = vmatprep.subr.bf16.mxu0 0
    %12228 = vmatpush1.bf16.msra.mxu0 %v8515
    %12229 = vmatprep.subr.bf16.mxu0 0
    %12230 = vmatpush1.bf16.msra.mxu0 %v8508
    %12231 = vmatprep.subr.bf16.mxu0 0
    %12232 = vmatpush1.bf16.msra.mxu0 %v8501
    %12233 = vmatprep.subr.bf16.mxu0 0
    %12234 = vmatpush1.bf16.msra.mxu0 %v8494
    %12235 = vmatprep.subr.bf16.mxu0 0
    %12236 = vmatpush1.bf16.msra.mxu0 %v8487
    %12237 = vmatprep.subr.bf16.mxu0 0
    %12238 = vmatpush1.bf16.msra.mxu0 %v8480
    %12239 = vmatprep.subr.bf16.mxu0 0
    %12240 = vmatpush1.bf16.msra.mxu0 %v8473
    %12241 = vmatprep.subr.bf16.mxu0 0
    %12242 = vmatpush1.bf16.msra.mxu0 %v8466
    %12243 = vmatprep.subr.bf16.mxu0 0
    %12244 = vmatpush2.bf16.msra.mxu0 %v8571
    %12245 = vmatprep.subr.bf16.mxu0 0
    %12246 = vmatpush2.bf16.msra.mxu0 %v8564
    %12247 = vmatprep.subr.bf16.mxu0 0
    %12248 = vmatpush2.bf16.msra.mxu0 %v8557
    %12249 = vmatprep.subr.bf16.mxu0 0
    %12250 = vmatpush2.bf16.msra.mxu0 %v8550
    %12251 = vmatprep.subr.bf16.mxu0 0
    %12252 = vmatpush2.bf16.msra.mxu0 %v8543
    %12253 = vmatprep.subr.bf16.mxu0 0
    %12254 = vmatpush2.bf16.msra.mxu0 %v8536
    %12255 = vmatprep.subr.bf16.mxu0 0
    %12256 = vmatpush2.bf16.msra.mxu0 %v8529
    %12257 = vmatprep.subr.bf16.mxu0 0
    %12258 = vmatpush2.bf16.msra.mxu0 %v8522
    %12259 = vmatprep.mubr.bf16.mxu0 %v11566
    %12260 = vmatmul.mubr.bf16.gmra.mxu0 %v11565
    %v12261 = vpop.f32.mrf.mxu0
    %v12262 = vadd.f32 %v12222, %v12261
    %v12263 = vpop.f32.mrf.mxu0
    %v12264 = vpop.f32.mrf.mxu0
    %v12265 = vpop.f32.mrf.mxu0
    %12266 = vdwg.mxu0
    %12267 = vmatprep.subr.bf16.mxu0 0
    %12268 = vmatpush1.bf16.msra.mxu0 %v8627
    %12269 = vmatprep.subr.bf16.mxu0 0
    %12270 = vmatpush1.bf16.msra.mxu0 %v8620
    %12271 = vmatprep.subr.bf16.mxu0 0
    %12272 = vmatpush1.bf16.msra.mxu0 %v8613
    %12273 = vmatprep.subr.bf16.mxu0 0
    %12274 = vmatpush1.bf16.msra.mxu0 %v8606
    %12275 = vmatprep.subr.bf16.mxu0 0
    %12276 = vmatpush1.bf16.msra.mxu0 %v8599
    %12277 = vmatprep.subr.bf16.mxu0 0
    %12278 = vmatpush1.bf16.msra.mxu0 %v8592
    %12279 = vmatprep.subr.bf16.mxu0 0
    %12280 = vmatpush1.bf16.msra.mxu0 %v8585
    %12281 = vmatprep.subr.bf16.mxu0 0
    %12282 = vmatpush1.bf16.msra.mxu0 %v8578
    %12283 = vmatprep.subr.bf16.mxu0 0
    %12284 = vmatpush2.bf16.msra.mxu0 %v8683
    %12285 = vmatprep.subr.bf16.mxu0 0
    %12286 = vmatpush2.bf16.msra.mxu0 %v8676
    %12287 = vmatprep.subr.bf16.mxu0 0
    %12288 = vmatpush2.bf16.msra.mxu0 %v8669
    %12289 = vmatprep.subr.bf16.mxu0 0
    %12290 = vmatpush2.bf16.msra.mxu0 %v8662
    %12291 = vmatprep.subr.bf16.mxu0 0
    %12292 = vmatpush2.bf16.msra.mxu0 %v8655
    %12293 = vmatprep.subr.bf16.mxu0 0
    %12294 = vmatpush2.bf16.msra.mxu0 %v8648
    %12295 = vmatprep.subr.bf16.mxu0 0
    %12296 = vmatpush2.bf16.msra.mxu0 %v8641
    %12297 = vmatprep.subr.bf16.mxu0 0
    %12298 = vmatpush2.bf16.msra.mxu0 %v8634
    %12299 = vmatprep.mubr.bf16.mxu0 %v11568
    %12300 = vmatmul.mubr.bf16.gmra.mxu0 %v11567
    %v12301 = vpop.f32.mrf.mxu0
    %v12302 = vadd.f32 %v12262, %v12301
    %v12303 = vpop.f32.mrf.mxu0
    %v12304 = vpop.f32.mrf.mxu0
    %v12305 = vpop.f32.mrf.mxu0
    %12306 = vdwg.mxu0
    %12307 = vmatprep.subr.bf16.mxu0 0
    %12308 = vmatpush1.bf16.msra.mxu0 %v8739
    %12309 = vmatprep.subr.bf16.mxu0 0
    %12310 = vmatpush1.bf16.msra.mxu0 %v8732
    %12311 = vmatprep.subr.bf16.mxu0 0
    %12312 = vmatpush1.bf16.msra.mxu0 %v8725
    %12313 = vmatprep.subr.bf16.mxu0 0
    %12314 = vmatpush1.bf16.msra.mxu0 %v8718
    %12315 = vmatprep.subr.bf16.mxu0 0
    %12316 = vmatpush1.bf16.msra.mxu0 %v8711
    %12317 = vmatprep.subr.bf16.mxu0 0
    %12318 = vmatpush1.bf16.msra.mxu0 %v8704
    %12319 = vmatprep.subr.bf16.mxu0 0
    %12320 = vmatpush1.bf16.msra.mxu0 %v8697
    %12321 = vmatprep.subr.bf16.mxu0 0
    %12322 = vmatpush1.bf16.msra.mxu0 %v8690
    %12323 = vmatprep.subr.bf16.mxu0 0
    %12324 = vmatpush2.bf16.msra.mxu0 %v8795
    %12325 = vmatprep.subr.bf16.mxu0 0
    %12326 = vmatpush2.bf16.msra.mxu0 %v8788
    %12327 = vmatprep.subr.bf16.mxu0 0
    %12328 = vmatpush2.bf16.msra.mxu0 %v8781
    %12329 = vmatprep.subr.bf16.mxu0 0
    %12330 = vmatpush2.bf16.msra.mxu0 %v8774
    %12331 = vmatprep.subr.bf16.mxu0 0
    %12332 = vmatpush2.bf16.msra.mxu0 %v8767
    %12333 = vmatprep.subr.bf16.mxu0 0
    %12334 = vmatpush2.bf16.msra.mxu0 %v8760
    %12335 = vmatprep.subr.bf16.mxu0 0
    %12336 = vmatpush2.bf16.msra.mxu0 %v8753
    %12337 = vmatprep.subr.bf16.mxu0 0
    %12338 = vmatpush2.bf16.msra.mxu0 %v8746
    %12339 = vmatprep.mubr.bf16.mxu0 %v11570
    %12340 = vmatmul.mubr.bf16.gmra.mxu0 %v11569
    %v12341 = vpop.f32.mrf.mxu0
    %v12342 = vadd.f32 %v12302, %v12341
    %v12343 = vpop.f32.mrf.mxu0
    %v12344 = vpop.f32.mrf.mxu0
    %v12345 = vpop.f32.mrf.mxu0
    %12346 = vdwg.mxu0
    %12347 = vmatprep.subr.bf16.mxu0 0
    %12348 = vmatpush1.bf16.msra.mxu0 %v8851
    %12349 = vmatprep.subr.bf16.mxu0 0
    %12350 = vmatpush1.bf16.msra.mxu0 %v8844
    %12351 = vmatprep.subr.bf16.mxu0 0
    %12352 = vmatpush1.bf16.msra.mxu0 %v8837
    %12353 = vmatprep.subr.bf16.mxu0 0
    %12354 = vmatpush1.bf16.msra.mxu0 %v8830
    %12355 = vmatprep.subr.bf16.mxu0 0
    %12356 = vmatpush1.bf16.msra.mxu0 %v8823
    %12357 = vmatprep.subr.bf16.mxu0 0
    %12358 = vmatpush1.bf16.msra.mxu0 %v8816
    %12359 = vmatprep.subr.bf16.mxu0 0
    %12360 = vmatpush1.bf16.msra.mxu0 %v8809
    %12361 = vmatprep.subr.bf16.mxu0 0
    %12362 = vmatpush1.bf16.msra.mxu0 %v8802
    %12363 = vmatprep.subr.bf16.mxu0 0
    %12364 = vmatpush2.bf16.msra.mxu0 0
    %12365 = vmatprep.subr.bf16.mxu0 0
    %12366 = vmatpush2.bf16.msra.mxu0 0
    %12367 = vmatprep.subr.bf16.mxu0 0
    %12368 = vmatpush2.bf16.msra.mxu0 0
    %12369 = vmatprep.subr.bf16.mxu0 0
    %12370 = vmatpush2.bf16.msra.mxu0 0
    %12371 = vmatprep.subr.bf16.mxu0 0
    %12372 = vmatpush2.bf16.msra.mxu0 0
    %12373 = vmatprep.subr.bf16.mxu0 0
    %12374 = vmatpush2.bf16.msra.mxu0 0
    %12375 = vmatprep.subr.bf16.mxu0 0
    %12376 = vmatpush2.bf16.msra.mxu0 0
    %12377 = vmatprep.subr.bf16.mxu0 0
    %12378 = vmatpush2.bf16.msra.mxu0 0
    %12379 = vmatprep.mubr.bf16.mxu0 0
    %12380 = vmatmul.mubr.bf16.gmra.mxu0 %v11571
    %v12381 = vpop.f32.mrf.mxu0
    %v12382 = vadd.f32 %v12342, %v12381
    %v12383 = vpop.f32.mrf.mxu0
    %v12384 = vpop.f32.mrf.mxu0
    %v12385 = vpop.f32.mrf.mxu0
    %12386 = vdwg.mxu0
    %v12387 = vsub.f32 %v11771, %v74
    %v12388 = vsub.f32 %v11773, %v82
    %v12389 = vsub.f32 %v11976, %v81
    %v12390 = vsub.f32 %v11978, %v83
    %v12391 = vsub.f32 %v12181, %v91
    %v12392 = vsub.f32 %v12183, %v99
    %v12393 = vsub.f32 %v12382, %v98
    %v12394 = vpack.c.bf16 %v12387, %v12387
    %v12395 = vpack.c.bf16 %v12388, %v12388
    %v12396 = vpack.c.bf16 %v12389, %v12389
    %v12397 = vpack.c.bf16 %v12390, %v12390
    %v12398 = vpack.c.bf16 %v12391, %v12391
    %v12399 = vpack.c.bf16 %v12392, %v12392
    %v12400 = vpack.c.bf16 %v12393, %v12393
    %v12402 = vsel %vm2905, %v12400, 0
    %12404 = vmatprep.subr.bf16.mxu0 %v2087
    %12405 = vmatpush1.bf16.msra.mxu0 %v2086
    %12406 = vmatprep.subr.bf16.mxu0 %v2078
    %12407 = vmatpush1.bf16.msra.mxu0 %v2077
    %12408 = vmatprep.subr.bf16.mxu0 %v2069
    %12409 = vmatpush1.bf16.msra.mxu0 %v2068
    %12410 = vmatprep.subr.bf16.mxu0 %v2060
    %12411 = vmatpush1.bf16.msra.mxu0 %v2059
    %12412 = vmatprep.subr.bf16.mxu0 %v2051
    %12413 = vmatpush1.bf16.msra.mxu0 %v2050
    %12414 = vmatprep.subr.bf16.mxu0 %v2042
    %12415 = vmatpush1.bf16.msra.mxu0 %v2041
    %12416 = vmatprep.subr.bf16.mxu0 %v2033
    %12417 = vmatpush1.bf16.msra.mxu0 %v2032
    %12418 = vmatprep.subr.bf16.mxu0 %v2024
    %12419 = vmatpush1.bf16.msra.mxu0 %v2023
    %12420 = vmatprep.subr.bf16.mxu0 %v2159
    %12421 = vmatpush2.bf16.msra.mxu0 %v2158
    %12422 = vmatprep.subr.bf16.mxu0 %v2150
    %12423 = vmatpush2.bf16.msra.mxu0 %v2149
    %12424 = vmatprep.subr.bf16.mxu0 %v2141
    %12425 = vmatpush2.bf16.msra.mxu0 %v2140
    %12426 = vmatprep.subr.bf16.mxu0 %v2132
    %12427 = vmatpush2.bf16.msra.mxu0 %v2131
    %12428 = vmatprep.subr.bf16.mxu0 %v2123
    %12429 = vmatpush2.bf16.msra.mxu0 %v2122
    %12430 = vmatprep.subr.bf16.mxu0 %v2114
    %12431 = vmatpush2.bf16.msra.mxu0 %v2113
    %12432 = vmatprep.subr.bf16.mxu0 %v2105
    %12433 = vmatpush2.bf16.msra.mxu0 %v2104
    %12434 = vmatprep.subr.bf16.mxu0 %v2096
    %12435 = vmatpush2.bf16.msra.mxu0 %v2095
    %12436 = vmatprep.mubr.bf16.mxu0 %v12395
    %12437 = vmatmul.mubr.bf16.gmra.mxu0 %v12394
    %v12438 = vpop.f32.mrf.mxu0
    %v12439 = vadd.f32 0.0, %v12438
    %v12440 = vpop.f32.mrf.mxu0
    %v12441 = vadd.f32 0.0, %v12440
    %v12442 = vpop.f32.mrf.mxu0
    %v12443 = vpop.f32.mrf.mxu0
    %12444 = vdwg.mxu0
    %12445 = vmatprep.subr.bf16.mxu0 %v2231
    %12446 = vmatpush1.bf16.msra.mxu0 %v2230
    %12447 = vmatprep.subr.bf16.mxu0 %v2222
    %12448 = vmatpush1.bf16.msra.mxu0 %v2221
    %12449 = vmatprep.subr.bf16.mxu0 %v2213
    %12450 = vmatpush1.bf16.msra.mxu0 %v2212
    %12451 = vmatprep.subr.bf16.mxu0 %v2204
    %12452 = vmatpush1.bf16.msra.mxu0 %v2203
    %12453 = vmatprep.subr.bf16.mxu0 %v2195
    %12454 = vmatpush1.bf16.msra.mxu0 %v2194
    %12455 = vmatprep.subr.bf16.mxu0 %v2186
    %12456 = vmatpush1.bf16.msra.mxu0 %v2185
    %12457 = vmatprep.subr.bf16.mxu0 %v2177
    %12458 = vmatpush1.bf16.msra.mxu0 %v2176
    %12459 = vmatprep.subr.bf16.mxu0 %v2168
    %12460 = vmatpush1.bf16.msra.mxu0 %v2167
    %12461 = vmatprep.subr.bf16.mxu0 %v2303
    %12462 = vmatpush2.bf16.msra.mxu0 %v2302
    %12463 = vmatprep.subr.bf16.mxu0 %v2294
    %12464 = vmatpush2.bf16.msra.mxu0 %v2293
    %12465 = vmatprep.subr.bf16.mxu0 %v2285
    %12466 = vmatpush2.bf16.msra.mxu0 %v2284
    %12467 = vmatprep.subr.bf16.mxu0 %v2276
    %12468 = vmatpush2.bf16.msra.mxu0 %v2275
    %12469 = vmatprep.subr.bf16.mxu0 %v2267
    %12470 = vmatpush2.bf16.msra.mxu0 %v2266
    %12471 = vmatprep.subr.bf16.mxu0 %v2258
    %12472 = vmatpush2.bf16.msra.mxu0 %v2257
    %12473 = vmatprep.subr.bf16.mxu0 %v2249
    %12474 = vmatpush2.bf16.msra.mxu0 %v2248
    %12475 = vmatprep.subr.bf16.mxu0 %v2240
    %12476 = vmatpush2.bf16.msra.mxu0 %v2239
    %12477 = vmatprep.mubr.bf16.mxu0 %v12397
    %12478 = vmatmul.mubr.bf16.gmra.mxu0 %v12396
    %v12479 = vpop.f32.mrf.mxu0
    %v12480 = vadd.f32 %v12439, %v12479
    %v12481 = vpop.f32.mrf.mxu0
    %v12482 = vadd.f32 %v12441, %v12481
    %v12483 = vpop.f32.mrf.mxu0
    %v12484 = vpop.f32.mrf.mxu0
    %12485 = vdwg.mxu0
    %12486 = vmatprep.subr.bf16.mxu0 %v2375
    %12487 = vmatpush1.bf16.msra.mxu0 %v2374
    %12488 = vmatprep.subr.bf16.mxu0 %v2366
    %12489 = vmatpush1.bf16.msra.mxu0 %v2365
    %12490 = vmatprep.subr.bf16.mxu0 %v2357
    %12491 = vmatpush1.bf16.msra.mxu0 %v2356
    %12492 = vmatprep.subr.bf16.mxu0 %v2348
    %12493 = vmatpush1.bf16.msra.mxu0 %v2347
    %12494 = vmatprep.subr.bf16.mxu0 %v2339
    %12495 = vmatpush1.bf16.msra.mxu0 %v2338
    %12496 = vmatprep.subr.bf16.mxu0 %v2330
    %12497 = vmatpush1.bf16.msra.mxu0 %v2329
    %12498 = vmatprep.subr.bf16.mxu0 %v2321
    %12499 = vmatpush1.bf16.msra.mxu0 %v2320
    %12500 = vmatprep.subr.bf16.mxu0 %v2312
    %12501 = vmatpush1.bf16.msra.mxu0 %v2311
    %12502 = vmatprep.subr.bf16.mxu0 %v2447
    %12503 = vmatpush2.bf16.msra.mxu0 %v2446
    %12504 = vmatprep.subr.bf16.mxu0 %v2438
    %12505 = vmatpush2.bf16.msra.mxu0 %v2437
    %12506 = vmatprep.subr.bf16.mxu0 %v2429
    %12507 = vmatpush2.bf16.msra.mxu0 %v2428
    %12508 = vmatprep.subr.bf16.mxu0 %v2420
    %12509 = vmatpush2.bf16.msra.mxu0 %v2419
    %12510 = vmatprep.subr.bf16.mxu0 %v2411
    %12511 = vmatpush2.bf16.msra.mxu0 %v2410
    %12512 = vmatprep.subr.bf16.mxu0 %v2402
    %12513 = vmatpush2.bf16.msra.mxu0 %v2401
    %12514 = vmatprep.subr.bf16.mxu0 %v2393
    %12515 = vmatpush2.bf16.msra.mxu0 %v2392
    %12516 = vmatprep.subr.bf16.mxu0 %v2384
    %12517 = vmatpush2.bf16.msra.mxu0 %v2383
    %12518 = vmatprep.mubr.bf16.mxu0 %v12399
    %12519 = vmatmul.mubr.bf16.gmra.mxu0 %v12398
    %v12520 = vpop.f32.mrf.mxu0
    %v12521 = vadd.f32 %v12480, %v12520
    %v12522 = vpop.f32.mrf.mxu0
    %v12523 = vadd.f32 %v12482, %v12522
    %v12524 = vpop.f32.mrf.mxu0
    %v12525 = vpop.f32.mrf.mxu0
    %12526 = vdwg.mxu0
    %12527 = vmatprep.subr.bf16.mxu0 0
    %12528 = vmatpush1.bf16.msra.mxu0 0
    %12529 = vmatprep.subr.bf16.mxu0 0
    %12530 = vmatpush1.bf16.msra.mxu0 0
    %12531 = vmatprep.subr.bf16.mxu0 0
    %12532 = vmatpush1.bf16.msra.mxu0 0
    %12533 = vmatprep.subr.bf16.mxu0 0
    %12534 = vmatpush1.bf16.msra.mxu0 0
    %12535 = vmatprep.subr.bf16.mxu0 0
    %12536 = vmatpush1.bf16.msra.mxu0 0
    %12537 = vmatprep.subr.bf16.mxu0 0
    %12538 = vmatpush1.bf16.msra.mxu0 0
    %12539 = vmatprep.subr.bf16.mxu0 0
    %12540 = vmatpush1.bf16.msra.mxu0 0
    %12541 = vmatprep.subr.bf16.mxu0 %v2456
    %12542 = vmatpush1.bf16.msra.mxu0 %v2455
    %12543 = vmatprep.subr.bf16.mxu0 0
    %12544 = vmatpush2.bf16.msra.mxu0 0
    %12545 = vmatprep.subr.bf16.mxu0 0
    %12546 = vmatpush2.bf16.msra.mxu0 0
    %12547 = vmatprep.subr.bf16.mxu0 0
    %12548 = vmatpush2.bf16.msra.mxu0 0
    %12549 = vmatprep.subr.bf16.mxu0 0
    %12550 = vmatpush2.bf16.msra.mxu0 0
    %12551 = vmatprep.subr.bf16.mxu0 0
    %12552 = vmatpush2.bf16.msra.mxu0 0
    %12553 = vmatprep.subr.bf16.mxu0 0
    %12554 = vmatpush2.bf16.msra.mxu0 0
    %12555 = vmatprep.subr.bf16.mxu0 0
    %12556 = vmatpush2.bf16.msra.mxu0 0
    %12557 = vmatprep.subr.bf16.mxu0 0
    %12558 = vmatpush2.bf16.msra.mxu0 0
    %12559 = vmatprep.mubr.bf16.mxu0 0
    %12560 = vmatmul.mubr.bf16.gmra.mxu0 %v12402
    %v12561 = vpop.f32.mrf.mxu0
    %v12562 = vadd.f32 %v12521, %v12561
    %v12563 = vpop.f32.mrf.mxu0
    %v12564 = vadd.f32 %v12523, %v12563
    %v12565 = vpop.f32.mrf.mxu0
    %v12566 = vpop.f32.mrf.mxu0
    %12567 = vdwg.mxu0
    %12568 = vmatprep.subr.bf16.mxu0 %v2089
    %12569 = vmatpush1.bf16.msra.mxu0 %v2088
    %12570 = vmatprep.subr.bf16.mxu0 %v2080
    %12571 = vmatpush1.bf16.msra.mxu0 %v2079
    %12572 = vmatprep.subr.bf16.mxu0 %v2071
    %12573 = vmatpush1.bf16.msra.mxu0 %v2070
    %12574 = vmatprep.subr.bf16.mxu0 %v2062
    %12575 = vmatpush1.bf16.msra.mxu0 %v2061
    %12576 = vmatprep.subr.bf16.mxu0 %v2053
    %12577 = vmatpush1.bf16.msra.mxu0 %v2052
    %12578 = vmatprep.subr.bf16.mxu0 %v2044
    %12579 = vmatpush1.bf16.msra.mxu0 %v2043
    %12580 = vmatprep.subr.bf16.mxu0 %v2035
    %12581 = vmatpush1.bf16.msra.mxu0 %v2034
    %12582 = vmatprep.subr.bf16.mxu0 %v2026
    %12583 = vmatpush1.bf16.msra.mxu0 %v2025
    %12584 = vmatprep.subr.bf16.mxu0 %v2161
    %12585 = vmatpush2.bf16.msra.mxu0 %v2160
    %12586 = vmatprep.subr.bf16.mxu0 %v2152
    %12587 = vmatpush2.bf16.msra.mxu0 %v2151
    %12588 = vmatprep.subr.bf16.mxu0 %v2143
    %12589 = vmatpush2.bf16.msra.mxu0 %v2142
    %12590 = vmatprep.subr.bf16.mxu0 %v2134
    %12591 = vmatpush2.bf16.msra.mxu0 %v2133
    %12592 = vmatprep.subr.bf16.mxu0 %v2125
    %12593 = vmatpush2.bf16.msra.mxu0 %v2124
    %12594 = vmatprep.subr.bf16.mxu0 %v2116
    %12595 = vmatpush2.bf16.msra.mxu0 %v2115
    %12596 = vmatprep.subr.bf16.mxu0 %v2107
    %12597 = vmatpush2.bf16.msra.mxu0 %v2106
    %12598 = vmatprep.subr.bf16.mxu0 %v2098
    %12599 = vmatpush2.bf16.msra.mxu0 %v2097
    %12600 = vmatprep.mubr.bf16.mxu0 %v12395
    %12601 = vmatmul.mubr.bf16.gmra.mxu0 %v12394
    %v12602 = vpop.f32.mrf.mxu0
    %v12603 = vadd.f32 0.0, %v12602
    %v12604 = vpop.f32.mrf.mxu0
    %v12605 = vadd.f32 0.0, %v12604
    %v12606 = vpop.f32.mrf.mxu0
    %v12607 = vpop.f32.mrf.mxu0
    %12608 = vdwg.mxu0
    %12609 = vmatprep.subr.bf16.mxu0 %v2233
    %12610 = vmatpush1.bf16.msra.mxu0 %v2232
    %12611 = vmatprep.subr.bf16.mxu0 %v2224
    %12612 = vmatpush1.bf16.msra.mxu0 %v2223
    %12613 = vmatprep.subr.bf16.mxu0 %v2215
    %12614 = vmatpush1.bf16.msra.mxu0 %v2214
    %12615 = vmatprep.subr.bf16.mxu0 %v2206
    %12616 = vmatpush1.bf16.msra.mxu0 %v2205
    %12617 = vmatprep.subr.bf16.mxu0 %v2197
    %12618 = vmatpush1.bf16.msra.mxu0 %v2196
    %12619 = vmatprep.subr.bf16.mxu0 %v2188
    %12620 = vmatpush1.bf16.msra.mxu0 %v2187
    %12621 = vmatprep.subr.bf16.mxu0 %v2179
    %12622 = vmatpush1.bf16.msra.mxu0 %v2178
    %12623 = vmatprep.subr.bf16.mxu0 %v2170
    %12624 = vmatpush1.bf16.msra.mxu0 %v2169
    %12625 = vmatprep.subr.bf16.mxu0 %v2305
    %12626 = vmatpush2.bf16.msra.mxu0 %v2304
    %12627 = vmatprep.subr.bf16.mxu0 %v2296
    %12628 = vmatpush2.bf16.msra.mxu0 %v2295
    %12629 = vmatprep.subr.bf16.mxu0 %v2287
    %12630 = vmatpush2.bf16.msra.mxu0 %v2286
    %12631 = vmatprep.subr.bf16.mxu0 %v2278
    %12632 = vmatpush2.bf16.msra.mxu0 %v2277
    %12633 = vmatprep.subr.bf16.mxu0 %v2269
    %12634 = vmatpush2.bf16.msra.mxu0 %v2268
    %12635 = vmatprep.subr.bf16.mxu0 %v2260
    %12636 = vmatpush2.bf16.msra.mxu0 %v2259
    %12637 = vmatprep.subr.bf16.mxu0 %v2251
    %12638 = vmatpush2.bf16.msra.mxu0 %v2250
    %12639 = vmatprep.subr.bf16.mxu0 %v2242
    %12640 = vmatpush2.bf16.msra.mxu0 %v2241
    %12641 = vmatprep.mubr.bf16.mxu0 %v12397
    %12642 = vmatmul.mubr.bf16.gmra.mxu0 %v12396
    %v12643 = vpop.f32.mrf.mxu0
    %v12644 = vadd.f32 %v12603, %v12643
    %v12645 = vpop.f32.mrf.mxu0
    %v12646 = vadd.f32 %v12605, %v12645
    %v12647 = vpop.f32.mrf.mxu0
    %v12648 = vpop.f32.mrf.mxu0
    %12649 = vdwg.mxu0
    %12650 = vmatprep.subr.bf16.mxu0 %v2377
    %12651 = vmatpush1.bf16.msra.mxu0 %v2376
    %12652 = vmatprep.subr.bf16.mxu0 %v2368
    %12653 = vmatpush1.bf16.msra.mxu0 %v2367
    %12654 = vmatprep.subr.bf16.mxu0 %v2359
    %12655 = vmatpush1.bf16.msra.mxu0 %v2358
    %12656 = vmatprep.subr.bf16.mxu0 %v2350
    %12657 = vmatpush1.bf16.msra.mxu0 %v2349
    %12658 = vmatprep.subr.bf16.mxu0 %v2341
    %12659 = vmatpush1.bf16.msra.mxu0 %v2340
    %12660 = vmatprep.subr.bf16.mxu0 %v2332
    %12661 = vmatpush1.bf16.msra.mxu0 %v2331
    %12662 = vmatprep.subr.bf16.mxu0 %v2323
    %12663 = vmatpush1.bf16.msra.mxu0 %v2322
    %12664 = vmatprep.subr.bf16.mxu0 %v2314
    %12665 = vmatpush1.bf16.msra.mxu0 %v2313
    %12666 = vmatprep.subr.bf16.mxu0 %v2449
    %12667 = vmatpush2.bf16.msra.mxu0 %v2448
    %12668 = vmatprep.subr.bf16.mxu0 %v2440
    %12669 = vmatpush2.bf16.msra.mxu0 %v2439
    %12670 = vmatprep.subr.bf16.mxu0 %v2431
    %12671 = vmatpush2.bf16.msra.mxu0 %v2430
    %12672 = vmatprep.subr.bf16.mxu0 %v2422
    %12673 = vmatpush2.bf16.msra.mxu0 %v2421
    %12674 = vmatprep.subr.bf16.mxu0 %v2413
    %12675 = vmatpush2.bf16.msra.mxu0 %v2412
    %12676 = vmatprep.subr.bf16.mxu0 %v2404
    %12677 = vmatpush2.bf16.msra.mxu0 %v2403
    %12678 = vmatprep.subr.bf16.mxu0 %v2395
    %12679 = vmatpush2.bf16.msra.mxu0 %v2394
    %12680 = vmatprep.subr.bf16.mxu0 %v2386
    %12681 = vmatpush2.bf16.msra.mxu0 %v2385
    %12682 = vmatprep.mubr.bf16.mxu0 %v12399
    %12683 = vmatmul.mubr.bf16.gmra.mxu0 %v12398
    %v12684 = vpop.f32.mrf.mxu0
    %v12685 = vadd.f32 %v12644, %v12684
    %v12686 = vpop.f32.mrf.mxu0
    %v12687 = vadd.f32 %v12646, %v12686
    %v12688 = vpop.f32.mrf.mxu0
    %v12689 = vpop.f32.mrf.mxu0
    %12690 = vdwg.mxu0
    %12691 = vmatprep.subr.bf16.mxu0 0
    %12692 = vmatpush1.bf16.msra.mxu0 0
    %12693 = vmatprep.subr.bf16.mxu0 0
    %12694 = vmatpush1.bf16.msra.mxu0 0
    %12695 = vmatprep.subr.bf16.mxu0 0
    %12696 = vmatpush1.bf16.msra.mxu0 0
    %12697 = vmatprep.subr.bf16.mxu0 0
    %12698 = vmatpush1.bf16.msra.mxu0 0
    %12699 = vmatprep.subr.bf16.mxu0 0
    %12700 = vmatpush1.bf16.msra.mxu0 0
    %12701 = vmatprep.subr.bf16.mxu0 0
    %12702 = vmatpush1.bf16.msra.mxu0 0
    %12703 = vmatprep.subr.bf16.mxu0 0
    %12704 = vmatpush1.bf16.msra.mxu0 0
    %12705 = vmatprep.subr.bf16.mxu0 %v2458
    %12706 = vmatpush1.bf16.msra.mxu0 %v2457
    %12707 = vmatprep.subr.bf16.mxu0 0
    %12708 = vmatpush2.bf16.msra.mxu0 0
    %12709 = vmatprep.subr.bf16.mxu0 0
    %12710 = vmatpush2.bf16.msra.mxu0 0
    %12711 = vmatprep.subr.bf16.mxu0 0
    %12712 = vmatpush2.bf16.msra.mxu0 0
    %12713 = vmatprep.subr.bf16.mxu0 0
    %12714 = vmatpush2.bf16.msra.mxu0 0
    %12715 = vmatprep.subr.bf16.mxu0 0
    %12716 = vmatpush2.bf16.msra.mxu0 0
    %12717 = vmatprep.subr.bf16.mxu0 0
    %12718 = vmatpush2.bf16.msra.mxu0 0
    %12719 = vmatprep.subr.bf16.mxu0 0
    %12720 = vmatpush2.bf16.msra.mxu0 0
    %12721 = vmatprep.subr.bf16.mxu0 0
    %12722 = vmatpush2.bf16.msra.mxu0 0
    %12723 = vmatprep.mubr.bf16.mxu0 0
    %12724 = vmatmul.mubr.bf16.gmra.mxu0 %v12402
    %v12725 = vpop.f32.mrf.mxu0
    %v12726 = vadd.f32 %v12685, %v12725
    %v12727 = vpop.f32.mrf.mxu0
    %v12728 = vadd.f32 %v12687, %v12727
    %v12729 = vpop.f32.mrf.mxu0
    %v12730 = vpop.f32.mrf.mxu0
    %12731 = vdwg.mxu0
    %12732 = vmatprep.subr.bf16.mxu0 %v2091
    %12733 = vmatpush1.bf16.msra.mxu0 %v2090
    %12734 = vmatprep.subr.bf16.mxu0 %v2082
    %12735 = vmatpush1.bf16.msra.mxu0 %v2081
    %12736 = vmatprep.subr.bf16.mxu0 %v2073
    %12737 = vmatpush1.bf16.msra.mxu0 %v2072
    %12738 = vmatprep.subr.bf16.mxu0 %v2064
    %12739 = vmatpush1.bf16.msra.mxu0 %v2063
    %12740 = vmatprep.subr.bf16.mxu0 %v2055
    %12741 = vmatpush1.bf16.msra.mxu0 %v2054
    %12742 = vmatprep.subr.bf16.mxu0 %v2046
    %12743 = vmatpush1.bf16.msra.mxu0 %v2045
    %12744 = vmatprep.subr.bf16.mxu0 %v2037
    %12745 = vmatpush1.bf16.msra.mxu0 %v2036
    %12746 = vmatprep.subr.bf16.mxu0 %v2028
    %12747 = vmatpush1.bf16.msra.mxu0 %v2027
    %12748 = vmatprep.subr.bf16.mxu0 %v2163
    %12749 = vmatpush2.bf16.msra.mxu0 %v2162
    %12750 = vmatprep.subr.bf16.mxu0 %v2154
    %12751 = vmatpush2.bf16.msra.mxu0 %v2153
    %12752 = vmatprep.subr.bf16.mxu0 %v2145
    %12753 = vmatpush2.bf16.msra.mxu0 %v2144
    %12754 = vmatprep.subr.bf16.mxu0 %v2136
    %12755 = vmatpush2.bf16.msra.mxu0 %v2135
    %12756 = vmatprep.subr.bf16.mxu0 %v2127
    %12757 = vmatpush2.bf16.msra.mxu0 %v2126
    %12758 = vmatprep.subr.bf16.mxu0 %v2118
    %12759 = vmatpush2.bf16.msra.mxu0 %v2117
    %12760 = vmatprep.subr.bf16.mxu0 %v2109
    %12761 = vmatpush2.bf16.msra.mxu0 %v2108
    %12762 = vmatprep.subr.bf16.mxu0 %v2100
    %12763 = vmatpush2.bf16.msra.mxu0 %v2099
    %12764 = vmatprep.mubr.bf16.mxu0 %v12395
    %12765 = vmatmul.mubr.bf16.gmra.mxu0 %v12394
    %v12766 = vpop.f32.mrf.mxu0
    %v12767 = vadd.f32 0.0, %v12766
    %v12768 = vpop.f32.mrf.mxu0
    %v12769 = vadd.f32 0.0, %v12768
    %v12770 = vpop.f32.mrf.mxu0
    %v12771 = vpop.f32.mrf.mxu0
    %12772 = vdwg.mxu0
    %12773 = vmatprep.subr.bf16.mxu0 %v2235
    %12774 = vmatpush1.bf16.msra.mxu0 %v2234
    %12775 = vmatprep.subr.bf16.mxu0 %v2226
    %12776 = vmatpush1.bf16.msra.mxu0 %v2225
    %12777 = vmatprep.subr.bf16.mxu0 %v2217
    %12778 = vmatpush1.bf16.msra.mxu0 %v2216
    %12779 = vmatprep.subr.bf16.mxu0 %v2208
    %12780 = vmatpush1.bf16.msra.mxu0 %v2207
    %12781 = vmatprep.subr.bf16.mxu0 %v2199
    %12782 = vmatpush1.bf16.msra.mxu0 %v2198
    %12783 = vmatprep.subr.bf16.mxu0 %v2190
    %12784 = vmatpush1.bf16.msra.mxu0 %v2189
    %12785 = vmatprep.subr.bf16.mxu0 %v2181
    %12786 = vmatpush1.bf16.msra.mxu0 %v2180
    %12787 = vmatprep.subr.bf16.mxu0 %v2172
    %12788 = vmatpush1.bf16.msra.mxu0 %v2171
    %12789 = vmatprep.subr.bf16.mxu0 %v2307
    %12790 = vmatpush2.bf16.msra.mxu0 %v2306
    %12791 = vmatprep.subr.bf16.mxu0 %v2298
    %12792 = vmatpush2.bf16.msra.mxu0 %v2297
    %12793 = vmatprep.subr.bf16.mxu0 %v2289
    %12794 = vmatpush2.bf16.msra.mxu0 %v2288
    %12795 = vmatprep.subr.bf16.mxu0 %v2280
    %12796 = vmatpush2.bf16.msra.mxu0 %v2279
    %12797 = vmatprep.subr.bf16.mxu0 %v2271
    %12798 = vmatpush2.bf16.msra.mxu0 %v2270
    %12799 = vmatprep.subr.bf16.mxu0 %v2262
    %12800 = vmatpush2.bf16.msra.mxu0 %v2261
    %12801 = vmatprep.subr.bf16.mxu0 %v2253
    %12802 = vmatpush2.bf16.msra.mxu0 %v2252
    %12803 = vmatprep.subr.bf16.mxu0 %v2244
    %12804 = vmatpush2.bf16.msra.mxu0 %v2243
    %12805 = vmatprep.mubr.bf16.mxu0 %v12397
    %12806 = vmatmul.mubr.bf16.gmra.mxu0 %v12396
    %v12807 = vpop.f32.mrf.mxu0
    %v12808 = vadd.f32 %v12767, %v12807
    %v12809 = vpop.f32.mrf.mxu0
    %v12810 = vadd.f32 %v12769, %v12809
    %v12811 = vpop.f32.mrf.mxu0
    %v12812 = vpop.f32.mrf.mxu0
    %12813 = vdwg.mxu0
    %12814 = vmatprep.subr.bf16.mxu0 %v2379
    %12815 = vmatpush1.bf16.msra.mxu0 %v2378
    %12816 = vmatprep.subr.bf16.mxu0 %v2370
    %12817 = vmatpush1.bf16.msra.mxu0 %v2369
    %12818 = vmatprep.subr.bf16.mxu0 %v2361
    %12819 = vmatpush1.bf16.msra.mxu0 %v2360
    %12820 = vmatprep.subr.bf16.mxu0 %v2352
    %12821 = vmatpush1.bf16.msra.mxu0 %v2351
    %12822 = vmatprep.subr.bf16.mxu0 %v2343
    %12823 = vmatpush1.bf16.msra.mxu0 %v2342
    %12824 = vmatprep.subr.bf16.mxu0 %v2334
    %12825 = vmatpush1.bf16.msra.mxu0 %v2333
    %12826 = vmatprep.subr.bf16.mxu0 %v2325
    %12827 = vmatpush1.bf16.msra.mxu0 %v2324
    %12828 = vmatprep.subr.bf16.mxu0 %v2316
    %12829 = vmatpush1.bf16.msra.mxu0 %v2315
    %12830 = vmatprep.subr.bf16.mxu0 %v2451
    %12831 = vmatpush2.bf16.msra.mxu0 %v2450
    %12832 = vmatprep.subr.bf16.mxu0 %v2442
    %12833 = vmatpush2.bf16.msra.mxu0 %v2441
    %12834 = vmatprep.subr.bf16.mxu0 %v2433
    %12835 = vmatpush2.bf16.msra.mxu0 %v2432
    %12836 = vmatprep.subr.bf16.mxu0 %v2424
    %12837 = vmatpush2.bf16.msra.mxu0 %v2423
    %12838 = vmatprep.subr.bf16.mxu0 %v2415
    %12839 = vmatpush2.bf16.msra.mxu0 %v2414
    %12840 = vmatprep.subr.bf16.mxu0 %v2406
    %12841 = vmatpush2.bf16.msra.mxu0 %v2405
    %12842 = vmatprep.subr.bf16.mxu0 %v2397
    %12843 = vmatpush2.bf16.msra.mxu0 %v2396
    %12844 = vmatprep.subr.bf16.mxu0 %v2388
    %12845 = vmatpush2.bf16.msra.mxu0 %v2387
    %12846 = vmatprep.mubr.bf16.mxu0 %v12399
    %12847 = vmatmul.mubr.bf16.gmra.mxu0 %v12398
    %v12848 = vpop.f32.mrf.mxu0
    %v12849 = vadd.f32 %v12808, %v12848
    %v12850 = vpop.f32.mrf.mxu0
    %v12851 = vadd.f32 %v12810, %v12850
    %v12852 = vpop.f32.mrf.mxu0
    %v12853 = vpop.f32.mrf.mxu0
    %12854 = vdwg.mxu0
    %12855 = vmatprep.subr.bf16.mxu0 0
    %12856 = vmatpush1.bf16.msra.mxu0 0
    %12857 = vmatprep.subr.bf16.mxu0 0
    %12858 = vmatpush1.bf16.msra.mxu0 0
    %12859 = vmatprep.subr.bf16.mxu0 0
    %12860 = vmatpush1.bf16.msra.mxu0 0
    %12861 = vmatprep.subr.bf16.mxu0 0
    %12862 = vmatpush1.bf16.msra.mxu0 0
    %12863 = vmatprep.subr.bf16.mxu0 0
    %12864 = vmatpush1.bf16.msra.mxu0 0
    %12865 = vmatprep.subr.bf16.mxu0 0
    %12866 = vmatpush1.bf16.msra.mxu0 0
    %12867 = vmatprep.subr.bf16.mxu0 0
    %12868 = vmatpush1.bf16.msra.mxu0 0
    %12869 = vmatprep.subr.bf16.mxu0 %v2460
    %12870 = vmatpush1.bf16.msra.mxu0 %v2459
    %12871 = vmatprep.subr.bf16.mxu0 0
    %12872 = vmatpush2.bf16.msra.mxu0 0
    %12873 = vmatprep.subr.bf16.mxu0 0
    %12874 = vmatpush2.bf16.msra.mxu0 0
    %12875 = vmatprep.subr.bf16.mxu0 0
    %12876 = vmatpush2.bf16.msra.mxu0 0
    %12877 = vmatprep.subr.bf16.mxu0 0
    %12878 = vmatpush2.bf16.msra.mxu0 0
    %12879 = vmatprep.subr.bf16.mxu0 0
    %12880 = vmatpush2.bf16.msra.mxu0 0
    %12881 = vmatprep.subr.bf16.mxu0 0
    %12882 = vmatpush2.bf16.msra.mxu0 0
    %12883 = vmatprep.subr.bf16.mxu0 0
    %12884 = vmatpush2.bf16.msra.mxu0 0
    %12885 = vmatprep.subr.bf16.mxu0 0
    %12886 = vmatpush2.bf16.msra.mxu0 0
    %12887 = vmatprep.mubr.bf16.mxu0 0
    %12888 = vmatmul.mubr.bf16.gmra.mxu0 %v12402
    %v12889 = vpop.f32.mrf.mxu0
    %v12890 = vadd.f32 %v12849, %v12889
    %v12891 = vpop.f32.mrf.mxu0
    %v12892 = vadd.f32 %v12851, %v12891
    %v12893 = vpop.f32.mrf.mxu0
    %v12894 = vpop.f32.mrf.mxu0
    %12895 = vdwg.mxu0
    %12896 = vmatprep.subr.bf16.mxu0 %v2093
    %12897 = vmatpush1.bf16.msra.mxu0 %v2092
    %12898 = vmatprep.subr.bf16.mxu0 %v2084
    %12899 = vmatpush1.bf16.msra.mxu0 %v2083
    %12900 = vmatprep.subr.bf16.mxu0 %v2075
    %12901 = vmatpush1.bf16.msra.mxu0 %v2074
    %12902 = vmatprep.subr.bf16.mxu0 %v2066
    %12903 = vmatpush1.bf16.msra.mxu0 %v2065
    %12904 = vmatprep.subr.bf16.mxu0 %v2057
    %12905 = vmatpush1.bf16.msra.mxu0 %v2056
    %12906 = vmatprep.subr.bf16.mxu0 %v2048
    %12907 = vmatpush1.bf16.msra.mxu0 %v2047
    %12908 = vmatprep.subr.bf16.mxu0 %v2039
    %12909 = vmatpush1.bf16.msra.mxu0 %v2038
    %12910 = vmatprep.subr.bf16.mxu0 %v2030
    %12911 = vmatpush1.bf16.msra.mxu0 %v2029
    %12912 = vmatprep.subr.bf16.mxu0 %v2165
    %12913 = vmatpush2.bf16.msra.mxu0 %v2164
    %12914 = vmatprep.subr.bf16.mxu0 %v2156
    %12915 = vmatpush2.bf16.msra.mxu0 %v2155
    %12916 = vmatprep.subr.bf16.mxu0 %v2147
    %12917 = vmatpush2.bf16.msra.mxu0 %v2146
    %12918 = vmatprep.subr.bf16.mxu0 %v2138
    %12919 = vmatpush2.bf16.msra.mxu0 %v2137
    %12920 = vmatprep.subr.bf16.mxu0 %v2129
    %12921 = vmatpush2.bf16.msra.mxu0 %v2128
    %12922 = vmatprep.subr.bf16.mxu0 %v2120
    %12923 = vmatpush2.bf16.msra.mxu0 %v2119
    %12924 = vmatprep.subr.bf16.mxu0 %v2111
    %12925 = vmatpush2.bf16.msra.mxu0 %v2110
    %12926 = vmatprep.subr.bf16.mxu0 %v2102
    %12927 = vmatpush2.bf16.msra.mxu0 %v2101
    %12928 = vmatprep.mubr.bf16.mxu0 %v12395
    %12929 = vmatmul.mubr.bf16.gmra.mxu0 %v12394
    %v12930 = vpop.f32.mrf.mxu0
    %v12931 = vadd.f32 0.0, %v12930
    %v12932 = vpop.f32.mrf.mxu0
    %v12933 = vadd.f32 0.0, %v12932
    %v12934 = vpop.f32.mrf.mxu0
    %v12935 = vpop.f32.mrf.mxu0
    %12936 = vdwg.mxu0
    %12937 = vmatprep.subr.bf16.mxu0 %v2237
    %12938 = vmatpush1.bf16.msra.mxu0 %v2236
    %12939 = vmatprep.subr.bf16.mxu0 %v2228
    %12940 = vmatpush1.bf16.msra.mxu0 %v2227
    %12941 = vmatprep.subr.bf16.mxu0 %v2219
    %12942 = vmatpush1.bf16.msra.mxu0 %v2218
    %12943 = vmatprep.subr.bf16.mxu0 %v2210
    %12944 = vmatpush1.bf16.msra.mxu0 %v2209
    %12945 = vmatprep.subr.bf16.mxu0 %v2201
    %12946 = vmatpush1.bf16.msra.mxu0 %v2200
    %12947 = vmatprep.subr.bf16.mxu0 %v2192
    %12948 = vmatpush1.bf16.msra.mxu0 %v2191
    %12949 = vmatprep.subr.bf16.mxu0 %v2183
    %12950 = vmatpush1.bf16.msra.mxu0 %v2182
    %12951 = vmatprep.subr.bf16.mxu0 %v2174
    %12952 = vmatpush1.bf16.msra.mxu0 %v2173
    %12953 = vmatprep.subr.bf16.mxu0 %v2309
    %12954 = vmatpush2.bf16.msra.mxu0 %v2308
    %12955 = vmatprep.subr.bf16.mxu0 %v2300
    %12956 = vmatpush2.bf16.msra.mxu0 %v2299
    %12957 = vmatprep.subr.bf16.mxu0 %v2291
    %12958 = vmatpush2.bf16.msra.mxu0 %v2290
    %12959 = vmatprep.subr.bf16.mxu0 %v2282
    %12960 = vmatpush2.bf16.msra.mxu0 %v2281
    %12961 = vmatprep.subr.bf16.mxu0 %v2273
    %12962 = vmatpush2.bf16.msra.mxu0 %v2272
    %12963 = vmatprep.subr.bf16.mxu0 %v2264
    %12964 = vmatpush2.bf16.msra.mxu0 %v2263
    %12965 = vmatprep.subr.bf16.mxu0 %v2255
    %12966 = vmatpush2.bf16.msra.mxu0 %v2254
    %12967 = vmatprep.subr.bf16.mxu0 %v2246
    %12968 = vmatpush2.bf16.msra.mxu0 %v2245
    %12969 = vmatprep.mubr.bf16.mxu0 %v12397
    %12970 = vmatmul.mubr.bf16.gmra.mxu0 %v12396
    %v12971 = vpop.f32.mrf.mxu0
    %v12972 = vadd.f32 %v12931, %v12971
    %v12973 = vpop.f32.mrf.mxu0
    %v12974 = vadd.f32 %v12933, %v12973
    %v12975 = vpop.f32.mrf.mxu0
    %v12976 = vpop.f32.mrf.mxu0
    %12977 = vdwg.mxu0
    %12978 = vmatprep.subr.bf16.mxu0 %v2381
    %12979 = vmatpush1.bf16.msra.mxu0 %v2380
    %12980 = vmatprep.subr.bf16.mxu0 %v2372
    %12981 = vmatpush1.bf16.msra.mxu0 %v2371
    %12982 = vmatprep.subr.bf16.mxu0 %v2363
    %12983 = vmatpush1.bf16.msra.mxu0 %v2362
    %12984 = vmatprep.subr.bf16.mxu0 %v2354
    %12985 = vmatpush1.bf16.msra.mxu0 %v2353
    %12986 = vmatprep.subr.bf16.mxu0 %v2345
    %12987 = vmatpush1.bf16.msra.mxu0 %v2344
    %12988 = vmatprep.subr.bf16.mxu0 %v2336
    %12989 = vmatpush1.bf16.msra.mxu0 %v2335
    %12990 = vmatprep.subr.bf16.mxu0 %v2327
    %12991 = vmatpush1.bf16.msra.mxu0 %v2326
    %12992 = vmatprep.subr.bf16.mxu0 %v2318
    %12993 = vmatpush1.bf16.msra.mxu0 %v2317
    %12994 = vmatprep.subr.bf16.mxu0 %v2453
    %12995 = vmatpush2.bf16.msra.mxu0 %v2452
    %12996 = vmatprep.subr.bf16.mxu0 %v2444
    %12997 = vmatpush2.bf16.msra.mxu0 %v2443
    %12998 = vmatprep.subr.bf16.mxu0 %v2435
    %12999 = vmatpush2.bf16.msra.mxu0 %v2434
    %13000 = vmatprep.subr.bf16.mxu0 %v2426
    %13001 = vmatpush2.bf16.msra.mxu0 %v2425
    %13002 = vmatprep.subr.bf16.mxu0 %v2417
    %13003 = vmatpush2.bf16.msra.mxu0 %v2416
    %13004 = vmatprep.subr.bf16.mxu0 %v2408
    %13005 = vmatpush2.bf16.msra.mxu0 %v2407
    %13006 = vmatprep.subr.bf16.mxu0 %v2399
    %13007 = vmatpush2.bf16.msra.mxu0 %v2398
    %13008 = vmatprep.subr.bf16.mxu0 %v2390
    %13009 = vmatpush2.bf16.msra.mxu0 %v2389
    %13010 = vmatprep.mubr.bf16.mxu0 %v12399
    %13011 = vmatmul.mubr.bf16.gmra.mxu0 %v12398
    %v13012 = vpop.f32.mrf.mxu0
    %v13013 = vadd.f32 %v12972, %v13012
    %v13014 = vpop.f32.mrf.mxu0
    %v13015 = vadd.f32 %v12974, %v13014
    %v13016 = vpop.f32.mrf.mxu0
    %v13017 = vpop.f32.mrf.mxu0
    %13018 = vdwg.mxu0
    %13019 = vmatprep.subr.bf16.mxu0 0
    %13020 = vmatpush1.bf16.msra.mxu0 0
    %13021 = vmatprep.subr.bf16.mxu0 0
    %13022 = vmatpush1.bf16.msra.mxu0 0
    %13023 = vmatprep.subr.bf16.mxu0 0
    %13024 = vmatpush1.bf16.msra.mxu0 0
    %13025 = vmatprep.subr.bf16.mxu0 0
    %13026 = vmatpush1.bf16.msra.mxu0 0
    %13027 = vmatprep.subr.bf16.mxu0 0
    %13028 = vmatpush1.bf16.msra.mxu0 0
    %13029 = vmatprep.subr.bf16.mxu0 0
    %13030 = vmatpush1.bf16.msra.mxu0 0
    %13031 = vmatprep.subr.bf16.mxu0 0
    %13032 = vmatpush1.bf16.msra.mxu0 0
    %13033 = vmatprep.subr.bf16.mxu0 %v2462
    %13034 = vmatpush1.bf16.msra.mxu0 %v2461
    %13035 = vmatprep.subr.bf16.mxu0 0
    %13036 = vmatpush2.bf16.msra.mxu0 0
    %13037 = vmatprep.subr.bf16.mxu0 0
    %13038 = vmatpush2.bf16.msra.mxu0 0
    %13039 = vmatprep.subr.bf16.mxu0 0
    %13040 = vmatpush2.bf16.msra.mxu0 0
    %13041 = vmatprep.subr.bf16.mxu0 0
    %13042 = vmatpush2.bf16.msra.mxu0 0
    %13043 = vmatprep.subr.bf16.mxu0 0
    %13044 = vmatpush2.bf16.msra.mxu0 0
    %13045 = vmatprep.subr.bf16.mxu0 0
    %13046 = vmatpush2.bf16.msra.mxu0 0
    %13047 = vmatprep.subr.bf16.mxu0 0
    %13048 = vmatpush2.bf16.msra.mxu0 0
    %13049 = vmatprep.subr.bf16.mxu0 0
    %13050 = vmatpush2.bf16.msra.mxu0 0
    %13051 = vmatprep.mubr.bf16.mxu0 0
    %13052 = vmatmul.mubr.bf16.gmra.mxu0 %v12402
    %v13053 = vpop.f32.mrf.mxu0
    %v13054 = vadd.f32 %v13013, %v13053
    %v13055 = vpop.f32.mrf.mxu0
    %v13056 = vadd.f32 %v13015, %v13055
    %v13057 = vpop.f32.mrf.mxu0
    %v13058 = vpop.f32.mrf.mxu0
    %13059 = vdwg.mxu0
    %13060 = vmatprep.subr.bf16.mxu0 0
    %13061 = vmatpush1.bf16.msra.mxu0 %v2094
    %13062 = vmatprep.subr.bf16.mxu0 0
    %13063 = vmatpush1.bf16.msra.mxu0 %v2085
    %13064 = vmatprep.subr.bf16.mxu0 0
    %13065 = vmatpush1.bf16.msra.mxu0 %v2076
    %13066 = vmatprep.subr.bf16.mxu0 0
    %13067 = vmatpush1.bf16.msra.mxu0 %v2067
    %13068 = vmatprep.subr.bf16.mxu0 0
    %13069 = vmatpush1.bf16.msra.mxu0 %v2058
    %13070 = vmatprep.subr.bf16.mxu0 0
    %13071 = vmatpush1.bf16.msra.mxu0 %v2049
    %13072 = vmatprep.subr.bf16.mxu0 0
    %13073 = vmatpush1.bf16.msra.mxu0 %v2040
    %13074 = vmatprep.subr.bf16.mxu0 0
    %13075 = vmatpush1.bf16.msra.mxu0 %v2031
    %13076 = vmatprep.subr.bf16.mxu0 0
    %13077 = vmatpush2.bf16.msra.mxu0 %v2166
    %13078 = vmatprep.subr.bf16.mxu0 0
    %13079 = vmatpush2.bf16.msra.mxu0 %v2157
    %13080 = vmatprep.subr.bf16.mxu0 0
    %13081 = vmatpush2.bf16.msra.mxu0 %v2148
    %13082 = vmatprep.subr.bf16.mxu0 0
    %13083 = vmatpush2.bf16.msra.mxu0 %v2139
    %13084 = vmatprep.subr.bf16.mxu0 0
    %13085 = vmatpush2.bf16.msra.mxu0 %v2130
    %13086 = vmatprep.subr.bf16.mxu0 0
    %13087 = vmatpush2.bf16.msra.mxu0 %v2121
    %13088 = vmatprep.subr.bf16.mxu0 0
    %13089 = vmatpush2.bf16.msra.mxu0 %v2112
    %13090 = vmatprep.subr.bf16.mxu0 0
    %13091 = vmatpush2.bf16.msra.mxu0 %v2103
    %13092 = vmatprep.mubr.bf16.mxu0 %v12395
    %13093 = vmatmul.mubr.bf16.gmra.mxu0 %v12394
    %v13094 = vpop.f32.mrf.mxu0
    %v13095 = vadd.f32 0.0, %v13094
    %v13096 = vpop.f32.mrf.mxu0
    %v13097 = vpop.f32.mrf.mxu0
    %v13098 = vpop.f32.mrf.mxu0
    %13099 = vdwg.mxu0
    %13100 = vmatprep.subr.bf16.mxu0 0
    %13101 = vmatpush1.bf16.msra.mxu0 %v2238
    %13102 = vmatprep.subr.bf16.mxu0 0
    %13103 = vmatpush1.bf16.msra.mxu0 %v2229
    %13104 = vmatprep.subr.bf16.mxu0 0
    %13105 = vmatpush1.bf16.msra.mxu0 %v2220
    %13106 = vmatprep.subr.bf16.mxu0 0
    %13107 = vmatpush1.bf16.msra.mxu0 %v2211
    %13108 = vmatprep.subr.bf16.mxu0 0
    %13109 = vmatpush1.bf16.msra.mxu0 %v2202
    %13110 = vmatprep.subr.bf16.mxu0 0
    %13111 = vmatpush1.bf16.msra.mxu0 %v2193
    %13112 = vmatprep.subr.bf16.mxu0 0
    %13113 = vmatpush1.bf16.msra.mxu0 %v2184
    %13114 = vmatprep.subr.bf16.mxu0 0
    %13115 = vmatpush1.bf16.msra.mxu0 %v2175
    %13116 = vmatprep.subr.bf16.mxu0 0
    %13117 = vmatpush2.bf16.msra.mxu0 %v2310
    %13118 = vmatprep.subr.bf16.mxu0 0
    %13119 = vmatpush2.bf16.msra.mxu0 %v2301
    %13120 = vmatprep.subr.bf16.mxu0 0
    %13121 = vmatpush2.bf16.msra.mxu0 %v2292
    %13122 = vmatprep.subr.bf16.mxu0 0
    %13123 = vmatpush2.bf16.msra.mxu0 %v2283
    %13124 = vmatprep.subr.bf16.mxu0 0
    %13125 = vmatpush2.bf16.msra.mxu0 %v2274
    %13126 = vmatprep.subr.bf16.mxu0 0
    %13127 = vmatpush2.bf16.msra.mxu0 %v2265
    %13128 = vmatprep.subr.bf16.mxu0 0
    %13129 = vmatpush2.bf16.msra.mxu0 %v2256
    %13130 = vmatprep.subr.bf16.mxu0 0
    %13131 = vmatpush2.bf16.msra.mxu0 %v2247
    %13132 = vmatprep.mubr.bf16.mxu0 %v12397
    %13133 = vmatmul.mubr.bf16.gmra.mxu0 %v12396
    %v13134 = vpop.f32.mrf.mxu0
    %v13135 = vadd.f32 %v13095, %v13134
    %v13136 = vpop.f32.mrf.mxu0
    %v13137 = vpop.f32.mrf.mxu0
    %v13138 = vpop.f32.mrf.mxu0
    %13139 = vdwg.mxu0
    %13140 = vmatprep.subr.bf16.mxu0 0
    %13141 = vmatpush1.bf16.msra.mxu0 %v2382
    %13142 = vmatprep.subr.bf16.mxu0 0
    %13143 = vmatpush1.bf16.msra.mxu0 %v2373
    %13144 = vmatprep.subr.bf16.mxu0 0
    %13145 = vmatpush1.bf16.msra.mxu0 %v2364
    %13146 = vmatprep.subr.bf16.mxu0 0
    %13147 = vmatpush1.bf16.msra.mxu0 %v2355
    %13148 = vmatprep.subr.bf16.mxu0 0
    %13149 = vmatpush1.bf16.msra.mxu0 %v2346
    %13150 = vmatprep.subr.bf16.mxu0 0
    %13151 = vmatpush1.bf16.msra.mxu0 %v2337
    %13152 = vmatprep.subr.bf16.mxu0 0
    %13153 = vmatpush1.bf16.msra.mxu0 %v2328
    %13154 = vmatprep.subr.bf16.mxu0 0
    %13155 = vmatpush1.bf16.msra.mxu0 %v2319
    %13156 = vmatprep.subr.bf16.mxu0 0
    %13157 = vmatpush2.bf16.msra.mxu0 %v2454
    %13158 = vmatprep.subr.bf16.mxu0 0
    %13159 = vmatpush2.bf16.msra.mxu0 %v2445
    %13160 = vmatprep.subr.bf16.mxu0 0
    %13161 = vmatpush2.bf16.msra.mxu0 %v2436
    %13162 = vmatprep.subr.bf16.mxu0 0
    %13163 = vmatpush2.bf16.msra.mxu0 %v2427
    %13164 = vmatprep.subr.bf16.mxu0 0
    %13165 = vmatpush2.bf16.msra.mxu0 %v2418
    %13166 = vmatprep.subr.bf16.mxu0 0
    %13167 = vmatpush2.bf16.msra.mxu0 %v2409
    %13168 = vmatprep.subr.bf16.mxu0 0
    %13169 = vmatpush2.bf16.msra.mxu0 %v2400
    %13170 = vmatprep.subr.bf16.mxu0 0
    %13171 = vmatpush2.bf16.msra.mxu0 %v2391
    %13172 = vmatprep.mubr.bf16.mxu0 %v12399
    %13173 = vmatmul.mubr.bf16.gmra.mxu0 %v12398
    %v13174 = vpop.f32.mrf.mxu0
    %v13175 = vadd.f32 %v13135, %v13174
    %v13176 = vpop.f32.mrf.mxu0
    %v13177 = vpop.f32.mrf.mxu0
    %v13178 = vpop.f32.mrf.mxu0
    %13179 = vdwg.mxu0
    %13180 = vmatprep.subr.bf16.mxu0 0
    %13181 = vmatpush1.bf16.msra.mxu0 0
    %13182 = vmatprep.subr.bf16.mxu0 0
    %13183 = vmatpush1.bf16.msra.mxu0 0
    %13184 = vmatprep.subr.bf16.mxu0 0
    %13185 = vmatpush1.bf16.msra.mxu0 0
    %13186 = vmatprep.subr.bf16.mxu0 0
    %13187 = vmatpush1.bf16.msra.mxu0 0
    %13188 = vmatprep.subr.bf16.mxu0 0
    %13189 = vmatpush1.bf16.msra.mxu0 0
    %13190 = vmatprep.subr.bf16.mxu0 0
    %13191 = vmatpush1.bf16.msra.mxu0 0
    %13192 = vmatprep.subr.bf16.mxu0 0
    %13193 = vmatpush1.bf16.msra.mxu0 0
    %13194 = vmatprep.subr.bf16.mxu0 0
    %13195 = vmatpush1.bf16.msra.mxu0 %v2463
    %13196 = vmatprep.subr.bf16.mxu0 0
    %13197 = vmatpush2.bf16.msra.mxu0 0
    %13198 = vmatprep.subr.bf16.mxu0 0
    %13199 = vmatpush2.bf16.msra.mxu0 0
    %13200 = vmatprep.subr.bf16.mxu0 0
    %13201 = vmatpush2.bf16.msra.mxu0 0
    %13202 = vmatprep.subr.bf16.mxu0 0
    %13203 = vmatpush2.bf16.msra.mxu0 0
    %13204 = vmatprep.subr.bf16.mxu0 0
    %13205 = vmatpush2.bf16.msra.mxu0 0
    %13206 = vmatprep.subr.bf16.mxu0 0
    %13207 = vmatpush2.bf16.msra.mxu0 0
    %13208 = vmatprep.subr.bf16.mxu0 0
    %13209 = vmatpush2.bf16.msra.mxu0 0
    %13210 = vmatprep.subr.bf16.mxu0 0
    %13211 = vmatpush2.bf16.msra.mxu0 0
    %13212 = vmatprep.mubr.bf16.mxu0 0
    %13213 = vmatmul.mubr.bf16.gmra.mxu0 %v12402
    %v13214 = vpop.f32.mrf.mxu0
    %v13215 = vadd.f32 %v13175, %v13214
    %v13216 = vpop.f32.mrf.mxu0
    %v13217 = vpop.f32.mrf.mxu0
    %v13218 = vpop.f32.mrf.mxu0
    %13219 = vdwg.mxu0
    %v13220 = vsub.f32 %v11394, %v12562
    %v13221 = vsub.f32 %v11396, %v12564
    %v13222 = vsub.f32 %v11435, %v12726
    %v13223 = vsub.f32 %v11437, %v12728
    %v13224 = vsub.f32 %v11476, %v12890
    %v13225 = vsub.f32 %v11478, %v12892
    %v13226 = vsub.f32 %v11517, %v13054
    %v13227 = vsub.f32 %v11519, %v13056
    %v13228 = vsub.f32 %v11558, %v13215
    %v13229 = vadd.f32 %v13220, %v609
    %v13230 = vadd.f32 %v13221, %v613
    %v13231 = vadd.f32 %v13222, %v617
    %v13232 = vadd.f32 %v13223, %v621
    %v13233 = vadd.f32 %v13224, %v625
    %v13234 = vadd.f32 %v13225, %v629
    %v13235 = vadd.f32 %v13226, %v633
    %v13236 = vadd.f32 %v13227, %v637
    %v13237 = vadd.f32 %v13228, %v641
    %v13238 = vmax.f32 %v13229, 0.0
    %v13239 = vmax.f32 %v13230, 0.0
    %v13240 = vmax.f32 %v13231, 0.0
    %v13241 = vmax.f32 %v13232, 0.0
    %v13242 = vmax.f32 %v13233, 0.0
    %v13243 = vmax.f32 %v13234, 0.0
    %v13244 = vmax.f32 %v13235, 0.0
    %v13245 = vmax.f32 %v13236, 0.0
    %v13246 = vmax.f32 %v13237, 0.0
    %v13247 = vsub.f32 %v11394, %v13238
    %v13248 = vsub.f32 %v11396, %v13239
    %v13249 = vsub.f32 %v11435, %v13240
    %v13250 = vsub.f32 %v11437, %v13241
    %v13251 = vsub.f32 %v11476, %v13242
    %v13252 = vsub.f32 %v11478, %v13243
    %v13253 = vsub.f32 %v11517, %v13244
    %v13254 = vsub.f32 %v11519, %v13245
    %v13255 = vsub.f32 %v11558, %v13246
    %v13256 = vpack.c.bf16 %v13247, %v13247
    %v13257 = vpack.c.bf16 %v13248, %v13248
    %v13258 = vpack.c.bf16 %v13249, %v13249
    %v13259 = vpack.c.bf16 %v13250, %v13250
    %v13260 = vpack.c.bf16 %v13251, %v13251
    %v13261 = vpack.c.bf16 %v13252, %v13252
    %v13262 = vpack.c.bf16 %v13253, %v13253
    %v13263 = vpack.c.bf16 %v13254, %v13254
    %v13264 = vpack.c.bf16 %v13255, %v13255
    %13265 = vmatprep.subr.bf16.mxu0 %v4345
    %13266 = vmatpush1.bf16.msra.mxu0 %v4344
    %13267 = vmatprep.subr.bf16.mxu0 %v4343
    %13268 = vmatpush1.bf16.msra.mxu0 %v4342
    %13269 = vmatprep.subr.bf16.mxu0 %v4341
    %13270 = vmatpush1.bf16.msra.mxu0 %v4340
    %13271 = vmatprep.subr.bf16.mxu0 %v4339
    %13272 = vmatpush1.bf16.msra.mxu0 %v4338
    %13273 = vmatprep.subr.bf16.mxu0 %v4337
    %13274 = vmatpush1.bf16.msra.mxu0 %v4336
    %13275 = vmatprep.subr.bf16.mxu0 %v4335
    %13276 = vmatpush1.bf16.msra.mxu0 %v4334
    %13277 = vmatprep.subr.bf16.mxu0 %v4333
    %13278 = vmatpush1.bf16.msra.mxu0 %v4332
    %13279 = vmatprep.subr.bf16.mxu0 %v4331
    %13280 = vmatpush1.bf16.msra.mxu0 %v4330
    %13281 = vmatprep.subr.bf16.mxu0 %v4361
    %13282 = vmatpush2.bf16.msra.mxu0 %v4360
    %13283 = vmatprep.subr.bf16.mxu0 %v4359
    %13284 = vmatpush2.bf16.msra.mxu0 %v4358
    %13285 = vmatprep.subr.bf16.mxu0 %v4357
    %13286 = vmatpush2.bf16.msra.mxu0 %v4356
    %13287 = vmatprep.subr.bf16.mxu0 %v4355
    %13288 = vmatpush2.bf16.msra.mxu0 %v4354
    %13289 = vmatprep.subr.bf16.mxu0 %v4353
    %13290 = vmatpush2.bf16.msra.mxu0 %v4352
    %13291 = vmatprep.subr.bf16.mxu0 %v4351
    %13292 = vmatpush2.bf16.msra.mxu0 %v4350
    %13293 = vmatprep.subr.bf16.mxu0 %v4349
    %13294 = vmatpush2.bf16.msra.mxu0 %v4348
    %13295 = vmatprep.subr.bf16.mxu0 %v4347
    %13296 = vmatpush2.bf16.msra.mxu0 %v4346
    %13297 = vmatprep.mubr.bf16.mxu0 %v13257
    %13298 = vmatmul.mubr.bf16.gmra.mxu0 %v13256
    %v13299 = vpop.f32.mrf.mxu0
    %v13300 = vadd.f32 0.0, %v13299
    %v13301 = vpop.f32.mrf.mxu0
    %v13302 = vadd.f32 0.0, %v13301
    %v13303 = vpop.f32.mrf.mxu0
    %v13304 = vpop.f32.mrf.mxu0
    %13305 = vdwg.mxu0
    %13306 = vmatprep.subr.bf16.mxu0 %v4377
    %13307 = vmatpush1.bf16.msra.mxu0 %v4376
    %13308 = vmatprep.subr.bf16.mxu0 %v4375
    %13309 = vmatpush1.bf16.msra.mxu0 %v4374
    %13310 = vmatprep.subr.bf16.mxu0 %v4373
    %13311 = vmatpush1.bf16.msra.mxu0 %v4372
    %13312 = vmatprep.subr.bf16.mxu0 %v4371
    %13313 = vmatpush1.bf16.msra.mxu0 %v4370
    %13314 = vmatprep.subr.bf16.mxu0 %v4369
    %13315 = vmatpush1.bf16.msra.mxu0 %v4368
    %13316 = vmatprep.subr.bf16.mxu0 %v4367
    %13317 = vmatpush1.bf16.msra.mxu0 %v4366
    %13318 = vmatprep.subr.bf16.mxu0 %v4365
    %13319 = vmatpush1.bf16.msra.mxu0 %v4364
    %13320 = vmatprep.subr.bf16.mxu0 %v4363
    %13321 = vmatpush1.bf16.msra.mxu0 %v4362
    %13322 = vmatprep.subr.bf16.mxu0 %v4393
    %13323 = vmatpush2.bf16.msra.mxu0 %v4392
    %13324 = vmatprep.subr.bf16.mxu0 %v4391
    %13325 = vmatpush2.bf16.msra.mxu0 %v4390
    %13326 = vmatprep.subr.bf16.mxu0 %v4389
    %13327 = vmatpush2.bf16.msra.mxu0 %v4388
    %13328 = vmatprep.subr.bf16.mxu0 %v4387
    %13329 = vmatpush2.bf16.msra.mxu0 %v4386
    %13330 = vmatprep.subr.bf16.mxu0 %v4385
    %13331 = vmatpush2.bf16.msra.mxu0 %v4384
    %13332 = vmatprep.subr.bf16.mxu0 %v4383
    %13333 = vmatpush2.bf16.msra.mxu0 %v4382
    %13334 = vmatprep.subr.bf16.mxu0 %v4381
    %13335 = vmatpush2.bf16.msra.mxu0 %v4380
    %13336 = vmatprep.subr.bf16.mxu0 %v4379
    %13337 = vmatpush2.bf16.msra.mxu0 %v4378
    %13338 = vmatprep.mubr.bf16.mxu0 %v13259
    %13339 = vmatmul.mubr.bf16.gmra.mxu0 %v13258
    %v13340 = vpop.f32.mrf.mxu0
    %v13341 = vadd.f32 %v13300, %v13340
    %v13342 = vpop.f32.mrf.mxu0
    %v13343 = vadd.f32 %v13302, %v13342
    %v13344 = vpop.f32.mrf.mxu0
    %v13345 = vpop.f32.mrf.mxu0
    %13346 = vdwg.mxu0
    %13347 = vmatprep.subr.bf16.mxu0 %v4409
    %13348 = vmatpush1.bf16.msra.mxu0 %v4408
    %13349 = vmatprep.subr.bf16.mxu0 %v4407
    %13350 = vmatpush1.bf16.msra.mxu0 %v4406
    %13351 = vmatprep.subr.bf16.mxu0 %v4405
    %13352 = vmatpush1.bf16.msra.mxu0 %v4404
    %13353 = vmatprep.subr.bf16.mxu0 %v4403
    %13354 = vmatpush1.bf16.msra.mxu0 %v4402
    %13355 = vmatprep.subr.bf16.mxu0 %v4401
    %13356 = vmatpush1.bf16.msra.mxu0 %v4400
    %13357 = vmatprep.subr.bf16.mxu0 %v4399
    %13358 = vmatpush1.bf16.msra.mxu0 %v4398
    %13359 = vmatprep.subr.bf16.mxu0 %v4397
    %13360 = vmatpush1.bf16.msra.mxu0 %v4396
    %13361 = vmatprep.subr.bf16.mxu0 %v4395
    %13362 = vmatpush1.bf16.msra.mxu0 %v4394
    %13363 = vmatprep.subr.bf16.mxu0 %v4425
    %13364 = vmatpush2.bf16.msra.mxu0 %v4424
    %13365 = vmatprep.subr.bf16.mxu0 %v4423
    %13366 = vmatpush2.bf16.msra.mxu0 %v4422
    %13367 = vmatprep.subr.bf16.mxu0 %v4421
    %13368 = vmatpush2.bf16.msra.mxu0 %v4420
    %13369 = vmatprep.subr.bf16.mxu0 %v4419
    %13370 = vmatpush2.bf16.msra.mxu0 %v4418
    %13371 = vmatprep.subr.bf16.mxu0 %v4417
    %13372 = vmatpush2.bf16.msra.mxu0 %v4416
    %13373 = vmatprep.subr.bf16.mxu0 %v4415
    %13374 = vmatpush2.bf16.msra.mxu0 %v4414
    %13375 = vmatprep.subr.bf16.mxu0 %v4413
    %13376 = vmatpush2.bf16.msra.mxu0 %v4412
    %13377 = vmatprep.subr.bf16.mxu0 %v4411
    %13378 = vmatpush2.bf16.msra.mxu0 %v4410
    %13379 = vmatprep.mubr.bf16.mxu0 %v13261
    %13380 = vmatmul.mubr.bf16.gmra.mxu0 %v13260
    %v13381 = vpop.f32.mrf.mxu0
    %v13382 = vadd.f32 %v13341, %v13381
    %v13383 = vpop.f32.mrf.mxu0
    %v13384 = vadd.f32 %v13343, %v13383
    %v13385 = vpop.f32.mrf.mxu0
    %v13386 = vpop.f32.mrf.mxu0
    %13387 = vdwg.mxu0
    %13388 = vmatprep.subr.bf16.mxu0 %v4441
    %13389 = vmatpush1.bf16.msra.mxu0 %v4440
    %13390 = vmatprep.subr.bf16.mxu0 %v4439
    %13391 = vmatpush1.bf16.msra.mxu0 %v4438
    %13392 = vmatprep.subr.bf16.mxu0 %v4437
    %13393 = vmatpush1.bf16.msra.mxu0 %v4436
    %13394 = vmatprep.subr.bf16.mxu0 %v4435
    %13395 = vmatpush1.bf16.msra.mxu0 %v4434
    %13396 = vmatprep.subr.bf16.mxu0 %v4433
    %13397 = vmatpush1.bf16.msra.mxu0 %v4432
    %13398 = vmatprep.subr.bf16.mxu0 %v4431
    %13399 = vmatpush1.bf16.msra.mxu0 %v4430
    %13400 = vmatprep.subr.bf16.mxu0 %v4429
    %13401 = vmatpush1.bf16.msra.mxu0 %v4428
    %13402 = vmatprep.subr.bf16.mxu0 %v4427
    %13403 = vmatpush1.bf16.msra.mxu0 %v4426
    %13404 = vmatprep.subr.bf16.mxu0 %v4457
    %13405 = vmatpush2.bf16.msra.mxu0 %v4456
    %13406 = vmatprep.subr.bf16.mxu0 %v4455
    %13407 = vmatpush2.bf16.msra.mxu0 %v4454
    %13408 = vmatprep.subr.bf16.mxu0 %v4453
    %13409 = vmatpush2.bf16.msra.mxu0 %v4452
    %13410 = vmatprep.subr.bf16.mxu0 %v4451
    %13411 = vmatpush2.bf16.msra.mxu0 %v4450
    %13412 = vmatprep.subr.bf16.mxu0 %v4449
    %13413 = vmatpush2.bf16.msra.mxu0 %v4448
    %13414 = vmatprep.subr.bf16.mxu0 %v4447
    %13415 = vmatpush2.bf16.msra.mxu0 %v4446
    %13416 = vmatprep.subr.bf16.mxu0 %v4445
    %13417 = vmatpush2.bf16.msra.mxu0 %v4444
    %13418 = vmatprep.subr.bf16.mxu0 %v4443
    %13419 = vmatpush2.bf16.msra.mxu0 %v4442
    %13420 = vmatprep.mubr.bf16.mxu0 %v13263
    %13421 = vmatmul.mubr.bf16.gmra.mxu0 %v13262
    %v13422 = vpop.f32.mrf.mxu0
    %v13423 = vadd.f32 %v13382, %v13422
    %v13424 = vpop.f32.mrf.mxu0
    %v13425 = vadd.f32 %v13384, %v13424
    %v13426 = vpop.f32.mrf.mxu0
    %v13427 = vpop.f32.mrf.mxu0
    %13428 = vdwg.mxu0
    %13429 = vmatprep.subr.bf16.mxu0 %v4473
    %13430 = vmatpush1.bf16.msra.mxu0 %v4472
    %13431 = vmatprep.subr.bf16.mxu0 %v4471
    %13432 = vmatpush1.bf16.msra.mxu0 %v4470
    %13433 = vmatprep.subr.bf16.mxu0 %v4469
    %13434 = vmatpush1.bf16.msra.mxu0 %v4468
    %13435 = vmatprep.subr.bf16.mxu0 %v4467
    %13436 = vmatpush1.bf16.msra.mxu0 %v4466
    %13437 = vmatprep.subr.bf16.mxu0 %v4465
    %13438 = vmatpush1.bf16.msra.mxu0 %v4464
    %13439 = vmatprep.subr.bf16.mxu0 %v4463
    %13440 = vmatpush1.bf16.msra.mxu0 %v4462
    %13441 = vmatprep.subr.bf16.mxu0 %v4461
    %13442 = vmatpush1.bf16.msra.mxu0 %v4460
    %13443 = vmatprep.subr.bf16.mxu0 %v4459
    %13444 = vmatpush1.bf16.msra.mxu0 %v4458
    %13445 = vmatprep.subr.bf16.mxu0 0
    %13446 = vmatpush2.bf16.msra.mxu0 0
    %13447 = vmatprep.subr.bf16.mxu0 0
    %13448 = vmatpush2.bf16.msra.mxu0 0
    %13449 = vmatprep.subr.bf16.mxu0 0
    %13450 = vmatpush2.bf16.msra.mxu0 0
    %13451 = vmatprep.subr.bf16.mxu0 0
    %13452 = vmatpush2.bf16.msra.mxu0 0
    %13453 = vmatprep.subr.bf16.mxu0 0
    %13454 = vmatpush2.bf16.msra.mxu0 0
    %13455 = vmatprep.subr.bf16.mxu0 0
    %13456 = vmatpush2.bf16.msra.mxu0 0
    %13457 = vmatprep.subr.bf16.mxu0 0
    %13458 = vmatpush2.bf16.msra.mxu0 0
    %13459 = vmatprep.subr.bf16.mxu0 0
    %13460 = vmatpush2.bf16.msra.mxu0 0
    %13461 = vmatprep.mubr.bf16.mxu0 0
    %13462 = vmatmul.mubr.bf16.gmra.mxu0 %v13264
    %v13463 = vpop.f32.mrf.mxu0
    %v13464 = vadd.f32 %v13423, %v13463
    %v13465 = vpop.f32.mrf.mxu0
    %v13466 = vadd.f32 %v13425, %v13465
    %v13467 = vpop.f32.mrf.mxu0
    %v13468 = vpop.f32.mrf.mxu0
    %13469 = vdwg.mxu0
    %v13470 = vsub.f32 %v11351, %v13464
    %v13471 = vsub.f32 %v11353, %v13466
    %v13472 = vadd.f32 %v13470, %v3891
    %v13473 = vadd.f32 %v13471, %v3895
    %v13474 = vmax.f32 %v13472, 0.0
    %v13475 = vmax.f32 %v13473, 0.0
    %v13476 = vsub.f32 %v11351, %v13474
    %v13477 = vsub.f32 %v11353, %v13475
    %v13478 = vpack.c.bf16 %v13476, %v13476
    %v13479 = vpack.c.bf16 %v13477, %v13477
    %13480 = vmatprep.subr.bf16.mxu0 0
    %13481 = vmatpush1.bf16.msra.mxu0 %v4936
    %13482 = vmatprep.subr.bf16.mxu0 0
    %13483 = vmatpush1.bf16.msra.mxu0 %v4935
    %13484 = vmatprep.subr.bf16.mxu0 0
    %13485 = vmatpush1.bf16.msra.mxu0 %v4934
    %13486 = vmatprep.subr.bf16.mxu0 0
    %13487 = vmatpush1.bf16.msra.mxu0 %v4933
    %13488 = vmatprep.subr.bf16.mxu0 0
    %13489 = vmatpush1.bf16.msra.mxu0 %v4932
    %13490 = vmatprep.subr.bf16.mxu0 0
    %13491 = vmatpush1.bf16.msra.mxu0 %v4931
    %13492 = vmatprep.subr.bf16.mxu0 0
    %13493 = vmatpush1.bf16.msra.mxu0 %v4930
    %13494 = vmatprep.subr.bf16.mxu0 0
    %13495 = vmatpush1.bf16.msra.mxu0 %v4929
    %13496 = vmatprep.subr.bf16.mxu0 0
    %13497 = vmatpush2.bf16.msra.mxu0 %v4944
    %13498 = vmatprep.subr.bf16.mxu0 0
    %13499 = vmatpush2.bf16.msra.mxu0 %v4943
    %13500 = vmatprep.subr.bf16.mxu0 0
    %13501 = vmatpush2.bf16.msra.mxu0 %v4942
    %13502 = vmatprep.subr.bf16.mxu0 0
    %13503 = vmatpush2.bf16.msra.mxu0 %v4941
    %13504 = vmatprep.subr.bf16.mxu0 0
    %13505 = vmatpush2.bf16.msra.mxu0 %v4940
    %13506 = vmatprep.subr.bf16.mxu0 0
    %13507 = vmatpush2.bf16.msra.mxu0 %v4939
    %13508 = vmatprep.subr.bf16.mxu0 0
    %13509 = vmatpush2.bf16.msra.mxu0 %v4938
    %13510 = vmatprep.subr.bf16.mxu0 0
    %13511 = vmatpush2.bf16.msra.mxu0 %v4937
    %13512 = vmatprep.mubr.bf16.mxu0 %v13479
    %13513 = vmatmul.mubr.bf16.gmra.mxu0 %v13478
    %v13514 = vpop.f32.mrf.mxu0
    %v13515 = vadd.f32 0.0, %v13514
    %v13516 = vpop.f32.mrf.mxu0
    %v13517 = vpop.f32.mrf.mxu0
    %v13518 = vpop.f32.mrf.mxu0
    %13519 = vdwg.mxu0
    %v13520 = vsub.f32 %v11311, %v13515
    %v13521 = vadd.f32 %v13520, %v4863
    %v13522 = vmax.f32 %v13521, 0.0
    %v13523 = vld [vmem:[%s11] sm:$0xff]
    %v13524 = vld [vmem:[%s11 + $0x8] sm:$0xff]
    %v13525 = vld [vmem:[%s11 + $0x10] sm:$0xff]
    %v13526 = vld [vmem:[%s11 + $0x18] sm:$0xff]
    %v13527 = vld [vmem:[%s12] sm:$0x1]
    %v13529 = vlaneseq
    %v13530 = vshrl.u32 %v13529, 7
    %v13531 = vsub.s32 0, %v13530
    %v13532 = vrot.slane %v13527, %v13531
    %v13535 = vsel %vm5032, %v13522, 0
    %13537 = vmatprep.subr.mxu0 0.0
    %13538 = vmatpush1.msra.mxu0 0.0
    %13539 = vmatprep.subr.mxu0 0.0
    %13540 = vmatpush1.msra.mxu0 0.0
    %13541 = vmatprep.subr.mxu0 0.0
    %13542 = vmatpush1.msra.mxu0 0.0
    %13543 = vmatprep.subr.mxu0 0.0
    %13544 = vmatpush1.msra.mxu0 0.0
    %13545 = vmatprep.subr.mxu0 0.0
    %13546 = vmatpush1.msra.mxu0 0.0
    %13547 = vmatprep.subr.mxu0 0.0
    %13548 = vmatpush1.msra.mxu0 0.0
    %13549 = vmatprep.subr.mxu0 0.0
    %13550 = vmatpush1.msra.mxu0 0.0
    %13551 = vmatprep.subr.mxu0 0.0
    %13552 = vmatpush1.msra.mxu0 0.0
    %13553 = vmatprep.subr.mxu0 0.0
    %13554 = vmatpush1.msra.mxu0 0.0
    %13555 = vmatprep.subr.mxu0 0.0
    %13556 = vmatpush1.msra.mxu0 0.0
    %13557 = vmatprep.subr.mxu0 0.0
    %13558 = vmatpush1.msra.mxu0 0.0
    %13559 = vmatprep.subr.mxu0 0.0
    %13560 = vmatpush1.msra.mxu0 0.0
    %13561 = vmatprep.subr.mxu0 0.0
    %13562 = vmatpush1.msra.mxu0 %v13526
    %13563 = vmatprep.subr.mxu0 0.0
    %13564 = vmatpush1.msra.mxu0 %v13525
    %13565 = vmatprep.subr.mxu0 0.0
    %13566 = vmatpush1.msra.mxu0 %v13524
    %13567 = vmatprep.subr.mxu0 0.0
    %13568 = vmatpush1.msra.mxu0 %v13523
    %13569 = vmatprep.subr.mxu0 0.0
    %13570 = vmatpush2.msra.mxu0 0.0
    %13571 = vmatprep.subr.mxu0 0.0
    %13572 = vmatpush2.msra.mxu0 0.0
    %13573 = vmatprep.subr.mxu0 0.0
    %13574 = vmatpush2.msra.mxu0 0.0
    %13575 = vmatprep.subr.mxu0 0.0
    %13576 = vmatpush2.msra.mxu0 0.0
    %13577 = vmatprep.subr.mxu0 0.0
    %13578 = vmatpush2.msra.mxu0 0.0
    %13579 = vmatprep.subr.mxu0 0.0
    %13580 = vmatpush2.msra.mxu0 0.0
    %13581 = vmatprep.subr.mxu0 0.0
    %13582 = vmatpush2.msra.mxu0 0.0
    %13583 = vmatprep.subr.mxu0 0.0
    %13584 = vmatpush2.msra.mxu0 0.0
    %13585 = vmatprep.subr.mxu0 0.0
    %13586 = vmatpush2.msra.mxu0 0.0
    %13587 = vmatprep.subr.mxu0 0.0
    %13588 = vmatpush2.msra.mxu0 0.0
    %13589 = vmatprep.subr.mxu0 0.0
    %13590 = vmatpush2.msra.mxu0 0.0
    %13591 = vmatprep.subr.mxu0 0.0
    %13592 = vmatpush2.msra.mxu0 0.0
    %13593 = vmatprep.subr.mxu0 0.0
    %13594 = vmatpush2.msra.mxu0 0.0
    %13595 = vmatprep.subr.mxu0 0.0
    %13596 = vmatpush2.msra.mxu0 0.0
    %13597 = vmatprep.subr.mxu0 0.0
    %13598 = vmatpush2.msra.mxu0 0.0
    %13599 = vmatprep.subr.mxu0 0.0
    %13600 = vmatpush2.msra.mxu0 0.0
    %13601 = vmatprep.mubr.f32.mxu0 0.0
    %13602 = vmatmul.mubr.f32.gmra.mxu0 %v13535
    %v13603 = vpop.f32.mrf.mxu0
    %v13604 = vadd.f32 %v13532, %v13603
    %v13605 = vpop.f32.mrf.mxu0
    %13606 = vdwg.mxu0
    %vm13607 = vcmask 74752
    %v13608 = vsel %vm13607, %v13604, -inf
    %13609 = vmax.xlane.f32.xlu0 %v13608
    %v13610 = vpop.xlane.xlu0 %13609
    %v13611 = vsub.f32 %v13604, %v13610
    %v13612 = vmul.f32 %v13611, 1.442695
    %v13613 = vpow.pop %v13612
    %v13614 = vsel %vm13607, %v13613, 0.0
    %13615 = vadd.xlane.f32.xlu0 %v13614
    %v13616 = vpop.xlane.xlu0 %13615
    %v13617 = vlog2.pop %v13616
    %v13618 = vmul.f32 %v13617, 0.6931472
    %v13619 = vadd.f32 %v13618, %v13610
    %v13620 = vsub.f32 %v13604, %v13619
    %13621 = vst.msk [vmem:[#allocation5] sm:$0x3] %vm13607, %v13620
    // Predicated region
    $region58: #{ml_fista_net_forward.1} parent=1 // pred_check
      _
    $region59: #{ml_fista_net_forward.1} parent=1 // pred_check_branch
      %13623 = sbr.rel (0) target = $region61
    $region60: #{ml_fista_net_forward.1} parent=1 // pred_region
      %s13625 = ssub.s32 32, 32
      %13626 = vsyncadd [#allocation3], %s13625
      %s13628 = sshll.u32 [#allocation5], 4
      %s13629 = int_to_ptr.vmem [resolvable:$true] %s13628
      %13631 = dma.vmem_to_hbm [thread:$0]  %s13629, 32, %s13, [#allocation3]
    $region61: #{ml_fista_net_forward.1} parent=1 // pred_fallthru
      _
    // Predicated region
    $region62: #{ml_fista_net_forward.1} parent=1 // pred_check
      _
    $region63: #{ml_fista_net_forward.1} parent=1 // pred_check_branch
      %13633 = sbr.rel (0) target = $region65
    $region64: #{ml_fista_net_forward.1} parent=1 // pred_region
      %13634 = dma.done [#allocation3], 32
    $region65: #{ml_fista_net_forward.1} parent=1 // pred_fallthru
      _
    %13635 = vsyncpa [#allocation3], 1
    %13636 = vsyncpa [#allocation4], 1

</llo_original>
